<compile_context>
chip_gen: v7x
topology: tpu7x:2x2x1
jax: 0.10.0
libtpu: 0.0.40
codegen_flags: <defaults>
</compile_context>

<pallas_src>
import numpy as np

import jax
import jax.numpy as jnp
from jax.experimental import pallas as pl
from jax.experimental.pallas import tpu as pltpu


# ---------------------------------------------------------------------------
# Fused kernel: conv1+pool1 -> conv2+pool2 -> fc for one block of Bt images.
# ---------------------------------------------------------------------------
def _cnn_fused_kernel(x_ref, w1a_ref, w1b_ref, b1_ref, w2_ref, b2_ref,
                      wf_ref, bf_ref, o_ref, xg_ref, h1_ref, h2_ref):
    """Shapes (M = Bt*8 rows, 8 rows per image):

    x_ref  : (M, 120)        bf16  row (b,P) = padded-image rows 4P..4P+3
    w1a_ref: (120, 2048)     bf16  conv1 band matrix (input rows 4P..4P+3)
    w1b_ref: (60, 2048)      bf16  conv1 band matrix (input rows 4P+4,4P+5)
    b1_ref : (1, 512)  f32,  w2_ref: (4, 224, 1024) bf16,  b2_ref: (1, 256) f32
    wf_ref : (7, 256, 10) bf16,    bf_ref: (1, 10) f32
    o_ref  : (M, 10) f32     logits of image b on row b*8 (other rows garbage)
    xg_ref : (M+8, 120)  bf16 scratch (input + tail guard)
    h1_ref : (M+16, 512) bf16 scratch (pooled conv1, zero guard rows)
    h2_ref : (M+8, 256)  bf16 scratch (pooled conv2, zero tail guard)
    """
    M = o_ref.shape[0]
    f32 = jnp.float32

    # ---- stage the input block into a guard-padded scratch ----------------
    xv = x_ref[...]                                   # (M, 120)
    xg_ref[0:M, :] = xv
    xg_ref[M:M + 8, :] = jnp.zeros((8, 120), xg_ref.dtype)

    # ---- conv1 (+ bias + ReLU + 2x2 maxpool) -------------------------------
    # y1[(b,P), q*512 + e*256 + m*16 + c] = raw conv1 at row 2*(2P+e)+a,
    # col 2m+d, channel c, with pool tap q = a*2+d.
    y1 = jnp.dot(xv, w1a_ref[...], preferred_element_type=f32)
    y1 = y1 + jnp.dot(xg_ref[1:M + 1, 0:60], w1b_ref[...],
                      preferred_element_type=f32)
    m1 = jnp.maximum(jnp.maximum(y1[:, 0:512], y1[:, 512:1024]),
                     jnp.maximum(y1[:, 1024:1536], y1[:, 1536:2048]))
    # bias + ReLU hoisted after the pool max (bias tap-invariant, max/ReLU
    # monotone -> identical result).
    h1 = jnp.maximum(m1 + b1_ref[...], 0.0)
    # rows P == 7 of every image are out-of-range garbage; they double as the
    # zero border rows of conv2's padded input, so force them to zero.
    ridx = jax.lax.broadcasted_iota(jnp.int32, (M, 1), 0)
    h1 = jnp.where((ridx & 7) < 7, h1, 0.0).astype(h1_ref.dtype)

    h1_ref[0:8, :] = jnp.zeros((8, 512), h1_ref.dtype)        # front guard
    h1_ref[8:M + 8, :] = h1
    h1_ref[M + 8:M + 16, :] = jnp.zeros((8, 512), h1_ref.dtype)  # tail guard

    # ---- conv2 (+ bias + ReLU + 2x2 maxpool) -------------------------------
    # Four accumulating matmuls over row-shifted slices of the padded pooled
    # conv1 activation (the four row taps 2p2..2p2+3 of the 3x3 conv / pool).
    y2 = jnp.dot(h1_ref[7:M + 7, 256:480], w2_ref[0], preferred_element_type=f32)
    y2 = y2 + jnp.dot(h1_ref[8:M + 8, 0:224], w2_ref[1], preferred_element_type=f32)
    y2 = y2 + jnp.dot(h1_ref[8:M + 8, 256:480], w2_ref[2], preferred_element_type=f32)
    y2 = y2 + jnp.dot(h1_ref[9:M + 9, 0:224], w2_ref[3], preferred_element_type=f32)
    m2 = jnp.maximum(jnp.maximum(y2[:, 0:256], y2[:, 256:512]),
                     jnp.maximum(y2[:, 512:768], y2[:, 768:1024]))
    h2 = jnp.maximum(m2 + b2_ref[...], 0.0).astype(h2_ref.dtype)

    h2_ref[0:M, :] = h2
    h2_ref[M:M + 8, :] = jnp.zeros((8, 256), h2_ref.dtype)

    # ---- fc ----------------------------------------------------------------
    # logits[b] = sum_{pi=0..6} H2[b*8+pi, :] @ WF[pi]; they land on row b*8.
    acc = jnp.dot(h2_ref[0:M, :], wf_ref[0], preferred_element_type=f32)
    for pi in range(1, 7):
        acc = acc + jnp.dot(h2_ref[pi:pi + M, :], wf_ref[pi],
                            preferred_element_type=f32)
    o_ref[...] = acc + bf_ref[...]


# ---------------------------------------------------------------------------
# Wrapper: weight re-layout (tiny einsums) + input pad/reshape + pallas_call.
# ---------------------------------------------------------------------------
def _conv1_band_mats(w1):
    # Selection tensors: [input lane (s*30+j), output pos, 3x3 tap]
    SA = np.zeros((120, 128, 9), np.float32)
    SB = np.zeros((60, 128, 9), np.float32)
    for a in range(2):                # output-row parity inside the pool pair
        for d in range(2):            # output-col parity inside the pool pair
            for e in range(2):        # pooled-row parity (p = 2P + e)
                for m in range(14):   # pooled col
                    opos = (a * 4 + d * 2 + e) * 16 + m
                    for dy in range(3):
                        s = 2 * e + a + dy            # band row 0..5
                        for dx in range(3):
                            j = 2 * m + d + dx        # padded col 0..29
                            t = dy * 3 + dx
                            if s < 4:
                                SA[s * 30 + j, opos, t] = 1.0
                            else:
                                SB[(s - 4) * 30 + j, opos, t] = 1.0
    w1t = w1.reshape(16, 9).astype(jnp.float32).T     # (tap, c)
    W1A = jnp.einsum('kot,tc->koc', SA, w1t).reshape(120, 2048)
    W1B = jnp.einsum('kot,tc->koc', SB, w1t).reshape(60, 2048)
    return W1A.astype(jnp.bfloat16), W1B.astype(jnp.bfloat16)


def _conv2_mats(w2):
    # [q (row tap), m (pooled1 col), output pos, 3x3 tap]
    S2 = np.zeros((4, 14, 32, 9), np.float32)
    for q in range(4):
        for a2 in range(2):
            dy = q - a2
            if not 0 <= dy <= 2:
                continue
            for d2 in range(2):
                for m2 in range(7):
                    opos = (a2 * 2 + d2) * 8 + m2
                    for dx in range(3):
                        m = 2 * m2 + d2 + dx - 1      # pooled1 col feeding in
                        if 0 <= m <= 13:              # borders are zeros
                            S2[q, m, opos, dy * 3 + dx] = 1.0
    w2r = jnp.transpose(w2.reshape(32, 16, 9).astype(jnp.float32), (2, 1, 0))
    W2 = jnp.einsum('qmot,tic->qmioc', S2, w2r).reshape(4, 224, 1024)
    return W2.astype(jnp.bfloat16)


def cnn_mnist_forward(x_nchw, w1, b1, w2, b2, wf, bf):
    """Matches CNN_MNIST.forward (PyTorch NCHW semantics)."""
    B = x_nchw.shape[0]
    if B >= 64:
        Bt = 32
    elif B >= 32:
        Bt = 16
    else:
        Bt = 8
    Bpad = ((B + Bt - 1) // Bt) * Bt
    nblk = Bpad // Bt
    M = Bt * 8

    # ---- input: batch pad + conv halo + 2 alignment rows, viewed as 4-row
    #      bands (row (b, P) = padded image rows 4P..4P+3). Free reshape, 1x data.
    x28 = x_nchw.reshape(B, 28, 28).astype(jnp.float32)
    x32 = jnp.pad(x28, ((0, Bpad - B), (1, 3), (1, 1)))          # (Bpad,32,30)
    xr4 = x32.reshape(Bpad * 8, 120).astype(jnp.bfloat16)

    # ---- weights in kernel-friendly layouts (tiny tensors) -----------------
    W1A, W1B = _conv1_band_mats(w1)
    W2m = _conv2_mats(w2)

    mok1 = np.zeros((1, 2, 16, 1), np.float32)
    mok1[:, :, :14, :] = 1.0
    b1t = (b1.astype(jnp.float32).reshape(1, 1, 1, 16) * mok1).reshape(1, 512)

    mok2 = np.zeros((1, 8, 1), np.float32)
    mok2[:, :7, :] = 1.0
    b2t = (b2.astype(jnp.float32).reshape(1, 1, 32) * mok2).reshape(1, 256)

    # fold PyTorch's NCHW flatten into the fc weight layout: rows = pj*32+c2.
    WFm = jnp.transpose(wf.reshape(10, 32, 7, 7).astype(jnp.float32),
                        (2, 3, 1, 0))                            # (pi,pj,c2,o)
    WFm = jnp.pad(WFm, ((0, 0), (0, 1), (0, 0), (0, 0)))
    WFm = WFm.reshape(7, 256, 10).astype(jnp.bfloat16)
    bft = bf.reshape(1, 10).astype(jnp.float32)

    out = pl.pallas_call(
        _cnn_fused_kernel,
        out_shape=jax.ShapeDtypeStruct((Bpad * 8, 10), jnp.float32),
        grid=(nblk,),
        in_specs=[
            pl.BlockSpec((M, 120), lambda i: (i, 0)),
            pl.BlockSpec((120, 2048), lambda i: (0, 0)),
            pl.BlockSpec((60, 2048), lambda i: (0, 0)),
            pl.BlockSpec((1, 512), lambda i: (0, 0)),
            pl.BlockSpec((4, 224, 1024), lambda i: (0, 0, 0)),
            pl.BlockSpec((1, 256), lambda i: (0, 0)),
            pl.BlockSpec((7, 256, 10), lambda i: (0, 0, 0)),
            pl.BlockSpec((1, 10), lambda i: (0, 0)),
        ],
        out_specs=pl.BlockSpec((M, 10), lambda i: (i, 0)),
        scratch_shapes=[
            pltpu.VMEM((M + 8, 120), jnp.bfloat16),    # input + tail guard
            pltpu.VMEM((M + 16, 512), jnp.bfloat16),   # pooled conv1 + guards
            pltpu.VMEM((M + 8, 256), jnp.bfloat16),    # pooled conv2 + guard
        ],
        compiler_params=pltpu.CompilerParams(
            dimension_semantics=("parallel",),
            vmem_limit_bytes=32 * 1024 * 1024,
        ),
    )(xr4, W1A, W1B, b1t, W2m, b2t, WFm, bft)

    logits = out.reshape(Bpad, 8, 10)[:, 0, :]
    return logits[:B]


# ---------------------------------------------------------------------------
# Pure-JAX reference (correctness check only)
# ---------------------------------------------------------------------------
def reference_forward(x, w1, b1, w2, b2, wf, bf):
    def block(h, w, b):
        y = jax.lax.conv_general_dilated(
            h, w, (1, 1), ((1, 1), (1, 1)),
            dimension_numbers=("NCHW", "OIHW", "NCHW"))
        y = jax.nn.relu(y + b[None, :, None, None])
        return jax.lax.reduce_window(
            y, -jnp.inf, jax.lax.max, (1, 1, 2, 2), (1, 1, 2, 2), "VALID")

    y = block(x, w1, b1)
    y = block(y, w2, b2)
    flat = y.reshape(y.shape[0], -1)
    return flat @ wf.T + bf


if __name__ == "__main__":
    key = jax.random.PRNGKey(0)
    kx, k1w, k1b, k2w, k2b, kfw, kfb = jax.random.split(key, 7)

    # B = 13: not a multiple of the batch tile -> exercises the padded path
    # and a 2-block grid (per the review's correctness concern).
    B = 13
    x = jax.random.normal(kx, (B, 1, 28, 28), jnp.float32)

    # deterministic synthetic parameters (PyTorch layouts)
    w1 = jax.random.normal(k1w, (16, 1, 3, 3), jnp.float32) * 0.2
    b1 = jax.random.normal(k1b, (16,), jnp.float32) * 0.1
    w2 = jax.random.normal(k2w, (32, 16, 3, 3), jnp.float32) * 0.05
    b2 = jax.random.normal(k2b, (32,), jnp.float32) * 0.1
    wf = jax.random.normal(kfw, (10, 7 * 7 * 32), jnp.float32) * 0.02
    bf = jax.random.normal(kfb, (10,), jnp.float32) * 0.1

    fwd = jax.jit(cnn_mnist_forward)
    out = jax.block_until_ready(fwd(x, w1, b1, w2, b2, wf, bf))

    ref = reference_forward(x, w1, b1, w2, b2, wf, bf)
    assert out.shape == (B, 10), out.shape
    # bf16 matmul operands (f32 accumulation) -> loosened tolerance
    assert jnp.allclose(out, ref, rtol=3e-2, atol=3e-2), (out, ref)
    print("KERNEL_OK")
</pallas_src>

<mosaic_0001>
module attributes {stable_mosaic.version = 11 : i64} {
  func.func @_cnn_fused_kernel(%arg0: i32, %arg1: memref<64x120xbf16, #tpu.memory_space<vmem>>, %arg2: memref<120x2048xbf16, #tpu.memory_space<vmem>>, %arg3: memref<60x2048xbf16, #tpu.memory_space<vmem>>, %arg4: memref<1x512xf32, #tpu.memory_space<vmem>>, %arg5: memref<4x224x1024xbf16, #tpu.memory_space<vmem>>, %arg6: memref<1x256xf32, #tpu.memory_space<vmem>>, %arg7: memref<7x256x10xbf16, #tpu.memory_space<vmem>>, %arg8: memref<1x10xf32, #tpu.memory_space<vmem>>, %arg9: memref<64x10xf32, #tpu.memory_space<vmem>>, %arg10: memref<72x120xbf16, #tpu.memory_space<vmem>>, %arg11: memref<80x512xbf16, #tpu.memory_space<vmem>>, %arg12: memref<72x256xbf16, #tpu.memory_space<vmem>>) attributes {dimension_semantics = [#tpu.dimension_semantics<parallel>], iteration_bounds = array<i64: 2>, scalar_prefetch = 0 : i64, scratch_operands = 3 : i64, tpu.core_type = #tpu.core_type<tc>, window_params = [{transform_indices = @transform_0, window_bounds = array<i64: 64, 120>}, {pipeline_mode = #tpu.pipeline_mode<synchronous>, transform_indices = @transform_1, window_bounds = array<i64: 120, 2048>}, {pipeline_mode = #tpu.pipeline_mode<synchronous>, transform_indices = @transform_2, window_bounds = array<i64: 60, 2048>}, {pipeline_mode = #tpu.pipeline_mode<synchronous>, transform_indices = @transform_3, window_bounds = array<i64: 1, 512>}, {pipeline_mode = #tpu.pipeline_mode<synchronous>, transform_indices = @transform_4, window_bounds = array<i64: 4, 224, 1024>}, {pipeline_mode = #tpu.pipeline_mode<synchronous>, transform_indices = @transform_5, window_bounds = array<i64: 1, 256>}, {pipeline_mode = #tpu.pipeline_mode<synchronous>, transform_indices = @transform_6, window_bounds = array<i64: 7, 256, 10>}, {pipeline_mode = #tpu.pipeline_mode<synchronous>, transform_indices = @transform_7, window_bounds = array<i64: 1, 10>}, {transform_indices = @transform_8, window_bounds = array<i64: 64, 10>}]} {
    %c0 = arith.constant 0 : index
    %c0_0 = arith.constant 0 : index
    %0 = vector.load %arg1[%c0, %c0_0] : memref<64x120xbf16, #tpu.memory_space<vmem>>, vector<64x120xbf16>
    %c0_1 = arith.constant 0 : index
    %c0_2 = arith.constant 0 : index
    %1 = vector.load %arg10[%c0_1, %c0_2] : memref<72x120xbf16, #tpu.memory_space<vmem>>, vector<64x120xbf16>
    tpu.vector_store %arg10[%c0_1, %c0_2], %0 {strides = array<i32>} : memref<72x120xbf16, #tpu.memory_space<vmem>>, vector<64x120xbf16>,
    %cst = arith.constant 0.000000e+00 : bf16
    %2 = vector.broadcast %cst : bf16 to vector<8x120xbf16>
    %c64 = arith.constant 64 : index
    %c0_3 = arith.constant 0 : index
    %3 = vector.load %arg10[%c64, %c0_3] : memref<72x120xbf16, #tpu.memory_space<vmem>>, vector<8x120xbf16>
    tpu.vector_store %arg10[%c64, %c0_3], %2 {strides = array<i32>} : memref<72x120xbf16, #tpu.memory_space<vmem>>, vector<8x120xbf16>,
    %c0_4 = arith.constant 0 : index
    %c0_5 = arith.constant 0 : index
    %4 = vector.load %arg2[%c0_4, %c0_5] : memref<120x2048xbf16, #tpu.memory_space<vmem>>, vector<120x2048xbf16>
    %cst_6 = arith.constant dense<0.000000e+00> : vector<64x2048xf32>
    %5 = tpu.matmul %0, %4, %cst_6 {dimension_numbers = #tpu.dot_dimension_numbers<[1], [0], [0], [1], [0, 0, 1, 1], [], []>} : vector<64x120xbf16>, vector<120x2048xbf16>, vector<64x2048xf32> -> vector<64x2048xf32>
    %c1 = arith.constant 1 : index
    %c0_7 = arith.constant 0 : index
    %6 = vector.load %arg10[%c1, %c0_7] : memref<72x120xbf16, #tpu.memory_space<vmem>>, vector<64x60xbf16>
    %c0_8 = arith.constant 0 : index
    %c0_9 = arith.constant 0 : index
    %7 = vector.load %arg3[%c0_8, %c0_9] : memref<60x2048xbf16, #tpu.memory_space<vmem>>, vector<60x2048xbf16>
    %cst_10 = arith.constant dense<0.000000e+00> : vector<64x2048xf32>
    %8 = tpu.matmul %6, %7, %cst_10 {dimension_numbers = #tpu.dot_dimension_numbers<[1], [0], [0], [1], [0, 0, 1, 1], [], []>} : vector<64x60xbf16>, vector<60x2048xbf16>, vector<64x2048xf32> -> vector<64x2048xf32>
    %9 = arith.addf %5, %8 : vector<64x2048xf32>
    %10 = vector.extract_strided_slice %9 {offsets = [0, 0], sizes = [64, 512], strides = [1, 1]} : vector<64x2048xf32> to vector<64x512xf32>
    %11 = vector.extract_strided_slice %9 {offsets = [0, 512], sizes = [64, 512], strides = [1, 1]} : vector<64x2048xf32> to vector<64x512xf32>
    %12 = arith.maximumf %10, %11 : vector<64x512xf32>
    %13 = vector.extract_strided_slice %9 {offsets = [0, 1024], sizes = [64, 512], strides = [1, 1]} : vector<64x2048xf32> to vector<64x512xf32>
    %14 = vector.extract_strided_slice %9 {offsets = [0, 1536], sizes = [64, 512], strides = [1, 1]} : vector<64x2048xf32> to vector<64x512xf32>
    %15 = arith.maximumf %13, %14 : vector<64x512xf32>
    %16 = arith.maximumf %12, %15 : vector<64x512xf32>
    %c0_11 = arith.constant 0 : index
    %c0_12 = arith.constant 0 : index
    %17 = vector.load %arg4[%c0_11, %c0_12] : memref<1x512xf32, #tpu.memory_space<vmem>>, vector<1x512xf32>
    %18 = vector.broadcast %17 : vector<1x512xf32> to vector<64x512xf32>
    %19 = arith.addf %16, %18 : vector<64x512xf32>
    %cst_13 = arith.constant 0.000000e+00 : f32
    %20 = vector.broadcast %cst_13 : f32 to vector<64x512xf32>
    %21 = arith.maximumf %19, %20 : vector<64x512xf32>
    %22 = tpu.iota {dimensions = array<i32: 0>} : vector<64x1xi32>
    %c7_i32 = arith.constant 7 : i32
    %23 = vector.broadcast %c7_i32 : i32 to vector<64x1xi32>
    %24 = arith.andi %22, %23 : vector<64x1xi32>
    %c7_i32_14 = arith.constant 7 : i32
    %25 = vector.broadcast %c7_i32_14 : i32 to vector<64x1xi32>
    %26 = arith.cmpi slt, %24, %25 : vector<64x1xi32>
    %cst_15 = arith.constant 0.000000e+00 : f32
    %27 = vector.shape_cast %26 : vector<64x1xi1> to vector<64x1xi1>
    %28 = vector.broadcast %27 : vector<64x1xi1> to vector<64x512xi1>
    %29 = vector.broadcast %cst_15 : f32 to vector<64x512xf32>
    %30 = arith.select %28, %21, %29 : vector<64x512xi1>, vector<64x512xf32>
    %31 = arith.truncf %30 : vector<64x512xf32> to vector<64x512xbf16>
    %cst_16 = arith.constant 0.000000e+00 : bf16
    %32 = vector.broadcast %cst_16 : bf16 to vector<8x512xbf16>
    %c0_17 = arith.constant 0 : index
    %c0_18 = arith.constant 0 : index
    %33 = vector.load %arg11[%c0_17, %c0_18] : memref<80x512xbf16, #tpu.memory_space<vmem>>, vector<8x512xbf16>
    tpu.vector_store %arg11[%c0_17, %c0_18], %32 {strides = array<i32>} : memref<80x512xbf16, #tpu.memory_space<vmem>>, vector<8x512xbf16>,
    %c8 = arith.constant 8 : index
    %c0_19 = arith.constant 0 : index
    %34 = vector.load %arg11[%c8, %c0_19] : memref<80x512xbf16, #tpu.memory_space<vmem>>, vector<64x512xbf16>
    tpu.vector_store %arg11[%c8, %c0_19], %31 {strides = array<i32>} : memref<80x512xbf16, #tpu.memory_space<vmem>>, vector<64x512xbf16>,
    %cst_20 = arith.constant 0.000000e+00 : bf16
    %35 = vector.broadcast %cst_20 : bf16 to vector<8x512xbf16>
    %c72 = arith.constant 72 : index
    %c0_21 = arith.constant 0 : index
    %36 = vector.load %arg11[%c72, %c0_21] : memref<80x512xbf16, #tpu.memory_space<vmem>>, vector<8x512xbf16>
    tpu.vector_store %arg11[%c72, %c0_21], %35 {strides = array<i32>} : memref<80x512xbf16, #tpu.memory_space<vmem>>, vector<8x512xbf16>,
    %c7 = arith.constant 7 : index
    %c256 = arith.constant 256 : index
    %37 = vector.load %arg11[%c7, %c256] : memref<80x512xbf16, #tpu.memory_space<vmem>>, vector<64x224xbf16>
    %c0_22 = arith.constant 0 : index
    %c0_23 = arith.constant 0 : index
    %c0_24 = arith.constant 0 : index
    %38 = vector.load %arg5[%c0_22, %c0_23, %c0_24] : memref<4x224x1024xbf16, #tpu.memory_space<vmem>>, vector<1x224x1024xbf16>
    %39 = vector.shape_cast %38 : vector<1x224x1024xbf16> to vector<224x1024xbf16>
    %cst_25 = arith.constant dense<0.000000e+00> : vector<64x1024xf32>
    %40 = tpu.matmul %37, %39, %cst_25 {dimension_numbers = #tpu.dot_dimension_numbers<[1], [0], [0], [1], [0, 0, 1, 1], [], []>} : vector<64x224xbf16>, vector<224x1024xbf16>, vector<64x1024xf32> -> vector<64x1024xf32>
    %c8_26 = arith.constant 8 : index
    %c0_27 = arith.constant 0 : index
    %41 = vector.load %arg11[%c8_26, %c0_27] : memref<80x512xbf16, #tpu.memory_space<vmem>>, vector<64x224xbf16>
    %c1_28 = arith.constant 1 : index
    %c0_29 = arith.constant 0 : index
    %c0_30 = arith.constant 0 : index
    %42 = vector.load %arg5[%c1_28, %c0_29, %c0_30] : memref<4x224x1024xbf16, #tpu.memory_space<vmem>>, vector<1x224x1024xbf16>
    %43 = vector.shape_cast %42 : vector<1x224x1024xbf16> to vector<224x1024xbf16>
    %cst_31 = arith.constant dense<0.000000e+00> : vector<64x1024xf32>
    %44 = tpu.matmul %41, %43, %cst_31 {dimension_numbers = #tpu.dot_dimension_numbers<[1], [0], [0], [1], [0, 0, 1, 1], [], []>} : vector<64x224xbf16>, vector<224x1024xbf16>, vector<64x1024xf32> -> vector<64x1024xf32>
    %45 = arith.addf %40, %44 : vector<64x1024xf32>
    %c8_32 = arith.constant 8 : index
    %c256_33 = arith.constant 256 : index
    %46 = vector.load %arg11[%c8_32, %c256_33] : memref<80x512xbf16, #tpu.memory_space<vmem>>, vector<64x224xbf16>
    %c2 = arith.constant 2 : index
    %c0_34 = arith.constant 0 : index
    %c0_35 = arith.constant 0 : index
    %47 = vector.load %arg5[%c2, %c0_34, %c0_35] : memref<4x224x1024xbf16, #tpu.memory_space<vmem>>, vector<1x224x1024xbf16>
    %48 = vector.shape_cast %47 : vector<1x224x1024xbf16> to vector<224x1024xbf16>
    %cst_36 = arith.constant dense<0.000000e+00> : vector<64x1024xf32>
    %49 = tpu.matmul %46, %48, %cst_36 {dimension_numbers = #tpu.dot_dimension_numbers<[1], [0], [0], [1], [0, 0, 1, 1], [], []>} : vector<64x224xbf16>, vector<224x1024xbf16>, vector<64x1024xf32> -> vector<64x1024xf32>
    %50 = arith.addf %45, %49 : vector<64x1024xf32>
    %c9 = arith.constant 9 : index
    %c0_37 = arith.constant 0 : index
    %51 = vector.load %arg11[%c9, %c0_37] : memref<80x512xbf16, #tpu.memory_space<vmem>>, vector<64x224xbf16>
    %c3 = arith.constant 3 : index
    %c0_38 = arith.constant 0 : index
    %c0_39 = arith.constant 0 : index
    %52 = vector.load %arg5[%c3, %c0_38, %c0_39] : memref<4x224x1024xbf16, #tpu.memory_space<vmem>>, vector<1x224x1024xbf16>
    %53 = vector.shape_cast %52 : vector<1x224x1024xbf16> to vector<224x1024xbf16>
    %cst_40 = arith.constant dense<0.000000e+00> : vector<64x1024xf32>
    %54 = tpu.matmul %51, %53, %cst_40 {dimension_numbers = #tpu.dot_dimension_numbers<[1], [0], [0], [1], [0, 0, 1, 1], [], []>} : vector<64x224xbf16>, vector<224x1024xbf16>, vector<64x1024xf32> -> vector<64x1024xf32>
    %55 = arith.addf %50, %54 : vector<64x1024xf32>
    %56 = vector.extract_strided_slice %55 {offsets = [0, 0], sizes = [64, 256], strides = [1, 1]} : vector<64x1024xf32> to vector<64x256xf32>
    %57 = vector.extract_strided_slice %55 {offsets = [0, 256], sizes = [64, 256], strides = [1, 1]} : vector<64x1024xf32> to vector<64x256xf32>
    %58 = arith.maximumf %56, %57 : vector<64x256xf32>
    %59 = vector.extract_strided_slice %55 {offsets = [0, 512], sizes = [64, 256], strides = [1, 1]} : vector<64x1024xf32> to vector<64x256xf32>
    %60 = vector.extract_strided_slice %55 {offsets = [0, 768], sizes = [64, 256], strides = [1, 1]} : vector<64x1024xf32> to vector<64x256xf32>
    %61 = arith.maximumf %59, %60 : vector<64x256xf32>
    %62 = arith.maximumf %58, %61 : vector<64x256xf32>
    %c0_41 = arith.constant 0 : index
    %c0_42 = arith.constant 0 : index
    %63 = vector.load %arg6[%c0_41, %c0_42] : memref<1x256xf32, #tpu.memory_space<vmem>>, vector<1x256xf32>
    %64 = vector.broadcast %63 : vector<1x256xf32> to vector<64x256xf32>
    %65 = arith.addf %62, %64 : vector<64x256xf32>
    %cst_43 = arith.constant 0.000000e+00 : f32
    %66 = vector.broadcast %cst_43 : f32 to vector<64x256xf32>
    %67 = arith.maximumf %65, %66 : vector<64x256xf32>
    %68 = arith.truncf %67 : vector<64x256xf32> to vector<64x256xbf16>
    %c0_44 = arith.constant 0 : index
    %c0_45 = arith.constant 0 : index
    %69 = vector.load %arg12[%c0_44, %c0_45] : memref<72x256xbf16, #tpu.memory_space<vmem>>, vector<64x256xbf16>
    tpu.vector_store %arg12[%c0_44, %c0_45], %68 {strides = array<i32>} : memref<72x256xbf16, #tpu.memory_space<vmem>>, vector<64x256xbf16>,
    %cst_46 = arith.constant 0.000000e+00 : bf16
    %70 = vector.broadcast %cst_46 : bf16 to vector<8x256xbf16>
    %c64_47 = arith.constant 64 : index
    %c0_48 = arith.constant 0 : index
    %71 = vector.load %arg12[%c64_47, %c0_48] : memref<72x256xbf16, #tpu.memory_space<vmem>>, vector<8x256xbf16>
    tpu.vector_store %arg12[%c64_47, %c0_48], %70 {strides = array<i32>} : memref<72x256xbf16, #tpu.memory_space<vmem>>, vector<8x256xbf16>,
    %c0_49 = arith.constant 0 : index
    %c0_50 = arith.constant 0 : index
    %72 = vector.load %arg12[%c0_49, %c0_50] : memref<72x256xbf16, #tpu.memory_space<vmem>>, vector<64x256xbf16>
    %c0_51 = arith.constant 0 : index
    %c0_52 = arith.constant 0 : index
    %c0_53 = arith.constant 0 : index
    %73 = vector.load %arg7[%c0_51, %c0_52, %c0_53] : memref<7x256x10xbf16, #tpu.memory_space<vmem>>, vector<1x256x10xbf16>
    %74 = vector.shape_cast %73 : vector<1x256x10xbf16> to vector<256x10xbf16>
    %cst_54 = arith.constant dense<0.000000e+00> : vector<64x10xf32>
    %75 = tpu.matmul %72, %74, %cst_54 {dimension_numbers = #tpu.dot_dimension_numbers<[1], [0], [0], [1], [0, 0, 1, 1], [], []>} : vector<64x256xbf16>, vector<256x10xbf16>, vector<64x10xf32> -> vector<64x10xf32>
    %c1_55 = arith.constant 1 : index
    %c0_56 = arith.constant 0 : index
    %76 = vector.load %arg12[%c1_55, %c0_56] : memref<72x256xbf16, #tpu.memory_space<vmem>>, vector<64x256xbf16>
    %c1_57 = arith.constant 1 : index
    %c0_58 = arith.constant 0 : index
    %c0_59 = arith.constant 0 : index
    %77 = vector.load %arg7[%c1_57, %c0_58, %c0_59] : memref<7x256x10xbf16, #tpu.memory_space<vmem>>, vector<1x256x10xbf16>
    %78 = vector.shape_cast %77 : vector<1x256x10xbf16> to vector<256x10xbf16>
    %cst_60 = arith.constant dense<0.000000e+00> : vector<64x10xf32>
    %79 = tpu.matmul %76, %78, %cst_60 {dimension_numbers = #tpu.dot_dimension_numbers<[1], [0], [0], [1], [0, 0, 1, 1], [], []>} : vector<64x256xbf16>, vector<256x10xbf16>, vector<64x10xf32> -> vector<64x10xf32>
    %80 = arith.addf %75, %79 : vector<64x10xf32>
    %c2_61 = arith.constant 2 : index
    %c0_62 = arith.constant 0 : index
    %81 = vector.load %arg12[%c2_61, %c0_62] : memref<72x256xbf16, #tpu.memory_space<vmem>>, vector<64x256xbf16>
    %c2_63 = arith.constant 2 : index
    %c0_64 = arith.constant 0 : index
    %c0_65 = arith.constant 0 : index
    %82 = vector.load %arg7[%c2_63, %c0_64, %c0_65] : memref<7x256x10xbf16, #tpu.memory_space<vmem>>, vector<1x256x10xbf16>
    %83 = vector.shape_cast %82 : vector<1x256x10xbf16> to vector<256x10xbf16>
    %cst_66 = arith.constant dense<0.000000e+00> : vector<64x10xf32>
    %84 = tpu.matmul %81, %83, %cst_66 {dimension_numbers = #tpu.dot_dimension_numbers<[1], [0], [0], [1], [0, 0, 1, 1], [], []>} : vector<64x256xbf16>, vector<256x10xbf16>, vector<64x10xf32> -> vector<64x10xf32>
    %85 = arith.addf %80, %84 : vector<64x10xf32>
    %c3_67 = arith.constant 3 : index
    %c0_68 = arith.constant 0 : index
    %86 = vector.load %arg12[%c3_67, %c0_68] : memref<72x256xbf16, #tpu.memory_space<vmem>>, vector<64x256xbf16>
    %c3_69 = arith.constant 3 : index
    %c0_70 = arith.constant 0 : index
    %c0_71 = arith.constant 0 : index
    %87 = vector.load %arg7[%c3_69, %c0_70, %c0_71] : memref<7x256x10xbf16, #tpu.memory_space<vmem>>, vector<1x256x10xbf16>
    %88 = vector.shape_cast %87 : vector<1x256x10xbf16> to vector<256x10xbf16>
    %cst_72 = arith.constant dense<0.000000e+00> : vector<64x10xf32>
    %89 = tpu.matmul %86, %88, %cst_72 {dimension_numbers = #tpu.dot_dimension_numbers<[1], [0], [0], [1], [0, 0, 1, 1], [], []>} : vector<64x256xbf16>, vector<256x10xbf16>, vector<64x10xf32> -> vector<64x10xf32>
    %90 = arith.addf %85, %89 : vector<64x10xf32>
    %c4 = arith.constant 4 : index
    %c0_73 = arith.constant 0 : index
    %91 = vector.load %arg12[%c4, %c0_73] : memref<72x256xbf16, #tpu.memory_space<vmem>>, vector<64x256xbf16>
    %c4_74 = arith.constant 4 : index
    %c0_75 = arith.constant 0 : index
    %c0_76 = arith.constant 0 : index
    %92 = vector.load %arg7[%c4_74, %c0_75, %c0_76] : memref<7x256x10xbf16, #tpu.memory_space<vmem>>, vector<1x256x10xbf16>
    %93 = vector.shape_cast %92 : vector<1x256x10xbf16> to vector<256x10xbf16>
    %cst_77 = arith.constant dense<0.000000e+00> : vector<64x10xf32>
    %94 = tpu.matmul %91, %93, %cst_77 {dimension_numbers = #tpu.dot_dimension_numbers<[1], [0], [0], [1], [0, 0, 1, 1], [], []>} : vector<64x256xbf16>, vector<256x10xbf16>, vector<64x10xf32> -> vector<64x10xf32>
    %95 = arith.addf %90, %94 : vector<64x10xf32>
    %c5 = arith.constant 5 : index
    %c0_78 = arith.constant 0 : index
    %96 = vector.load %arg12[%c5, %c0_78] : memref<72x256xbf16, #tpu.memory_space<vmem>>, vector<64x256xbf16>
    %c5_79 = arith.constant 5 : index
    %c0_80 = arith.constant 0 : index
    %c0_81 = arith.constant 0 : index
    %97 = vector.load %arg7[%c5_79, %c0_80, %c0_81] : memref<7x256x10xbf16, #tpu.memory_space<vmem>>, vector<1x256x10xbf16>
    %98 = vector.shape_cast %97 : vector<1x256x10xbf16> to vector<256x10xbf16>
    %cst_82 = arith.constant dense<0.000000e+00> : vector<64x10xf32>
    %99 = tpu.matmul %96, %98, %cst_82 {dimension_numbers = #tpu.dot_dimension_numbers<[1], [0], [0], [1], [0, 0, 1, 1], [], []>} : vector<64x256xbf16>, vector<256x10xbf16>, vector<64x10xf32> -> vector<64x10xf32>
    %100 = arith.addf %95, %99 : vector<64x10xf32>
    %c6 = arith.constant 6 : index
    %c0_83 = arith.constant 0 : index
    %101 = vector.load %arg12[%c6, %c0_83] : memref<72x256xbf16, #tpu.memory_space<vmem>>, vector<64x256xbf16>
    %c6_84 = arith.constant 6 : index
    %c0_85 = arith.constant 0 : index
    %c0_86 = arith.constant 0 : index
    %102 = vector.load %arg7[%c6_84, %c0_85, %c0_86] : memref<7x256x10xbf16, #tpu.memory_space<vmem>>, vector<1x256x10xbf16>
    %103 = vector.shape_cast %102 : vector<1x256x10xbf16> to vector<256x10xbf16>
    %cst_87 = arith.constant dense<0.000000e+00> : vector<64x10xf32>
    %104 = tpu.matmul %101, %103, %cst_87 {dimension_numbers = #tpu.dot_dimension_numbers<[1], [0], [0], [1], [0, 0, 1, 1], [], []>} : vector<64x256xbf16>, vector<256x10xbf16>, vector<64x10xf32> -> vector<64x10xf32>
    %105 = arith.addf %100, %104 : vector<64x10xf32>
    %c0_88 = arith.constant 0 : index
    %c0_89 = arith.constant 0 : index
    %106 = vector.load %arg8[%c0_88, %c0_89] : memref<1x10xf32, #tpu.memory_space<vmem>>, vector<1x10xf32>
    %107 = vector.broadcast %106 : vector<1x10xf32> to vector<64x10xf32>
    %108 = arith.addf %105, %107 : vector<64x10xf32>
    %c0_90 = arith.constant 0 : index
    %c0_91 = arith.constant 0 : index
    %109 = vector.load %arg9[%c0_90, %c0_91] : memref<64x10xf32, #tpu.memory_space<vmem>>, vector<64x10xf32>
    tpu.vector_store %arg9[%c0_90, %c0_91], %108 {strides = array<i32>} : memref<64x10xf32, #tpu.memory_space<vmem>>, vector<64x10xf32>,
    return
  }
  func.func @transform_0(%arg0: i32) -> (i32, i32) {
    %c0_i32 = arith.constant 0 : i32
    %c0_i32_0 = arith.constant 0 : i32
    return %arg0, %c0_i32 : i32, i32
  }
  func.func @transform_1(%arg0: i32) -> (i32, i32) {
    %c0_i32 = arith.constant 0 : i32
    %c0_i32_0 = arith.constant 0 : i32
    %c0_i32_1 = arith.constant 0 : i32
    return %c0_i32, %c0_i32_0 : i32, i32
  }
  func.func @transform_2(%arg0: i32) -> (i32, i32) {
    %c0_i32 = arith.constant 0 : i32
    %c0_i32_0 = arith.constant 0 : i32
    %c0_i32_1 = arith.constant 0 : i32
    return %c0_i32, %c0_i32_0 : i32, i32
  }
  func.func @transform_3(%arg0: i32) -> (i32, i32) {
    %c0_i32 = arith.constant 0 : i32
    %c0_i32_0 = arith.constant 0 : i32
    %c0_i32_1 = arith.constant 0 : i32
    return %c0_i32, %c0_i32_0 : i32, i32
  }
  func.func @transform_4(%arg0: i32) -> (i32, i32, i32) {
    %c0_i32 = arith.constant 0 : i32
    %c0_i32_0 = arith.constant 0 : i32
    %c0_i32_1 = arith.constant 0 : i32
    %c0_i32_2 = arith.constant 0 : i32
    return %c0_i32, %c0_i32_0, %c0_i32_1 : i32, i32, i32
  }
  func.func @transform_5(%arg0: i32) -> (i32, i32) {
    %c0_i32 = arith.constant 0 : i32
    %c0_i32_0 = arith.constant 0 : i32
    %c0_i32_1 = arith.constant 0 : i32
    return %c0_i32, %c0_i32_0 : i32, i32
  }
  func.func @transform_6(%arg0: i32) -> (i32, i32, i32) {
    %c0_i32 = arith.constant 0 : i32
    %c0_i32_0 = arith.constant 0 : i32
    %c0_i32_1 = arith.constant 0 : i32
    %c0_i32_2 = arith.constant 0 : i32
    return %c0_i32, %c0_i32_0, %c0_i32_1 : i32, i32, i32
  }
  func.func @transform_7(%arg0: i32) -> (i32, i32) {
    %c0_i32 = arith.constant 0 : i32
    %c0_i32_0 = arith.constant 0 : i32
    %c0_i32_1 = arith.constant 0 : i32
    return %c0_i32, %c0_i32_0 : i32, i32
  }
  func.func @transform_8(%arg0: i32) -> (i32, i32) {
    %c0_i32 = arith.constant 0 : i32
    %c0_i32_0 = arith.constant 0 : i32
    return %arg0, %c0_i32 : i32, i32
  }
}

</mosaic_0001>

<llo_original>
// kernel: mul.31
$region0: #{mul.31}
  #allocation0 [shape = 's32[1]{0}', space=sflag, size = 0x4, scoped, tag = 'scoped memory for mul.31']
  %s0 = inlined_call_operand.vmem [shape: f32[1,256], index: 0, kind: input, shape index: {}]
  %s1 = inlined_call_operand.vmem [shape: f32[1,256], index: 1, kind: input, shape index: {}]
  %s2 = inlined_call_operand.vmem [shape: f32[1,256], index: 2, kind: output, shape index: {}]
  %v3 = vld [vmem:[%s0] sm:$0x1]
  %v4 = vld [vmem:[%s1] sm:$0x1]
  %5 = xla_tuple %v3, %v4
  %6 = xla_tuple %5
  %v7 = vmul.f32 %v3, %v4
  %8 = xla_tuple %v7
  %9 = vst [vmem:[%s2] sm:$0x1] %v7
  %s10 = scalar_lea.vmem %s0, 1
  %v11 = vld [vmem:[%s10] sm:$0x1]
  %s12 = scalar_lea.vmem %s1, 1
  %v13 = vld [vmem:[%s12] sm:$0x1]
  %14 = xla_tuple %v11, %v13
  %15 = xla_tuple %14
  %v16 = vmul.f32 %v11, %v13
  %17 = xla_tuple %v16
  %s18 = scalar_lea.vmem %s2, 1
  %19 = vst [vmem:[%s18] sm:$0x1] %v16

// kernel: cnn_mnist_forward.1
$region0: #{cnn_mnist_forward.1}
  #allocation0 [shape = 'u32[]', space=smem, size = 0x4, offset = 0x4, fixed_abs, tag = 'smem constant byte address 0x4 - core index']
  #allocation1 [shape = 'u32[144,128]{1,0:T(1,128)}', space=vmem, size = 0x12000, scoped, tag = 'internal scratch']
  #allocation2 [shape = 'bf16[72,120]{1,0:T(8,128)(2,1)}', space=vmem, size = 0x4800, scoped, tag = 'scratch operand']
  #allocation3 [shape = 'bf16[80,512]{1,0:T(16,128)(2,1)}', space=vmem, size = 0x14000, scoped, tag = 'scratch operand']
  #allocation4 [shape = 'bf16[72,256]{1,0:T(8,128)(2,1)}', space=vmem, size = 0x9000, scoped, tag = 'scratch operand']
  %s0 = inlined_call_operand.vmem [shape: bf16[128,120], index: 0, kind: input, shape index: {}]
  %s1 = inlined_call_operand.vmem [shape: bf16[120,2048], index: 1, kind: input, shape index: {}]
  %s2 = inlined_call_operand.vmem [shape: bf16[60,2048], index: 2, kind: input, shape index: {}]
  %s3 = inlined_call_operand.vmem [shape: f32[1,512], index: 3, kind: input, shape index: {}]
  %s4 = inlined_call_operand.vmem [shape: bf16[4,224,1024], index: 4, kind: input, shape index: {}]
  %s5 = inlined_call_operand.vmem [shape: f32[1,256], index: 5, kind: input, shape index: {}]
  %s6 = inlined_call_operand.vmem [shape: bf16[7,256,10], index: 6, kind: input, shape index: {}]
  %s7 = inlined_call_operand.vmem [shape: f32[1,10], index: 7, kind: input, shape index: {}]
  %s8 = inlined_call_operand.vmem [shape: f32[128,10], index: 8, kind: output, shape index: {}]
  %s9 = sld [smem:[#allocation0]]
  $region65: #{cnn_mnist_forward.1} parent=0
    _
  %s11 = ssub.s32 1, %s9
  %s12 = scalar_select 0, %s11, %s9
  loop: start=0, step=1, limit=4
  $region2: #{cnn_mnist_forward.1} parent=0 // loop_pre_header
    _
  $region3: #{cnn_mnist_forward.1} parent=0 // loop_header
    %s14 = sphi 0, %s18
    %p15 = scmp.ge.s32.totalorder %s14, 4
    %s24 = sphi 0, %s26
    %s27 = sphi 0, %s24
    %s28 = sphi 0, %s27
    %s44 = sphi 0, %s28
    %s48 = sphi 0, %s48
    %s50 = sphi 0, %s48
    %s51 = sphi 0, %s50
    %s65 = sphi 0, %s51
    %s69 = sphi 0, %s69
    %s71 = sphi 0, %s69
    %s72 = sphi 0, %s71
    %s86 = sphi 0, %s72
    %s90 = sphi 0, %s90
    %s92 = sphi 0, %s90
    %s93 = sphi 0, %s92
    %s107 = sphi 0, %s93
    %s111 = sphi 0, %s111
    %s113 = sphi 0, %s111
    %s114 = sphi 0, %s113
    %s128 = sphi 0, %s114
    %s132 = sphi 0, %s132
    %s134 = sphi 0, %s132
    %s135 = sphi 0, %s134
    %s149 = sphi 0, %s135
    %s153 = sphi 0, %s153
    %s155 = sphi 0, %s153
    %s156 = sphi 0, %s155
    %s170 = sphi 0, %s156
    %s174 = sphi 0, %s174
    %s176 = sphi 0, %s174
    %s177 = sphi 0, %s176
    %s191 = sphi 0, %s177
    %s197 = sphi 0, %s199
    %s200 = sphi 0, %s197
    %s201 = sphi 0, %s200
    %s217 = sphi 0, %s201
  $region4: #{cnn_mnist_forward.1} parent=0 // loop_header_branch
    %17 = sbr.rel (%p15) target = $region8
  $region5: #{cnn_mnist_forward.1} parent=0 // loop_body
    %s19 = ssub.s32 %s14, 1
    %s20 = ssub.s32 %s14, 2
    %s21 = sadd.s32 %s14, 1
    %s22 = ssub.s32 %s14, %s21
    %p23 = scmp.eq.s32.totalorder %s22, 0
    %s25 = sadd.s32 %s24, 1
    %s26 = scalar_select %p23, %s24, %s25
    %p29 = pneg %p23
    %p30 = scmp.eq.s32.totalorder %s14, 1
    %p31 = por %p29, %p30
    %p32 = scmp.ne.s32.totalorder %s24, %s27
    %p33 = scmp.eq.s32.totalorder %s14, 0
    %p34 = por %p32, %p33
    %p35 = scmp.ne.s32.totalorder %s24, %s27
    %p36 = scmp.eq.s32.totalorder %s19, 1
    %p37 = por %p35, %p36
    %p38 = scmp.ne.s32.totalorder %s27, %s28
    %p39 = scmp.eq.s32.totalorder %s19, 0
    %p40 = por %p38, %p39
    %p41 = scmp.ne.s32.totalorder %s27, %s28
    %p42 = scmp.eq.s32.totalorder %s20, 1
    %p43 = por %p41, %p42
    %p45 = scmp.ne.s32.totalorder %s28, %s44
    %p46 = scmp.eq.s32.totalorder %s20, 0
    %p47 = por %p45, %p46
    %s49 = sadd.s32 %s48, 1
    %p52 = scmp.eq.s32.totalorder %s14, 1
    %p53 = scmp.ne.s32.totalorder %s48, %s50
    %p54 = scmp.eq.s32.totalorder %s14, 0
    %p55 = por %p53, %p54
    %p56 = scmp.ne.s32.totalorder %s48, %s50
    %p57 = scmp.eq.s32.totalorder %s19, 1
    %p58 = por %p56, %p57
    %p59 = scmp.ne.s32.totalorder %s50, %s51
    %p60 = scmp.eq.s32.totalorder %s19, 0
    %p61 = por %p59, %p60
    %p62 = scmp.ne.s32.totalorder %s50, %s51
    %p63 = scmp.eq.s32.totalorder %s20, 1
    %p64 = por %p62, %p63
    %p66 = scmp.ne.s32.totalorder %s51, %s65
    %p67 = scmp.eq.s32.totalorder %s20, 0
    %p68 = por %p66, %p67
    %s70 = sadd.s32 %s69, 1
    %p73 = scmp.eq.s32.totalorder %s14, 1
    %p74 = scmp.ne.s32.totalorder %s69, %s71
    %p75 = scmp.eq.s32.totalorder %s14, 0
    %p76 = por %p74, %p75
    %p77 = scmp.ne.s32.totalorder %s69, %s71
    %p78 = scmp.eq.s32.totalorder %s19, 1
    %p79 = por %p77, %p78
    %p80 = scmp.ne.s32.totalorder %s71, %s72
    %p81 = scmp.eq.s32.totalorder %s19, 0
    %p82 = por %p80, %p81
    %p83 = scmp.ne.s32.totalorder %s71, %s72
    %p84 = scmp.eq.s32.totalorder %s20, 1
    %p85 = por %p83, %p84
    %p87 = scmp.ne.s32.totalorder %s72, %s86
    %p88 = scmp.eq.s32.totalorder %s20, 0
    %p89 = por %p87, %p88
    %s91 = sadd.s32 %s90, 1
    %p94 = scmp.eq.s32.totalorder %s14, 1
    %p95 = scmp.ne.s32.totalorder %s90, %s92
    %p96 = scmp.eq.s32.totalorder %s14, 0
    %p97 = por %p95, %p96
    %p98 = scmp.ne.s32.totalorder %s90, %s92
    %p99 = scmp.eq.s32.totalorder %s19, 1
    %p100 = por %p98, %p99
    %p101 = scmp.ne.s32.totalorder %s92, %s93
    %p102 = scmp.eq.s32.totalorder %s19, 0
    %p103 = por %p101, %p102
    %p104 = scmp.ne.s32.totalorder %s92, %s93
    %p105 = scmp.eq.s32.totalorder %s20, 1
    %p106 = por %p104, %p105
    %p108 = scmp.ne.s32.totalorder %s93, %s107
    %p109 = scmp.eq.s32.totalorder %s20, 0
    %p110 = por %p108, %p109
    %s112 = sadd.s32 %s111, 1
    %p115 = scmp.eq.s32.totalorder %s14, 1
    %p116 = scmp.ne.s32.totalorder %s111, %s113
    %p117 = scmp.eq.s32.totalorder %s14, 0
    %p118 = por %p116, %p117
    %p119 = scmp.ne.s32.totalorder %s111, %s113
    %p120 = scmp.eq.s32.totalorder %s19, 1
    %p121 = por %p119, %p120
    %p122 = scmp.ne.s32.totalorder %s113, %s114
    %p123 = scmp.eq.s32.totalorder %s19, 0
    %p124 = por %p122, %p123
    %p125 = scmp.ne.s32.totalorder %s113, %s114
    %p126 = scmp.eq.s32.totalorder %s20, 1
    %p127 = por %p125, %p126
    %p129 = scmp.ne.s32.totalorder %s114, %s128
    %p130 = scmp.eq.s32.totalorder %s20, 0
    %p131 = por %p129, %p130
    %s133 = sadd.s32 %s132, 1
    %p136 = scmp.eq.s32.totalorder %s14, 1
    %p137 = scmp.ne.s32.totalorder %s132, %s134
    %p138 = scmp.eq.s32.totalorder %s14, 0
    %p139 = por %p137, %p138
    %p140 = scmp.ne.s32.totalorder %s132, %s134
    %p141 = scmp.eq.s32.totalorder %s19, 1
    %p142 = por %p140, %p141
    %p143 = scmp.ne.s32.totalorder %s134, %s135
    %p144 = scmp.eq.s32.totalorder %s19, 0
    %p145 = por %p143, %p144
    %p146 = scmp.ne.s32.totalorder %s134, %s135
    %p147 = scmp.eq.s32.totalorder %s20, 1
    %p148 = por %p146, %p147
    %p150 = scmp.ne.s32.totalorder %s135, %s149
    %p151 = scmp.eq.s32.totalorder %s20, 0
    %p152 = por %p150, %p151
    %s154 = sadd.s32 %s153, 1
    %p157 = scmp.eq.s32.totalorder %s14, 1
    %p158 = scmp.ne.s32.totalorder %s153, %s155
    %p159 = scmp.eq.s32.totalorder %s14, 0
    %p160 = por %p158, %p159
    %p161 = scmp.ne.s32.totalorder %s153, %s155
    %p162 = scmp.eq.s32.totalorder %s19, 1
    %p163 = por %p161, %p162
    %p164 = scmp.ne.s32.totalorder %s155, %s156
    %p165 = scmp.eq.s32.totalorder %s19, 0
    %p166 = por %p164, %p165
    %p167 = scmp.ne.s32.totalorder %s155, %s156
    %p168 = scmp.eq.s32.totalorder %s20, 1
    %p169 = por %p167, %p168
    %p171 = scmp.ne.s32.totalorder %s156, %s170
    %p172 = scmp.eq.s32.totalorder %s20, 0
    %p173 = por %p171, %p172
    %s175 = sadd.s32 %s174, 1
    %p178 = scmp.eq.s32.totalorder %s14, 1
    %p179 = scmp.ne.s32.totalorder %s174, %s176
    %p180 = scmp.eq.s32.totalorder %s14, 0
    %p181 = por %p179, %p180
    %p182 = scmp.ne.s32.totalorder %s174, %s176
    %p183 = scmp.eq.s32.totalorder %s19, 1
    %p184 = por %p182, %p183
    %p185 = scmp.ne.s32.totalorder %s176, %s177
    %p186 = scmp.eq.s32.totalorder %s19, 0
    %p187 = por %p185, %p186
    %p188 = scmp.ne.s32.totalorder %s176, %s177
    %p189 = scmp.eq.s32.totalorder %s20, 1
    %p190 = por %p188, %p189
    %p192 = scmp.ne.s32.totalorder %s177, %s191
    %p193 = scmp.eq.s32.totalorder %s20, 0
    %p194 = por %p192, %p193
    %s195 = ssub.s32 %s14, %s21
    %p196 = scmp.eq.s32.totalorder %s195, 0
    %s198 = sadd.s32 %s197, 1
    %s199 = scalar_select %p196, %s197, %s198
    %p202 = pneg %p196
    %p203 = scmp.eq.s32.totalorder %s14, 1
    %p204 = por %p202, %p203
    %p205 = scmp.ne.s32.totalorder %s197, %s200
    %p206 = scmp.eq.s32.totalorder %s14, 0
    %p207 = por %p205, %p206
    %p208 = scmp.ne.s32.totalorder %s197, %s200
    %p209 = scmp.eq.s32.totalorder %s19, 1
    %p210 = por %p208, %p209
    %p211 = scmp.ne.s32.totalorder %s200, %s201
    %p212 = scmp.eq.s32.totalorder %s19, 0
    %p213 = por %p211, %p212
    %p214 = scmp.ne.s32.totalorder %s200, %s201
    %p215 = scmp.eq.s32.totalorder %s20, 1
    %p216 = por %p214, %p215
    %p218 = scmp.ne.s32.totalorder %s201, %s217
    %p219 = scmp.eq.s32.totalorder %s20, 0
    %p220 = por %p218, %p219
    %p221 = scmp.le.s32.totalorder 1, %s14
    %p222 = scmp.lt.s32.totalorder %s14, 3
    %p223 = pnand %p221, %p222
    %p224 = pneg %p223
    // Predicated region
    $region9: #{cnn_mnist_forward.1} parent=5 // pred_check
      _
    $region10: #{cnn_mnist_forward.1} parent=5 // pred_check_branch
      %226 = sbr.rel (%p223) target = $region12
    $region11: #{cnn_mnist_forward.1} parent=5 // pred_region
      %s227 = ssub.s32 %s14, 1
      // Predicated region
      $region13: #{cnn_mnist_forward.1} parent=11 // pred_check
        %p228 = pneg %p61
      $region14: #{cnn_mnist_forward.1} parent=11 // pred_check_branch
        %230 = sbr.rel (%p228) target = $region16
      $region15: #{cnn_mnist_forward.1} parent=11 // pred_region
        _
      $region16: #{cnn_mnist_forward.1} parent=11 // pred_fallthru
        _
      // Predicated region
      $region17: #{cnn_mnist_forward.1} parent=11 // pred_check
        %p231 = pneg %p82
      $region18: #{cnn_mnist_forward.1} parent=11 // pred_check_branch
        %233 = sbr.rel (%p231) target = $region20
      $region19: #{cnn_mnist_forward.1} parent=11 // pred_region
        _
      $region20: #{cnn_mnist_forward.1} parent=11 // pred_fallthru
        _
      // Predicated region
      $region21: #{cnn_mnist_forward.1} parent=11 // pred_check
        %p234 = pneg %p103
      $region22: #{cnn_mnist_forward.1} parent=11 // pred_check_branch
        %236 = sbr.rel (%p234) target = $region24
      $region23: #{cnn_mnist_forward.1} parent=11 // pred_region
        _
      $region24: #{cnn_mnist_forward.1} parent=11 // pred_fallthru
        _
      // Predicated region
      $region25: #{cnn_mnist_forward.1} parent=11 // pred_check
        %p237 = pneg %p124
      $region26: #{cnn_mnist_forward.1} parent=11 // pred_check_branch
        %239 = sbr.rel (%p237) target = $region28
      $region27: #{cnn_mnist_forward.1} parent=11 // pred_region
        _
      $region28: #{cnn_mnist_forward.1} parent=11 // pred_fallthru
        _
      // Predicated region
      $region29: #{cnn_mnist_forward.1} parent=11 // pred_check
        %p240 = pneg %p145
      $region30: #{cnn_mnist_forward.1} parent=11 // pred_check_branch
        %242 = sbr.rel (%p240) target = $region32
      $region31: #{cnn_mnist_forward.1} parent=11 // pred_region
        _
      $region32: #{cnn_mnist_forward.1} parent=11 // pred_fallthru
        _
      // Predicated region
      $region33: #{cnn_mnist_forward.1} parent=11 // pred_check
        %p243 = pneg %p166
      $region34: #{cnn_mnist_forward.1} parent=11 // pred_check_branch
        %245 = sbr.rel (%p243) target = $region36
      $region35: #{cnn_mnist_forward.1} parent=11 // pred_region
        _
      $region36: #{cnn_mnist_forward.1} parent=11 // pred_fallthru
        _
      // Predicated region
      $region37: #{cnn_mnist_forward.1} parent=11 // pred_check
        %p246 = pneg %p187
      $region38: #{cnn_mnist_forward.1} parent=11 // pred_check_branch
        %248 = sbr.rel (%p246) target = $region40
      $region39: #{cnn_mnist_forward.1} parent=11 // pred_region
        _
      $region40: #{cnn_mnist_forward.1} parent=11 // pred_fallthru
        _
    $region12: #{cnn_mnist_forward.1} parent=5 // pred_fallthru
      _
    %p249 = scmp.lt.s32.totalorder %s14, 2
    // Predicated region
    $region41: #{cnn_mnist_forward.1} parent=5 // pred_check
      %p250 = pneg %p249
    $region42: #{cnn_mnist_forward.1} parent=5 // pred_check_branch
      %252 = sbr.rel (%p250) target = $region44
    $region43: #{cnn_mnist_forward.1} parent=5 // pred_region
      // Predicated region
      $region45: #{cnn_mnist_forward.1} parent=43 // pred_check
        %p253 = pneg %p34
      $region46: #{cnn_mnist_forward.1} parent=43 // pred_check_branch
        %255 = sbr.rel (%p253) target = $region48
      $region47: #{cnn_mnist_forward.1} parent=43 // pred_region
        %s256 = smul.u32 8, %s14
        %p257 = scmp.lt.s32.totalorder %s256, 15
        %s258 = scalar_select %p257, %s256, 15
        %s259 = smul.addr %s258, 4
        %s260 = scalar_lea.vmem %s0, %s259
        %s261 = smul.u32 8, %s14
      $region48: #{cnn_mnist_forward.1} parent=43 // pred_fallthru
        _
    $region44: #{cnn_mnist_forward.1} parent=5 // pred_fallthru
      _
    %p262 = scmp.le.s32.totalorder 1, %s14
    %p263 = scmp.lt.s32.totalorder %s14, 3
    %p264 = pnand %p262, %p263
    %p265 = pneg %p264
    // Predicated region
    $region49: #{cnn_mnist_forward.1} parent=5 // pred_check
      _
    $region50: #{cnn_mnist_forward.1} parent=5 // pred_check_branch
      %267 = sbr.rel (%p264) target = $region52
    $region51: #{cnn_mnist_forward.1} parent=5 // pred_region
      %s268 = ssub.s32 %s14, 1
      %s269 = smul.u32 8, %s19
      %p270 = scmp.lt.s32.totalorder %s269, 15
      %s271 = scalar_select %p270, %s269, 15
      %s272 = smul.addr %s271, 4
      %s273 = scalar_lea.vmem %s0, %s272
      %p274 = pneg %p40
      %p275 = pneg %p37
      %p276 = pneg %p61
      %p277 = pneg %p58
      %p278 = pneg %p82
      %p279 = pneg %p79
      %p280 = pneg %p103
      %p281 = pneg %p100
      %p282 = pneg %p124
      %p283 = pneg %p121
      %p284 = pneg %p145
      %p285 = pneg %p142
      %p286 = pneg %p166
      %p287 = pneg %p163
      %p288 = pneg %p187
      %p289 = pneg %p184
      %p290 = pneg %p213
      %p291 = pneg %p210
      %s292 = smul.u32 8, %s19
      %p293 = scmp.lt.s32.totalorder %s292, 15
      %s294 = scalar_select %p293, %s292, 15
      %s295 = smul.addr %s294, 8
      %s296 = scalar_lea.vmem %s8, %s295
      %s297 = smul.u32 8, %s19
      %p298 = scmp.lt.s32.totalorder %s297, 15
      %s299 = scalar_select %p298, %s297, 15
      %s300 = smul.addr %s299, 4
      %s301 = scalar_lea.vmem %s0, %s300
      %s302 = smul.u32 8, %s19
      %s303 = smul.u32 8, %s19
      %p304 = scmp.lt.s32.totalorder %s303, 15
      %s305 = scalar_select %p304, %s303, 15
      %s306 = smul.addr %s305, 8
      %s307 = scalar_lea.vmem %s8, %s306
      %s308 = smul.u32 8, %s19
      %v310 = vld [vmem:[%s301] sm:$0xf]
      %v311 = vld [vmem:[%s301 + $0x4] sm:$0xf]
      %v312 = vld [vmem:[%s301 + $0x8] sm:$0xf]
      %v313 = vld [vmem:[%s301 + $0xc] sm:$0xf]
      %v314 = vld [vmem:[%s301 + $0x10] sm:$0xf]
      %v315 = vld [vmem:[%s301 + $0x14] sm:$0xf]
      %v316 = vld [vmem:[%s301 + $0x18] sm:$0xf]
      %v317 = vld [vmem:[%s301 + $0x1c] sm:$0xf]
      %vm318 = vcmask 977920
      %319 = vst.msk [vmem:[#allocation2] sm:$0xf] %vm318, %v310
      %320 = vst.msk [vmem:[#allocation2 + $0x4] sm:$0xf] %vm318, %v311
      %321 = vst.msk [vmem:[#allocation2 + $0x8] sm:$0xf] %vm318, %v312
      %322 = vst.msk [vmem:[#allocation2 + $0xc] sm:$0xf] %vm318, %v313
      %323 = vst.msk [vmem:[#allocation2 + $0x10] sm:$0xf] %vm318, %v314
      %324 = vst.msk [vmem:[#allocation2 + $0x14] sm:$0xf] %vm318, %v315
      %325 = vst.msk [vmem:[#allocation2 + $0x18] sm:$0xf] %vm318, %v316
      %326 = vst.msk [vmem:[#allocation2 + $0x1c] sm:$0xf] %vm318, %v317
      %327 = vst.msk [vmem:[#allocation2 + $0x20] sm:$0xf] %vm318, 0
      %v328 = vld [vmem:[%s1] sm:$0xff]
      %v329 = vld [vmem:[%s1 + $0x8] sm:$0xff]
      %v330 = vld [vmem:[%s1 + $0x10] sm:$0xff]
      %v331 = vld [vmem:[%s1 + $0x18] sm:$0xff]
      %v332 = vld [vmem:[%s1 + $0x20] sm:$0xff]
      %v333 = vld [vmem:[%s1 + $0x28] sm:$0xff]
      %v334 = vld [vmem:[%s1 + $0x30] sm:$0xff]
      %v335 = vld [vmem:[%s1 + $0x38] sm:$0xff]
      %v336 = vld [vmem:[%s1 + $0x40] sm:$0xff]
      %v337 = vld [vmem:[%s1 + $0x48] sm:$0xff]
      %v338 = vld [vmem:[%s1 + $0x50] sm:$0xff]
      %v339 = vld [vmem:[%s1 + $0x58] sm:$0xff]
      %v340 = vld [vmem:[%s1 + $0x60] sm:$0xff]
      %v341 = vld [vmem:[%s1 + $0x68] sm:$0xff]
      %v342 = vld [vmem:[%s1 + $0x70] sm:$0xff]
      %v343 = vld [vmem:[%s1 + $0x78] sm:$0xff]
      %v344 = vld [vmem:[%s1 + $0x80] sm:$0xff]
      %v345 = vld [vmem:[%s1 + $0x88] sm:$0xff]
      %v346 = vld [vmem:[%s1 + $0x90] sm:$0xff]
      %v347 = vld [vmem:[%s1 + $0x98] sm:$0xff]
      %v348 = vld [vmem:[%s1 + $0xa0] sm:$0xff]
      %v349 = vld [vmem:[%s1 + $0xa8] sm:$0xff]
      %v350 = vld [vmem:[%s1 + $0xb0] sm:$0xff]
      %v351 = vld [vmem:[%s1 + $0xb8] sm:$0xff]
      %v352 = vld [vmem:[%s1 + $0xc0] sm:$0xff]
      %v353 = vld [vmem:[%s1 + $0xc8] sm:$0xff]
      %v354 = vld [vmem:[%s1 + $0xd0] sm:$0xff]
      %v355 = vld [vmem:[%s1 + $0xd8] sm:$0xff]
      %v356 = vld [vmem:[%s1 + $0xe0] sm:$0xff]
      %v357 = vld [vmem:[%s1 + $0xe8] sm:$0xff]
      %v358 = vld [vmem:[%s1 + $0xf0] sm:$0xff]
      %v359 = vld [vmem:[%s1 + $0xf8] sm:$0xff]
      %v360 = vld [vmem:[%s1 + $0x100] sm:$0xff]
      %v361 = vld [vmem:[%s1 + $0x108] sm:$0xff]
      %v362 = vld [vmem:[%s1 + $0x110] sm:$0xff]
      %v363 = vld [vmem:[%s1 + $0x118] sm:$0xff]
      %v364 = vld [vmem:[%s1 + $0x120] sm:$0xff]
      %v365 = vld [vmem:[%s1 + $0x128] sm:$0xff]
      %v366 = vld [vmem:[%s1 + $0x130] sm:$0xff]
      %v367 = vld [vmem:[%s1 + $0x138] sm:$0xff]
      %v368 = vld [vmem:[%s1 + $0x140] sm:$0xff]
      %v369 = vld [vmem:[%s1 + $0x148] sm:$0xff]
      %v370 = vld [vmem:[%s1 + $0x150] sm:$0xff]
      %v371 = vld [vmem:[%s1 + $0x158] sm:$0xff]
      %v372 = vld [vmem:[%s1 + $0x160] sm:$0xff]
      %v373 = vld [vmem:[%s1 + $0x168] sm:$0xff]
      %v374 = vld [vmem:[%s1 + $0x170] sm:$0xff]
      %v375 = vld [vmem:[%s1 + $0x178] sm:$0xff]
      %v376 = vld [vmem:[%s1 + $0x180] sm:$0xff]
      %v377 = vld [vmem:[%s1 + $0x188] sm:$0xff]
      %v378 = vld [vmem:[%s1 + $0x190] sm:$0xff]
      %v379 = vld [vmem:[%s1 + $0x198] sm:$0xff]
      %v380 = vld [vmem:[%s1 + $0x1a0] sm:$0xff]
      %v381 = vld [vmem:[%s1 + $0x1a8] sm:$0xff]
      %v382 = vld [vmem:[%s1 + $0x1b0] sm:$0xff]
      %v383 = vld [vmem:[%s1 + $0x1b8] sm:$0xff]
      %v384 = vld [vmem:[%s1 + $0x1c0] sm:$0xff]
      %v385 = vld [vmem:[%s1 + $0x1c8] sm:$0xff]
      %v386 = vld [vmem:[%s1 + $0x1d0] sm:$0xff]
      %v387 = vld [vmem:[%s1 + $0x1d8] sm:$0xff]
      %v388 = vld [vmem:[%s1 + $0x1e0] sm:$0xff]
      %v389 = vld [vmem:[%s1 + $0x1e8] sm:$0xff]
      %v390 = vld [vmem:[%s1 + $0x1f0] sm:$0xff]
      %v391 = vld [vmem:[%s1 + $0x1f8] sm:$0xff]
      %v392 = vld [vmem:[%s1 + $0x200] sm:$0xff]
      %v393 = vld [vmem:[%s1 + $0x208] sm:$0xff]
      %v394 = vld [vmem:[%s1 + $0x210] sm:$0xff]
      %v395 = vld [vmem:[%s1 + $0x218] sm:$0xff]
      %v396 = vld [vmem:[%s1 + $0x220] sm:$0xff]
      %v397 = vld [vmem:[%s1 + $0x228] sm:$0xff]
      %v398 = vld [vmem:[%s1 + $0x230] sm:$0xff]
      %v399 = vld [vmem:[%s1 + $0x238] sm:$0xff]
      %v400 = vld [vmem:[%s1 + $0x240] sm:$0xff]
      %v401 = vld [vmem:[%s1 + $0x248] sm:$0xff]
      %v402 = vld [vmem:[%s1 + $0x250] sm:$0xff]
      %v403 = vld [vmem:[%s1 + $0x258] sm:$0xff]
      %v404 = vld [vmem:[%s1 + $0x260] sm:$0xff]
      %v405 = vld [vmem:[%s1 + $0x268] sm:$0xff]
      %v406 = vld [vmem:[%s1 + $0x270] sm:$0xff]
      %v407 = vld [vmem:[%s1 + $0x278] sm:$0xff]
      %v408 = vld [vmem:[%s1 + $0x280] sm:$0xff]
      %v409 = vld [vmem:[%s1 + $0x288] sm:$0xff]
      %v410 = vld [vmem:[%s1 + $0x290] sm:$0xff]
      %v411 = vld [vmem:[%s1 + $0x298] sm:$0xff]
      %v412 = vld [vmem:[%s1 + $0x2a0] sm:$0xff]
      %v413 = vld [vmem:[%s1 + $0x2a8] sm:$0xff]
      %v414 = vld [vmem:[%s1 + $0x2b0] sm:$0xff]
      %v415 = vld [vmem:[%s1 + $0x2b8] sm:$0xff]
      %v416 = vld [vmem:[%s1 + $0x2c0] sm:$0xff]
      %v417 = vld [vmem:[%s1 + $0x2c8] sm:$0xff]
      %v418 = vld [vmem:[%s1 + $0x2d0] sm:$0xff]
      %v419 = vld [vmem:[%s1 + $0x2d8] sm:$0xff]
      %v420 = vld [vmem:[%s1 + $0x2e0] sm:$0xff]
      %v421 = vld [vmem:[%s1 + $0x2e8] sm:$0xff]
      %v422 = vld [vmem:[%s1 + $0x2f0] sm:$0xff]
      %v423 = vld [vmem:[%s1 + $0x2f8] sm:$0xff]
      %v424 = vld [vmem:[%s1 + $0x300] sm:$0xff]
      %v425 = vld [vmem:[%s1 + $0x308] sm:$0xff]
      %v426 = vld [vmem:[%s1 + $0x310] sm:$0xff]
      %v427 = vld [vmem:[%s1 + $0x318] sm:$0xff]
      %v428 = vld [vmem:[%s1 + $0x320] sm:$0xff]
      %v429 = vld [vmem:[%s1 + $0x328] sm:$0xff]
      %v430 = vld [vmem:[%s1 + $0x330] sm:$0xff]
      %v431 = vld [vmem:[%s1 + $0x338] sm:$0xff]
      %v432 = vld [vmem:[%s1 + $0x340] sm:$0xff]
      %v433 = vld [vmem:[%s1 + $0x348] sm:$0xff]
      %v434 = vld [vmem:[%s1 + $0x350] sm:$0xff]
      %v435 = vld [vmem:[%s1 + $0x358] sm:$0xff]
      %v436 = vld [vmem:[%s1 + $0x360] sm:$0xff]
      %v437 = vld [vmem:[%s1 + $0x368] sm:$0xff]
      %v438 = vld [vmem:[%s1 + $0x370] sm:$0xff]
      %v439 = vld [vmem:[%s1 + $0x378] sm:$0xff]
      %v440 = vld [vmem:[%s1 + $0x380] sm:$0xff]
      %v441 = vld [vmem:[%s1 + $0x388] sm:$0xff]
      %v442 = vld [vmem:[%s1 + $0x390] sm:$0xff]
      %v443 = vld [vmem:[%s1 + $0x398] sm:$0xff]
      %v444 = vld [vmem:[%s1 + $0x3a0] sm:$0xff]
      %v445 = vld [vmem:[%s1 + $0x3a8] sm:$0xff]
      %v446 = vld [vmem:[%s1 + $0x3b0] sm:$0xff]
      %v447 = vld [vmem:[%s1 + $0x3b8] sm:$0xff]
      %v448 = vld [vmem:[#allocation2] sm:$0xf]
      %v449 = vld [vmem:[#allocation2 + $0x4] sm:$0xf]
      %v450 = vld [vmem:[#allocation2 + $0x8] sm:$0xf]
      %v451 = vld [vmem:[#allocation2 + $0xc] sm:$0xf]
      %v452 = vld [vmem:[#allocation2 + $0x10] sm:$0xf]
      %v453 = vld [vmem:[#allocation2 + $0x14] sm:$0xf]
      %v454 = vld [vmem:[#allocation2 + $0x18] sm:$0xf]
      %v455 = vld [vmem:[#allocation2 + $0x1c] sm:$0xf]
      %v456 = vld [vmem:[#allocation2 + $0x20] sm:$0x1]
      %v457 = vld [vmem:[%s2] sm:$0xff]
      %v458 = vld [vmem:[%s2 + $0x8] sm:$0xff]
      %v459 = vld [vmem:[%s2 + $0x10] sm:$0xff]
      %v460 = vld [vmem:[%s2 + $0x18] sm:$0xff]
      %v461 = vld [vmem:[%s2 + $0x20] sm:$0xff]
      %v462 = vld [vmem:[%s2 + $0x28] sm:$0xff]
      %v463 = vld [vmem:[%s2 + $0x30] sm:$0xff]
      %v464 = vld [vmem:[%s2 + $0x38] sm:$0xff]
      %v465 = vld [vmem:[%s2 + $0x40] sm:$0xff]
      %v466 = vld [vmem:[%s2 + $0x48] sm:$0xff]
      %v467 = vld [vmem:[%s2 + $0x50] sm:$0xff]
      %v468 = vld [vmem:[%s2 + $0x58] sm:$0xff]
      %v469 = vld [vmem:[%s2 + $0x60] sm:$0xff]
      %v470 = vld [vmem:[%s2 + $0x68] sm:$0xff]
      %v471 = vld [vmem:[%s2 + $0x70] sm:$0xff]
      %v472 = vld [vmem:[%s2 + $0x78] sm:$0xff]
      %v473 = vld [vmem:[%s2 + $0x80] sm:$0xff]
      %v474 = vld [vmem:[%s2 + $0x88] sm:$0xff]
      %v475 = vld [vmem:[%s2 + $0x90] sm:$0xff]
      %v476 = vld [vmem:[%s2 + $0x98] sm:$0xff]
      %v477 = vld [vmem:[%s2 + $0xa0] sm:$0xff]
      %v478 = vld [vmem:[%s2 + $0xa8] sm:$0xff]
      %v479 = vld [vmem:[%s2 + $0xb0] sm:$0xff]
      %v480 = vld [vmem:[%s2 + $0xb8] sm:$0xff]
      %v481 = vld [vmem:[%s2 + $0xc0] sm:$0xff]
      %v482 = vld [vmem:[%s2 + $0xc8] sm:$0xff]
      %v483 = vld [vmem:[%s2 + $0xd0] sm:$0xff]
      %v484 = vld [vmem:[%s2 + $0xd8] sm:$0xff]
      %v485 = vld [vmem:[%s2 + $0xe0] sm:$0xff]
      %v486 = vld [vmem:[%s2 + $0xe8] sm:$0xff]
      %v487 = vld [vmem:[%s2 + $0xf0] sm:$0xff]
      %v488 = vld [vmem:[%s2 + $0xf8] sm:$0xff]
      %v489 = vld [vmem:[%s2 + $0x100] sm:$0xff]
      %v490 = vld [vmem:[%s2 + $0x108] sm:$0xff]
      %v491 = vld [vmem:[%s2 + $0x110] sm:$0xff]
      %v492 = vld [vmem:[%s2 + $0x118] sm:$0xff]
      %v493 = vld [vmem:[%s2 + $0x120] sm:$0xff]
      %v494 = vld [vmem:[%s2 + $0x128] sm:$0xff]
      %v495 = vld [vmem:[%s2 + $0x130] sm:$0xff]
      %v496 = vld [vmem:[%s2 + $0x138] sm:$0xff]
      %v497 = vld [vmem:[%s2 + $0x140] sm:$0xff]
      %v498 = vld [vmem:[%s2 + $0x148] sm:$0xff]
      %v499 = vld [vmem:[%s2 + $0x150] sm:$0xff]
      %v500 = vld [vmem:[%s2 + $0x158] sm:$0xff]
      %v501 = vld [vmem:[%s2 + $0x160] sm:$0xff]
      %v502 = vld [vmem:[%s2 + $0x168] sm:$0xff]
      %v503 = vld [vmem:[%s2 + $0x170] sm:$0xff]
      %v504 = vld [vmem:[%s2 + $0x178] sm:$0xff]
      %v505 = vld [vmem:[%s2 + $0x180] sm:$0xff]
      %v506 = vld [vmem:[%s2 + $0x188] sm:$0xff]
      %v507 = vld [vmem:[%s2 + $0x190] sm:$0xff]
      %v508 = vld [vmem:[%s2 + $0x198] sm:$0xff]
      %v509 = vld [vmem:[%s2 + $0x1a0] sm:$0xff]
      %v510 = vld [vmem:[%s2 + $0x1a8] sm:$0xff]
      %v511 = vld [vmem:[%s2 + $0x1b0] sm:$0xff]
      %v512 = vld [vmem:[%s2 + $0x1b8] sm:$0xff]
      %v513 = vld [vmem:[%s2 + $0x1c0] sm:$0x33]
      %v514 = vld [vmem:[%s2 + $0x1c8] sm:$0x33]
      %v515 = vld [vmem:[%s2 + $0x1d0] sm:$0x33]
      %v516 = vld [vmem:[%s2 + $0x1d8] sm:$0x33]
      %v517 = vld [vmem:[%s2 + $0x1e0] sm:$0x33]
      %v518 = vld [vmem:[%s2 + $0x1e8] sm:$0x33]
      %v519 = vld [vmem:[%s2 + $0x1f0] sm:$0x33]
      %v520 = vld [vmem:[%s2 + $0x1f8] sm:$0x33]
      %v530 = vunpack.c.l.b16 %v448
      %v531 = vunpack.c.l.b16 %v449
      %v532 = vunpack.c.l.b16 %v450
      %v533 = vunpack.c.l.b16 %v451
      %v534 = vunpack.c.l.b16 %v452
      %v535 = vunpack.c.l.b16 %v453
      %v536 = vunpack.c.l.b16 %v454
      %v537 = vunpack.c.l.b16 %v455
      %v538 = vunpack.c.l.b16 %v456
      %v539 = vpack.c.b16 %v531, %v530
      %v540 = vpack.c.b16 %v533, %v532
      %v541 = vpack.c.b16 %v535, %v534
      %v542 = vpack.c.b16 %v537, %v536
      %v543 = vpack.c.b16 %v538, %v538
      %vm544 = vsmask.f32 7424
      %v546 = vshrl.u32 %v539, 16
      %v548 = vshll.u32 %v539, 16
      %v550 = vrot.slane %v548, 1
      %v551 = vor.u32 %v546, %v550
      %v553 = vshll.u32 %v540, 16
      %v555 = vrot.slane %v553, 1
      %v556 = vsel %vm544, %v551, %v555
      %v557 = vshrl.u32 %v540, 16
      %v559 = vor.u32 %v557, %v555
      %v561 = vshll.u32 %v541, 16
      %v563 = vrot.slane %v561, 1
      %v564 = vsel %vm544, %v559, %v563
      %v565 = vshrl.u32 %v541, 16
      %v567 = vor.u32 %v565, %v563
      %v569 = vshll.u32 %v542, 16
      %v571 = vrot.slane %v569, 1
      %v572 = vsel %vm544, %v567, %v571
      %v573 = vshrl.u32 %v542, 16
      %v575 = vor.u32 %v573, %v571
      %v577 = vshll.u32 %v543, 16
      %v579 = vrot.slane %v577, 1
      %v580 = vsel %vm544, %v575, %v579
      %v645 = vunpack.c.l.b16 %v457
      %v646 = vunpack.c.h.b16 %v457
      %v647 = vunpack.c.l.b16 %v458
      %v648 = vunpack.c.h.b16 %v458
      %v649 = vunpack.c.l.b16 %v459
      %v650 = vunpack.c.h.b16 %v459
      %v651 = vunpack.c.l.b16 %v460
      %v652 = vunpack.c.h.b16 %v460
      %v653 = vunpack.c.l.b16 %v461
      %v654 = vunpack.c.h.b16 %v461
      %v655 = vunpack.c.l.b16 %v462
      %v656 = vunpack.c.h.b16 %v462
      %v657 = vunpack.c.l.b16 %v463
      %v658 = vunpack.c.h.b16 %v463
      %v659 = vunpack.c.l.b16 %v464
      %v660 = vunpack.c.h.b16 %v464
      %v661 = vunpack.c.l.b16 %v465
      %v662 = vunpack.c.h.b16 %v465
      %v663 = vunpack.c.l.b16 %v466
      %v664 = vunpack.c.h.b16 %v466
      %v665 = vunpack.c.l.b16 %v467
      %v666 = vunpack.c.h.b16 %v467
      %v667 = vunpack.c.l.b16 %v468
      %v668 = vunpack.c.h.b16 %v468
      %v669 = vunpack.c.l.b16 %v469
      %v670 = vunpack.c.h.b16 %v469
      %v671 = vunpack.c.l.b16 %v470
      %v672 = vunpack.c.h.b16 %v470
      %v673 = vunpack.c.l.b16 %v471
      %v674 = vunpack.c.h.b16 %v471
      %v675 = vunpack.c.l.b16 %v472
      %v676 = vunpack.c.h.b16 %v472
      %v677 = vunpack.c.l.b16 %v473
      %v678 = vunpack.c.h.b16 %v473
      %v679 = vunpack.c.l.b16 %v474
      %v680 = vunpack.c.h.b16 %v474
      %v681 = vunpack.c.l.b16 %v475
      %v682 = vunpack.c.h.b16 %v475
      %v683 = vunpack.c.l.b16 %v476
      %v684 = vunpack.c.h.b16 %v476
      %v685 = vunpack.c.l.b16 %v477
      %v686 = vunpack.c.h.b16 %v477
      %v687 = vunpack.c.l.b16 %v478
      %v688 = vunpack.c.h.b16 %v478
      %v689 = vunpack.c.l.b16 %v479
      %v690 = vunpack.c.h.b16 %v479
      %v691 = vunpack.c.l.b16 %v480
      %v692 = vunpack.c.h.b16 %v480
      %v693 = vunpack.c.l.b16 %v481
      %v694 = vunpack.c.h.b16 %v481
      %v695 = vunpack.c.l.b16 %v482
      %v696 = vunpack.c.h.b16 %v482
      %v697 = vunpack.c.l.b16 %v483
      %v698 = vunpack.c.h.b16 %v483
      %v699 = vunpack.c.l.b16 %v484
      %v700 = vunpack.c.h.b16 %v484
      %v701 = vunpack.c.l.b16 %v485
      %v702 = vunpack.c.h.b16 %v485
      %v703 = vunpack.c.l.b16 %v486
      %v704 = vunpack.c.h.b16 %v486
      %v705 = vunpack.c.l.b16 %v487
      %v706 = vunpack.c.h.b16 %v487
      %v707 = vunpack.c.l.b16 %v488
      %v708 = vunpack.c.h.b16 %v488
      %v709 = vunpack.c.l.b16 %v489
      %v710 = vunpack.c.h.b16 %v489
      %v711 = vunpack.c.l.b16 %v490
      %v712 = vunpack.c.h.b16 %v490
      %v713 = vunpack.c.l.b16 %v491
      %v714 = vunpack.c.h.b16 %v491
      %v715 = vunpack.c.l.b16 %v492
      %v716 = vunpack.c.h.b16 %v492
      %v717 = vunpack.c.l.b16 %v493
      %v718 = vunpack.c.h.b16 %v493
      %v719 = vunpack.c.l.b16 %v494
      %v720 = vunpack.c.h.b16 %v494
      %v721 = vunpack.c.l.b16 %v495
      %v722 = vunpack.c.h.b16 %v495
      %v723 = vunpack.c.l.b16 %v496
      %v724 = vunpack.c.h.b16 %v496
      %v725 = vunpack.c.l.b16 %v497
      %v726 = vunpack.c.h.b16 %v497
      %v727 = vunpack.c.l.b16 %v498
      %v728 = vunpack.c.h.b16 %v498
      %v729 = vunpack.c.l.b16 %v499
      %v730 = vunpack.c.h.b16 %v499
      %v731 = vunpack.c.l.b16 %v500
      %v732 = vunpack.c.h.b16 %v500
      %v733 = vunpack.c.l.b16 %v501
      %v734 = vunpack.c.h.b16 %v501
      %v735 = vunpack.c.l.b16 %v502
      %v736 = vunpack.c.h.b16 %v502
      %v737 = vunpack.c.l.b16 %v503
      %v738 = vunpack.c.h.b16 %v503
      %v739 = vunpack.c.l.b16 %v504
      %v740 = vunpack.c.h.b16 %v504
      %v741 = vunpack.c.l.b16 %v505
      %v742 = vunpack.c.h.b16 %v505
      %v743 = vunpack.c.l.b16 %v506
      %v744 = vunpack.c.h.b16 %v506
      %v745 = vunpack.c.l.b16 %v507
      %v746 = vunpack.c.h.b16 %v507
      %v747 = vunpack.c.l.b16 %v508
      %v748 = vunpack.c.h.b16 %v508
      %v749 = vunpack.c.l.b16 %v509
      %v750 = vunpack.c.h.b16 %v509
      %v751 = vunpack.c.l.b16 %v510
      %v752 = vunpack.c.h.b16 %v510
      %v753 = vunpack.c.l.b16 %v511
      %v754 = vunpack.c.h.b16 %v511
      %v755 = vunpack.c.l.b16 %v512
      %v756 = vunpack.c.h.b16 %v512
      %v757 = vunpack.c.l.b16 %v513
      %v758 = vunpack.c.h.b16 %v513
      %v759 = vunpack.c.l.b16 %v514
      %v760 = vunpack.c.h.b16 %v514
      %v761 = vunpack.c.l.b16 %v515
      %v762 = vunpack.c.h.b16 %v515
      %v763 = vunpack.c.l.b16 %v516
      %v764 = vunpack.c.h.b16 %v516
      %v765 = vunpack.c.l.b16 %v517
      %v766 = vunpack.c.h.b16 %v517
      %v767 = vunpack.c.l.b16 %v518
      %v768 = vunpack.c.h.b16 %v518
      %v769 = vunpack.c.l.b16 %v519
      %v770 = vunpack.c.h.b16 %v519
      %v771 = vunpack.c.l.b16 %v520
      %v772 = vunpack.c.h.b16 %v520
      %v773 = vpack.c.b16 %v661, %v645
      %v774 = vpack.c.b16 %v662, %v646
      %v775 = vpack.c.b16 %v663, %v647
      %v776 = vpack.c.b16 %v664, %v648
      %v777 = vpack.c.b16 %v665, %v649
      %v778 = vpack.c.b16 %v666, %v650
      %v779 = vpack.c.b16 %v667, %v651
      %v780 = vpack.c.b16 %v668, %v652
      %v781 = vpack.c.b16 %v669, %v653
      %v782 = vpack.c.b16 %v670, %v654
      %v783 = vpack.c.b16 %v671, %v655
      %v784 = vpack.c.b16 %v672, %v656
      %v785 = vpack.c.b16 %v673, %v657
      %v786 = vpack.c.b16 %v674, %v658
      %v787 = vpack.c.b16 %v675, %v659
      %v788 = vpack.c.b16 %v676, %v660
      %v789 = vpack.c.b16 %v693, %v677
      %v790 = vpack.c.b16 %v694, %v678
      %v791 = vpack.c.b16 %v695, %v679
      %v792 = vpack.c.b16 %v696, %v680
      %v793 = vpack.c.b16 %v697, %v681
      %v794 = vpack.c.b16 %v698, %v682
      %v795 = vpack.c.b16 %v699, %v683
      %v796 = vpack.c.b16 %v700, %v684
      %v797 = vpack.c.b16 %v701, %v685
      %v798 = vpack.c.b16 %v702, %v686
      %v799 = vpack.c.b16 %v703, %v687
      %v800 = vpack.c.b16 %v704, %v688
      %v801 = vpack.c.b16 %v705, %v689
      %v802 = vpack.c.b16 %v706, %v690
      %v803 = vpack.c.b16 %v707, %v691
      %v804 = vpack.c.b16 %v708, %v692
      %v805 = vpack.c.b16 %v725, %v709
      %v806 = vpack.c.b16 %v726, %v710
      %v807 = vpack.c.b16 %v727, %v711
      %v808 = vpack.c.b16 %v728, %v712
      %v809 = vpack.c.b16 %v729, %v713
      %v810 = vpack.c.b16 %v730, %v714
      %v811 = vpack.c.b16 %v731, %v715
      %v812 = vpack.c.b16 %v732, %v716
      %v813 = vpack.c.b16 %v733, %v717
      %v814 = vpack.c.b16 %v734, %v718
      %v815 = vpack.c.b16 %v735, %v719
      %v816 = vpack.c.b16 %v736, %v720
      %v817 = vpack.c.b16 %v737, %v721
      %v818 = vpack.c.b16 %v738, %v722
      %v819 = vpack.c.b16 %v739, %v723
      %v820 = vpack.c.b16 %v740, %v724
      %v821 = vpack.c.b16 %v757, %v741
      %v822 = vpack.c.b16 %v758, %v742
      %v823 = vpack.c.b16 %v759, %v743
      %v824 = vpack.c.b16 %v760, %v744
      %v825 = vpack.c.b16 %v761, %v745
      %v826 = vpack.c.b16 %v762, %v746
      %v827 = vpack.c.b16 %v763, %v747
      %v828 = vpack.c.b16 %v764, %v748
      %v829 = vpack.c.b16 %v765, %v749
      %v830 = vpack.c.b16 %v766, %v750
      %v831 = vpack.c.b16 %v767, %v751
      %v832 = vpack.c.b16 %v768, %v752
      %v833 = vpack.c.b16 %v769, %v753
      %v834 = vpack.c.b16 %v770, %v754
      %v835 = vpack.c.b16 %v771, %v755
      %v836 = vpack.c.b16 %v772, %v756
      %vm885 = vcmask 490496
      %v887 = vsel %vm885, %v556, 0
      %v890 = vsel %vm885, %v564, 0
      %v893 = vsel %vm885, %v572, 0
      %v896 = vsel %vm885, %v580, 0
      %vm898 = vcmask 1045504
      %v900 = vsel %vm898, %v821, 0
      %v903 = vsel %vm898, %v822, 0
      %v906 = vsel %vm898, %v823, 0
      %v909 = vsel %vm898, %v824, 0
      %v912 = vsel %vm898, %v825, 0
      %v915 = vsel %vm898, %v826, 0
      %v918 = vsel %vm898, %v827, 0
      %v921 = vsel %vm898, %v828, 0
      %v924 = vsel %vm898, %v829, 0
      %v927 = vsel %vm898, %v830, 0
      %v930 = vsel %vm898, %v831, 0
      %v933 = vsel %vm898, %v832, 0
      %v936 = vsel %vm898, %v833, 0
      %v939 = vsel %vm898, %v834, 0
      %v942 = vsel %vm898, %v835, 0
      %v945 = vsel %vm898, %v836, 0
      %947 = vmatprep.subr.bf16.mxu0 %v774
      %948 = vmatpush1.bf16.msra.mxu0 %v773
      %949 = vmatprep.subr.bf16.mxu0 %v790
      %950 = vmatpush1.bf16.msra.mxu0 %v789
      %951 = vmatprep.subr.bf16.mxu0 %v806
      %952 = vmatpush1.bf16.msra.mxu0 %v805
      %953 = vmatprep.subr.bf16.mxu0 %v903
      %954 = vmatpush1.bf16.msra.mxu0 %v900
      %955 = vmatprep.subr.bf16.mxu0 0
      %956 = vmatpush1.bf16.msra.mxu0 0
      %957 = vmatprep.subr.bf16.mxu0 0
      %958 = vmatpush1.bf16.msra.mxu0 0
      %959 = vmatprep.subr.bf16.mxu0 0
      %960 = vmatpush1.bf16.msra.mxu0 0
      %961 = vmatprep.subr.bf16.mxu0 0
      %962 = vmatpush1.bf16.msra.mxu0 0
      %963 = vmatprep.subr.bf16.mxu0 0
      %964 = vmatpush1.bf16.msra.mxu0 0
      %965 = vmatprep.subr.bf16.mxu0 0
      %966 = vmatpush1.bf16.msra.mxu0 0
      %967 = vmatprep.subr.bf16.mxu0 0
      %968 = vmatpush1.bf16.msra.mxu0 0
      %969 = vmatprep.subr.bf16.mxu0 0
      %970 = vmatpush1.bf16.msra.mxu0 0
      %971 = vmatprep.subr.bf16.mxu0 0
      %972 = vmatpush1.bf16.msra.mxu0 0
      %973 = vmatprep.subr.bf16.mxu0 0
      %974 = vmatpush1.bf16.msra.mxu0 0
      %975 = vmatprep.subr.bf16.mxu0 0
      %976 = vmatpush1.bf16.msra.mxu0 0
      %977 = vmatprep.subr.bf16.mxu0 0
      %978 = vmatpush1.bf16.msra.mxu0 0
      %979 = vmatprep.mubr.bf16.mxu0 0
      %980 = vmatmul.mubr.bf16.gmra.mrb[0].mxu0 %v887
      %v981 = vpop.f32.mrb[0].mxu0
      %v982 = vadd.f32 0.0, %v981
      %v983 = vpop.f32.mrb[0].mxu0
      %v984 = vadd.f32 0.0, %v983
      %v985 = vpop.f32.mrb[0].mxu0
      %v986 = vadd.f32 0.0, %v985
      %v987 = vpop.f32.mrb[0].mxu0
      %v988 = vadd.f32 0.0, %v987
      %989 = vmatprep.mubr.bf16.mxu0 0
      %990 = vmatmul.mubr.bf16.gmra.mrb[0].mxu0 %v890
      %v991 = vpop.f32.mrb[0].mxu0
      %v992 = vadd.f32 0.0, %v991
      %v993 = vpop.f32.mrb[0].mxu0
      %v994 = vadd.f32 0.0, %v993
      %v995 = vpop.f32.mrb[0].mxu0
      %v996 = vadd.f32 0.0, %v995
      %v997 = vpop.f32.mrb[0].mxu0
      %v998 = vadd.f32 0.0, %v997
      %999 = vmatprep.mubr.bf16.mxu0 0
      %1000 = vmatmul.mubr.bf16.gmra.mrb[0].mxu0 %v893
      %v1001 = vpop.f32.mrb[0].mxu0
      %v1002 = vadd.f32 0.0, %v1001
      %v1003 = vpop.f32.mrb[0].mxu0
      %v1004 = vadd.f32 0.0, %v1003
      %v1005 = vpop.f32.mrb[0].mxu0
      %v1006 = vadd.f32 0.0, %v1005
      %v1007 = vpop.f32.mrb[0].mxu0
      %v1008 = vadd.f32 0.0, %v1007
      %1009 = vmatprep.mubr.bf16.mxu0 0
      %1010 = vmatmul.mubr.bf16.gmra.mrb[0].mxu0 %v896
      %v1011 = vpop.f32.mrb[0].mxu0
      %v1012 = vadd.f32 0.0, %v1011
      %v1013 = vpop.f32.mrb[0].mxu0
      %v1014 = vadd.f32 0.0, %v1013
      %v1015 = vpop.f32.mrb[0].mxu0
      %v1016 = vadd.f32 0.0, %v1015
      %v1017 = vpop.f32.mrb[0].mxu0
      %v1018 = vadd.f32 0.0, %v1017
      %1019 = vdwg.mxu0
      %1020 = vmatprep.subr.bf16.mxu0 %v776
      %1021 = vmatpush1.bf16.msra.mxu0 %v775
      %1022 = vmatprep.subr.bf16.mxu0 %v792
      %1023 = vmatpush1.bf16.msra.mxu0 %v791
      %1024 = vmatprep.subr.bf16.mxu0 %v808
      %1025 = vmatpush1.bf16.msra.mxu0 %v807
      %1026 = vmatprep.subr.bf16.mxu0 %v909
      %1027 = vmatpush1.bf16.msra.mxu0 %v906
      %1028 = vmatprep.subr.bf16.mxu0 0
      %1029 = vmatpush1.bf16.msra.mxu0 0
      %1030 = vmatprep.subr.bf16.mxu0 0
      %1031 = vmatpush1.bf16.msra.mxu0 0
      %1032 = vmatprep.subr.bf16.mxu0 0
      %1033 = vmatpush1.bf16.msra.mxu0 0
      %1034 = vmatprep.subr.bf16.mxu0 0
      %1035 = vmatpush1.bf16.msra.mxu0 0
      %1036 = vmatprep.subr.bf16.mxu0 0
      %1037 = vmatpush1.bf16.msra.mxu0 0
      %1038 = vmatprep.subr.bf16.mxu0 0
      %1039 = vmatpush1.bf16.msra.mxu0 0
      %1040 = vmatprep.subr.bf16.mxu0 0
      %1041 = vmatpush1.bf16.msra.mxu0 0
      %1042 = vmatprep.subr.bf16.mxu0 0
      %1043 = vmatpush1.bf16.msra.mxu0 0
      %1044 = vmatprep.subr.bf16.mxu0 0
      %1045 = vmatpush1.bf16.msra.mxu0 0
      %1046 = vmatprep.subr.bf16.mxu0 0
      %1047 = vmatpush1.bf16.msra.mxu0 0
      %1048 = vmatprep.subr.bf16.mxu0 0
      %1049 = vmatpush1.bf16.msra.mxu0 0
      %1050 = vmatprep.subr.bf16.mxu0 0
      %1051 = vmatpush1.bf16.msra.mxu0 0
      %1052 = vmatprep.mubr.bf16.mxu0 0
      %1053 = vmatmul.mubr.bf16.gmra.mrb[0].mxu0 %v887
      %v1054 = vpop.f32.mrb[0].mxu0
      %v1055 = vadd.f32 0.0, %v1054
      %v1056 = vpop.f32.mrb[0].mxu0
      %v1057 = vadd.f32 0.0, %v1056
      %v1058 = vpop.f32.mrb[0].mxu0
      %v1059 = vadd.f32 0.0, %v1058
      %v1060 = vpop.f32.mrb[0].mxu0
      %v1061 = vadd.f32 0.0, %v1060
      %1062 = vmatprep.mubr.bf16.mxu0 0
      %1063 = vmatmul.mubr.bf16.gmra.mrb[0].mxu0 %v890
      %v1064 = vpop.f32.mrb[0].mxu0
      %v1065 = vadd.f32 0.0, %v1064
      %v1066 = vpop.f32.mrb[0].mxu0
      %v1067 = vadd.f32 0.0, %v1066
      %v1068 = vpop.f32.mrb[0].mxu0
      %v1069 = vadd.f32 0.0, %v1068
      %v1070 = vpop.f32.mrb[0].mxu0
      %v1071 = vadd.f32 0.0, %v1070
      %1072 = vmatprep.mubr.bf16.mxu0 0
      %1073 = vmatmul.mubr.bf16.gmra.mrb[0].mxu0 %v893
      %v1074 = vpop.f32.mrb[0].mxu0
      %v1075 = vadd.f32 0.0, %v1074
      %v1076 = vpop.f32.mrb[0].mxu0
      %v1077 = vadd.f32 0.0, %v1076
      %v1078 = vpop.f32.mrb[0].mxu0
      %v1079 = vadd.f32 0.0, %v1078
      %v1080 = vpop.f32.mrb[0].mxu0
      %v1081 = vadd.f32 0.0, %v1080
      %1082 = vmatprep.mubr.bf16.mxu0 0
      %1083 = vmatmul.mubr.bf16.gmra.mrb[0].mxu0 %v896
      %v1084 = vpop.f32.mrb[0].mxu0
      %v1085 = vadd.f32 0.0, %v1084
      %v1086 = vpop.f32.mrb[0].mxu0
      %v1087 = vadd.f32 0.0, %v1086
      %v1088 = vpop.f32.mrb[0].mxu0
      %v1089 = vadd.f32 0.0, %v1088
      %v1090 = vpop.f32.mrb[0].mxu0
      %v1091 = vadd.f32 0.0, %v1090
      %1092 = vdwg.mxu0
      %1093 = vmatprep.subr.bf16.mxu0 %v778
      %1094 = vmatpush1.bf16.msra.mxu0 %v777
      %1095 = vmatprep.subr.bf16.mxu0 %v794
      %1096 = vmatpush1.bf16.msra.mxu0 %v793
      %1097 = vmatprep.subr.bf16.mxu0 %v810
      %1098 = vmatpush1.bf16.msra.mxu0 %v809
      %1099 = vmatprep.subr.bf16.mxu0 %v915
      %1100 = vmatpush1.bf16.msra.mxu0 %v912
      %1101 = vmatprep.subr.bf16.mxu0 0
      %1102 = vmatpush1.bf16.msra.mxu0 0
      %1103 = vmatprep.subr.bf16.mxu0 0
      %1104 = vmatpush1.bf16.msra.mxu0 0
      %1105 = vmatprep.subr.bf16.mxu0 0
      %1106 = vmatpush1.bf16.msra.mxu0 0
      %1107 = vmatprep.subr.bf16.mxu0 0
      %1108 = vmatpush1.bf16.msra.mxu0 0
      %1109 = vmatprep.subr.bf16.mxu0 0
      %1110 = vmatpush1.bf16.msra.mxu0 0
      %1111 = vmatprep.subr.bf16.mxu0 0
      %1112 = vmatpush1.bf16.msra.mxu0 0
      %1113 = vmatprep.subr.bf16.mxu0 0
      %1114 = vmatpush1.bf16.msra.mxu0 0
      %1115 = vmatprep.subr.bf16.mxu0 0
      %1116 = vmatpush1.bf16.msra.mxu0 0
      %1117 = vmatprep.subr.bf16.mxu0 0
      %1118 = vmatpush1.bf16.msra.mxu0 0
      %1119 = vmatprep.subr.bf16.mxu0 0
      %1120 = vmatpush1.bf16.msra.mxu0 0
      %1121 = vmatprep.subr.bf16.mxu0 0
      %1122 = vmatpush1.bf16.msra.mxu0 0
      %1123 = vmatprep.subr.bf16.mxu0 0
      %1124 = vmatpush1.bf16.msra.mxu0 0
      %1125 = vmatprep.mubr.bf16.mxu0 0
      %1126 = vmatmul.mubr.bf16.gmra.mrb[0].mxu0 %v887
      %v1127 = vpop.f32.mrb[0].mxu0
      %v1128 = vadd.f32 0.0, %v1127
      %v1129 = vpop.f32.mrb[0].mxu0
      %v1130 = vadd.f32 0.0, %v1129
      %v1131 = vpop.f32.mrb[0].mxu0
      %v1132 = vadd.f32 0.0, %v1131
      %v1133 = vpop.f32.mrb[0].mxu0
      %v1134 = vadd.f32 0.0, %v1133
      %1135 = vmatprep.mubr.bf16.mxu0 0
      %1136 = vmatmul.mubr.bf16.gmra.mrb[0].mxu0 %v890
      %v1137 = vpop.f32.mrb[0].mxu0
      %v1138 = vadd.f32 0.0, %v1137
      %v1139 = vpop.f32.mrb[0].mxu0
      %v1140 = vadd.f32 0.0, %v1139
      %v1141 = vpop.f32.mrb[0].mxu0
      %v1142 = vadd.f32 0.0, %v1141
      %v1143 = vpop.f32.mrb[0].mxu0
      %v1144 = vadd.f32 0.0, %v1143
      %1145 = vmatprep.mubr.bf16.mxu0 0
      %1146 = vmatmul.mubr.bf16.gmra.mrb[0].mxu0 %v893
      %v1147 = vpop.f32.mrb[0].mxu0
      %v1148 = vadd.f32 0.0, %v1147
      %v1149 = vpop.f32.mrb[0].mxu0
      %v1150 = vadd.f32 0.0, %v1149
      %v1151 = vpop.f32.mrb[0].mxu0
      %v1152 = vadd.f32 0.0, %v1151
      %v1153 = vpop.f32.mrb[0].mxu0
      %v1154 = vadd.f32 0.0, %v1153
      %1155 = vmatprep.mubr.bf16.mxu0 0
      %1156 = vmatmul.mubr.bf16.gmra.mrb[0].mxu0 %v896
      %v1157 = vpop.f32.mrb[0].mxu0
      %v1158 = vadd.f32 0.0, %v1157
      %v1159 = vpop.f32.mrb[0].mxu0
      %v1160 = vadd.f32 0.0, %v1159
      %v1161 = vpop.f32.mrb[0].mxu0
      %v1162 = vadd.f32 0.0, %v1161
      %v1163 = vpop.f32.mrb[0].mxu0
      %v1164 = vadd.f32 0.0, %v1163
      %1165 = vdwg.mxu0
      %1166 = vmatprep.subr.bf16.mxu0 %v780
      %1167 = vmatpush1.bf16.msra.mxu0 %v779
      %1168 = vmatprep.subr.bf16.mxu0 %v796
      %1169 = vmatpush1.bf16.msra.mxu0 %v795
      %1170 = vmatprep.subr.bf16.mxu0 %v812
      %1171 = vmatpush1.bf16.msra.mxu0 %v811
      %1172 = vmatprep.subr.bf16.mxu0 %v921
      %1173 = vmatpush1.bf16.msra.mxu0 %v918
      %1174 = vmatprep.subr.bf16.mxu0 0
      %1175 = vmatpush1.bf16.msra.mxu0 0
      %1176 = vmatprep.subr.bf16.mxu0 0
      %1177 = vmatpush1.bf16.msra.mxu0 0
      %1178 = vmatprep.subr.bf16.mxu0 0
      %1179 = vmatpush1.bf16.msra.mxu0 0
      %1180 = vmatprep.subr.bf16.mxu0 0
      %1181 = vmatpush1.bf16.msra.mxu0 0
      %1182 = vmatprep.subr.bf16.mxu0 0
      %1183 = vmatpush1.bf16.msra.mxu0 0
      %1184 = vmatprep.subr.bf16.mxu0 0
      %1185 = vmatpush1.bf16.msra.mxu0 0
      %1186 = vmatprep.subr.bf16.mxu0 0
      %1187 = vmatpush1.bf16.msra.mxu0 0
      %1188 = vmatprep.subr.bf16.mxu0 0
      %1189 = vmatpush1.bf16.msra.mxu0 0
      %1190 = vmatprep.subr.bf16.mxu0 0
      %1191 = vmatpush1.bf16.msra.mxu0 0
      %1192 = vmatprep.subr.bf16.mxu0 0
      %1193 = vmatpush1.bf16.msra.mxu0 0
      %1194 = vmatprep.subr.bf16.mxu0 0
      %1195 = vmatpush1.bf16.msra.mxu0 0
      %1196 = vmatprep.subr.bf16.mxu0 0
      %1197 = vmatpush1.bf16.msra.mxu0 0
      %1198 = vmatprep.mubr.bf16.mxu0 0
      %1199 = vmatmul.mubr.bf16.gmra.mrb[0].mxu0 %v887
      %v1200 = vpop.f32.mrb[0].mxu0
      %v1201 = vadd.f32 0.0, %v1200
      %v1202 = vpop.f32.mrb[0].mxu0
      %v1203 = vadd.f32 0.0, %v1202
      %v1204 = vpop.f32.mrb[0].mxu0
      %v1205 = vadd.f32 0.0, %v1204
      %v1206 = vpop.f32.mrb[0].mxu0
      %v1207 = vadd.f32 0.0, %v1206
      %1208 = vmatprep.mubr.bf16.mxu0 0
      %1209 = vmatmul.mubr.bf16.gmra.mrb[0].mxu0 %v890
      %v1210 = vpop.f32.mrb[0].mxu0
      %v1211 = vadd.f32 0.0, %v1210
      %v1212 = vpop.f32.mrb[0].mxu0
      %v1213 = vadd.f32 0.0, %v1212
      %v1214 = vpop.f32.mrb[0].mxu0
      %v1215 = vadd.f32 0.0, %v1214
      %v1216 = vpop.f32.mrb[0].mxu0
      %v1217 = vadd.f32 0.0, %v1216
      %1218 = vmatprep.mubr.bf16.mxu0 0
      %1219 = vmatmul.mubr.bf16.gmra.mrb[0].mxu0 %v893
      %v1220 = vpop.f32.mrb[0].mxu0
      %v1221 = vadd.f32 0.0, %v1220
      %v1222 = vpop.f32.mrb[0].mxu0
      %v1223 = vadd.f32 0.0, %v1222
      %v1224 = vpop.f32.mrb[0].mxu0
      %v1225 = vadd.f32 0.0, %v1224
      %v1226 = vpop.f32.mrb[0].mxu0
      %v1227 = vadd.f32 0.0, %v1226
      %1228 = vmatprep.mubr.bf16.mxu0 0
      %1229 = vmatmul.mubr.bf16.gmra.mrb[0].mxu0 %v896
      %v1230 = vpop.f32.mrb[0].mxu0
      %v1231 = vadd.f32 0.0, %v1230
      %v1232 = vpop.f32.mrb[0].mxu0
      %v1233 = vadd.f32 0.0, %v1232
      %v1234 = vpop.f32.mrb[0].mxu0
      %v1235 = vadd.f32 0.0, %v1234
      %v1236 = vpop.f32.mrb[0].mxu0
      %v1237 = vadd.f32 0.0, %v1236
      %1238 = vdwg.mxu0
      %1239 = vmatprep.subr.bf16.mxu0 %v782
      %1240 = vmatpush1.bf16.msra.mxu0 %v781
      %1241 = vmatprep.subr.bf16.mxu0 %v798
      %1242 = vmatpush1.bf16.msra.mxu0 %v797
      %1243 = vmatprep.subr.bf16.mxu0 %v814
      %1244 = vmatpush1.bf16.msra.mxu0 %v813
      %1245 = vmatprep.subr.bf16.mxu0 %v927
      %1246 = vmatpush1.bf16.msra.mxu0 %v924
      %1247 = vmatprep.subr.bf16.mxu0 0
      %1248 = vmatpush1.bf16.msra.mxu0 0
      %1249 = vmatprep.subr.bf16.mxu0 0
      %1250 = vmatpush1.bf16.msra.mxu0 0
      %1251 = vmatprep.subr.bf16.mxu0 0
      %1252 = vmatpush1.bf16.msra.mxu0 0
      %1253 = vmatprep.subr.bf16.mxu0 0
      %1254 = vmatpush1.bf16.msra.mxu0 0
      %1255 = vmatprep.subr.bf16.mxu0 0
      %1256 = vmatpush1.bf16.msra.mxu0 0
      %1257 = vmatprep.subr.bf16.mxu0 0
      %1258 = vmatpush1.bf16.msra.mxu0 0
      %1259 = vmatprep.subr.bf16.mxu0 0
      %1260 = vmatpush1.bf16.msra.mxu0 0
      %1261 = vmatprep.subr.bf16.mxu0 0
      %1262 = vmatpush1.bf16.msra.mxu0 0
      %1263 = vmatprep.subr.bf16.mxu0 0
      %1264 = vmatpush1.bf16.msra.mxu0 0
      %1265 = vmatprep.subr.bf16.mxu0 0
      %1266 = vmatpush1.bf16.msra.mxu0 0
      %1267 = vmatprep.subr.bf16.mxu0 0
      %1268 = vmatpush1.bf16.msra.mxu0 0
      %1269 = vmatprep.subr.bf16.mxu0 0
      %1270 = vmatpush1.bf16.msra.mxu0 0
      %1271 = vmatprep.mubr.bf16.mxu0 0
      %1272 = vmatmul.mubr.bf16.gmra.mrb[0].mxu0 %v887
      %v1273 = vpop.f32.mrb[0].mxu0
      %v1274 = vadd.f32 0.0, %v1273
      %v1275 = vpop.f32.mrb[0].mxu0
      %v1276 = vadd.f32 0.0, %v1275
      %v1277 = vpop.f32.mrb[0].mxu0
      %v1278 = vadd.f32 0.0, %v1277
      %v1279 = vpop.f32.mrb[0].mxu0
      %v1280 = vadd.f32 0.0, %v1279
      %1281 = vmatprep.mubr.bf16.mxu0 0
      %1282 = vmatmul.mubr.bf16.gmra.mrb[0].mxu0 %v890
      %v1283 = vpop.f32.mrb[0].mxu0
      %v1284 = vadd.f32 0.0, %v1283
      %v1285 = vpop.f32.mrb[0].mxu0
      %v1286 = vadd.f32 0.0, %v1285
      %v1287 = vpop.f32.mrb[0].mxu0
      %v1288 = vadd.f32 0.0, %v1287
      %v1289 = vpop.f32.mrb[0].mxu0
      %v1290 = vadd.f32 0.0, %v1289
      %1291 = vmatprep.mubr.bf16.mxu0 0
      %1292 = vmatmul.mubr.bf16.gmra.mrb[0].mxu0 %v893
      %v1293 = vpop.f32.mrb[0].mxu0
      %v1294 = vadd.f32 0.0, %v1293
      %v1295 = vpop.f32.mrb[0].mxu0
      %v1296 = vadd.f32 0.0, %v1295
      %v1297 = vpop.f32.mrb[0].mxu0
      %v1298 = vadd.f32 0.0, %v1297
      %v1299 = vpop.f32.mrb[0].mxu0
      %v1300 = vadd.f32 0.0, %v1299
      %1301 = vmatprep.mubr.bf16.mxu0 0
      %1302 = vmatmul.mubr.bf16.gmra.mrb[0].mxu0 %v896
      %v1303 = vpop.f32.mrb[0].mxu0
      %v1304 = vadd.f32 0.0, %v1303
      %v1305 = vpop.f32.mrb[0].mxu0
      %v1306 = vadd.f32 0.0, %v1305
      %v1307 = vpop.f32.mrb[0].mxu0
      %v1308 = vadd.f32 0.0, %v1307
      %v1309 = vpop.f32.mrb[0].mxu0
      %v1310 = vadd.f32 0.0, %v1309
      %1311 = vdwg.mxu0
      %1312 = vmatprep.subr.bf16.mxu0 %v784
      %1313 = vmatpush1.bf16.msra.mxu0 %v783
      %1314 = vmatprep.subr.bf16.mxu0 %v800
      %1315 = vmatpush1.bf16.msra.mxu0 %v799
      %1316 = vmatprep.subr.bf16.mxu0 %v816
      %1317 = vmatpush1.bf16.msra.mxu0 %v815
      %1318 = vmatprep.subr.bf16.mxu0 %v933
      %1319 = vmatpush1.bf16.msra.mxu0 %v930
      %1320 = vmatprep.subr.bf16.mxu0 0
      %1321 = vmatpush1.bf16.msra.mxu0 0
      %1322 = vmatprep.subr.bf16.mxu0 0
      %1323 = vmatpush1.bf16.msra.mxu0 0
      %1324 = vmatprep.subr.bf16.mxu0 0
      %1325 = vmatpush1.bf16.msra.mxu0 0
      %1326 = vmatprep.subr.bf16.mxu0 0
      %1327 = vmatpush1.bf16.msra.mxu0 0
      %1328 = vmatprep.subr.bf16.mxu0 0
      %1329 = vmatpush1.bf16.msra.mxu0 0
      %1330 = vmatprep.subr.bf16.mxu0 0
      %1331 = vmatpush1.bf16.msra.mxu0 0
      %1332 = vmatprep.subr.bf16.mxu0 0
      %1333 = vmatpush1.bf16.msra.mxu0 0
      %1334 = vmatprep.subr.bf16.mxu0 0
      %1335 = vmatpush1.bf16.msra.mxu0 0
      %1336 = vmatprep.subr.bf16.mxu0 0
      %1337 = vmatpush1.bf16.msra.mxu0 0
      %1338 = vmatprep.subr.bf16.mxu0 0
      %1339 = vmatpush1.bf16.msra.mxu0 0
      %1340 = vmatprep.subr.bf16.mxu0 0
      %1341 = vmatpush1.bf16.msra.mxu0 0
      %1342 = vmatprep.subr.bf16.mxu0 0
      %1343 = vmatpush1.bf16.msra.mxu0 0
      %1344 = vmatprep.mubr.bf16.mxu0 0
      %1345 = vmatmul.mubr.bf16.gmra.mrb[0].mxu0 %v887
      %v1346 = vpop.f32.mrb[0].mxu0
      %v1347 = vadd.f32 0.0, %v1346
      %v1348 = vpop.f32.mrb[0].mxu0
      %v1349 = vadd.f32 0.0, %v1348
      %v1350 = vpop.f32.mrb[0].mxu0
      %v1351 = vadd.f32 0.0, %v1350
      %v1352 = vpop.f32.mrb[0].mxu0
      %v1353 = vadd.f32 0.0, %v1352
      %1354 = vmatprep.mubr.bf16.mxu0 0
      %1355 = vmatmul.mubr.bf16.gmra.mrb[0].mxu0 %v890
      %v1356 = vpop.f32.mrb[0].mxu0
      %v1357 = vadd.f32 0.0, %v1356
      %v1358 = vpop.f32.mrb[0].mxu0
      %v1359 = vadd.f32 0.0, %v1358
      %v1360 = vpop.f32.mrb[0].mxu0
      %v1361 = vadd.f32 0.0, %v1360
      %v1362 = vpop.f32.mrb[0].mxu0
      %v1363 = vadd.f32 0.0, %v1362
      %1364 = vmatprep.mubr.bf16.mxu0 0
      %1365 = vmatmul.mubr.bf16.gmra.mrb[0].mxu0 %v893
      %v1366 = vpop.f32.mrb[0].mxu0
      %v1367 = vadd.f32 0.0, %v1366
      %v1368 = vpop.f32.mrb[0].mxu0
      %v1369 = vadd.f32 0.0, %v1368
      %v1370 = vpop.f32.mrb[0].mxu0
      %v1371 = vadd.f32 0.0, %v1370
      %v1372 = vpop.f32.mrb[0].mxu0
      %v1373 = vadd.f32 0.0, %v1372
      %1374 = vmatprep.mubr.bf16.mxu0 0
      %1375 = vmatmul.mubr.bf16.gmra.mrb[0].mxu0 %v896
      %v1376 = vpop.f32.mrb[0].mxu0
      %v1377 = vadd.f32 0.0, %v1376
      %v1378 = vpop.f32.mrb[0].mxu0
      %v1379 = vadd.f32 0.0, %v1378
      %v1380 = vpop.f32.mrb[0].mxu0
      %v1381 = vadd.f32 0.0, %v1380
      %v1382 = vpop.f32.mrb[0].mxu0
      %v1383 = vadd.f32 0.0, %v1382
      %1384 = vdwg.mxu0
      %1385 = vmatprep.subr.bf16.mxu0 %v786
      %1386 = vmatpush1.bf16.msra.mxu0 %v785
      %1387 = vmatprep.subr.bf16.mxu0 %v802
      %1388 = vmatpush1.bf16.msra.mxu0 %v801
      %1389 = vmatprep.subr.bf16.mxu0 %v818
      %1390 = vmatpush1.bf16.msra.mxu0 %v817
      %1391 = vmatprep.subr.bf16.mxu0 %v939
      %1392 = vmatpush1.bf16.msra.mxu0 %v936
      %1393 = vmatprep.subr.bf16.mxu0 0
      %1394 = vmatpush1.bf16.msra.mxu0 0
      %1395 = vmatprep.subr.bf16.mxu0 0
      %1396 = vmatpush1.bf16.msra.mxu0 0
      %1397 = vmatprep.subr.bf16.mxu0 0
      %1398 = vmatpush1.bf16.msra.mxu0 0
      %1399 = vmatprep.subr.bf16.mxu0 0
      %1400 = vmatpush1.bf16.msra.mxu0 0
      %1401 = vmatprep.subr.bf16.mxu0 0
      %1402 = vmatpush1.bf16.msra.mxu0 0
      %1403 = vmatprep.subr.bf16.mxu0 0
      %1404 = vmatpush1.bf16.msra.mxu0 0
      %1405 = vmatprep.subr.bf16.mxu0 0
      %1406 = vmatpush1.bf16.msra.mxu0 0
      %1407 = vmatprep.subr.bf16.mxu0 0
      %1408 = vmatpush1.bf16.msra.mxu0 0
      %1409 = vmatprep.subr.bf16.mxu0 0
      %1410 = vmatpush1.bf16.msra.mxu0 0
      %1411 = vmatprep.subr.bf16.mxu0 0
      %1412 = vmatpush1.bf16.msra.mxu0 0
      %1413 = vmatprep.subr.bf16.mxu0 0
      %1414 = vmatpush1.bf16.msra.mxu0 0
      %1415 = vmatprep.subr.bf16.mxu0 0
      %1416 = vmatpush1.bf16.msra.mxu0 0
      %1417 = vmatprep.mubr.bf16.mxu0 0
      %1418 = vmatmul.mubr.bf16.gmra.mrb[0].mxu0 %v887
      %v1419 = vpop.f32.mrb[0].mxu0
      %v1420 = vadd.f32 0.0, %v1419
      %v1421 = vpop.f32.mrb[0].mxu0
      %v1422 = vadd.f32 0.0, %v1421
      %v1423 = vpop.f32.mrb[0].mxu0
      %v1424 = vadd.f32 0.0, %v1423
      %v1425 = vpop.f32.mrb[0].mxu0
      %v1426 = vadd.f32 0.0, %v1425
      %1427 = vmatprep.mubr.bf16.mxu0 0
      %1428 = vmatmul.mubr.bf16.gmra.mrb[0].mxu0 %v890
      %v1429 = vpop.f32.mrb[0].mxu0
      %v1430 = vadd.f32 0.0, %v1429
      %v1431 = vpop.f32.mrb[0].mxu0
      %v1432 = vadd.f32 0.0, %v1431
      %v1433 = vpop.f32.mrb[0].mxu0
      %v1434 = vadd.f32 0.0, %v1433
      %v1435 = vpop.f32.mrb[0].mxu0
      %v1436 = vadd.f32 0.0, %v1435
      %1437 = vmatprep.mubr.bf16.mxu0 0
      %1438 = vmatmul.mubr.bf16.gmra.mrb[0].mxu0 %v893
      %v1439 = vpop.f32.mrb[0].mxu0
      %v1440 = vadd.f32 0.0, %v1439
      %v1441 = vpop.f32.mrb[0].mxu0
      %v1442 = vadd.f32 0.0, %v1441
      %v1443 = vpop.f32.mrb[0].mxu0
      %v1444 = vadd.f32 0.0, %v1443
      %v1445 = vpop.f32.mrb[0].mxu0
      %v1446 = vadd.f32 0.0, %v1445
      %1447 = vmatprep.mubr.bf16.mxu0 0
      %1448 = vmatmul.mubr.bf16.gmra.mrb[0].mxu0 %v896
      %v1449 = vpop.f32.mrb[0].mxu0
      %v1450 = vadd.f32 0.0, %v1449
      %v1451 = vpop.f32.mrb[0].mxu0
      %v1452 = vadd.f32 0.0, %v1451
      %v1453 = vpop.f32.mrb[0].mxu0
      %v1454 = vadd.f32 0.0, %v1453
      %v1455 = vpop.f32.mrb[0].mxu0
      %v1456 = vadd.f32 0.0, %v1455
      %1457 = vdwg.mxu0
      %1458 = vmatprep.subr.bf16.mxu0 %v788
      %1459 = vmatpush1.bf16.msra.mxu0 %v787
      %1460 = vmatprep.subr.bf16.mxu0 %v804
      %1461 = vmatpush1.bf16.msra.mxu0 %v803
      %1462 = vmatprep.subr.bf16.mxu0 %v820
      %1463 = vmatpush1.bf16.msra.mxu0 %v819
      %1464 = vmatprep.subr.bf16.mxu0 %v945
      %1465 = vmatpush1.bf16.msra.mxu0 %v942
      %1466 = vmatprep.subr.bf16.mxu0 0
      %1467 = vmatpush1.bf16.msra.mxu0 0
      %1468 = vmatprep.subr.bf16.mxu0 0
      %1469 = vmatpush1.bf16.msra.mxu0 0
      %1470 = vmatprep.subr.bf16.mxu0 0
      %1471 = vmatpush1.bf16.msra.mxu0 0
      %1472 = vmatprep.subr.bf16.mxu0 0
      %1473 = vmatpush1.bf16.msra.mxu0 0
      %1474 = vmatprep.subr.bf16.mxu0 0
      %1475 = vmatpush1.bf16.msra.mxu0 0
      %1476 = vmatprep.subr.bf16.mxu0 0
      %1477 = vmatpush1.bf16.msra.mxu0 0
      %1478 = vmatprep.subr.bf16.mxu0 0
      %1479 = vmatpush1.bf16.msra.mxu0 0
      %1480 = vmatprep.subr.bf16.mxu0 0
      %1481 = vmatpush1.bf16.msra.mxu0 0
      %1482 = vmatprep.subr.bf16.mxu0 0
      %1483 = vmatpush1.bf16.msra.mxu0 0
      %1484 = vmatprep.subr.bf16.mxu0 0
      %1485 = vmatpush1.bf16.msra.mxu0 0
      %1486 = vmatprep.subr.bf16.mxu0 0
      %1487 = vmatpush1.bf16.msra.mxu0 0
      %1488 = vmatprep.subr.bf16.mxu0 0
      %1489 = vmatpush1.bf16.msra.mxu0 0
      %1490 = vmatprep.mubr.bf16.mxu0 0
      %1491 = vmatmul.mubr.bf16.gmra.mrb[0].mxu0 %v887
      %v1492 = vpop.f32.mrb[0].mxu0
      %v1493 = vadd.f32 0.0, %v1492
      %v1494 = vpop.f32.mrb[0].mxu0
      %v1495 = vadd.f32 0.0, %v1494
      %v1496 = vpop.f32.mrb[0].mxu0
      %v1497 = vadd.f32 0.0, %v1496
      %v1498 = vpop.f32.mrb[0].mxu0
      %v1499 = vadd.f32 0.0, %v1498
      %1500 = vmatprep.mubr.bf16.mxu0 0
      %1501 = vmatmul.mubr.bf16.gmra.mrb[0].mxu0 %v890
      %v1502 = vpop.f32.mrb[0].mxu0
      %v1503 = vadd.f32 0.0, %v1502
      %v1504 = vpop.f32.mrb[0].mxu0
      %v1505 = vadd.f32 0.0, %v1504
      %v1506 = vpop.f32.mrb[0].mxu0
      %v1507 = vadd.f32 0.0, %v1506
      %v1508 = vpop.f32.mrb[0].mxu0
      %v1509 = vadd.f32 0.0, %v1508
      %1510 = vmatprep.mubr.bf16.mxu0 0
      %1511 = vmatmul.mubr.bf16.gmra.mrb[0].mxu0 %v893
      %v1512 = vpop.f32.mrb[0].mxu0
      %v1513 = vadd.f32 0.0, %v1512
      %v1514 = vpop.f32.mrb[0].mxu0
      %v1515 = vadd.f32 0.0, %v1514
      %v1516 = vpop.f32.mrb[0].mxu0
      %v1517 = vadd.f32 0.0, %v1516
      %v1518 = vpop.f32.mrb[0].mxu0
      %v1519 = vadd.f32 0.0, %v1518
      %1520 = vmatprep.mubr.bf16.mxu0 0
      %1521 = vmatmul.mubr.bf16.gmra.mrb[0].mxu0 %v896
      %v1522 = vpop.f32.mrb[0].mxu0
      %v1523 = vadd.f32 0.0, %v1522
      %v1524 = vpop.f32.mrb[0].mxu0
      %v1525 = vadd.f32 0.0, %v1524
      %v1526 = vpop.f32.mrb[0].mxu0
      %v1527 = vadd.f32 0.0, %v1526
      %v1528 = vpop.f32.mrb[0].mxu0
      %v1529 = vadd.f32 0.0, %v1528
      %1530 = vdwg.mxu0
      %v1539 = vunpack.c.l.b16 %v310
      %v1540 = vunpack.c.l.b16 %v311
      %v1541 = vunpack.c.l.b16 %v312
      %v1542 = vunpack.c.l.b16 %v313
      %v1543 = vunpack.c.l.b16 %v314
      %v1544 = vunpack.c.l.b16 %v315
      %v1545 = vunpack.c.l.b16 %v316
      %v1546 = vunpack.c.l.b16 %v317
      %v1547 = vpack.c.b16 %v1540, %v1539
      %v1548 = vpack.c.b16 %v1542, %v1541
      %v1549 = vpack.c.b16 %v1544, %v1543
      %v1550 = vpack.c.b16 %v1546, %v1545
      %v1671 = vunpack.c.l.b16 %v328
      %v1672 = vunpack.c.h.b16 %v328
      %v1673 = vunpack.c.l.b16 %v329
      %v1674 = vunpack.c.h.b16 %v329
      %v1675 = vunpack.c.l.b16 %v330
      %v1676 = vunpack.c.h.b16 %v330
      %v1677 = vunpack.c.l.b16 %v331
      %v1678 = vunpack.c.h.b16 %v331
      %v1679 = vunpack.c.l.b16 %v332
      %v1680 = vunpack.c.h.b16 %v332
      %v1681 = vunpack.c.l.b16 %v333
      %v1682 = vunpack.c.h.b16 %v333
      %v1683 = vunpack.c.l.b16 %v334
      %v1684 = vunpack.c.h.b16 %v334
      %v1685 = vunpack.c.l.b16 %v335
      %v1686 = vunpack.c.h.b16 %v335
      %v1687 = vunpack.c.l.b16 %v336
      %v1688 = vunpack.c.h.b16 %v336
      %v1689 = vunpack.c.l.b16 %v337
      %v1690 = vunpack.c.h.b16 %v337
      %v1691 = vunpack.c.l.b16 %v338
      %v1692 = vunpack.c.h.b16 %v338
      %v1693 = vunpack.c.l.b16 %v339
      %v1694 = vunpack.c.h.b16 %v339
      %v1695 = vunpack.c.l.b16 %v340
      %v1696 = vunpack.c.h.b16 %v340
      %v1697 = vunpack.c.l.b16 %v341
      %v1698 = vunpack.c.h.b16 %v341
      %v1699 = vunpack.c.l.b16 %v342
      %v1700 = vunpack.c.h.b16 %v342
      %v1701 = vunpack.c.l.b16 %v343
      %v1702 = vunpack.c.h.b16 %v343
      %v1703 = vunpack.c.l.b16 %v344
      %v1704 = vunpack.c.h.b16 %v344
      %v1705 = vunpack.c.l.b16 %v345
      %v1706 = vunpack.c.h.b16 %v345
      %v1707 = vunpack.c.l.b16 %v346
      %v1708 = vunpack.c.h.b16 %v346
      %v1709 = vunpack.c.l.b16 %v347
      %v1710 = vunpack.c.h.b16 %v347
      %v1711 = vunpack.c.l.b16 %v348
      %v1712 = vunpack.c.h.b16 %v348
      %v1713 = vunpack.c.l.b16 %v349
      %v1714 = vunpack.c.h.b16 %v349
      %v1715 = vunpack.c.l.b16 %v350
      %v1716 = vunpack.c.h.b16 %v350
      %v1717 = vunpack.c.l.b16 %v351
      %v1718 = vunpack.c.h.b16 %v351
      %v1719 = vunpack.c.l.b16 %v352
      %v1720 = vunpack.c.h.b16 %v352
      %v1721 = vunpack.c.l.b16 %v353
      %v1722 = vunpack.c.h.b16 %v353
      %v1723 = vunpack.c.l.b16 %v354
      %v1724 = vunpack.c.h.b16 %v354
      %v1725 = vunpack.c.l.b16 %v355
      %v1726 = vunpack.c.h.b16 %v355
      %v1727 = vunpack.c.l.b16 %v356
      %v1728 = vunpack.c.h.b16 %v356
      %v1729 = vunpack.c.l.b16 %v357
      %v1730 = vunpack.c.h.b16 %v357
      %v1731 = vunpack.c.l.b16 %v358
      %v1732 = vunpack.c.h.b16 %v358
      %v1733 = vunpack.c.l.b16 %v359
      %v1734 = vunpack.c.h.b16 %v359
      %v1735 = vunpack.c.l.b16 %v360
      %v1736 = vunpack.c.h.b16 %v360
      %v1737 = vunpack.c.l.b16 %v361
      %v1738 = vunpack.c.h.b16 %v361
      %v1739 = vunpack.c.l.b16 %v362
      %v1740 = vunpack.c.h.b16 %v362
      %v1741 = vunpack.c.l.b16 %v363
      %v1742 = vunpack.c.h.b16 %v363
      %v1743 = vunpack.c.l.b16 %v364
      %v1744 = vunpack.c.h.b16 %v364
      %v1745 = vunpack.c.l.b16 %v365
      %v1746 = vunpack.c.h.b16 %v365
      %v1747 = vunpack.c.l.b16 %v366
      %v1748 = vunpack.c.h.b16 %v366
      %v1749 = vunpack.c.l.b16 %v367
      %v1750 = vunpack.c.h.b16 %v367
      %v1751 = vunpack.c.l.b16 %v368
      %v1752 = vunpack.c.h.b16 %v368
      %v1753 = vunpack.c.l.b16 %v369
      %v1754 = vunpack.c.h.b16 %v369
      %v1755 = vunpack.c.l.b16 %v370
      %v1756 = vunpack.c.h.b16 %v370
      %v1757 = vunpack.c.l.b16 %v371
      %v1758 = vunpack.c.h.b16 %v371
      %v1759 = vunpack.c.l.b16 %v372
      %v1760 = vunpack.c.h.b16 %v372
      %v1761 = vunpack.c.l.b16 %v373
      %v1762 = vunpack.c.h.b16 %v373
      %v1763 = vunpack.c.l.b16 %v374
      %v1764 = vunpack.c.h.b16 %v374
      %v1765 = vunpack.c.l.b16 %v375
      %v1766 = vunpack.c.h.b16 %v375
      %v1767 = vunpack.c.l.b16 %v376
      %v1768 = vunpack.c.h.b16 %v376
      %v1769 = vunpack.c.l.b16 %v377
      %v1770 = vunpack.c.h.b16 %v377
      %v1771 = vunpack.c.l.b16 %v378
      %v1772 = vunpack.c.h.b16 %v378
      %v1773 = vunpack.c.l.b16 %v379
      %v1774 = vunpack.c.h.b16 %v379
      %v1775 = vunpack.c.l.b16 %v380
      %v1776 = vunpack.c.h.b16 %v380
      %v1777 = vunpack.c.l.b16 %v381
      %v1778 = vunpack.c.h.b16 %v381
      %v1779 = vunpack.c.l.b16 %v382
      %v1780 = vunpack.c.h.b16 %v382
      %v1781 = vunpack.c.l.b16 %v383
      %v1782 = vunpack.c.h.b16 %v383
      %v1783 = vunpack.c.l.b16 %v384
      %v1784 = vunpack.c.h.b16 %v384
      %v1785 = vunpack.c.l.b16 %v385
      %v1786 = vunpack.c.h.b16 %v385
      %v1787 = vunpack.c.l.b16 %v386
      %v1788 = vunpack.c.h.b16 %v386
      %v1789 = vunpack.c.l.b16 %v387
      %v1790 = vunpack.c.h.b16 %v387
      %v1791 = vunpack.c.l.b16 %v388
      %v1792 = vunpack.c.h.b16 %v388
      %v1793 = vunpack.c.l.b16 %v389
      %v1794 = vunpack.c.h.b16 %v389
      %v1795 = vunpack.c.l.b16 %v390
      %v1796 = vunpack.c.h.b16 %v390
      %v1797 = vunpack.c.l.b16 %v391
      %v1798 = vunpack.c.h.b16 %v391
      %v1799 = vunpack.c.l.b16 %v392
      %v1800 = vunpack.c.h.b16 %v392
      %v1801 = vunpack.c.l.b16 %v393
      %v1802 = vunpack.c.h.b16 %v393
      %v1803 = vunpack.c.l.b16 %v394
      %v1804 = vunpack.c.h.b16 %v394
      %v1805 = vunpack.c.l.b16 %v395
      %v1806 = vunpack.c.h.b16 %v395
      %v1807 = vunpack.c.l.b16 %v396
      %v1808 = vunpack.c.h.b16 %v396
      %v1809 = vunpack.c.l.b16 %v397
      %v1810 = vunpack.c.h.b16 %v397
      %v1811 = vunpack.c.l.b16 %v398
      %v1812 = vunpack.c.h.b16 %v398
      %v1813 = vunpack.c.l.b16 %v399
      %v1814 = vunpack.c.h.b16 %v399
      %v1815 = vunpack.c.l.b16 %v400
      %v1816 = vunpack.c.h.b16 %v400
      %v1817 = vunpack.c.l.b16 %v401
      %v1818 = vunpack.c.h.b16 %v401
      %v1819 = vunpack.c.l.b16 %v402
      %v1820 = vunpack.c.h.b16 %v402
      %v1821 = vunpack.c.l.b16 %v403
      %v1822 = vunpack.c.h.b16 %v403
      %v1823 = vunpack.c.l.b16 %v404
      %v1824 = vunpack.c.h.b16 %v404
      %v1825 = vunpack.c.l.b16 %v405
      %v1826 = vunpack.c.h.b16 %v405
      %v1827 = vunpack.c.l.b16 %v406
      %v1828 = vunpack.c.h.b16 %v406
      %v1829 = vunpack.c.l.b16 %v407
      %v1830 = vunpack.c.h.b16 %v407
      %v1831 = vunpack.c.l.b16 %v408
      %v1832 = vunpack.c.h.b16 %v408
      %v1833 = vunpack.c.l.b16 %v409
      %v1834 = vunpack.c.h.b16 %v409
      %v1835 = vunpack.c.l.b16 %v410
      %v1836 = vunpack.c.h.b16 %v410
      %v1837 = vunpack.c.l.b16 %v411
      %v1838 = vunpack.c.h.b16 %v411
      %v1839 = vunpack.c.l.b16 %v412
      %v1840 = vunpack.c.h.b16 %v412
      %v1841 = vunpack.c.l.b16 %v413
      %v1842 = vunpack.c.h.b16 %v413
      %v1843 = vunpack.c.l.b16 %v414
      %v1844 = vunpack.c.h.b16 %v414
      %v1845 = vunpack.c.l.b16 %v415
      %v1846 = vunpack.c.h.b16 %v415
      %v1847 = vunpack.c.l.b16 %v416
      %v1848 = vunpack.c.h.b16 %v416
      %v1849 = vunpack.c.l.b16 %v417
      %v1850 = vunpack.c.h.b16 %v417
      %v1851 = vunpack.c.l.b16 %v418
      %v1852 = vunpack.c.h.b16 %v418
      %v1853 = vunpack.c.l.b16 %v419
      %v1854 = vunpack.c.h.b16 %v419
      %v1855 = vunpack.c.l.b16 %v420
      %v1856 = vunpack.c.h.b16 %v420
      %v1857 = vunpack.c.l.b16 %v421
      %v1858 = vunpack.c.h.b16 %v421
      %v1859 = vunpack.c.l.b16 %v422
      %v1860 = vunpack.c.h.b16 %v422
      %v1861 = vunpack.c.l.b16 %v423
      %v1862 = vunpack.c.h.b16 %v423
      %v1863 = vunpack.c.l.b16 %v424
      %v1864 = vunpack.c.h.b16 %v424
      %v1865 = vunpack.c.l.b16 %v425
      %v1866 = vunpack.c.h.b16 %v425
      %v1867 = vunpack.c.l.b16 %v426
      %v1868 = vunpack.c.h.b16 %v426
      %v1869 = vunpack.c.l.b16 %v427
      %v1870 = vunpack.c.h.b16 %v427
      %v1871 = vunpack.c.l.b16 %v428
      %v1872 = vunpack.c.h.b16 %v428
      %v1873 = vunpack.c.l.b16 %v429
      %v1874 = vunpack.c.h.b16 %v429
      %v1875 = vunpack.c.l.b16 %v430
      %v1876 = vunpack.c.h.b16 %v430
      %v1877 = vunpack.c.l.b16 %v431
      %v1878 = vunpack.c.h.b16 %v431
      %v1879 = vunpack.c.l.b16 %v432
      %v1880 = vunpack.c.h.b16 %v432
      %v1881 = vunpack.c.l.b16 %v433
      %v1882 = vunpack.c.h.b16 %v433
      %v1883 = vunpack.c.l.b16 %v434
      %v1884 = vunpack.c.h.b16 %v434
      %v1885 = vunpack.c.l.b16 %v435
      %v1886 = vunpack.c.h.b16 %v435
      %v1887 = vunpack.c.l.b16 %v436
      %v1888 = vunpack.c.h.b16 %v436
      %v1889 = vunpack.c.l.b16 %v437
      %v1890 = vunpack.c.h.b16 %v437
      %v1891 = vunpack.c.l.b16 %v438
      %v1892 = vunpack.c.h.b16 %v438
      %v1893 = vunpack.c.l.b16 %v439
      %v1894 = vunpack.c.h.b16 %v439
      %v1895 = vunpack.c.l.b16 %v440
      %v1896 = vunpack.c.h.b16 %v440
      %v1897 = vunpack.c.l.b16 %v441
      %v1898 = vunpack.c.h.b16 %v441
      %v1899 = vunpack.c.l.b16 %v442
      %v1900 = vunpack.c.h.b16 %v442
      %v1901 = vunpack.c.l.b16 %v443
      %v1902 = vunpack.c.h.b16 %v443
      %v1903 = vunpack.c.l.b16 %v444
      %v1904 = vunpack.c.h.b16 %v444
      %v1905 = vunpack.c.l.b16 %v445
      %v1906 = vunpack.c.h.b16 %v445
      %v1907 = vunpack.c.l.b16 %v446
      %v1908 = vunpack.c.h.b16 %v446
      %v1909 = vunpack.c.l.b16 %v447
      %v1910 = vunpack.c.h.b16 %v447
      %v1911 = vpack.c.b16 %v1687, %v1671
      %v1912 = vpack.c.b16 %v1688, %v1672
      %v1913 = vpack.c.b16 %v1689, %v1673
      %v1914 = vpack.c.b16 %v1690, %v1674
      %v1915 = vpack.c.b16 %v1691, %v1675
      %v1916 = vpack.c.b16 %v1692, %v1676
      %v1917 = vpack.c.b16 %v1693, %v1677
      %v1918 = vpack.c.b16 %v1694, %v1678
      %v1919 = vpack.c.b16 %v1695, %v1679
      %v1920 = vpack.c.b16 %v1696, %v1680
      %v1921 = vpack.c.b16 %v1697, %v1681
      %v1922 = vpack.c.b16 %v1698, %v1682
      %v1923 = vpack.c.b16 %v1699, %v1683
      %v1924 = vpack.c.b16 %v1700, %v1684
      %v1925 = vpack.c.b16 %v1701, %v1685
      %v1926 = vpack.c.b16 %v1702, %v1686
      %v1927 = vpack.c.b16 %v1719, %v1703
      %v1928 = vpack.c.b16 %v1720, %v1704
      %v1929 = vpack.c.b16 %v1721, %v1705
      %v1930 = vpack.c.b16 %v1722, %v1706
      %v1931 = vpack.c.b16 %v1723, %v1707
      %v1932 = vpack.c.b16 %v1724, %v1708
      %v1933 = vpack.c.b16 %v1725, %v1709
      %v1934 = vpack.c.b16 %v1726, %v1710
      %v1935 = vpack.c.b16 %v1727, %v1711
      %v1936 = vpack.c.b16 %v1728, %v1712
      %v1937 = vpack.c.b16 %v1729, %v1713
      %v1938 = vpack.c.b16 %v1730, %v1714
      %v1939 = vpack.c.b16 %v1731, %v1715
      %v1940 = vpack.c.b16 %v1732, %v1716
      %v1941 = vpack.c.b16 %v1733, %v1717
      %v1942 = vpack.c.b16 %v1734, %v1718
      %v1943 = vpack.c.b16 %v1751, %v1735
      %v1944 = vpack.c.b16 %v1752, %v1736
      %v1945 = vpack.c.b16 %v1753, %v1737
      %v1946 = vpack.c.b16 %v1754, %v1738
      %v1947 = vpack.c.b16 %v1755, %v1739
      %v1948 = vpack.c.b16 %v1756, %v1740
      %v1949 = vpack.c.b16 %v1757, %v1741
      %v1950 = vpack.c.b16 %v1758, %v1742
      %v1951 = vpack.c.b16 %v1759, %v1743
      %v1952 = vpack.c.b16 %v1760, %v1744
      %v1953 = vpack.c.b16 %v1761, %v1745
      %v1954 = vpack.c.b16 %v1762, %v1746
      %v1955 = vpack.c.b16 %v1763, %v1747
      %v1956 = vpack.c.b16 %v1764, %v1748
      %v1957 = vpack.c.b16 %v1765, %v1749
      %v1958 = vpack.c.b16 %v1766, %v1750
      %v1959 = vpack.c.b16 %v1783, %v1767
      %v1960 = vpack.c.b16 %v1784, %v1768
      %v1961 = vpack.c.b16 %v1785, %v1769
      %v1962 = vpack.c.b16 %v1786, %v1770
      %v1963 = vpack.c.b16 %v1787, %v1771
      %v1964 = vpack.c.b16 %v1788, %v1772
      %v1965 = vpack.c.b16 %v1789, %v1773
      %v1966 = vpack.c.b16 %v1790, %v1774
      %v1967 = vpack.c.b16 %v1791, %v1775
      %v1968 = vpack.c.b16 %v1792, %v1776
      %v1969 = vpack.c.b16 %v1793, %v1777
      %v1970 = vpack.c.b16 %v1794, %v1778
      %v1971 = vpack.c.b16 %v1795, %v1779
      %v1972 = vpack.c.b16 %v1796, %v1780
      %v1973 = vpack.c.b16 %v1797, %v1781
      %v1974 = vpack.c.b16 %v1798, %v1782
      %v1975 = vpack.c.b16 %v1815, %v1799
      %v1976 = vpack.c.b16 %v1816, %v1800
      %v1977 = vpack.c.b16 %v1817, %v1801
      %v1978 = vpack.c.b16 %v1818, %v1802
      %v1979 = vpack.c.b16 %v1819, %v1803
      %v1980 = vpack.c.b16 %v1820, %v1804
      %v1981 = vpack.c.b16 %v1821, %v1805
      %v1982 = vpack.c.b16 %v1822, %v1806
      %v1983 = vpack.c.b16 %v1823, %v1807
      %v1984 = vpack.c.b16 %v1824, %v1808
      %v1985 = vpack.c.b16 %v1825, %v1809
      %v1986 = vpack.c.b16 %v1826, %v1810
      %v1987 = vpack.c.b16 %v1827, %v1811
      %v1988 = vpack.c.b16 %v1828, %v1812
      %v1989 = vpack.c.b16 %v1829, %v1813
      %v1990 = vpack.c.b16 %v1830, %v1814
      %v1991 = vpack.c.b16 %v1847, %v1831
      %v1992 = vpack.c.b16 %v1848, %v1832
      %v1993 = vpack.c.b16 %v1849, %v1833
      %v1994 = vpack.c.b16 %v1850, %v1834
      %v1995 = vpack.c.b16 %v1851, %v1835
      %v1996 = vpack.c.b16 %v1852, %v1836
      %v1997 = vpack.c.b16 %v1853, %v1837
      %v1998 = vpack.c.b16 %v1854, %v1838
      %v1999 = vpack.c.b16 %v1855, %v1839
      %v2000 = vpack.c.b16 %v1856, %v1840
      %v2001 = vpack.c.b16 %v1857, %v1841
      %v2002 = vpack.c.b16 %v1858, %v1842
      %v2003 = vpack.c.b16 %v1859, %v1843
      %v2004 = vpack.c.b16 %v1860, %v1844
      %v2005 = vpack.c.b16 %v1861, %v1845
      %v2006 = vpack.c.b16 %v1862, %v1846
      %v2007 = vpack.c.b16 %v1879, %v1863
      %v2008 = vpack.c.b16 %v1880, %v1864
      %v2009 = vpack.c.b16 %v1881, %v1865
      %v2010 = vpack.c.b16 %v1882, %v1866
      %v2011 = vpack.c.b16 %v1883, %v1867
      %v2012 = vpack.c.b16 %v1884, %v1868
      %v2013 = vpack.c.b16 %v1885, %v1869
      %v2014 = vpack.c.b16 %v1886, %v1870
      %v2015 = vpack.c.b16 %v1887, %v1871
      %v2016 = vpack.c.b16 %v1888, %v1872
      %v2017 = vpack.c.b16 %v1889, %v1873
      %v2018 = vpack.c.b16 %v1890, %v1874
      %v2019 = vpack.c.b16 %v1891, %v1875
      %v2020 = vpack.c.b16 %v1892, %v1876
      %v2021 = vpack.c.b16 %v1893, %v1877
      %v2022 = vpack.c.b16 %v1894, %v1878
      %v2023 = vpack.c.b16 %v1895, %v1895
      %v2024 = vpack.c.b16 %v1896, %v1896
      %v2025 = vpack.c.b16 %v1897, %v1897
      %v2026 = vpack.c.b16 %v1898, %v1898
      %v2027 = vpack.c.b16 %v1899, %v1899
      %v2028 = vpack.c.b16 %v1900, %v1900
      %v2029 = vpack.c.b16 %v1901, %v1901
      %v2030 = vpack.c.b16 %v1902, %v1902
      %v2031 = vpack.c.b16 %v1903, %v1903
      %v2032 = vpack.c.b16 %v1904, %v1904
      %v2033 = vpack.c.b16 %v1905, %v1905
      %v2034 = vpack.c.b16 %v1906, %v1906
      %v2035 = vpack.c.b16 %v1907, %v1907
      %v2036 = vpack.c.b16 %v1908, %v1908
      %v2037 = vpack.c.b16 %v1909, %v1909
      %v2038 = vpack.c.b16 %v1910, %v1910
      %vm2151 = vcmask 982016
      %v2153 = vsel %vm2151, %v1547, 0
      %v2156 = vsel %vm2151, %v1548, 0
      %v2159 = vsel %vm2151, %v1549, 0
      %v2162 = vsel %vm2151, %v1550, 0
      %vm2164 = vcmask 1043456
      %v2166 = vsel %vm2164, %v2023, 0
      %v2169 = vsel %vm2164, %v2024, 0
      %v2172 = vsel %vm2164, %v2025, 0
      %v2175 = vsel %vm2164, %v2026, 0
      %v2178 = vsel %vm2164, %v2027, 0
      %v2181 = vsel %vm2164, %v2028, 0
      %v2184 = vsel %vm2164, %v2029, 0
      %v2187 = vsel %vm2164, %v2030, 0
      %v2190 = vsel %vm2164, %v2031, 0
      %v2193 = vsel %vm2164, %v2032, 0
      %v2196 = vsel %vm2164, %v2033, 0
      %v2199 = vsel %vm2164, %v2034, 0
      %v2202 = vsel %vm2164, %v2035, 0
      %v2205 = vsel %vm2164, %v2036, 0
      %v2208 = vsel %vm2164, %v2037, 0
      %v2211 = vsel %vm2164, %v2038, 0
      %2213 = vmatprep.subr.bf16.mxu0 %v1912
      %2214 = vmatpush1.bf16.msra.mxu0 %v1911
      %2215 = vmatprep.subr.bf16.mxu0 %v1928
      %2216 = vmatpush1.bf16.msra.mxu0 %v1927
      %2217 = vmatprep.subr.bf16.mxu0 %v1944
      %2218 = vmatpush1.bf16.msra.mxu0 %v1943
      %2219 = vmatprep.subr.bf16.mxu0 %v1960
      %2220 = vmatpush1.bf16.msra.mxu0 %v1959
      %2221 = vmatprep.subr.bf16.mxu0 %v1976
      %2222 = vmatpush1.bf16.msra.mxu0 %v1975
      %2223 = vmatprep.subr.bf16.mxu0 %v1992
      %2224 = vmatpush1.bf16.msra.mxu0 %v1991
      %2225 = vmatprep.subr.bf16.mxu0 %v2008
      %2226 = vmatpush1.bf16.msra.mxu0 %v2007
      %2227 = vmatprep.subr.bf16.mxu0 %v2169
      %2228 = vmatpush1.bf16.msra.mxu0 %v2166
      %2229 = vmatprep.subr.bf16.mxu0 0
      %2230 = vmatpush1.bf16.msra.mxu0 0
      %2231 = vmatprep.subr.bf16.mxu0 0
      %2232 = vmatpush1.bf16.msra.mxu0 0
      %2233 = vmatprep.subr.bf16.mxu0 0
      %2234 = vmatpush1.bf16.msra.mxu0 0
      %2235 = vmatprep.subr.bf16.mxu0 0
      %2236 = vmatpush1.bf16.msra.mxu0 0
      %2237 = vmatprep.subr.bf16.mxu0 0
      %2238 = vmatpush1.bf16.msra.mxu0 0
      %2239 = vmatprep.subr.bf16.mxu0 0
      %2240 = vmatpush1.bf16.msra.mxu0 0
      %2241 = vmatprep.subr.bf16.mxu0 0
      %2242 = vmatpush1.bf16.msra.mxu0 0
      %2243 = vmatprep.subr.bf16.mxu0 0
      %2244 = vmatpush1.bf16.msra.mxu0 0
      %2245 = vmatprep.mubr.bf16.mxu0 0
      %2246 = vmatmul.mubr.bf16.gmra.mrb[0].mxu0 %v2153
      %v2247 = vpop.f32.mrb[0].mxu0
      %v2248 = vadd.f32 %v982, %v2247
      %v2249 = vpop.f32.mrb[0].mxu0
      %v2250 = vadd.f32 %v984, %v2249
      %v2251 = vpop.f32.mrb[0].mxu0
      %v2252 = vadd.f32 %v986, %v2251
      %v2253 = vpop.f32.mrb[0].mxu0
      %v2254 = vadd.f32 %v988, %v2253
      %2255 = vmatprep.mubr.bf16.mxu0 0
      %2256 = vmatmul.mubr.bf16.gmra.mrb[0].mxu0 %v2156
      %v2257 = vpop.f32.mrb[0].mxu0
      %v2258 = vadd.f32 %v992, %v2257
      %v2259 = vpop.f32.mrb[0].mxu0
      %v2260 = vadd.f32 %v994, %v2259
      %v2261 = vpop.f32.mrb[0].mxu0
      %v2262 = vadd.f32 %v996, %v2261
      %v2263 = vpop.f32.mrb[0].mxu0
      %v2264 = vadd.f32 %v998, %v2263
      %2265 = vmatprep.mubr.bf16.mxu0 0
      %2266 = vmatmul.mubr.bf16.gmra.mrb[0].mxu0 %v2159
      %v2267 = vpop.f32.mrb[0].mxu0
      %v2268 = vadd.f32 %v1002, %v2267
      %v2269 = vpop.f32.mrb[0].mxu0
      %v2270 = vadd.f32 %v1004, %v2269
      %v2271 = vpop.f32.mrb[0].mxu0
      %v2272 = vadd.f32 %v1006, %v2271
      %v2273 = vpop.f32.mrb[0].mxu0
      %v2274 = vadd.f32 %v1008, %v2273
      %2275 = vmatprep.mubr.bf16.mxu0 0
      %2276 = vmatmul.mubr.bf16.gmra.mrb[0].mxu0 %v2162
      %v2277 = vpop.f32.mrb[0].mxu0
      %v2278 = vadd.f32 %v1012, %v2277
      %v2279 = vpop.f32.mrb[0].mxu0
      %v2280 = vadd.f32 %v1014, %v2279
      %v2281 = vpop.f32.mrb[0].mxu0
      %v2282 = vadd.f32 %v1016, %v2281
      %v2283 = vpop.f32.mrb[0].mxu0
      %v2284 = vadd.f32 %v1018, %v2283
      %2285 = vdwg.mxu0
      %2286 = vmatprep.subr.bf16.mxu0 %v1914
      %2287 = vmatpush1.bf16.msra.mxu0 %v1913
      %2288 = vmatprep.subr.bf16.mxu0 %v1930
      %2289 = vmatpush1.bf16.msra.mxu0 %v1929
      %2290 = vmatprep.subr.bf16.mxu0 %v1946
      %2291 = vmatpush1.bf16.msra.mxu0 %v1945
      %2292 = vmatprep.subr.bf16.mxu0 %v1962
      %2293 = vmatpush1.bf16.msra.mxu0 %v1961
      %2294 = vmatprep.subr.bf16.mxu0 %v1978
      %2295 = vmatpush1.bf16.msra.mxu0 %v1977
      %2296 = vmatprep.subr.bf16.mxu0 %v1994
      %2297 = vmatpush1.bf16.msra.mxu0 %v1993
      %2298 = vmatprep.subr.bf16.mxu0 %v2010
      %2299 = vmatpush1.bf16.msra.mxu0 %v2009
      %2300 = vmatprep.subr.bf16.mxu0 %v2175
      %2301 = vmatpush1.bf16.msra.mxu0 %v2172
      %2302 = vmatprep.subr.bf16.mxu0 0
      %2303 = vmatpush1.bf16.msra.mxu0 0
      %2304 = vmatprep.subr.bf16.mxu0 0
      %2305 = vmatpush1.bf16.msra.mxu0 0
      %2306 = vmatprep.subr.bf16.mxu0 0
      %2307 = vmatpush1.bf16.msra.mxu0 0
      %2308 = vmatprep.subr.bf16.mxu0 0
      %2309 = vmatpush1.bf16.msra.mxu0 0
      %2310 = vmatprep.subr.bf16.mxu0 0
      %2311 = vmatpush1.bf16.msra.mxu0 0
      %2312 = vmatprep.subr.bf16.mxu0 0
      %2313 = vmatpush1.bf16.msra.mxu0 0
      %2314 = vmatprep.subr.bf16.mxu0 0
      %2315 = vmatpush1.bf16.msra.mxu0 0
      %2316 = vmatprep.subr.bf16.mxu0 0
      %2317 = vmatpush1.bf16.msra.mxu0 0
      %2318 = vmatprep.mubr.bf16.mxu0 0
      %2319 = vmatmul.mubr.bf16.gmra.mrb[0].mxu0 %v2153
      %v2320 = vpop.f32.mrb[0].mxu0
      %v2321 = vadd.f32 %v1055, %v2320
      %v2322 = vpop.f32.mrb[0].mxu0
      %v2323 = vadd.f32 %v1057, %v2322
      %v2324 = vpop.f32.mrb[0].mxu0
      %v2325 = vadd.f32 %v1059, %v2324
      %v2326 = vpop.f32.mrb[0].mxu0
      %v2327 = vadd.f32 %v1061, %v2326
      %2328 = vmatprep.mubr.bf16.mxu0 0
      %2329 = vmatmul.mubr.bf16.gmra.mrb[0].mxu0 %v2156
      %v2330 = vpop.f32.mrb[0].mxu0
      %v2331 = vadd.f32 %v1065, %v2330
      %v2332 = vpop.f32.mrb[0].mxu0
      %v2333 = vadd.f32 %v1067, %v2332
      %v2334 = vpop.f32.mrb[0].mxu0
      %v2335 = vadd.f32 %v1069, %v2334
      %v2336 = vpop.f32.mrb[0].mxu0
      %v2337 = vadd.f32 %v1071, %v2336
      %2338 = vmatprep.mubr.bf16.mxu0 0
      %2339 = vmatmul.mubr.bf16.gmra.mrb[0].mxu0 %v2159
      %v2340 = vpop.f32.mrb[0].mxu0
      %v2341 = vadd.f32 %v1075, %v2340
      %v2342 = vpop.f32.mrb[0].mxu0
      %v2343 = vadd.f32 %v1077, %v2342
      %v2344 = vpop.f32.mrb[0].mxu0
      %v2345 = vadd.f32 %v1079, %v2344
      %v2346 = vpop.f32.mrb[0].mxu0
      %v2347 = vadd.f32 %v1081, %v2346
      %2348 = vmatprep.mubr.bf16.mxu0 0
      %2349 = vmatmul.mubr.bf16.gmra.mrb[0].mxu0 %v2162
      %v2350 = vpop.f32.mrb[0].mxu0
      %v2351 = vadd.f32 %v1085, %v2350
      %v2352 = vpop.f32.mrb[0].mxu0
      %v2353 = vadd.f32 %v1087, %v2352
      %v2354 = vpop.f32.mrb[0].mxu0
      %v2355 = vadd.f32 %v1089, %v2354
      %v2356 = vpop.f32.mrb[0].mxu0
      %v2357 = vadd.f32 %v1091, %v2356
      %2358 = vdwg.mxu0
      %2359 = vmatprep.subr.bf16.mxu0 %v1916
      %2360 = vmatpush1.bf16.msra.mxu0 %v1915
      %2361 = vmatprep.subr.bf16.mxu0 %v1932
      %2362 = vmatpush1.bf16.msra.mxu0 %v1931
      %2363 = vmatprep.subr.bf16.mxu0 %v1948
      %2364 = vmatpush1.bf16.msra.mxu0 %v1947
      %2365 = vmatprep.subr.bf16.mxu0 %v1964
      %2366 = vmatpush1.bf16.msra.mxu0 %v1963
      %2367 = vmatprep.subr.bf16.mxu0 %v1980
      %2368 = vmatpush1.bf16.msra.mxu0 %v1979
      %2369 = vmatprep.subr.bf16.mxu0 %v1996
      %2370 = vmatpush1.bf16.msra.mxu0 %v1995
      %2371 = vmatprep.subr.bf16.mxu0 %v2012
      %2372 = vmatpush1.bf16.msra.mxu0 %v2011
      %2373 = vmatprep.subr.bf16.mxu0 %v2181
      %2374 = vmatpush1.bf16.msra.mxu0 %v2178
      %2375 = vmatprep.subr.bf16.mxu0 0
      %2376 = vmatpush1.bf16.msra.mxu0 0
      %2377 = vmatprep.subr.bf16.mxu0 0
      %2378 = vmatpush1.bf16.msra.mxu0 0
      %2379 = vmatprep.subr.bf16.mxu0 0
      %2380 = vmatpush1.bf16.msra.mxu0 0
      %2381 = vmatprep.subr.bf16.mxu0 0
      %2382 = vmatpush1.bf16.msra.mxu0 0
      %2383 = vmatprep.subr.bf16.mxu0 0
      %2384 = vmatpush1.bf16.msra.mxu0 0
      %2385 = vmatprep.subr.bf16.mxu0 0
      %2386 = vmatpush1.bf16.msra.mxu0 0
      %2387 = vmatprep.subr.bf16.mxu0 0
      %2388 = vmatpush1.bf16.msra.mxu0 0
      %2389 = vmatprep.subr.bf16.mxu0 0
      %2390 = vmatpush1.bf16.msra.mxu0 0
      %2391 = vmatprep.mubr.bf16.mxu0 0
      %2392 = vmatmul.mubr.bf16.gmra.mrb[0].mxu0 %v2153
      %v2393 = vpop.f32.mrb[0].mxu0
      %v2394 = vadd.f32 %v1128, %v2393
      %v2395 = vpop.f32.mrb[0].mxu0
      %v2396 = vadd.f32 %v1130, %v2395
      %v2397 = vpop.f32.mrb[0].mxu0
      %v2398 = vadd.f32 %v1132, %v2397
      %v2399 = vpop.f32.mrb[0].mxu0
      %v2400 = vadd.f32 %v1134, %v2399
      %2401 = vmatprep.mubr.bf16.mxu0 0
      %2402 = vmatmul.mubr.bf16.gmra.mrb[0].mxu0 %v2156
      %v2403 = vpop.f32.mrb[0].mxu0
      %v2404 = vadd.f32 %v1138, %v2403
      %v2405 = vpop.f32.mrb[0].mxu0
      %v2406 = vadd.f32 %v1140, %v2405
      %v2407 = vpop.f32.mrb[0].mxu0
      %v2408 = vadd.f32 %v1142, %v2407
      %v2409 = vpop.f32.mrb[0].mxu0
      %v2410 = vadd.f32 %v1144, %v2409
      %2411 = vmatprep.mubr.bf16.mxu0 0
      %2412 = vmatmul.mubr.bf16.gmra.mrb[0].mxu0 %v2159
      %v2413 = vpop.f32.mrb[0].mxu0
      %v2414 = vadd.f32 %v1148, %v2413
      %v2415 = vpop.f32.mrb[0].mxu0
      %v2416 = vadd.f32 %v1150, %v2415
      %v2417 = vpop.f32.mrb[0].mxu0
      %v2418 = vadd.f32 %v1152, %v2417
      %v2419 = vpop.f32.mrb[0].mxu0
      %v2420 = vadd.f32 %v1154, %v2419
      %2421 = vmatprep.mubr.bf16.mxu0 0
      %2422 = vmatmul.mubr.bf16.gmra.mrb[0].mxu0 %v2162
      %v2423 = vpop.f32.mrb[0].mxu0
      %v2424 = vadd.f32 %v1158, %v2423
      %v2425 = vpop.f32.mrb[0].mxu0
      %v2426 = vadd.f32 %v1160, %v2425
      %v2427 = vpop.f32.mrb[0].mxu0
      %v2428 = vadd.f32 %v1162, %v2427
      %v2429 = vpop.f32.mrb[0].mxu0
      %v2430 = vadd.f32 %v1164, %v2429
      %2431 = vdwg.mxu0
      %2432 = vmatprep.subr.bf16.mxu0 %v1918
      %2433 = vmatpush1.bf16.msra.mxu0 %v1917
      %2434 = vmatprep.subr.bf16.mxu0 %v1934
      %2435 = vmatpush1.bf16.msra.mxu0 %v1933
      %2436 = vmatprep.subr.bf16.mxu0 %v1950
      %2437 = vmatpush1.bf16.msra.mxu0 %v1949
      %2438 = vmatprep.subr.bf16.mxu0 %v1966
      %2439 = vmatpush1.bf16.msra.mxu0 %v1965
      %2440 = vmatprep.subr.bf16.mxu0 %v1982
      %2441 = vmatpush1.bf16.msra.mxu0 %v1981
      %2442 = vmatprep.subr.bf16.mxu0 %v1998
      %2443 = vmatpush1.bf16.msra.mxu0 %v1997
      %2444 = vmatprep.subr.bf16.mxu0 %v2014
      %2445 = vmatpush1.bf16.msra.mxu0 %v2013
      %2446 = vmatprep.subr.bf16.mxu0 %v2187
      %2447 = vmatpush1.bf16.msra.mxu0 %v2184
      %2448 = vmatprep.subr.bf16.mxu0 0
      %2449 = vmatpush1.bf16.msra.mxu0 0
      %2450 = vmatprep.subr.bf16.mxu0 0
      %2451 = vmatpush1.bf16.msra.mxu0 0
      %2452 = vmatprep.subr.bf16.mxu0 0
      %2453 = vmatpush1.bf16.msra.mxu0 0
      %2454 = vmatprep.subr.bf16.mxu0 0
      %2455 = vmatpush1.bf16.msra.mxu0 0
      %2456 = vmatprep.subr.bf16.mxu0 0
      %2457 = vmatpush1.bf16.msra.mxu0 0
      %2458 = vmatprep.subr.bf16.mxu0 0
      %2459 = vmatpush1.bf16.msra.mxu0 0
      %2460 = vmatprep.subr.bf16.mxu0 0
      %2461 = vmatpush1.bf16.msra.mxu0 0
      %2462 = vmatprep.subr.bf16.mxu0 0
      %2463 = vmatpush1.bf16.msra.mxu0 0
      %2464 = vmatprep.mubr.bf16.mxu0 0
      %2465 = vmatmul.mubr.bf16.gmra.mrb[0].mxu0 %v2153
      %v2466 = vpop.f32.mrb[0].mxu0
      %v2467 = vadd.f32 %v1201, %v2466
      %v2468 = vpop.f32.mrb[0].mxu0
      %v2469 = vadd.f32 %v1203, %v2468
      %v2470 = vpop.f32.mrb[0].mxu0
      %v2471 = vadd.f32 %v1205, %v2470
      %v2472 = vpop.f32.mrb[0].mxu0
      %v2473 = vadd.f32 %v1207, %v2472
      %2474 = vmatprep.mubr.bf16.mxu0 0
      %2475 = vmatmul.mubr.bf16.gmra.mrb[0].mxu0 %v2156
      %v2476 = vpop.f32.mrb[0].mxu0
      %v2477 = vadd.f32 %v1211, %v2476
      %v2478 = vpop.f32.mrb[0].mxu0
      %v2479 = vadd.f32 %v1213, %v2478
      %v2480 = vpop.f32.mrb[0].mxu0
      %v2481 = vadd.f32 %v1215, %v2480
      %v2482 = vpop.f32.mrb[0].mxu0
      %v2483 = vadd.f32 %v1217, %v2482
      %2484 = vmatprep.mubr.bf16.mxu0 0
      %2485 = vmatmul.mubr.bf16.gmra.mrb[0].mxu0 %v2159
      %v2486 = vpop.f32.mrb[0].mxu0
      %v2487 = vadd.f32 %v1221, %v2486
      %v2488 = vpop.f32.mrb[0].mxu0
      %v2489 = vadd.f32 %v1223, %v2488
      %v2490 = vpop.f32.mrb[0].mxu0
      %v2491 = vadd.f32 %v1225, %v2490
      %v2492 = vpop.f32.mrb[0].mxu0
      %v2493 = vadd.f32 %v1227, %v2492
      %2494 = vmatprep.mubr.bf16.mxu0 0
      %2495 = vmatmul.mubr.bf16.gmra.mrb[0].mxu0 %v2162
      %v2496 = vpop.f32.mrb[0].mxu0
      %v2497 = vadd.f32 %v1231, %v2496
      %v2498 = vpop.f32.mrb[0].mxu0
      %v2499 = vadd.f32 %v1233, %v2498
      %v2500 = vpop.f32.mrb[0].mxu0
      %v2501 = vadd.f32 %v1235, %v2500
      %v2502 = vpop.f32.mrb[0].mxu0
      %v2503 = vadd.f32 %v1237, %v2502
      %2504 = vdwg.mxu0
      %2505 = vmatprep.subr.bf16.mxu0 %v1920
      %2506 = vmatpush1.bf16.msra.mxu0 %v1919
      %2507 = vmatprep.subr.bf16.mxu0 %v1936
      %2508 = vmatpush1.bf16.msra.mxu0 %v1935
      %2509 = vmatprep.subr.bf16.mxu0 %v1952
      %2510 = vmatpush1.bf16.msra.mxu0 %v1951
      %2511 = vmatprep.subr.bf16.mxu0 %v1968
      %2512 = vmatpush1.bf16.msra.mxu0 %v1967
      %2513 = vmatprep.subr.bf16.mxu0 %v1984
      %2514 = vmatpush1.bf16.msra.mxu0 %v1983
      %2515 = vmatprep.subr.bf16.mxu0 %v2000
      %2516 = vmatpush1.bf16.msra.mxu0 %v1999
      %2517 = vmatprep.subr.bf16.mxu0 %v2016
      %2518 = vmatpush1.bf16.msra.mxu0 %v2015
      %2519 = vmatprep.subr.bf16.mxu0 %v2193
      %2520 = vmatpush1.bf16.msra.mxu0 %v2190
      %2521 = vmatprep.subr.bf16.mxu0 0
      %2522 = vmatpush1.bf16.msra.mxu0 0
      %2523 = vmatprep.subr.bf16.mxu0 0
      %2524 = vmatpush1.bf16.msra.mxu0 0
      %2525 = vmatprep.subr.bf16.mxu0 0
      %2526 = vmatpush1.bf16.msra.mxu0 0
      %2527 = vmatprep.subr.bf16.mxu0 0
      %2528 = vmatpush1.bf16.msra.mxu0 0
      %2529 = vmatprep.subr.bf16.mxu0 0
      %2530 = vmatpush1.bf16.msra.mxu0 0
      %2531 = vmatprep.subr.bf16.mxu0 0
      %2532 = vmatpush1.bf16.msra.mxu0 0
      %2533 = vmatprep.subr.bf16.mxu0 0
      %2534 = vmatpush1.bf16.msra.mxu0 0
      %2535 = vmatprep.subr.bf16.mxu0 0
      %2536 = vmatpush1.bf16.msra.mxu0 0
      %2537 = vmatprep.mubr.bf16.mxu0 0
      %2538 = vmatmul.mubr.bf16.gmra.mrb[0].mxu0 %v2153
      %v2539 = vpop.f32.mrb[0].mxu0
      %v2540 = vadd.f32 %v1274, %v2539
      %v2541 = vpop.f32.mrb[0].mxu0
      %v2542 = vadd.f32 %v1276, %v2541
      %v2543 = vpop.f32.mrb[0].mxu0
      %v2544 = vadd.f32 %v1278, %v2543
      %v2545 = vpop.f32.mrb[0].mxu0
      %v2546 = vadd.f32 %v1280, %v2545
      %2547 = vmatprep.mubr.bf16.mxu0 0
      %2548 = vmatmul.mubr.bf16.gmra.mrb[0].mxu0 %v2156
      %v2549 = vpop.f32.mrb[0].mxu0
      %v2550 = vadd.f32 %v1284, %v2549
      %v2551 = vpop.f32.mrb[0].mxu0
      %v2552 = vadd.f32 %v1286, %v2551
      %v2553 = vpop.f32.mrb[0].mxu0
      %v2554 = vadd.f32 %v1288, %v2553
      %v2555 = vpop.f32.mrb[0].mxu0
      %v2556 = vadd.f32 %v1290, %v2555
      %2557 = vmatprep.mubr.bf16.mxu0 0
      %2558 = vmatmul.mubr.bf16.gmra.mrb[0].mxu0 %v2159
      %v2559 = vpop.f32.mrb[0].mxu0
      %v2560 = vadd.f32 %v1294, %v2559
      %v2561 = vpop.f32.mrb[0].mxu0
      %v2562 = vadd.f32 %v1296, %v2561
      %v2563 = vpop.f32.mrb[0].mxu0
      %v2564 = vadd.f32 %v1298, %v2563
      %v2565 = vpop.f32.mrb[0].mxu0
      %v2566 = vadd.f32 %v1300, %v2565
      %2567 = vmatprep.mubr.bf16.mxu0 0
      %2568 = vmatmul.mubr.bf16.gmra.mrb[0].mxu0 %v2162
      %v2569 = vpop.f32.mrb[0].mxu0
      %v2570 = vadd.f32 %v1304, %v2569
      %v2571 = vpop.f32.mrb[0].mxu0
      %v2572 = vadd.f32 %v1306, %v2571
      %v2573 = vpop.f32.mrb[0].mxu0
      %v2574 = vadd.f32 %v1308, %v2573
      %v2575 = vpop.f32.mrb[0].mxu0
      %v2576 = vadd.f32 %v1310, %v2575
      %2577 = vdwg.mxu0
      %2578 = vmatprep.subr.bf16.mxu0 %v1922
      %2579 = vmatpush1.bf16.msra.mxu0 %v1921
      %2580 = vmatprep.subr.bf16.mxu0 %v1938
      %2581 = vmatpush1.bf16.msra.mxu0 %v1937
      %2582 = vmatprep.subr.bf16.mxu0 %v1954
      %2583 = vmatpush1.bf16.msra.mxu0 %v1953
      %2584 = vmatprep.subr.bf16.mxu0 %v1970
      %2585 = vmatpush1.bf16.msra.mxu0 %v1969
      %2586 = vmatprep.subr.bf16.mxu0 %v1986
      %2587 = vmatpush1.bf16.msra.mxu0 %v1985
      %2588 = vmatprep.subr.bf16.mxu0 %v2002
      %2589 = vmatpush1.bf16.msra.mxu0 %v2001
      %2590 = vmatprep.subr.bf16.mxu0 %v2018
      %2591 = vmatpush1.bf16.msra.mxu0 %v2017
      %2592 = vmatprep.subr.bf16.mxu0 %v2199
      %2593 = vmatpush1.bf16.msra.mxu0 %v2196
      %2594 = vmatprep.subr.bf16.mxu0 0
      %2595 = vmatpush1.bf16.msra.mxu0 0
      %2596 = vmatprep.subr.bf16.mxu0 0
      %2597 = vmatpush1.bf16.msra.mxu0 0
      %2598 = vmatprep.subr.bf16.mxu0 0
      %2599 = vmatpush1.bf16.msra.mxu0 0
      %2600 = vmatprep.subr.bf16.mxu0 0
      %2601 = vmatpush1.bf16.msra.mxu0 0
      %2602 = vmatprep.subr.bf16.mxu0 0
      %2603 = vmatpush1.bf16.msra.mxu0 0
      %2604 = vmatprep.subr.bf16.mxu0 0
      %2605 = vmatpush1.bf16.msra.mxu0 0
      %2606 = vmatprep.subr.bf16.mxu0 0
      %2607 = vmatpush1.bf16.msra.mxu0 0
      %2608 = vmatprep.subr.bf16.mxu0 0
      %2609 = vmatpush1.bf16.msra.mxu0 0
      %2610 = vmatprep.mubr.bf16.mxu0 0
      %2611 = vmatmul.mubr.bf16.gmra.mrb[0].mxu0 %v2153
      %v2612 = vpop.f32.mrb[0].mxu0
      %v2613 = vadd.f32 %v1347, %v2612
      %v2614 = vpop.f32.mrb[0].mxu0
      %v2615 = vadd.f32 %v1349, %v2614
      %v2616 = vpop.f32.mrb[0].mxu0
      %v2617 = vadd.f32 %v1351, %v2616
      %v2618 = vpop.f32.mrb[0].mxu0
      %v2619 = vadd.f32 %v1353, %v2618
      %2620 = vmatprep.mubr.bf16.mxu0 0
      %2621 = vmatmul.mubr.bf16.gmra.mrb[0].mxu0 %v2156
      %v2622 = vpop.f32.mrb[0].mxu0
      %v2623 = vadd.f32 %v1357, %v2622
      %v2624 = vpop.f32.mrb[0].mxu0
      %v2625 = vadd.f32 %v1359, %v2624
      %v2626 = vpop.f32.mrb[0].mxu0
      %v2627 = vadd.f32 %v1361, %v2626
      %v2628 = vpop.f32.mrb[0].mxu0
      %v2629 = vadd.f32 %v1363, %v2628
      %2630 = vmatprep.mubr.bf16.mxu0 0
      %2631 = vmatmul.mubr.bf16.gmra.mrb[0].mxu0 %v2159
      %v2632 = vpop.f32.mrb[0].mxu0
      %v2633 = vadd.f32 %v1367, %v2632
      %v2634 = vpop.f32.mrb[0].mxu0
      %v2635 = vadd.f32 %v1369, %v2634
      %v2636 = vpop.f32.mrb[0].mxu0
      %v2637 = vadd.f32 %v1371, %v2636
      %v2638 = vpop.f32.mrb[0].mxu0
      %v2639 = vadd.f32 %v1373, %v2638
      %2640 = vmatprep.mubr.bf16.mxu0 0
      %2641 = vmatmul.mubr.bf16.gmra.mrb[0].mxu0 %v2162
      %v2642 = vpop.f32.mrb[0].mxu0
      %v2643 = vadd.f32 %v1377, %v2642
      %v2644 = vpop.f32.mrb[0].mxu0
      %v2645 = vadd.f32 %v1379, %v2644
      %v2646 = vpop.f32.mrb[0].mxu0
      %v2647 = vadd.f32 %v1381, %v2646
      %v2648 = vpop.f32.mrb[0].mxu0
      %v2649 = vadd.f32 %v1383, %v2648
      %2650 = vdwg.mxu0
      %2651 = vmatprep.subr.bf16.mxu0 %v1924
      %2652 = vmatpush1.bf16.msra.mxu0 %v1923
      %2653 = vmatprep.subr.bf16.mxu0 %v1940
      %2654 = vmatpush1.bf16.msra.mxu0 %v1939
      %2655 = vmatprep.subr.bf16.mxu0 %v1956
      %2656 = vmatpush1.bf16.msra.mxu0 %v1955
      %2657 = vmatprep.subr.bf16.mxu0 %v1972
      %2658 = vmatpush1.bf16.msra.mxu0 %v1971
      %2659 = vmatprep.subr.bf16.mxu0 %v1988
      %2660 = vmatpush1.bf16.msra.mxu0 %v1987
      %2661 = vmatprep.subr.bf16.mxu0 %v2004
      %2662 = vmatpush1.bf16.msra.mxu0 %v2003
      %2663 = vmatprep.subr.bf16.mxu0 %v2020
      %2664 = vmatpush1.bf16.msra.mxu0 %v2019
      %2665 = vmatprep.subr.bf16.mxu0 %v2205
      %2666 = vmatpush1.bf16.msra.mxu0 %v2202
      %2667 = vmatprep.subr.bf16.mxu0 0
      %2668 = vmatpush1.bf16.msra.mxu0 0
      %2669 = vmatprep.subr.bf16.mxu0 0
      %2670 = vmatpush1.bf16.msra.mxu0 0
      %2671 = vmatprep.subr.bf16.mxu0 0
      %2672 = vmatpush1.bf16.msra.mxu0 0
      %2673 = vmatprep.subr.bf16.mxu0 0
      %2674 = vmatpush1.bf16.msra.mxu0 0
      %2675 = vmatprep.subr.bf16.mxu0 0
      %2676 = vmatpush1.bf16.msra.mxu0 0
      %2677 = vmatprep.subr.bf16.mxu0 0
      %2678 = vmatpush1.bf16.msra.mxu0 0
      %2679 = vmatprep.subr.bf16.mxu0 0
      %2680 = vmatpush1.bf16.msra.mxu0 0
      %2681 = vmatprep.subr.bf16.mxu0 0
      %2682 = vmatpush1.bf16.msra.mxu0 0
      %2683 = vmatprep.mubr.bf16.mxu0 0
      %2684 = vmatmul.mubr.bf16.gmra.mrb[0].mxu0 %v2153
      %v2685 = vpop.f32.mrb[0].mxu0
      %v2686 = vadd.f32 %v1420, %v2685
      %v2687 = vpop.f32.mrb[0].mxu0
      %v2688 = vadd.f32 %v1422, %v2687
      %v2689 = vpop.f32.mrb[0].mxu0
      %v2690 = vadd.f32 %v1424, %v2689
      %v2691 = vpop.f32.mrb[0].mxu0
      %v2692 = vadd.f32 %v1426, %v2691
      %2693 = vmatprep.mubr.bf16.mxu0 0
      %2694 = vmatmul.mubr.bf16.gmra.mrb[0].mxu0 %v2156
      %v2695 = vpop.f32.mrb[0].mxu0
      %v2696 = vadd.f32 %v1430, %v2695
      %v2697 = vpop.f32.mrb[0].mxu0
      %v2698 = vadd.f32 %v1432, %v2697
      %v2699 = vpop.f32.mrb[0].mxu0
      %v2700 = vadd.f32 %v1434, %v2699
      %v2701 = vpop.f32.mrb[0].mxu0
      %v2702 = vadd.f32 %v1436, %v2701
      %2703 = vmatprep.mubr.bf16.mxu0 0
      %2704 = vmatmul.mubr.bf16.gmra.mrb[0].mxu0 %v2159
      %v2705 = vpop.f32.mrb[0].mxu0
      %v2706 = vadd.f32 %v1440, %v2705
      %v2707 = vpop.f32.mrb[0].mxu0
      %v2708 = vadd.f32 %v1442, %v2707
      %v2709 = vpop.f32.mrb[0].mxu0
      %v2710 = vadd.f32 %v1444, %v2709
      %v2711 = vpop.f32.mrb[0].mxu0
      %v2712 = vadd.f32 %v1446, %v2711
      %2713 = vmatprep.mubr.bf16.mxu0 0
      %2714 = vmatmul.mubr.bf16.gmra.mrb[0].mxu0 %v2162
      %v2715 = vpop.f32.mrb[0].mxu0
      %v2716 = vadd.f32 %v1450, %v2715
      %v2717 = vpop.f32.mrb[0].mxu0
      %v2718 = vadd.f32 %v1452, %v2717
      %v2719 = vpop.f32.mrb[0].mxu0
      %v2720 = vadd.f32 %v1454, %v2719
      %v2721 = vpop.f32.mrb[0].mxu0
      %v2722 = vadd.f32 %v1456, %v2721
      %2723 = vdwg.mxu0
      %2724 = vmatprep.subr.bf16.mxu0 %v1926
      %2725 = vmatpush1.bf16.msra.mxu0 %v1925
      %2726 = vmatprep.subr.bf16.mxu0 %v1942
      %2727 = vmatpush1.bf16.msra.mxu0 %v1941
      %2728 = vmatprep.subr.bf16.mxu0 %v1958
      %2729 = vmatpush1.bf16.msra.mxu0 %v1957
      %2730 = vmatprep.subr.bf16.mxu0 %v1974
      %2731 = vmatpush1.bf16.msra.mxu0 %v1973
      %2732 = vmatprep.subr.bf16.mxu0 %v1990
      %2733 = vmatpush1.bf16.msra.mxu0 %v1989
      %2734 = vmatprep.subr.bf16.mxu0 %v2006
      %2735 = vmatpush1.bf16.msra.mxu0 %v2005
      %2736 = vmatprep.subr.bf16.mxu0 %v2022
      %2737 = vmatpush1.bf16.msra.mxu0 %v2021
      %2738 = vmatprep.subr.bf16.mxu0 %v2211
      %2739 = vmatpush1.bf16.msra.mxu0 %v2208
      %2740 = vmatprep.subr.bf16.mxu0 0
      %2741 = vmatpush1.bf16.msra.mxu0 0
      %2742 = vmatprep.subr.bf16.mxu0 0
      %2743 = vmatpush1.bf16.msra.mxu0 0
      %2744 = vmatprep.subr.bf16.mxu0 0
      %2745 = vmatpush1.bf16.msra.mxu0 0
      %2746 = vmatprep.subr.bf16.mxu0 0
      %2747 = vmatpush1.bf16.msra.mxu0 0
      %2748 = vmatprep.subr.bf16.mxu0 0
      %2749 = vmatpush1.bf16.msra.mxu0 0
      %2750 = vmatprep.subr.bf16.mxu0 0
      %2751 = vmatpush1.bf16.msra.mxu0 0
      %2752 = vmatprep.subr.bf16.mxu0 0
      %2753 = vmatpush1.bf16.msra.mxu0 0
      %2754 = vmatprep.subr.bf16.mxu0 0
      %2755 = vmatpush1.bf16.msra.mxu0 0
      %2756 = vmatprep.mubr.bf16.mxu0 0
      %2757 = vmatmul.mubr.bf16.gmra.mrb[0].mxu0 %v2153
      %v2758 = vpop.f32.mrb[0].mxu0
      %v2759 = vadd.f32 %v1493, %v2758
      %v2760 = vpop.f32.mrb[0].mxu0
      %v2761 = vadd.f32 %v1495, %v2760
      %v2762 = vpop.f32.mrb[0].mxu0
      %v2763 = vadd.f32 %v1497, %v2762
      %v2764 = vpop.f32.mrb[0].mxu0
      %v2765 = vadd.f32 %v1499, %v2764
      %2766 = vmatprep.mubr.bf16.mxu0 0
      %2767 = vmatmul.mubr.bf16.gmra.mrb[0].mxu0 %v2156
      %v2768 = vpop.f32.mrb[0].mxu0
      %v2769 = vadd.f32 %v1503, %v2768
      %v2770 = vpop.f32.mrb[0].mxu0
      %v2771 = vadd.f32 %v1505, %v2770
      %v2772 = vpop.f32.mrb[0].mxu0
      %v2773 = vadd.f32 %v1507, %v2772
      %v2774 = vpop.f32.mrb[0].mxu0
      %v2775 = vadd.f32 %v1509, %v2774
      %2776 = vmatprep.mubr.bf16.mxu0 0
      %2777 = vmatmul.mubr.bf16.gmra.mrb[0].mxu0 %v2159
      %v2778 = vpop.f32.mrb[0].mxu0
      %v2779 = vadd.f32 %v1513, %v2778
      %v2780 = vpop.f32.mrb[0].mxu0
      %v2781 = vadd.f32 %v1515, %v2780
      %v2782 = vpop.f32.mrb[0].mxu0
      %v2783 = vadd.f32 %v1517, %v2782
      %v2784 = vpop.f32.mrb[0].mxu0
      %v2785 = vadd.f32 %v1519, %v2784
      %2786 = vmatprep.mubr.bf16.mxu0 0
      %2787 = vmatmul.mubr.bf16.gmra.mrb[0].mxu0 %v2162
      %v2788 = vpop.f32.mrb[0].mxu0
      %v2789 = vadd.f32 %v1523, %v2788
      %v2790 = vpop.f32.mrb[0].mxu0
      %v2791 = vadd.f32 %v1525, %v2790
      %v2792 = vpop.f32.mrb[0].mxu0
      %v2793 = vadd.f32 %v1527, %v2792
      %v2794 = vpop.f32.mrb[0].mxu0
      %v2795 = vadd.f32 %v1529, %v2794
      %2796 = vdwg.mxu0
      %v2797 = vmax.f32 %v2248, %v2394
      %v2798 = vmax.f32 %v2250, %v2396
      %v2799 = vmax.f32 %v2321, %v2467
      %v2800 = vmax.f32 %v2323, %v2469
      %v2801 = vmax.f32 %v2252, %v2398
      %v2802 = vmax.f32 %v2254, %v2400
      %v2803 = vmax.f32 %v2325, %v2471
      %v2804 = vmax.f32 %v2327, %v2473
      %v2805 = vmax.f32 %v2258, %v2404
      %v2806 = vmax.f32 %v2260, %v2406
      %v2807 = vmax.f32 %v2331, %v2477
      %v2808 = vmax.f32 %v2333, %v2479
      %v2809 = vmax.f32 %v2262, %v2408
      %v2810 = vmax.f32 %v2264, %v2410
      %v2811 = vmax.f32 %v2335, %v2481
      %v2812 = vmax.f32 %v2337, %v2483
      %v2813 = vmax.f32 %v2268, %v2414
      %v2814 = vmax.f32 %v2270, %v2416
      %v2815 = vmax.f32 %v2341, %v2487
      %v2816 = vmax.f32 %v2343, %v2489
      %v2817 = vmax.f32 %v2272, %v2418
      %v2818 = vmax.f32 %v2274, %v2420
      %v2819 = vmax.f32 %v2345, %v2491
      %v2820 = vmax.f32 %v2347, %v2493
      %v2821 = vmax.f32 %v2278, %v2424
      %v2822 = vmax.f32 %v2280, %v2426
      %v2823 = vmax.f32 %v2351, %v2497
      %v2824 = vmax.f32 %v2353, %v2499
      %v2825 = vmax.f32 %v2282, %v2428
      %v2826 = vmax.f32 %v2284, %v2430
      %v2827 = vmax.f32 %v2355, %v2501
      %v2828 = vmax.f32 %v2357, %v2503
      %v2829 = vmax.f32 %v2540, %v2686
      %v2830 = vmax.f32 %v2542, %v2688
      %v2831 = vmax.f32 %v2613, %v2759
      %v2832 = vmax.f32 %v2615, %v2761
      %v2833 = vmax.f32 %v2544, %v2690
      %v2834 = vmax.f32 %v2546, %v2692
      %v2835 = vmax.f32 %v2617, %v2763
      %v2836 = vmax.f32 %v2619, %v2765
      %v2837 = vmax.f32 %v2550, %v2696
      %v2838 = vmax.f32 %v2552, %v2698
      %v2839 = vmax.f32 %v2623, %v2769
      %v2840 = vmax.f32 %v2625, %v2771
      %v2841 = vmax.f32 %v2554, %v2700
      %v2842 = vmax.f32 %v2556, %v2702
      %v2843 = vmax.f32 %v2627, %v2773
      %v2844 = vmax.f32 %v2629, %v2775
      %v2845 = vmax.f32 %v2560, %v2706
      %v2846 = vmax.f32 %v2562, %v2708
      %v2847 = vmax.f32 %v2633, %v2779
      %v2848 = vmax.f32 %v2635, %v2781
      %v2849 = vmax.f32 %v2564, %v2710
      %v2850 = vmax.f32 %v2566, %v2712
      %v2851 = vmax.f32 %v2637, %v2783
      %v2852 = vmax.f32 %v2639, %v2785
      %v2853 = vmax.f32 %v2570, %v2716
      %v2854 = vmax.f32 %v2572, %v2718
      %v2855 = vmax.f32 %v2643, %v2789
      %v2856 = vmax.f32 %v2645, %v2791
      %v2857 = vmax.f32 %v2574, %v2720
      %v2858 = vmax.f32 %v2576, %v2722
      %v2859 = vmax.f32 %v2647, %v2793
      %v2860 = vmax.f32 %v2649, %v2795
      %v2861 = vmax.f32 %v2797, %v2829
      %v2862 = vmax.f32 %v2798, %v2830
      %v2863 = vmax.f32 %v2799, %v2831
      %v2864 = vmax.f32 %v2800, %v2832
      %v2865 = vmax.f32 %v2801, %v2833
      %v2866 = vmax.f32 %v2802, %v2834
      %v2867 = vmax.f32 %v2803, %v2835
      %v2868 = vmax.f32 %v2804, %v2836
      %v2869 = vmax.f32 %v2805, %v2837
      %v2870 = vmax.f32 %v2806, %v2838
      %v2871 = vmax.f32 %v2807, %v2839
      %v2872 = vmax.f32 %v2808, %v2840
      %v2873 = vmax.f32 %v2809, %v2841
      %v2874 = vmax.f32 %v2810, %v2842
      %v2875 = vmax.f32 %v2811, %v2843
      %v2876 = vmax.f32 %v2812, %v2844
      %v2877 = vmax.f32 %v2813, %v2845
      %v2878 = vmax.f32 %v2814, %v2846
      %v2879 = vmax.f32 %v2815, %v2847
      %v2880 = vmax.f32 %v2816, %v2848
      %v2881 = vmax.f32 %v2817, %v2849
      %v2882 = vmax.f32 %v2818, %v2850
      %v2883 = vmax.f32 %v2819, %v2851
      %v2884 = vmax.f32 %v2820, %v2852
      %v2885 = vmax.f32 %v2821, %v2853
      %v2886 = vmax.f32 %v2822, %v2854
      %v2887 = vmax.f32 %v2823, %v2855
      %v2888 = vmax.f32 %v2824, %v2856
      %v2889 = vmax.f32 %v2825, %v2857
      %v2890 = vmax.f32 %v2826, %v2858
      %v2891 = vmax.f32 %v2827, %v2859
      %v2892 = vmax.f32 %v2828, %v2860
      %v2893 = vld [vmem:[%s3] sm:$0xf]
      %v2895 = vlaneseq
      %v2896 = vshrl.u32 %v2895, 7
      %v2897 = vsub.s32 0, %v2896
      %v2898 = vrot.slane %v2893, %v2897
      %v2899 = vlaneseq
      %v2900 = vshrl.u32 %v2899, 7
      %v2901 = vsub.s32 1, %v2900
      %v2902 = vrot.slane %v2893, %v2901
      %v2903 = vlaneseq
      %v2904 = vshrl.u32 %v2903, 7
      %v2905 = vsub.s32 2, %v2904
      %v2906 = vrot.slane %v2893, %v2905
      %v2907 = vlaneseq
      %v2908 = vshrl.u32 %v2907, 7
      %v2909 = vsub.s32 3, %v2908
      %v2910 = vrot.slane %v2893, %v2909
      %v2915 = vadd.f32 %v2861, %v2898
      %v2916 = vadd.f32 %v2862, %v2902
      %v2917 = vadd.f32 %v2863, %v2906
      %v2918 = vadd.f32 %v2864, %v2910
      %v2919 = vadd.f32 %v2865, %v2898
      %v2920 = vadd.f32 %v2866, %v2902
      %v2921 = vadd.f32 %v2867, %v2906
      %v2922 = vadd.f32 %v2868, %v2910
      %v2923 = vadd.f32 %v2869, %v2898
      %v2924 = vadd.f32 %v2870, %v2902
      %v2925 = vadd.f32 %v2871, %v2906
      %v2926 = vadd.f32 %v2872, %v2910
      %v2927 = vadd.f32 %v2873, %v2898
      %v2928 = vadd.f32 %v2874, %v2902
      %v2929 = vadd.f32 %v2875, %v2906
      %v2930 = vadd.f32 %v2876, %v2910
      %v2931 = vadd.f32 %v2877, %v2898
      %v2932 = vadd.f32 %v2878, %v2902
      %v2933 = vadd.f32 %v2879, %v2906
      %v2934 = vadd.f32 %v2880, %v2910
      %v2935 = vadd.f32 %v2881, %v2898
      %v2936 = vadd.f32 %v2882, %v2902
      %v2937 = vadd.f32 %v2883, %v2906
      %v2938 = vadd.f32 %v2884, %v2910
      %v2939 = vadd.f32 %v2885, %v2898
      %v2940 = vadd.f32 %v2886, %v2902
      %v2941 = vadd.f32 %v2887, %v2906
      %v2942 = vadd.f32 %v2888, %v2910
      %v2943 = vadd.f32 %v2889, %v2898
      %v2944 = vadd.f32 %v2890, %v2902
      %v2945 = vadd.f32 %v2891, %v2906
      %v2946 = vadd.f32 %v2892, %v2910
      %v2947 = vmax.f32 %v2915, 0.0
      %v2948 = vmax.f32 %v2916, 0.0
      %v2949 = vmax.f32 %v2917, 0.0
      %v2950 = vmax.f32 %v2918, 0.0
      %v2951 = vmax.f32 %v2919, 0.0
      %v2952 = vmax.f32 %v2920, 0.0
      %v2953 = vmax.f32 %v2921, 0.0
      %v2954 = vmax.f32 %v2922, 0.0
      %v2955 = vmax.f32 %v2923, 0.0
      %v2956 = vmax.f32 %v2924, 0.0
      %v2957 = vmax.f32 %v2925, 0.0
      %v2958 = vmax.f32 %v2926, 0.0
      %v2959 = vmax.f32 %v2927, 0.0
      %v2960 = vmax.f32 %v2928, 0.0
      %v2961 = vmax.f32 %v2929, 0.0
      %v2962 = vmax.f32 %v2930, 0.0
      %v2963 = vmax.f32 %v2931, 0.0
      %v2964 = vmax.f32 %v2932, 0.0
      %v2965 = vmax.f32 %v2933, 0.0
      %v2966 = vmax.f32 %v2934, 0.0
      %v2967 = vmax.f32 %v2935, 0.0
      %v2968 = vmax.f32 %v2936, 0.0
      %v2969 = vmax.f32 %v2937, 0.0
      %v2970 = vmax.f32 %v2938, 0.0
      %v2971 = vmax.f32 %v2939, 0.0
      %v2972 = vmax.f32 %v2940, 0.0
      %v2973 = vmax.f32 %v2941, 0.0
      %v2974 = vmax.f32 %v2942, 0.0
      %v2975 = vmax.f32 %v2943, 0.0
      %v2976 = vmax.f32 %v2944, 0.0
      %v2977 = vmax.f32 %v2945, 0.0
      %v2978 = vmax.f32 %v2946, 0.0
      %v2979 = vlaneseq
      %v2980 = vshrl.u32 %v2979, 7
      %v2981 = vadd.s32 %v2980, 8
      %v2982 = vadd.s32 %v2980, 16
      %v2983 = vadd.s32 %v2980, 24
      %v2984 = vadd.s32 %v2980, 32
      %v2985 = vadd.s32 %v2980, 40
      %v2986 = vadd.s32 %v2980, 48
      %v2987 = vadd.s32 %v2980, 56
      %v2988 = vand.u32 %v2980, 7
      %v2989 = vand.u32 %v2981, 7
      %v2990 = vand.u32 %v2982, 7
      %v2991 = vand.u32 %v2983, 7
      %v2992 = vand.u32 %v2984, 7
      %v2993 = vand.u32 %v2985, 7
      %v2994 = vand.u32 %v2986, 7
      %v2995 = vand.u32 %v2987, 7
      %vm2996 = vcmp.lt.s32.totalorder %v2988, 7
      %vm2997 = vcmp.lt.s32.totalorder %v2989, 7
      %vm2998 = vcmp.lt.s32.totalorder %v2990, 7
      %vm2999 = vcmp.lt.s32.totalorder %v2991, 7
      %vm3000 = vcmp.lt.s32.totalorder %v2992, 7
      %vm3001 = vcmp.lt.s32.totalorder %v2993, 7
      %vm3002 = vcmp.lt.s32.totalorder %v2994, 7
      %vm3003 = vcmp.lt.s32.totalorder %v2995, 7
      %v3004 = vsel %vm2996, 1, 0
      %v3005 = vsel %vm2997, 1, 0
      %v3006 = vsel %vm2998, 1, 0
      %v3007 = vsel %vm2999, 1, 0
      %v3008 = vsel %vm3000, 1, 0
      %v3009 = vsel %vm3001, 1, 0
      %v3010 = vsel %vm3002, 1, 0
      %v3011 = vsel %vm3003, 1, 0
      %vm3012 = vcmp.eq.s32.totalorder %v3004, 1
      %vm3013 = vcmp.eq.s32.totalorder %v3005, 1
      %vm3014 = vcmp.eq.s32.totalorder %v3006, 1
      %vm3015 = vcmp.eq.s32.totalorder %v3007, 1
      %vm3016 = vcmp.eq.s32.totalorder %v3008, 1
      %vm3017 = vcmp.eq.s32.totalorder %v3009, 1
      %vm3018 = vcmp.eq.s32.totalorder %v3010, 1
      %vm3019 = vcmp.eq.s32.totalorder %v3011, 1
      %v3020 = vsel %vm3012, %v2947, 0.0
      %v3021 = vsel %vm3012, %v2948, 0.0
      %v3022 = vsel %vm3012, %v2949, 0.0
      %v3023 = vsel %vm3012, %v2950, 0.0
      %v3024 = vsel %vm3013, %v2951, 0.0
      %v3025 = vsel %vm3013, %v2952, 0.0
      %v3026 = vsel %vm3013, %v2953, 0.0
      %v3027 = vsel %vm3013, %v2954, 0.0
      %v3028 = vsel %vm3014, %v2955, 0.0
      %v3029 = vsel %vm3014, %v2956, 0.0
      %v3030 = vsel %vm3014, %v2957, 0.0
      %v3031 = vsel %vm3014, %v2958, 0.0
      %v3032 = vsel %vm3015, %v2959, 0.0
      %v3033 = vsel %vm3015, %v2960, 0.0
      %v3034 = vsel %vm3015, %v2961, 0.0
      %v3035 = vsel %vm3015, %v2962, 0.0
      %v3036 = vsel %vm3016, %v2963, 0.0
      %v3037 = vsel %vm3016, %v2964, 0.0
      %v3038 = vsel %vm3016, %v2965, 0.0
      %v3039 = vsel %vm3016, %v2966, 0.0
      %v3040 = vsel %vm3017, %v2967, 0.0
      %v3041 = vsel %vm3017, %v2968, 0.0
      %v3042 = vsel %vm3017, %v2969, 0.0
      %v3043 = vsel %vm3017, %v2970, 0.0
      %v3044 = vsel %vm3018, %v2971, 0.0
      %v3045 = vsel %vm3018, %v2972, 0.0
      %v3046 = vsel %vm3018, %v2973, 0.0
      %v3047 = vsel %vm3018, %v2974, 0.0
      %v3048 = vsel %vm3019, %v2975, 0.0
      %v3049 = vsel %vm3019, %v2976, 0.0
      %v3050 = vsel %vm3019, %v2977, 0.0
      %v3051 = vsel %vm3019, %v2978, 0.0
      %v3052 = vpack.c.bf16 %v3024, %v3020
      %v3053 = vpack.c.bf16 %v3025, %v3021
      %v3054 = vpack.c.bf16 %v3026, %v3022
      %v3055 = vpack.c.bf16 %v3027, %v3023
      %v3056 = vpack.c.bf16 %v3032, %v3028
      %v3057 = vpack.c.bf16 %v3033, %v3029
      %v3058 = vpack.c.bf16 %v3034, %v3030
      %v3059 = vpack.c.bf16 %v3035, %v3031
      %v3060 = vpack.c.bf16 %v3040, %v3036
      %v3061 = vpack.c.bf16 %v3041, %v3037
      %v3062 = vpack.c.bf16 %v3042, %v3038
      %v3063 = vpack.c.bf16 %v3043, %v3039
      %v3064 = vpack.c.bf16 %v3048, %v3044
      %v3065 = vpack.c.bf16 %v3049, %v3045
      %v3066 = vpack.c.bf16 %v3050, %v3046
      %v3067 = vpack.c.bf16 %v3051, %v3047
      %3068 = vst [vmem:[#allocation3] sm:$0xf] 0
      %3069 = vst [vmem:[#allocation3 + $0x8] sm:$0xf] 0
      %3070 = vst [vmem:[#allocation3 + $0x10] sm:$0xf] 0
      %3071 = vst [vmem:[#allocation3 + $0x18] sm:$0xf] 0
      %vm3088 = vcmask 1043456
      %v3089 = vrot.slane %v3052, 4
      %v3090 = vrot.slane %v3053, 4
      %v3091 = vrot.slane %v3054, 4
      %v3092 = vrot.slane %v3055, 4
      %v3093 = vrot.slane %v3056, 4
      %v3094 = vsel %vm3088, %v3089, %v3093
      %v3095 = vrot.slane %v3057, 4
      %v3096 = vsel %vm3088, %v3090, %v3095
      %v3097 = vrot.slane %v3058, 4
      %v3098 = vsel %vm3088, %v3091, %v3097
      %v3099 = vrot.slane %v3059, 4
      %v3100 = vsel %vm3088, %v3092, %v3099
      %v3101 = vrot.slane %v3060, 4
      %v3102 = vsel %vm3088, %v3093, %v3101
      %v3103 = vrot.slane %v3061, 4
      %v3104 = vsel %vm3088, %v3095, %v3103
      %v3105 = vrot.slane %v3062, 4
      %v3106 = vsel %vm3088, %v3097, %v3105
      %v3107 = vrot.slane %v3063, 4
      %v3108 = vsel %vm3088, %v3099, %v3107
      %v3109 = vrot.slane %v3064, 4
      %v3110 = vsel %vm3088, %v3101, %v3109
      %v3111 = vrot.slane %v3065, 4
      %v3112 = vsel %vm3088, %v3103, %v3111
      %v3113 = vrot.slane %v3066, 4
      %v3114 = vsel %vm3088, %v3105, %v3113
      %v3115 = vrot.slane %v3067, 4
      %v3116 = vsel %vm3088, %v3107, %v3115
      %3137 = vst [vmem:[#allocation3] sm:$0xf0] %v3089
      %3138 = vst [vmem:[#allocation3 + $0x8] sm:$0xf0] %v3090
      %3139 = vst [vmem:[#allocation3 + $0x10] sm:$0xf0] %v3091
      %3140 = vst [vmem:[#allocation3 + $0x18] sm:$0xf0] %v3092
      %3141 = vst [vmem:[#allocation3 + $0x20] sm:$0xff] %v3094
      %3142 = vst [vmem:[#allocation3 + $0x28] sm:$0xff] %v3096
      %3143 = vst [vmem:[#allocation3 + $0x30] sm:$0xff] %v3098
      %3144 = vst [vmem:[#allocation3 + $0x38] sm:$0xff] %v3100
      %3145 = vst [vmem:[#allocation3 + $0x40] sm:$0xff] %v3102
      %3146 = vst [vmem:[#allocation3 + $0x48] sm:$0xff] %v3104
      %3147 = vst [vmem:[#allocation3 + $0x50] sm:$0xff] %v3106
      %3148 = vst [vmem:[#allocation3 + $0x58] sm:$0xff] %v3108
      %3149 = vst [vmem:[#allocation3 + $0x60] sm:$0xff] %v3110
      %3150 = vst [vmem:[#allocation3 + $0x68] sm:$0xff] %v3112
      %3151 = vst [vmem:[#allocation3 + $0x70] sm:$0xff] %v3114
      %3152 = vst [vmem:[#allocation3 + $0x78] sm:$0xff] %v3116
      %3153 = vst [vmem:[#allocation3 + $0x80] sm:$0xf] %v3109
      %3154 = vst [vmem:[#allocation3 + $0x88] sm:$0xf] %v3111
      %3155 = vst [vmem:[#allocation3 + $0x90] sm:$0xf] %v3113
      %3156 = vst [vmem:[#allocation3 + $0x98] sm:$0xf] %v3115
      %3157 = vst [vmem:[#allocation3 + $0x80] sm:$0xf0] 0
      %3158 = vst [vmem:[#allocation3 + $0x88] sm:$0xf0] 0
      %3159 = vst [vmem:[#allocation3 + $0x90] sm:$0xf0] 0
      %3160 = vst [vmem:[#allocation3 + $0x98] sm:$0xf0] 0
      %v3161 = vld [vmem:[#allocation3 + $0x10] sm:$0xf8]
      %v3162 = vld [vmem:[#allocation3 + $0x18] sm:$0xf8]
      %v3163 = vld [vmem:[#allocation3 + $0x30] sm:$0xff]
      %v3164 = vld [vmem:[#allocation3 + $0x38] sm:$0xff]
      %v3165 = vld [vmem:[#allocation3 + $0x50] sm:$0xff]
      %v3166 = vld [vmem:[#allocation3 + $0x58] sm:$0xff]
      %v3167 = vld [vmem:[#allocation3 + $0x70] sm:$0xff]
      %v3168 = vld [vmem:[#allocation3 + $0x78] sm:$0xff]
      %v3169 = vld [vmem:[#allocation3 + $0x90] sm:$0xf]
      %v3170 = vld [vmem:[#allocation3 + $0x98] sm:$0xf]
      %v3171 = vld [vmem:[%s4] sm:$0xff]
      %v3172 = vld [vmem:[%s4 + $0x8] sm:$0xff]
      %v3173 = vld [vmem:[%s4 + $0x10] sm:$0xff]
      %v3174 = vld [vmem:[%s4 + $0x18] sm:$0xff]
      %v3175 = vld [vmem:[%s4 + $0x20] sm:$0xff]
      %v3176 = vld [vmem:[%s4 + $0x28] sm:$0xff]
      %v3177 = vld [vmem:[%s4 + $0x30] sm:$0xff]
      %v3178 = vld [vmem:[%s4 + $0x38] sm:$0xff]
      %v3179 = vld [vmem:[%s4 + $0x40] sm:$0xff]
      %v3180 = vld [vmem:[%s4 + $0x48] sm:$0xff]
      %v3181 = vld [vmem:[%s4 + $0x50] sm:$0xff]
      %v3182 = vld [vmem:[%s4 + $0x58] sm:$0xff]
      %v3183 = vld [vmem:[%s4 + $0x60] sm:$0xff]
      %v3184 = vld [vmem:[%s4 + $0x68] sm:$0xff]
      %v3185 = vld [vmem:[%s4 + $0x70] sm:$0xff]
      %v3186 = vld [vmem:[%s4 + $0x78] sm:$0xff]
      %v3187 = vld [vmem:[%s4 + $0x80] sm:$0xff]
      %v3188 = vld [vmem:[%s4 + $0x88] sm:$0xff]
      %v3189 = vld [vmem:[%s4 + $0x90] sm:$0xff]
      %v3190 = vld [vmem:[%s4 + $0x98] sm:$0xff]
      %v3191 = vld [vmem:[%s4 + $0xa0] sm:$0xff]
      %v3192 = vld [vmem:[%s4 + $0xa8] sm:$0xff]
      %v3193 = vld [vmem:[%s4 + $0xb0] sm:$0xff]
      %v3194 = vld [vmem:[%s4 + $0xb8] sm:$0xff]
      %v3195 = vld [vmem:[%s4 + $0xc0] sm:$0xff]
      %v3196 = vld [vmem:[%s4 + $0xc8] sm:$0xff]
      %v3197 = vld [vmem:[%s4 + $0xd0] sm:$0xff]
      %v3198 = vld [vmem:[%s4 + $0xd8] sm:$0xff]
      %v3199 = vld [vmem:[%s4 + $0xe0] sm:$0xff]
      %v3200 = vld [vmem:[%s4 + $0xe8] sm:$0xff]
      %v3201 = vld [vmem:[%s4 + $0xf0] sm:$0xff]
      %v3202 = vld [vmem:[%s4 + $0xf8] sm:$0xff]
      %v3203 = vld [vmem:[%s4 + $0x100] sm:$0xff]
      %v3204 = vld [vmem:[%s4 + $0x108] sm:$0xff]
      %v3205 = vld [vmem:[%s4 + $0x110] sm:$0xff]
      %v3206 = vld [vmem:[%s4 + $0x118] sm:$0xff]
      %v3207 = vld [vmem:[%s4 + $0x120] sm:$0xff]
      %v3208 = vld [vmem:[%s4 + $0x128] sm:$0xff]
      %v3209 = vld [vmem:[%s4 + $0x130] sm:$0xff]
      %v3210 = vld [vmem:[%s4 + $0x138] sm:$0xff]
      %v3211 = vld [vmem:[%s4 + $0x140] sm:$0xff]
      %v3212 = vld [vmem:[%s4 + $0x148] sm:$0xff]
      %v3213 = vld [vmem:[%s4 + $0x150] sm:$0xff]
      %v3214 = vld [vmem:[%s4 + $0x158] sm:$0xff]
      %v3215 = vld [vmem:[%s4 + $0x160] sm:$0xff]
      %v3216 = vld [vmem:[%s4 + $0x168] sm:$0xff]
      %v3217 = vld [vmem:[%s4 + $0x170] sm:$0xff]
      %v3218 = vld [vmem:[%s4 + $0x178] sm:$0xff]
      %v3219 = vld [vmem:[%s4 + $0x180] sm:$0xff]
      %v3220 = vld [vmem:[%s4 + $0x188] sm:$0xff]
      %v3221 = vld [vmem:[%s4 + $0x190] sm:$0xff]
      %v3222 = vld [vmem:[%s4 + $0x198] sm:$0xff]
      %v3223 = vld [vmem:[%s4 + $0x1a0] sm:$0xff]
      %v3224 = vld [vmem:[%s4 + $0x1a8] sm:$0xff]
      %v3225 = vld [vmem:[%s4 + $0x1b0] sm:$0xff]
      %v3226 = vld [vmem:[%s4 + $0x1b8] sm:$0xff]
      %v3227 = vld [vmem:[%s4 + $0x1c0] sm:$0xff]
      %v3228 = vld [vmem:[%s4 + $0x1c8] sm:$0xff]
      %v3229 = vld [vmem:[%s4 + $0x1d0] sm:$0xff]
      %v3230 = vld [vmem:[%s4 + $0x1d8] sm:$0xff]
      %v3231 = vld [vmem:[%s4 + $0x1e0] sm:$0xff]
      %v3232 = vld [vmem:[%s4 + $0x1e8] sm:$0xff]
      %v3233 = vld [vmem:[%s4 + $0x1f0] sm:$0xff]
      %v3234 = vld [vmem:[%s4 + $0x1f8] sm:$0xff]
      %v3235 = vld [vmem:[%s4 + $0x200] sm:$0xff]
      %v3236 = vld [vmem:[%s4 + $0x208] sm:$0xff]
      %v3237 = vld [vmem:[%s4 + $0x210] sm:$0xff]
      %v3238 = vld [vmem:[%s4 + $0x218] sm:$0xff]
      %v3239 = vld [vmem:[%s4 + $0x220] sm:$0xff]
      %v3240 = vld [vmem:[%s4 + $0x228] sm:$0xff]
      %v3241 = vld [vmem:[%s4 + $0x230] sm:$0xff]
      %v3242 = vld [vmem:[%s4 + $0x238] sm:$0xff]
      %v3243 = vld [vmem:[%s4 + $0x240] sm:$0xff]
      %v3244 = vld [vmem:[%s4 + $0x248] sm:$0xff]
      %v3245 = vld [vmem:[%s4 + $0x250] sm:$0xff]
      %v3246 = vld [vmem:[%s4 + $0x258] sm:$0xff]
      %v3247 = vld [vmem:[%s4 + $0x260] sm:$0xff]
      %v3248 = vld [vmem:[%s4 + $0x268] sm:$0xff]
      %v3249 = vld [vmem:[%s4 + $0x270] sm:$0xff]
      %v3250 = vld [vmem:[%s4 + $0x278] sm:$0xff]
      %v3251 = vld [vmem:[%s4 + $0x280] sm:$0xff]
      %v3252 = vld [vmem:[%s4 + $0x288] sm:$0xff]
      %v3253 = vld [vmem:[%s4 + $0x290] sm:$0xff]
      %v3254 = vld [vmem:[%s4 + $0x298] sm:$0xff]
      %v3255 = vld [vmem:[%s4 + $0x2a0] sm:$0xff]
      %v3256 = vld [vmem:[%s4 + $0x2a8] sm:$0xff]
      %v3257 = vld [vmem:[%s4 + $0x2b0] sm:$0xff]
      %v3258 = vld [vmem:[%s4 + $0x2b8] sm:$0xff]
      %v3259 = vld [vmem:[%s4 + $0x2c0] sm:$0xff]
      %v3260 = vld [vmem:[%s4 + $0x2c8] sm:$0xff]
      %v3261 = vld [vmem:[%s4 + $0x2d0] sm:$0xff]
      %v3262 = vld [vmem:[%s4 + $0x2d8] sm:$0xff]
      %v3263 = vld [vmem:[%s4 + $0x2e0] sm:$0xff]
      %v3264 = vld [vmem:[%s4 + $0x2e8] sm:$0xff]
      %v3265 = vld [vmem:[%s4 + $0x2f0] sm:$0xff]
      %v3266 = vld [vmem:[%s4 + $0x2f8] sm:$0xff]
      %v3267 = vld [vmem:[%s4 + $0x300] sm:$0xff]
      %v3268 = vld [vmem:[%s4 + $0x308] sm:$0xff]
      %v3269 = vld [vmem:[%s4 + $0x310] sm:$0xff]
      %v3270 = vld [vmem:[%s4 + $0x318] sm:$0xff]
      %v3271 = vld [vmem:[%s4 + $0x320] sm:$0xff]
      %v3272 = vld [vmem:[%s4 + $0x328] sm:$0xff]
      %v3273 = vld [vmem:[%s4 + $0x330] sm:$0xff]
      %v3274 = vld [vmem:[%s4 + $0x338] sm:$0xff]
      %v3275 = vld [vmem:[%s4 + $0x340] sm:$0xff]
      %v3276 = vld [vmem:[%s4 + $0x348] sm:$0xff]
      %v3277 = vld [vmem:[%s4 + $0x350] sm:$0xff]
      %v3278 = vld [vmem:[%s4 + $0x358] sm:$0xff]
      %v3279 = vld [vmem:[%s4 + $0x360] sm:$0xff]
      %v3280 = vld [vmem:[%s4 + $0x368] sm:$0xff]
      %v3281 = vld [vmem:[%s4 + $0x370] sm:$0xff]
      %v3282 = vld [vmem:[%s4 + $0x378] sm:$0xff]
      %v3283 = vld [vmem:[#allocation3] sm:$0xf0]
      %v3284 = vld [vmem:[#allocation3 + $0x8] sm:$0xf0]
      %v3285 = vld [vmem:[#allocation3 + $0x20] sm:$0xff]
      %v3286 = vld [vmem:[#allocation3 + $0x28] sm:$0xff]
      %v3287 = vld [vmem:[#allocation3 + $0x40] sm:$0xff]
      %v3288 = vld [vmem:[#allocation3 + $0x48] sm:$0xff]
      %v3289 = vld [vmem:[#allocation3 + $0x60] sm:$0xff]
      %v3290 = vld [vmem:[#allocation3 + $0x68] sm:$0xff]
      %v3291 = vld [vmem:[#allocation3 + $0x80] sm:$0xf]
      %v3292 = vld [vmem:[#allocation3 + $0x88] sm:$0xf]
      %s3293 = scalar_lea.vmem %s4, 896
      %v3294 = vld [vmem:[%s3293] sm:$0xff]
      %v3295 = vld [vmem:[%s3293 + $0x8] sm:$0xff]
      %v3296 = vld [vmem:[%s3293 + $0x10] sm:$0xff]
      %v3297 = vld [vmem:[%s3293 + $0x18] sm:$0xff]
      %v3298 = vld [vmem:[%s3293 + $0x20] sm:$0xff]
      %v3299 = vld [vmem:[%s3293 + $0x28] sm:$0xff]
      %v3300 = vld [vmem:[%s3293 + $0x30] sm:$0xff]
      %v3301 = vld [vmem:[%s3293 + $0x38] sm:$0xff]
      %v3302 = vld [vmem:[%s3293 + $0x40] sm:$0xff]
      %v3303 = vld [vmem:[%s3293 + $0x48] sm:$0xff]
      %v3304 = vld [vmem:[%s3293 + $0x50] sm:$0xff]
      %v3305 = vld [vmem:[%s3293 + $0x58] sm:$0xff]
      %v3306 = vld [vmem:[%s3293 + $0x60] sm:$0xff]
      %v3307 = vld [vmem:[%s3293 + $0x68] sm:$0xff]
      %v3308 = vld [vmem:[%s3293 + $0x70] sm:$0xff]
      %v3309 = vld [vmem:[%s3293 + $0x78] sm:$0xff]
      %v3310 = vld [vmem:[%s3293 + $0x80] sm:$0xff]
      %v3311 = vld [vmem:[%s3293 + $0x88] sm:$0xff]
      %v3312 = vld [vmem:[%s3293 + $0x90] sm:$0xff]
      %v3313 = vld [vmem:[%s3293 + $0x98] sm:$0xff]
      %v3314 = vld [vmem:[%s3293 + $0xa0] sm:$0xff]
      %v3315 = vld [vmem:[%s3293 + $0xa8] sm:$0xff]
      %v3316 = vld [vmem:[%s3293 + $0xb0] sm:$0xff]
      %v3317 = vld [vmem:[%s3293 + $0xb8] sm:$0xff]
      %v3318 = vld [vmem:[%s3293 + $0xc0] sm:$0xff]
      %v3319 = vld [vmem:[%s3293 + $0xc8] sm:$0xff]
      %v3320 = vld [vmem:[%s3293 + $0xd0] sm:$0xff]
      %v3321 = vld [vmem:[%s3293 + $0xd8] sm:$0xff]
      %v3322 = vld [vmem:[%s3293 + $0xe0] sm:$0xff]
      %v3323 = vld [vmem:[%s3293 + $0xe8] sm:$0xff]
      %v3324 = vld [vmem:[%s3293 + $0xf0] sm:$0xff]
      %v3325 = vld [vmem:[%s3293 + $0xf8] sm:$0xff]
      %v3326 = vld [vmem:[%s3293 + $0x100] sm:$0xff]
      %v3327 = vld [vmem:[%s3293 + $0x108] sm:$0xff]
      %v3328 = vld [vmem:[%s3293 + $0x110] sm:$0xff]
      %v3329 = vld [vmem:[%s3293 + $0x118] sm:$0xff]
      %v3330 = vld [vmem:[%s3293 + $0x120] sm:$0xff]
      %v3331 = vld [vmem:[%s3293 + $0x128] sm:$0xff]
      %v3332 = vld [vmem:[%s3293 + $0x130] sm:$0xff]
      %v3333 = vld [vmem:[%s3293 + $0x138] sm:$0xff]
      %v3334 = vld [vmem:[%s3293 + $0x140] sm:$0xff]
      %v3335 = vld [vmem:[%s3293 + $0x148] sm:$0xff]
      %v3336 = vld [vmem:[%s3293 + $0x150] sm:$0xff]
      %v3337 = vld [vmem:[%s3293 + $0x158] sm:$0xff]
      %v3338 = vld [vmem:[%s3293 + $0x160] sm:$0xff]
      %v3339 = vld [vmem:[%s3293 + $0x168] sm:$0xff]
      %v3340 = vld [vmem:[%s3293 + $0x170] sm:$0xff]
      %v3341 = vld [vmem:[%s3293 + $0x178] sm:$0xff]
      %v3342 = vld [vmem:[%s3293 + $0x180] sm:$0xff]
      %v3343 = vld [vmem:[%s3293 + $0x188] sm:$0xff]
      %v3344 = vld [vmem:[%s3293 + $0x190] sm:$0xff]
      %v3345 = vld [vmem:[%s3293 + $0x198] sm:$0xff]
      %v3346 = vld [vmem:[%s3293 + $0x1a0] sm:$0xff]
      %v3347 = vld [vmem:[%s3293 + $0x1a8] sm:$0xff]
      %v3348 = vld [vmem:[%s3293 + $0x1b0] sm:$0xff]
      %v3349 = vld [vmem:[%s3293 + $0x1b8] sm:$0xff]
      %v3350 = vld [vmem:[%s3293 + $0x1c0] sm:$0xff]
      %v3351 = vld [vmem:[%s3293 + $0x1c8] sm:$0xff]
      %v3352 = vld [vmem:[%s3293 + $0x1d0] sm:$0xff]
      %v3353 = vld [vmem:[%s3293 + $0x1d8] sm:$0xff]
      %v3354 = vld [vmem:[%s3293 + $0x1e0] sm:$0xff]
      %v3355 = vld [vmem:[%s3293 + $0x1e8] sm:$0xff]
      %v3356 = vld [vmem:[%s3293 + $0x1f0] sm:$0xff]
      %v3357 = vld [vmem:[%s3293 + $0x1f8] sm:$0xff]
      %v3358 = vld [vmem:[%s3293 + $0x200] sm:$0xff]
      %v3359 = vld [vmem:[%s3293 + $0x208] sm:$0xff]
      %v3360 = vld [vmem:[%s3293 + $0x210] sm:$0xff]
      %v3361 = vld [vmem:[%s3293 + $0x218] sm:$0xff]
      %v3362 = vld [vmem:[%s3293 + $0x220] sm:$0xff]
      %v3363 = vld [vmem:[%s3293 + $0x228] sm:$0xff]
      %v3364 = vld [vmem:[%s3293 + $0x230] sm:$0xff]
      %v3365 = vld [vmem:[%s3293 + $0x238] sm:$0xff]
      %v3366 = vld [vmem:[%s3293 + $0x240] sm:$0xff]
      %v3367 = vld [vmem:[%s3293 + $0x248] sm:$0xff]
      %v3368 = vld [vmem:[%s3293 + $0x250] sm:$0xff]
      %v3369 = vld [vmem:[%s3293 + $0x258] sm:$0xff]
      %v3370 = vld [vmem:[%s3293 + $0x260] sm:$0xff]
      %v3371 = vld [vmem:[%s3293 + $0x268] sm:$0xff]
      %v3372 = vld [vmem:[%s3293 + $0x270] sm:$0xff]
      %v3373 = vld [vmem:[%s3293 + $0x278] sm:$0xff]
      %v3374 = vld [vmem:[%s3293 + $0x280] sm:$0xff]
      %v3375 = vld [vmem:[%s3293 + $0x288] sm:$0xff]
      %v3376 = vld [vmem:[%s3293 + $0x290] sm:$0xff]
      %v3377 = vld [vmem:[%s3293 + $0x298] sm:$0xff]
      %v3378 = vld [vmem:[%s3293 + $0x2a0] sm:$0xff]
      %v3379 = vld [vmem:[%s3293 + $0x2a8] sm:$0xff]
      %v3380 = vld [vmem:[%s3293 + $0x2b0] sm:$0xff]
      %v3381 = vld [vmem:[%s3293 + $0x2b8] sm:$0xff]
      %v3382 = vld [vmem:[%s3293 + $0x2c0] sm:$0xff]
      %v3383 = vld [vmem:[%s3293 + $0x2c8] sm:$0xff]
      %v3384 = vld [vmem:[%s3293 + $0x2d0] sm:$0xff]
      %v3385 = vld [vmem:[%s3293 + $0x2d8] sm:$0xff]
      %v3386 = vld [vmem:[%s3293 + $0x2e0] sm:$0xff]
      %v3387 = vld [vmem:[%s3293 + $0x2e8] sm:$0xff]
      %v3388 = vld [vmem:[%s3293 + $0x2f0] sm:$0xff]
      %v3389 = vld [vmem:[%s3293 + $0x2f8] sm:$0xff]
      %v3390 = vld [vmem:[%s3293 + $0x300] sm:$0xff]
      %v3391 = vld [vmem:[%s3293 + $0x308] sm:$0xff]
      %v3392 = vld [vmem:[%s3293 + $0x310] sm:$0xff]
      %v3393 = vld [vmem:[%s3293 + $0x318] sm:$0xff]
      %v3394 = vld [vmem:[%s3293 + $0x320] sm:$0xff]
      %v3395 = vld [vmem:[%s3293 + $0x328] sm:$0xff]
      %v3396 = vld [vmem:[%s3293 + $0x330] sm:$0xff]
      %v3397 = vld [vmem:[%s3293 + $0x338] sm:$0xff]
      %v3398 = vld [vmem:[%s3293 + $0x340] sm:$0xff]
      %v3399 = vld [vmem:[%s3293 + $0x348] sm:$0xff]
      %v3400 = vld [vmem:[%s3293 + $0x350] sm:$0xff]
      %v3401 = vld [vmem:[%s3293 + $0x358] sm:$0xff]
      %v3402 = vld [vmem:[%s3293 + $0x360] sm:$0xff]
      %v3403 = vld [vmem:[%s3293 + $0x368] sm:$0xff]
      %v3404 = vld [vmem:[%s3293 + $0x370] sm:$0xff]
      %v3405 = vld [vmem:[%s3293 + $0x378] sm:$0xff]
      %v3416 = vrot.slane %v3283, 4
      %v3417 = vrot.slane %v3285, 4
      %v3418 = vsel %vm3088, %v3416, %v3417
      %v3419 = vrot.slane %v3284, 4
      %v3420 = vrot.slane %v3286, 4
      %v3421 = vsel %vm3088, %v3419, %v3420
      %v3422 = vrot.slane %v3287, 4
      %v3423 = vsel %vm3088, %v3417, %v3422
      %v3424 = vrot.slane %v3288, 4
      %v3425 = vsel %vm3088, %v3420, %v3424
      %v3426 = vrot.slane %v3289, 4
      %v3427 = vsel %vm3088, %v3422, %v3426
      %v3428 = vrot.slane %v3290, 4
      %v3429 = vsel %vm3088, %v3424, %v3428
      %v3430 = vrot.slane %v3291, 4
      %v3431 = vsel %vm3088, %v3426, %v3430
      %v3432 = vrot.slane %v3292, 4
      %v3433 = vsel %vm3088, %v3428, %v3432
      %v3550 = vunpack.c.l.b16 %v3294
      %v3551 = vunpack.c.h.b16 %v3294
      %v3552 = vunpack.c.l.b16 %v3295
      %v3553 = vunpack.c.h.b16 %v3295
      %v3554 = vunpack.c.l.b16 %v3296
      %v3555 = vunpack.c.h.b16 %v3296
      %v3556 = vunpack.c.l.b16 %v3297
      %v3557 = vunpack.c.h.b16 %v3297
      %v3558 = vunpack.c.l.b16 %v3298
      %v3559 = vunpack.c.h.b16 %v3298
      %v3560 = vunpack.c.l.b16 %v3299
      %v3561 = vunpack.c.h.b16 %v3299
      %v3562 = vunpack.c.l.b16 %v3300
      %v3563 = vunpack.c.h.b16 %v3300
      %v3564 = vunpack.c.l.b16 %v3301
      %v3565 = vunpack.c.h.b16 %v3301
      %v3566 = vunpack.c.l.b16 %v3302
      %v3567 = vunpack.c.h.b16 %v3302
      %v3568 = vunpack.c.l.b16 %v3303
      %v3569 = vunpack.c.h.b16 %v3303
      %v3570 = vunpack.c.l.b16 %v3304
      %v3571 = vunpack.c.h.b16 %v3304
      %v3572 = vunpack.c.l.b16 %v3305
      %v3573 = vunpack.c.h.b16 %v3305
      %v3574 = vunpack.c.l.b16 %v3306
      %v3575 = vunpack.c.h.b16 %v3306
      %v3576 = vunpack.c.l.b16 %v3307
      %v3577 = vunpack.c.h.b16 %v3307
      %v3578 = vunpack.c.l.b16 %v3308
      %v3579 = vunpack.c.h.b16 %v3308
      %v3580 = vunpack.c.l.b16 %v3309
      %v3581 = vunpack.c.h.b16 %v3309
      %v3582 = vunpack.c.l.b16 %v3310
      %v3583 = vunpack.c.h.b16 %v3310
      %v3584 = vunpack.c.l.b16 %v3311
      %v3585 = vunpack.c.h.b16 %v3311
      %v3586 = vunpack.c.l.b16 %v3312
      %v3587 = vunpack.c.h.b16 %v3312
      %v3588 = vunpack.c.l.b16 %v3313
      %v3589 = vunpack.c.h.b16 %v3313
      %v3590 = vunpack.c.l.b16 %v3314
      %v3591 = vunpack.c.h.b16 %v3314
      %v3592 = vunpack.c.l.b16 %v3315
      %v3593 = vunpack.c.h.b16 %v3315
      %v3594 = vunpack.c.l.b16 %v3316
      %v3595 = vunpack.c.h.b16 %v3316
      %v3596 = vunpack.c.l.b16 %v3317
      %v3597 = vunpack.c.h.b16 %v3317
      %v3598 = vunpack.c.l.b16 %v3318
      %v3599 = vunpack.c.h.b16 %v3318
      %v3600 = vunpack.c.l.b16 %v3319
      %v3601 = vunpack.c.h.b16 %v3319
      %v3602 = vunpack.c.l.b16 %v3320
      %v3603 = vunpack.c.h.b16 %v3320
      %v3604 = vunpack.c.l.b16 %v3321
      %v3605 = vunpack.c.h.b16 %v3321
      %v3606 = vunpack.c.l.b16 %v3322
      %v3607 = vunpack.c.h.b16 %v3322
      %v3608 = vunpack.c.l.b16 %v3323
      %v3609 = vunpack.c.h.b16 %v3323
      %v3610 = vunpack.c.l.b16 %v3324
      %v3611 = vunpack.c.h.b16 %v3324
      %v3612 = vunpack.c.l.b16 %v3325
      %v3613 = vunpack.c.h.b16 %v3325
      %v3614 = vunpack.c.l.b16 %v3326
      %v3615 = vunpack.c.h.b16 %v3326
      %v3616 = vunpack.c.l.b16 %v3327
      %v3617 = vunpack.c.h.b16 %v3327
      %v3618 = vunpack.c.l.b16 %v3328
      %v3619 = vunpack.c.h.b16 %v3328
      %v3620 = vunpack.c.l.b16 %v3329
      %v3621 = vunpack.c.h.b16 %v3329
      %v3622 = vunpack.c.l.b16 %v3330
      %v3623 = vunpack.c.h.b16 %v3330
      %v3624 = vunpack.c.l.b16 %v3331
      %v3625 = vunpack.c.h.b16 %v3331
      %v3626 = vunpack.c.l.b16 %v3332
      %v3627 = vunpack.c.h.b16 %v3332
      %v3628 = vunpack.c.l.b16 %v3333
      %v3629 = vunpack.c.h.b16 %v3333
      %v3630 = vunpack.c.l.b16 %v3334
      %v3631 = vunpack.c.h.b16 %v3334
      %v3632 = vunpack.c.l.b16 %v3335
      %v3633 = vunpack.c.h.b16 %v3335
      %v3634 = vunpack.c.l.b16 %v3336
      %v3635 = vunpack.c.h.b16 %v3336
      %v3636 = vunpack.c.l.b16 %v3337
      %v3637 = vunpack.c.h.b16 %v3337
      %v3638 = vunpack.c.l.b16 %v3338
      %v3639 = vunpack.c.h.b16 %v3338
      %v3640 = vunpack.c.l.b16 %v3339
      %v3641 = vunpack.c.h.b16 %v3339
      %v3642 = vunpack.c.l.b16 %v3340
      %v3643 = vunpack.c.h.b16 %v3340
      %v3644 = vunpack.c.l.b16 %v3341
      %v3645 = vunpack.c.h.b16 %v3341
      %v3646 = vunpack.c.l.b16 %v3342
      %v3647 = vunpack.c.h.b16 %v3342
      %v3648 = vunpack.c.l.b16 %v3343
      %v3649 = vunpack.c.h.b16 %v3343
      %v3650 = vunpack.c.l.b16 %v3344
      %v3651 = vunpack.c.h.b16 %v3344
      %v3652 = vunpack.c.l.b16 %v3345
      %v3653 = vunpack.c.h.b16 %v3345
      %v3654 = vunpack.c.l.b16 %v3346
      %v3655 = vunpack.c.h.b16 %v3346
      %v3656 = vunpack.c.l.b16 %v3347
      %v3657 = vunpack.c.h.b16 %v3347
      %v3658 = vunpack.c.l.b16 %v3348
      %v3659 = vunpack.c.h.b16 %v3348
      %v3660 = vunpack.c.l.b16 %v3349
      %v3661 = vunpack.c.h.b16 %v3349
      %v3662 = vunpack.c.l.b16 %v3350
      %v3663 = vunpack.c.h.b16 %v3350
      %v3664 = vunpack.c.l.b16 %v3351
      %v3665 = vunpack.c.h.b16 %v3351
      %v3666 = vunpack.c.l.b16 %v3352
      %v3667 = vunpack.c.h.b16 %v3352
      %v3668 = vunpack.c.l.b16 %v3353
      %v3669 = vunpack.c.h.b16 %v3353
      %v3670 = vunpack.c.l.b16 %v3354
      %v3671 = vunpack.c.h.b16 %v3354
      %v3672 = vunpack.c.l.b16 %v3355
      %v3673 = vunpack.c.h.b16 %v3355
      %v3674 = vunpack.c.l.b16 %v3356
      %v3675 = vunpack.c.h.b16 %v3356
      %v3676 = vunpack.c.l.b16 %v3357
      %v3677 = vunpack.c.h.b16 %v3357
      %v3678 = vunpack.c.l.b16 %v3358
      %v3679 = vunpack.c.h.b16 %v3358
      %v3680 = vunpack.c.l.b16 %v3359
      %v3681 = vunpack.c.h.b16 %v3359
      %v3682 = vunpack.c.l.b16 %v3360
      %v3683 = vunpack.c.h.b16 %v3360
      %v3684 = vunpack.c.l.b16 %v3361
      %v3685 = vunpack.c.h.b16 %v3361
      %v3686 = vunpack.c.l.b16 %v3362
      %v3687 = vunpack.c.h.b16 %v3362
      %v3688 = vunpack.c.l.b16 %v3363
      %v3689 = vunpack.c.h.b16 %v3363
      %v3690 = vunpack.c.l.b16 %v3364
      %v3691 = vunpack.c.h.b16 %v3364
      %v3692 = vunpack.c.l.b16 %v3365
      %v3693 = vunpack.c.h.b16 %v3365
      %v3694 = vunpack.c.l.b16 %v3366
      %v3695 = vunpack.c.h.b16 %v3366
      %v3696 = vunpack.c.l.b16 %v3367
      %v3697 = vunpack.c.h.b16 %v3367
      %v3698 = vunpack.c.l.b16 %v3368
      %v3699 = vunpack.c.h.b16 %v3368
      %v3700 = vunpack.c.l.b16 %v3369
      %v3701 = vunpack.c.h.b16 %v3369
      %v3702 = vunpack.c.l.b16 %v3370
      %v3703 = vunpack.c.h.b16 %v3370
      %v3704 = vunpack.c.l.b16 %v3371
      %v3705 = vunpack.c.h.b16 %v3371
      %v3706 = vunpack.c.l.b16 %v3372
      %v3707 = vunpack.c.h.b16 %v3372
      %v3708 = vunpack.c.l.b16 %v3373
      %v3709 = vunpack.c.h.b16 %v3373
      %v3710 = vunpack.c.l.b16 %v3374
      %v3711 = vunpack.c.h.b16 %v3374
      %v3712 = vunpack.c.l.b16 %v3375
      %v3713 = vunpack.c.h.b16 %v3375
      %v3714 = vunpack.c.l.b16 %v3376
      %v3715 = vunpack.c.h.b16 %v3376
      %v3716 = vunpack.c.l.b16 %v3377
      %v3717 = vunpack.c.h.b16 %v3377
      %v3718 = vunpack.c.l.b16 %v3378
      %v3719 = vunpack.c.h.b16 %v3378
      %v3720 = vunpack.c.l.b16 %v3379
      %v3721 = vunpack.c.h.b16 %v3379
      %v3722 = vunpack.c.l.b16 %v3380
      %v3723 = vunpack.c.h.b16 %v3380
      %v3724 = vunpack.c.l.b16 %v3381
      %v3725 = vunpack.c.h.b16 %v3381
      %v3726 = vunpack.c.l.b16 %v3382
      %v3727 = vunpack.c.h.b16 %v3382
      %v3728 = vunpack.c.l.b16 %v3383
      %v3729 = vunpack.c.h.b16 %v3383
      %v3730 = vunpack.c.l.b16 %v3384
      %v3731 = vunpack.c.h.b16 %v3384
      %v3732 = vunpack.c.l.b16 %v3385
      %v3733 = vunpack.c.h.b16 %v3385
      %v3734 = vunpack.c.l.b16 %v3386
      %v3735 = vunpack.c.h.b16 %v3386
      %v3736 = vunpack.c.l.b16 %v3387
      %v3737 = vunpack.c.h.b16 %v3387
      %v3738 = vunpack.c.l.b16 %v3388
      %v3739 = vunpack.c.h.b16 %v3388
      %v3740 = vunpack.c.l.b16 %v3389
      %v3741 = vunpack.c.h.b16 %v3389
      %v3742 = vunpack.c.l.b16 %v3390
      %v3743 = vunpack.c.h.b16 %v3390
      %v3744 = vunpack.c.l.b16 %v3391
      %v3745 = vunpack.c.h.b16 %v3391
      %v3746 = vunpack.c.l.b16 %v3392
      %v3747 = vunpack.c.h.b16 %v3392
      %v3748 = vunpack.c.l.b16 %v3393
      %v3749 = vunpack.c.h.b16 %v3393
      %v3750 = vunpack.c.l.b16 %v3394
      %v3751 = vunpack.c.h.b16 %v3394
      %v3752 = vunpack.c.l.b16 %v3395
      %v3753 = vunpack.c.h.b16 %v3395
      %v3754 = vunpack.c.l.b16 %v3396
      %v3755 = vunpack.c.h.b16 %v3396
      %v3756 = vunpack.c.l.b16 %v3397
      %v3757 = vunpack.c.h.b16 %v3397
      %v3758 = vunpack.c.l.b16 %v3398
      %v3759 = vunpack.c.h.b16 %v3398
      %v3760 = vunpack.c.l.b16 %v3399
      %v3761 = vunpack.c.h.b16 %v3399
      %v3762 = vunpack.c.l.b16 %v3400
      %v3763 = vunpack.c.h.b16 %v3400
      %v3764 = vunpack.c.l.b16 %v3401
      %v3765 = vunpack.c.h.b16 %v3401
      %v3766 = vunpack.c.l.b16 %v3402
      %v3767 = vunpack.c.h.b16 %v3402
      %v3768 = vunpack.c.l.b16 %v3403
      %v3769 = vunpack.c.h.b16 %v3403
      %v3770 = vunpack.c.l.b16 %v3404
      %v3771 = vunpack.c.h.b16 %v3404
      %v3772 = vunpack.c.l.b16 %v3405
      %v3773 = vunpack.c.h.b16 %v3405
      %v3774 = vpack.c.b16 %v3558, %v3550
      %v3775 = vpack.c.b16 %v3559, %v3551
      %v3776 = vpack.c.b16 %v3560, %v3552
      %v3777 = vpack.c.b16 %v3561, %v3553
      %v3778 = vpack.c.b16 %v3562, %v3554
      %v3779 = vpack.c.b16 %v3563, %v3555
      %v3780 = vpack.c.b16 %v3564, %v3556
      %v3781 = vpack.c.b16 %v3565, %v3557
      %v3782 = vpack.c.b16 %v3574, %v3566
      %v3783 = vpack.c.b16 %v3575, %v3567
      %v3784 = vpack.c.b16 %v3576, %v3568
      %v3785 = vpack.c.b16 %v3577, %v3569
      %v3786 = vpack.c.b16 %v3578, %v3570
      %v3787 = vpack.c.b16 %v3579, %v3571
      %v3788 = vpack.c.b16 %v3580, %v3572
      %v3789 = vpack.c.b16 %v3581, %v3573
      %v3790 = vpack.c.b16 %v3590, %v3582
      %v3791 = vpack.c.b16 %v3591, %v3583
      %v3792 = vpack.c.b16 %v3592, %v3584
      %v3793 = vpack.c.b16 %v3593, %v3585
      %v3794 = vpack.c.b16 %v3594, %v3586
      %v3795 = vpack.c.b16 %v3595, %v3587
      %v3796 = vpack.c.b16 %v3596, %v3588
      %v3797 = vpack.c.b16 %v3597, %v3589
      %v3798 = vpack.c.b16 %v3606, %v3598
      %v3799 = vpack.c.b16 %v3607, %v3599
      %v3800 = vpack.c.b16 %v3608, %v3600
      %v3801 = vpack.c.b16 %v3609, %v3601
      %v3802 = vpack.c.b16 %v3610, %v3602
      %v3803 = vpack.c.b16 %v3611, %v3603
      %v3804 = vpack.c.b16 %v3612, %v3604
      %v3805 = vpack.c.b16 %v3613, %v3605
      %v3806 = vpack.c.b16 %v3622, %v3614
      %v3807 = vpack.c.b16 %v3623, %v3615
      %v3808 = vpack.c.b16 %v3624, %v3616
      %v3809 = vpack.c.b16 %v3625, %v3617
      %v3810 = vpack.c.b16 %v3626, %v3618
      %v3811 = vpack.c.b16 %v3627, %v3619
      %v3812 = vpack.c.b16 %v3628, %v3620
      %v3813 = vpack.c.b16 %v3629, %v3621
      %v3814 = vpack.c.b16 %v3638, %v3630
      %v3815 = vpack.c.b16 %v3639, %v3631
      %v3816 = vpack.c.b16 %v3640, %v3632
      %v3817 = vpack.c.b16 %v3641, %v3633
      %v3818 = vpack.c.b16 %v3642, %v3634
      %v3819 = vpack.c.b16 %v3643, %v3635
      %v3820 = vpack.c.b16 %v3644, %v3636
      %v3821 = vpack.c.b16 %v3645, %v3637
      %v3822 = vpack.c.b16 %v3654, %v3646
      %v3823 = vpack.c.b16 %v3655, %v3647
      %v3824 = vpack.c.b16 %v3656, %v3648
      %v3825 = vpack.c.b16 %v3657, %v3649
      %v3826 = vpack.c.b16 %v3658, %v3650
      %v3827 = vpack.c.b16 %v3659, %v3651
      %v3828 = vpack.c.b16 %v3660, %v3652
      %v3829 = vpack.c.b16 %v3661, %v3653
      %v3830 = vpack.c.b16 %v3670, %v3662
      %v3831 = vpack.c.b16 %v3671, %v3663
      %v3832 = vpack.c.b16 %v3672, %v3664
      %v3833 = vpack.c.b16 %v3673, %v3665
      %v3834 = vpack.c.b16 %v3674, %v3666
      %v3835 = vpack.c.b16 %v3675, %v3667
      %v3836 = vpack.c.b16 %v3676, %v3668
      %v3837 = vpack.c.b16 %v3677, %v3669
      %v3838 = vpack.c.b16 %v3686, %v3678
      %v3839 = vpack.c.b16 %v3687, %v3679
      %v3840 = vpack.c.b16 %v3688, %v3680
      %v3841 = vpack.c.b16 %v3689, %v3681
      %v3842 = vpack.c.b16 %v3690, %v3682
      %v3843 = vpack.c.b16 %v3691, %v3683
      %v3844 = vpack.c.b16 %v3692, %v3684
      %v3845 = vpack.c.b16 %v3693, %v3685
      %v3846 = vpack.c.b16 %v3702, %v3694
      %v3847 = vpack.c.b16 %v3703, %v3695
      %v3848 = vpack.c.b16 %v3704, %v3696
      %v3849 = vpack.c.b16 %v3705, %v3697
      %v3850 = vpack.c.b16 %v3706, %v3698
      %v3851 = vpack.c.b16 %v3707, %v3699
      %v3852 = vpack.c.b16 %v3708, %v3700
      %v3853 = vpack.c.b16 %v3709, %v3701
      %v3854 = vpack.c.b16 %v3718, %v3710
      %v3855 = vpack.c.b16 %v3719, %v3711
      %v3856 = vpack.c.b16 %v3720, %v3712
      %v3857 = vpack.c.b16 %v3721, %v3713
      %v3858 = vpack.c.b16 %v3722, %v3714
      %v3859 = vpack.c.b16 %v3723, %v3715
      %v3860 = vpack.c.b16 %v3724, %v3716
      %v3861 = vpack.c.b16 %v3725, %v3717
      %v3862 = vpack.c.b16 %v3734, %v3726
      %v3863 = vpack.c.b16 %v3735, %v3727
      %v3864 = vpack.c.b16 %v3736, %v3728
      %v3865 = vpack.c.b16 %v3737, %v3729
      %v3866 = vpack.c.b16 %v3738, %v3730
      %v3867 = vpack.c.b16 %v3739, %v3731
      %v3868 = vpack.c.b16 %v3740, %v3732
      %v3869 = vpack.c.b16 %v3741, %v3733
      %v3870 = vpack.c.b16 %v3750, %v3742
      %v3871 = vpack.c.b16 %v3751, %v3743
      %v3872 = vpack.c.b16 %v3752, %v3744
      %v3873 = vpack.c.b16 %v3753, %v3745
      %v3874 = vpack.c.b16 %v3754, %v3746
      %v3875 = vpack.c.b16 %v3755, %v3747
      %v3876 = vpack.c.b16 %v3756, %v3748
      %v3877 = vpack.c.b16 %v3757, %v3749
      %v3878 = vpack.c.b16 %v3766, %v3758
      %v3879 = vpack.c.b16 %v3767, %v3759
      %v3880 = vpack.c.b16 %v3768, %v3760
      %v3881 = vpack.c.b16 %v3769, %v3761
      %v3882 = vpack.c.b16 %v3770, %v3762
      %v3883 = vpack.c.b16 %v3771, %v3763
      %v3884 = vpack.c.b16 %v3772, %v3764
      %v3885 = vpack.c.b16 %v3773, %v3765
      %vm3998 = vcmask 785408
      %v4000 = vsel %vm3998, %v3421, 0
      %v4003 = vsel %vm3998, %v3425, 0
      %v4006 = vsel %vm3998, %v3429, 0
      %v4009 = vsel %vm3998, %v3433, 0
      %4011 = vmatprep.subr.bf16.mxu0 %v3775
      %4012 = vmatpush1.bf16.msra.mxu0 %v3774
      %4013 = vmatprep.subr.bf16.mxu0 %v3783
      %4014 = vmatpush1.bf16.msra.mxu0 %v3782
      %4015 = vmatprep.subr.bf16.mxu0 %v3791
      %4016 = vmatpush1.bf16.msra.mxu0 %v3790
      %4017 = vmatprep.subr.bf16.mxu0 %v3799
      %4018 = vmatpush1.bf16.msra.mxu0 %v3798
      %4019 = vmatprep.subr.bf16.mxu0 %v3807
      %4020 = vmatpush1.bf16.msra.mxu0 %v3806
      %4021 = vmatprep.subr.bf16.mxu0 %v3815
      %4022 = vmatpush1.bf16.msra.mxu0 %v3814
      %4023 = vmatprep.subr.bf16.mxu0 %v3823
      %4024 = vmatpush1.bf16.msra.mxu0 %v3822
      %4025 = vmatprep.subr.bf16.mxu0 %v3831
      %4026 = vmatpush1.bf16.msra.mxu0 %v3830
      %4027 = vmatprep.subr.bf16.mxu0 %v3839
      %4028 = vmatpush1.bf16.msra.mxu0 %v3838
      %4029 = vmatprep.subr.bf16.mxu0 %v3847
      %4030 = vmatpush1.bf16.msra.mxu0 %v3846
      %4031 = vmatprep.subr.bf16.mxu0 %v3855
      %4032 = vmatpush1.bf16.msra.mxu0 %v3854
      %4033 = vmatprep.subr.bf16.mxu0 %v3863
      %4034 = vmatpush1.bf16.msra.mxu0 %v3862
      %4035 = vmatprep.subr.bf16.mxu0 %v3871
      %4036 = vmatpush1.bf16.msra.mxu0 %v3870
      %4037 = vmatprep.subr.bf16.mxu0 %v3879
      %4038 = vmatpush1.bf16.msra.mxu0 %v3878
      %4039 = vmatprep.subr.bf16.mxu0 0
      %4040 = vmatpush1.bf16.msra.mxu0 0
      %4041 = vmatprep.subr.bf16.mxu0 0
      %4042 = vmatpush1.bf16.msra.mxu0 0
      %4043 = vmatprep.mubr.bf16.mxu0 %v4000
      %4044 = vmatmul.mubr.bf16.gmra.mrb[0].mxu0 %v3418
      %v4045 = vpop.f32.mrb[0].mxu0
      %v4046 = vadd.f32 0.0, %v4045
      %v4047 = vpop.f32.mrb[0].mxu0
      %v4048 = vadd.f32 0.0, %v4047
      %v4049 = vpop.f32.mrb[0].mxu0
      %v4050 = vadd.f32 0.0, %v4049
      %v4051 = vpop.f32.mrb[0].mxu0
      %v4052 = vadd.f32 0.0, %v4051
      %4053 = vmatprep.mubr.bf16.mxu0 %v4003
      %4054 = vmatmul.mubr.bf16.gmra.mrb[0].mxu0 %v3423
      %v4055 = vpop.f32.mrb[0].mxu0
      %v4056 = vadd.f32 0.0, %v4055
      %v4057 = vpop.f32.mrb[0].mxu0
      %v4058 = vadd.f32 0.0, %v4057
      %v4059 = vpop.f32.mrb[0].mxu0
      %v4060 = vadd.f32 0.0, %v4059
      %v4061 = vpop.f32.mrb[0].mxu0
      %v4062 = vadd.f32 0.0, %v4061
      %4063 = vmatprep.mubr.bf16.mxu0 %v4006
      %4064 = vmatmul.mubr.bf16.gmra.mrb[0].mxu0 %v3427
      %v4065 = vpop.f32.mrb[0].mxu0
      %v4066 = vadd.f32 0.0, %v4065
      %v4067 = vpop.f32.mrb[0].mxu0
      %v4068 = vadd.f32 0.0, %v4067
      %v4069 = vpop.f32.mrb[0].mxu0
      %v4070 = vadd.f32 0.0, %v4069
      %v4071 = vpop.f32.mrb[0].mxu0
      %v4072 = vadd.f32 0.0, %v4071
      %4073 = vmatprep.mubr.bf16.mxu0 %v4009
      %4074 = vmatmul.mubr.bf16.gmra.mrb[0].mxu0 %v3431
      %v4075 = vpop.f32.mrb[0].mxu0
      %v4076 = vadd.f32 0.0, %v4075
      %v4077 = vpop.f32.mrb[0].mxu0
      %v4078 = vadd.f32 0.0, %v4077
      %v4079 = vpop.f32.mrb[0].mxu0
      %v4080 = vadd.f32 0.0, %v4079
      %v4081 = vpop.f32.mrb[0].mxu0
      %v4082 = vadd.f32 0.0, %v4081
      %4083 = vdwg.mxu0
      %4084 = vmatprep.subr.bf16.mxu0 %v3777
      %4085 = vmatpush1.bf16.msra.mxu0 %v3776
      %4086 = vmatprep.subr.bf16.mxu0 %v3785
      %4087 = vmatpush1.bf16.msra.mxu0 %v3784
      %4088 = vmatprep.subr.bf16.mxu0 %v3793
      %4089 = vmatpush1.bf16.msra.mxu0 %v3792
      %4090 = vmatprep.subr.bf16.mxu0 %v3801
      %4091 = vmatpush1.bf16.msra.mxu0 %v3800
      %4092 = vmatprep.subr.bf16.mxu0 %v3809
      %4093 = vmatpush1.bf16.msra.mxu0 %v3808
      %4094 = vmatprep.subr.bf16.mxu0 %v3817
      %4095 = vmatpush1.bf16.msra.mxu0 %v3816
      %4096 = vmatprep.subr.bf16.mxu0 %v3825
      %4097 = vmatpush1.bf16.msra.mxu0 %v3824
      %4098 = vmatprep.subr.bf16.mxu0 %v3833
      %4099 = vmatpush1.bf16.msra.mxu0 %v3832
      %4100 = vmatprep.subr.bf16.mxu0 %v3841
      %4101 = vmatpush1.bf16.msra.mxu0 %v3840
      %4102 = vmatprep.subr.bf16.mxu0 %v3849
      %4103 = vmatpush1.bf16.msra.mxu0 %v3848
      %4104 = vmatprep.subr.bf16.mxu0 %v3857
      %4105 = vmatpush1.bf16.msra.mxu0 %v3856
      %4106 = vmatprep.subr.bf16.mxu0 %v3865
      %4107 = vmatpush1.bf16.msra.mxu0 %v3864
      %4108 = vmatprep.subr.bf16.mxu0 %v3873
      %4109 = vmatpush1.bf16.msra.mxu0 %v3872
      %4110 = vmatprep.subr.bf16.mxu0 %v3881
      %4111 = vmatpush1.bf16.msra.mxu0 %v3880
      %4112 = vmatprep.subr.bf16.mxu0 0
      %4113 = vmatpush1.bf16.msra.mxu0 0
      %4114 = vmatprep.subr.bf16.mxu0 0
      %4115 = vmatpush1.bf16.msra.mxu0 0
      %4116 = vmatprep.mubr.bf16.mxu0 %v4000
      %4117 = vmatmul.mubr.bf16.gmra.mrb[0].mxu0 %v3418
      %v4118 = vpop.f32.mrb[0].mxu0
      %v4119 = vadd.f32 0.0, %v4118
      %v4120 = vpop.f32.mrb[0].mxu0
      %v4121 = vadd.f32 0.0, %v4120
      %v4122 = vpop.f32.mrb[0].mxu0
      %v4123 = vadd.f32 0.0, %v4122
      %v4124 = vpop.f32.mrb[0].mxu0
      %v4125 = vadd.f32 0.0, %v4124
      %4126 = vmatprep.mubr.bf16.mxu0 %v4003
      %4127 = vmatmul.mubr.bf16.gmra.mrb[0].mxu0 %v3423
      %v4128 = vpop.f32.mrb[0].mxu0
      %v4129 = vadd.f32 0.0, %v4128
      %v4130 = vpop.f32.mrb[0].mxu0
      %v4131 = vadd.f32 0.0, %v4130
      %v4132 = vpop.f32.mrb[0].mxu0
      %v4133 = vadd.f32 0.0, %v4132
      %v4134 = vpop.f32.mrb[0].mxu0
      %v4135 = vadd.f32 0.0, %v4134
      %4136 = vmatprep.mubr.bf16.mxu0 %v4006
      %4137 = vmatmul.mubr.bf16.gmra.mrb[0].mxu0 %v3427
      %v4138 = vpop.f32.mrb[0].mxu0
      %v4139 = vadd.f32 0.0, %v4138
      %v4140 = vpop.f32.mrb[0].mxu0
      %v4141 = vadd.f32 0.0, %v4140
      %v4142 = vpop.f32.mrb[0].mxu0
      %v4143 = vadd.f32 0.0, %v4142
      %v4144 = vpop.f32.mrb[0].mxu0
      %v4145 = vadd.f32 0.0, %v4144
      %4146 = vmatprep.mubr.bf16.mxu0 %v4009
      %4147 = vmatmul.mubr.bf16.gmra.mrb[0].mxu0 %v3431
      %v4148 = vpop.f32.mrb[0].mxu0
      %v4149 = vadd.f32 0.0, %v4148
      %v4150 = vpop.f32.mrb[0].mxu0
      %v4151 = vadd.f32 0.0, %v4150
      %v4152 = vpop.f32.mrb[0].mxu0
      %v4153 = vadd.f32 0.0, %v4152
      %v4154 = vpop.f32.mrb[0].mxu0
      %v4155 = vadd.f32 0.0, %v4154
      %4156 = vdwg.mxu0
      %4157 = vmatprep.subr.bf16.mxu0 %v3779
      %4158 = vmatpush1.bf16.msra.mxu0 %v3778
      %4159 = vmatprep.subr.bf16.mxu0 %v3787
      %4160 = vmatpush1.bf16.msra.mxu0 %v3786
      %4161 = vmatprep.subr.bf16.mxu0 %v3795
      %4162 = vmatpush1.bf16.msra.mxu0 %v3794
      %4163 = vmatprep.subr.bf16.mxu0 %v3803
      %4164 = vmatpush1.bf16.msra.mxu0 %v3802
      %4165 = vmatprep.subr.bf16.mxu0 %v3811
      %4166 = vmatpush1.bf16.msra.mxu0 %v3810
      %4167 = vmatprep.subr.bf16.mxu0 %v3819
      %4168 = vmatpush1.bf16.msra.mxu0 %v3818
      %4169 = vmatprep.subr.bf16.mxu0 %v3827
      %4170 = vmatpush1.bf16.msra.mxu0 %v3826
      %4171 = vmatprep.subr.bf16.mxu0 %v3835
      %4172 = vmatpush1.bf16.msra.mxu0 %v3834
      %4173 = vmatprep.subr.bf16.mxu0 %v3843
      %4174 = vmatpush1.bf16.msra.mxu0 %v3842
      %4175 = vmatprep.subr.bf16.mxu0 %v3851
      %4176 = vmatpush1.bf16.msra.mxu0 %v3850
      %4177 = vmatprep.subr.bf16.mxu0 %v3859
      %4178 = vmatpush1.bf16.msra.mxu0 %v3858
      %4179 = vmatprep.subr.bf16.mxu0 %v3867
      %4180 = vmatpush1.bf16.msra.mxu0 %v3866
      %4181 = vmatprep.subr.bf16.mxu0 %v3875
      %4182 = vmatpush1.bf16.msra.mxu0 %v3874
      %4183 = vmatprep.subr.bf16.mxu0 %v3883
      %4184 = vmatpush1.bf16.msra.mxu0 %v3882
      %4185 = vmatprep.subr.bf16.mxu0 0
      %4186 = vmatpush1.bf16.msra.mxu0 0
      %4187 = vmatprep.subr.bf16.mxu0 0
      %4188 = vmatpush1.bf16.msra.mxu0 0
      %4189 = vmatprep.mubr.bf16.mxu0 %v4000
      %4190 = vmatmul.mubr.bf16.gmra.mrb[0].mxu0 %v3418
      %v4191 = vpop.f32.mrb[0].mxu0
      %v4192 = vadd.f32 0.0, %v4191
      %v4193 = vpop.f32.mrb[0].mxu0
      %v4194 = vadd.f32 0.0, %v4193
      %v4195 = vpop.f32.mrb[0].mxu0
      %v4196 = vadd.f32 0.0, %v4195
      %v4197 = vpop.f32.mrb[0].mxu0
      %v4198 = vadd.f32 0.0, %v4197
      %4199 = vmatprep.mubr.bf16.mxu0 %v4003
      %4200 = vmatmul.mubr.bf16.gmra.mrb[0].mxu0 %v3423
      %v4201 = vpop.f32.mrb[0].mxu0
      %v4202 = vadd.f32 0.0, %v4201
      %v4203 = vpop.f32.mrb[0].mxu0
      %v4204 = vadd.f32 0.0, %v4203
      %v4205 = vpop.f32.mrb[0].mxu0
      %v4206 = vadd.f32 0.0, %v4205
      %v4207 = vpop.f32.mrb[0].mxu0
      %v4208 = vadd.f32 0.0, %v4207
      %4209 = vmatprep.mubr.bf16.mxu0 %v4006
      %4210 = vmatmul.mubr.bf16.gmra.mrb[0].mxu0 %v3427
      %v4211 = vpop.f32.mrb[0].mxu0
      %v4212 = vadd.f32 0.0, %v4211
      %v4213 = vpop.f32.mrb[0].mxu0
      %v4214 = vadd.f32 0.0, %v4213
      %v4215 = vpop.f32.mrb[0].mxu0
      %v4216 = vadd.f32 0.0, %v4215
      %v4217 = vpop.f32.mrb[0].mxu0
      %v4218 = vadd.f32 0.0, %v4217
      %4219 = vmatprep.mubr.bf16.mxu0 %v4009
      %4220 = vmatmul.mubr.bf16.gmra.mrb[0].mxu0 %v3431
      %v4221 = vpop.f32.mrb[0].mxu0
      %v4222 = vadd.f32 0.0, %v4221
      %v4223 = vpop.f32.mrb[0].mxu0
      %v4224 = vadd.f32 0.0, %v4223
      %v4225 = vpop.f32.mrb[0].mxu0
      %v4226 = vadd.f32 0.0, %v4225
      %v4227 = vpop.f32.mrb[0].mxu0
      %v4228 = vadd.f32 0.0, %v4227
      %4229 = vdwg.mxu0
      %4230 = vmatprep.subr.bf16.mxu0 %v3781
      %4231 = vmatpush1.bf16.msra.mxu0 %v3780
      %4232 = vmatprep.subr.bf16.mxu0 %v3789
      %4233 = vmatpush1.bf16.msra.mxu0 %v3788
      %4234 = vmatprep.subr.bf16.mxu0 %v3797
      %4235 = vmatpush1.bf16.msra.mxu0 %v3796
      %4236 = vmatprep.subr.bf16.mxu0 %v3805
      %4237 = vmatpush1.bf16.msra.mxu0 %v3804
      %4238 = vmatprep.subr.bf16.mxu0 %v3813
      %4239 = vmatpush1.bf16.msra.mxu0 %v3812
      %4240 = vmatprep.subr.bf16.mxu0 %v3821
      %4241 = vmatpush1.bf16.msra.mxu0 %v3820
      %4242 = vmatprep.subr.bf16.mxu0 %v3829
      %4243 = vmatpush1.bf16.msra.mxu0 %v3828
      %4244 = vmatprep.subr.bf16.mxu0 %v3837
      %4245 = vmatpush1.bf16.msra.mxu0 %v3836
      %4246 = vmatprep.subr.bf16.mxu0 %v3845
      %4247 = vmatpush1.bf16.msra.mxu0 %v3844
      %4248 = vmatprep.subr.bf16.mxu0 %v3853
      %4249 = vmatpush1.bf16.msra.mxu0 %v3852
      %4250 = vmatprep.subr.bf16.mxu0 %v3861
      %4251 = vmatpush1.bf16.msra.mxu0 %v3860
      %4252 = vmatprep.subr.bf16.mxu0 %v3869
      %4253 = vmatpush1.bf16.msra.mxu0 %v3868
      %4254 = vmatprep.subr.bf16.mxu0 %v3877
      %4255 = vmatpush1.bf16.msra.mxu0 %v3876
      %4256 = vmatprep.subr.bf16.mxu0 %v3885
      %4257 = vmatpush1.bf16.msra.mxu0 %v3884
      %4258 = vmatprep.subr.bf16.mxu0 0
      %4259 = vmatpush1.bf16.msra.mxu0 0
      %4260 = vmatprep.subr.bf16.mxu0 0
      %4261 = vmatpush1.bf16.msra.mxu0 0
      %4262 = vmatprep.mubr.bf16.mxu0 %v4000
      %4263 = vmatmul.mubr.bf16.gmra.mrb[0].mxu0 %v3418
      %v4264 = vpop.f32.mrb[0].mxu0
      %v4265 = vadd.f32 0.0, %v4264
      %v4266 = vpop.f32.mrb[0].mxu0
      %v4267 = vadd.f32 0.0, %v4266
      %v4268 = vpop.f32.mrb[0].mxu0
      %v4269 = vadd.f32 0.0, %v4268
      %v4270 = vpop.f32.mrb[0].mxu0
      %v4271 = vadd.f32 0.0, %v4270
      %4272 = vmatprep.mubr.bf16.mxu0 %v4003
      %4273 = vmatmul.mubr.bf16.gmra.mrb[0].mxu0 %v3423
      %v4274 = vpop.f32.mrb[0].mxu0
      %v4275 = vadd.f32 0.0, %v4274
      %v4276 = vpop.f32.mrb[0].mxu0
      %v4277 = vadd.f32 0.0, %v4276
      %v4278 = vpop.f32.mrb[0].mxu0
      %v4279 = vadd.f32 0.0, %v4278
      %v4280 = vpop.f32.mrb[0].mxu0
      %v4281 = vadd.f32 0.0, %v4280
      %4282 = vmatprep.mubr.bf16.mxu0 %v4006
      %4283 = vmatmul.mubr.bf16.gmra.mrb[0].mxu0 %v3427
      %v4284 = vpop.f32.mrb[0].mxu0
      %v4285 = vadd.f32 0.0, %v4284
      %v4286 = vpop.f32.mrb[0].mxu0
      %v4287 = vadd.f32 0.0, %v4286
      %v4288 = vpop.f32.mrb[0].mxu0
      %v4289 = vadd.f32 0.0, %v4288
      %v4290 = vpop.f32.mrb[0].mxu0
      %v4291 = vadd.f32 0.0, %v4290
      %4292 = vmatprep.mubr.bf16.mxu0 %v4009
      %4293 = vmatmul.mubr.bf16.gmra.mrb[0].mxu0 %v3431
      %v4294 = vpop.f32.mrb[0].mxu0
      %v4295 = vadd.f32 0.0, %v4294
      %v4296 = vpop.f32.mrb[0].mxu0
      %v4297 = vadd.f32 0.0, %v4296
      %v4298 = vpop.f32.mrb[0].mxu0
      %v4299 = vadd.f32 0.0, %v4298
      %v4300 = vpop.f32.mrb[0].mxu0
      %v4301 = vadd.f32 0.0, %v4300
      %4302 = vdwg.mxu0
      %vm4303 = vsmask.f32 4352
      %v4305 = vshrl.u32 %v3161, 16
      %v4307 = vrot.slane %v4305, 3
      %v4308 = vshll.u32 %v3161, 16
      %v4310 = vrot.slane %v4308, 4
      %v4311 = vor.u32 %v4307, %v4310
      %v4313 = vshrl.u32 %v3163, 16
      %v4315 = vrot.slane %v4313, 3
      %v4316 = vshll.u32 %v3163, 16
      %v4318 = vrot.slane %v4316, 4
      %v4319 = vor.u32 %v4315, %v4318
      %v4320 = vsel %vm4303, %v4311, %v4319
      %v4322 = vshrl.u32 %v3162, 16
      %v4324 = vrot.slane %v4322, 3
      %v4325 = vshll.u32 %v3162, 16
      %v4327 = vrot.slane %v4325, 4
      %v4328 = vor.u32 %v4324, %v4327
      %v4330 = vshrl.u32 %v3164, 16
      %v4332 = vrot.slane %v4330, 3
      %v4333 = vshll.u32 %v3164, 16
      %v4335 = vrot.slane %v4333, 4
      %v4336 = vor.u32 %v4332, %v4335
      %v4337 = vsel %vm4303, %v4328, %v4336
      %v4339 = vshrl.u32 %v3165, 16
      %v4341 = vrot.slane %v4339, 3
      %v4342 = vshll.u32 %v3165, 16
      %v4344 = vrot.slane %v4342, 4
      %v4345 = vor.u32 %v4341, %v4344
      %v4346 = vsel %vm4303, %v4319, %v4345
      %v4348 = vshrl.u32 %v3166, 16
      %v4350 = vrot.slane %v4348, 3
      %v4351 = vshll.u32 %v3166, 16
      %v4353 = vrot.slane %v4351, 4
      %v4354 = vor.u32 %v4350, %v4353
      %v4355 = vsel %vm4303, %v4336, %v4354
      %v4357 = vshrl.u32 %v3167, 16
      %v4359 = vrot.slane %v4357, 3
      %v4360 = vshll.u32 %v3167, 16
      %v4362 = vrot.slane %v4360, 4
      %v4363 = vor.u32 %v4359, %v4362
      %v4364 = vsel %vm4303, %v4345, %v4363
      %v4366 = vshrl.u32 %v3168, 16
      %v4368 = vrot.slane %v4366, 3
      %v4369 = vshll.u32 %v3168, 16
      %v4371 = vrot.slane %v4369, 4
      %v4372 = vor.u32 %v4368, %v4371
      %v4373 = vsel %vm4303, %v4354, %v4372
      %v4375 = vshrl.u32 %v3169, 16
      %v4377 = vrot.slane %v4375, 3
      %v4378 = vshll.u32 %v3169, 16
      %v4380 = vrot.slane %v4378, 4
      %v4381 = vor.u32 %v4377, %v4380
      %v4382 = vsel %vm4303, %v4363, %v4381
      %v4384 = vshrl.u32 %v3170, 16
      %v4386 = vrot.slane %v4384, 3
      %v4387 = vshll.u32 %v3170, 16
      %v4389 = vrot.slane %v4387, 4
      %v4390 = vor.u32 %v4386, %v4389
      %v4391 = vsel %vm4303, %v4372, %v4390
      %v4508 = vunpack.c.l.b16 %v3171
      %v4509 = vunpack.c.h.b16 %v3171
      %v4510 = vunpack.c.l.b16 %v3172
      %v4511 = vunpack.c.h.b16 %v3172
      %v4512 = vunpack.c.l.b16 %v3173
      %v4513 = vunpack.c.h.b16 %v3173
      %v4514 = vunpack.c.l.b16 %v3174
      %v4515 = vunpack.c.h.b16 %v3174
      %v4516 = vunpack.c.l.b16 %v3175
      %v4517 = vunpack.c.h.b16 %v3175
      %v4518 = vunpack.c.l.b16 %v3176
      %v4519 = vunpack.c.h.b16 %v3176
      %v4520 = vunpack.c.l.b16 %v3177
      %v4521 = vunpack.c.h.b16 %v3177
      %v4522 = vunpack.c.l.b16 %v3178
      %v4523 = vunpack.c.h.b16 %v3178
      %v4524 = vunpack.c.l.b16 %v3179
      %v4525 = vunpack.c.h.b16 %v3179
      %v4526 = vunpack.c.l.b16 %v3180
      %v4527 = vunpack.c.h.b16 %v3180
      %v4528 = vunpack.c.l.b16 %v3181
      %v4529 = vunpack.c.h.b16 %v3181
      %v4530 = vunpack.c.l.b16 %v3182
      %v4531 = vunpack.c.h.b16 %v3182
      %v4532 = vunpack.c.l.b16 %v3183
      %v4533 = vunpack.c.h.b16 %v3183
      %v4534 = vunpack.c.l.b16 %v3184
      %v4535 = vunpack.c.h.b16 %v3184
      %v4536 = vunpack.c.l.b16 %v3185
      %v4537 = vunpack.c.h.b16 %v3185
      %v4538 = vunpack.c.l.b16 %v3186
      %v4539 = vunpack.c.h.b16 %v3186
      %v4540 = vunpack.c.l.b16 %v3187
      %v4541 = vunpack.c.h.b16 %v3187
      %v4542 = vunpack.c.l.b16 %v3188
      %v4543 = vunpack.c.h.b16 %v3188
      %v4544 = vunpack.c.l.b16 %v3189
      %v4545 = vunpack.c.h.b16 %v3189
      %v4546 = vunpack.c.l.b16 %v3190
      %v4547 = vunpack.c.h.b16 %v3190
      %v4548 = vunpack.c.l.b16 %v3191
      %v4549 = vunpack.c.h.b16 %v3191
      %v4550 = vunpack.c.l.b16 %v3192
      %v4551 = vunpack.c.h.b16 %v3192
      %v4552 = vunpack.c.l.b16 %v3193
      %v4553 = vunpack.c.h.b16 %v3193
      %v4554 = vunpack.c.l.b16 %v3194
      %v4555 = vunpack.c.h.b16 %v3194
      %v4556 = vunpack.c.l.b16 %v3195
      %v4557 = vunpack.c.h.b16 %v3195
      %v4558 = vunpack.c.l.b16 %v3196
      %v4559 = vunpack.c.h.b16 %v3196
      %v4560 = vunpack.c.l.b16 %v3197
      %v4561 = vunpack.c.h.b16 %v3197
      %v4562 = vunpack.c.l.b16 %v3198
      %v4563 = vunpack.c.h.b16 %v3198
      %v4564 = vunpack.c.l.b16 %v3199
      %v4565 = vunpack.c.h.b16 %v3199
      %v4566 = vunpack.c.l.b16 %v3200
      %v4567 = vunpack.c.h.b16 %v3200
      %v4568 = vunpack.c.l.b16 %v3201
      %v4569 = vunpack.c.h.b16 %v3201
      %v4570 = vunpack.c.l.b16 %v3202
      %v4571 = vunpack.c.h.b16 %v3202
      %v4572 = vunpack.c.l.b16 %v3203
      %v4573 = vunpack.c.h.b16 %v3203
      %v4574 = vunpack.c.l.b16 %v3204
      %v4575 = vunpack.c.h.b16 %v3204
      %v4576 = vunpack.c.l.b16 %v3205
      %v4577 = vunpack.c.h.b16 %v3205
      %v4578 = vunpack.c.l.b16 %v3206
      %v4579 = vunpack.c.h.b16 %v3206
      %v4580 = vunpack.c.l.b16 %v3207
      %v4581 = vunpack.c.h.b16 %v3207
      %v4582 = vunpack.c.l.b16 %v3208
      %v4583 = vunpack.c.h.b16 %v3208
      %v4584 = vunpack.c.l.b16 %v3209
      %v4585 = vunpack.c.h.b16 %v3209
      %v4586 = vunpack.c.l.b16 %v3210
      %v4587 = vunpack.c.h.b16 %v3210
      %v4588 = vunpack.c.l.b16 %v3211
      %v4589 = vunpack.c.h.b16 %v3211
      %v4590 = vunpack.c.l.b16 %v3212
      %v4591 = vunpack.c.h.b16 %v3212
      %v4592 = vunpack.c.l.b16 %v3213
      %v4593 = vunpack.c.h.b16 %v3213
      %v4594 = vunpack.c.l.b16 %v3214
      %v4595 = vunpack.c.h.b16 %v3214
      %v4596 = vunpack.c.l.b16 %v3215
      %v4597 = vunpack.c.h.b16 %v3215
      %v4598 = vunpack.c.l.b16 %v3216
      %v4599 = vunpack.c.h.b16 %v3216
      %v4600 = vunpack.c.l.b16 %v3217
      %v4601 = vunpack.c.h.b16 %v3217
      %v4602 = vunpack.c.l.b16 %v3218
      %v4603 = vunpack.c.h.b16 %v3218
      %v4604 = vunpack.c.l.b16 %v3219
      %v4605 = vunpack.c.h.b16 %v3219
      %v4606 = vunpack.c.l.b16 %v3220
      %v4607 = vunpack.c.h.b16 %v3220
      %v4608 = vunpack.c.l.b16 %v3221
      %v4609 = vunpack.c.h.b16 %v3221
      %v4610 = vunpack.c.l.b16 %v3222
      %v4611 = vunpack.c.h.b16 %v3222
      %v4612 = vunpack.c.l.b16 %v3223
      %v4613 = vunpack.c.h.b16 %v3223
      %v4614 = vunpack.c.l.b16 %v3224
      %v4615 = vunpack.c.h.b16 %v3224
      %v4616 = vunpack.c.l.b16 %v3225
      %v4617 = vunpack.c.h.b16 %v3225
      %v4618 = vunpack.c.l.b16 %v3226
      %v4619 = vunpack.c.h.b16 %v3226
      %v4620 = vunpack.c.l.b16 %v3227
      %v4621 = vunpack.c.h.b16 %v3227
      %v4622 = vunpack.c.l.b16 %v3228
      %v4623 = vunpack.c.h.b16 %v3228
      %v4624 = vunpack.c.l.b16 %v3229
      %v4625 = vunpack.c.h.b16 %v3229
      %v4626 = vunpack.c.l.b16 %v3230
      %v4627 = vunpack.c.h.b16 %v3230
      %v4628 = vunpack.c.l.b16 %v3231
      %v4629 = vunpack.c.h.b16 %v3231
      %v4630 = vunpack.c.l.b16 %v3232
      %v4631 = vunpack.c.h.b16 %v3232
      %v4632 = vunpack.c.l.b16 %v3233
      %v4633 = vunpack.c.h.b16 %v3233
      %v4634 = vunpack.c.l.b16 %v3234
      %v4635 = vunpack.c.h.b16 %v3234
      %v4636 = vunpack.c.l.b16 %v3235
      %v4637 = vunpack.c.h.b16 %v3235
      %v4638 = vunpack.c.l.b16 %v3236
      %v4639 = vunpack.c.h.b16 %v3236
      %v4640 = vunpack.c.l.b16 %v3237
      %v4641 = vunpack.c.h.b16 %v3237
      %v4642 = vunpack.c.l.b16 %v3238
      %v4643 = vunpack.c.h.b16 %v3238
      %v4644 = vunpack.c.l.b16 %v3239
      %v4645 = vunpack.c.h.b16 %v3239
      %v4646 = vunpack.c.l.b16 %v3240
      %v4647 = vunpack.c.h.b16 %v3240
      %v4648 = vunpack.c.l.b16 %v3241
      %v4649 = vunpack.c.h.b16 %v3241
      %v4650 = vunpack.c.l.b16 %v3242
      %v4651 = vunpack.c.h.b16 %v3242
      %v4652 = vunpack.c.l.b16 %v3243
      %v4653 = vunpack.c.h.b16 %v3243
      %v4654 = vunpack.c.l.b16 %v3244
      %v4655 = vunpack.c.h.b16 %v3244
      %v4656 = vunpack.c.l.b16 %v3245
      %v4657 = vunpack.c.h.b16 %v3245
      %v4658 = vunpack.c.l.b16 %v3246
      %v4659 = vunpack.c.h.b16 %v3246
      %v4660 = vunpack.c.l.b16 %v3247
      %v4661 = vunpack.c.h.b16 %v3247
      %v4662 = vunpack.c.l.b16 %v3248
      %v4663 = vunpack.c.h.b16 %v3248
      %v4664 = vunpack.c.l.b16 %v3249
      %v4665 = vunpack.c.h.b16 %v3249
      %v4666 = vunpack.c.l.b16 %v3250
      %v4667 = vunpack.c.h.b16 %v3250
      %v4668 = vunpack.c.l.b16 %v3251
      %v4669 = vunpack.c.h.b16 %v3251
      %v4670 = vunpack.c.l.b16 %v3252
      %v4671 = vunpack.c.h.b16 %v3252
      %v4672 = vunpack.c.l.b16 %v3253
      %v4673 = vunpack.c.h.b16 %v3253
      %v4674 = vunpack.c.l.b16 %v3254
      %v4675 = vunpack.c.h.b16 %v3254
      %v4676 = vunpack.c.l.b16 %v3255
      %v4677 = vunpack.c.h.b16 %v3255
      %v4678 = vunpack.c.l.b16 %v3256
      %v4679 = vunpack.c.h.b16 %v3256
      %v4680 = vunpack.c.l.b16 %v3257
      %v4681 = vunpack.c.h.b16 %v3257
      %v4682 = vunpack.c.l.b16 %v3258
      %v4683 = vunpack.c.h.b16 %v3258
      %v4684 = vunpack.c.l.b16 %v3259
      %v4685 = vunpack.c.h.b16 %v3259
      %v4686 = vunpack.c.l.b16 %v3260
      %v4687 = vunpack.c.h.b16 %v3260
      %v4688 = vunpack.c.l.b16 %v3261
      %v4689 = vunpack.c.h.b16 %v3261
      %v4690 = vunpack.c.l.b16 %v3262
      %v4691 = vunpack.c.h.b16 %v3262
      %v4692 = vunpack.c.l.b16 %v3263
      %v4693 = vunpack.c.h.b16 %v3263
      %v4694 = vunpack.c.l.b16 %v3264
      %v4695 = vunpack.c.h.b16 %v3264
      %v4696 = vunpack.c.l.b16 %v3265
      %v4697 = vunpack.c.h.b16 %v3265
      %v4698 = vunpack.c.l.b16 %v3266
      %v4699 = vunpack.c.h.b16 %v3266
      %v4700 = vunpack.c.l.b16 %v3267
      %v4701 = vunpack.c.h.b16 %v3267
      %v4702 = vunpack.c.l.b16 %v3268
      %v4703 = vunpack.c.h.b16 %v3268
      %v4704 = vunpack.c.l.b16 %v3269
      %v4705 = vunpack.c.h.b16 %v3269
      %v4706 = vunpack.c.l.b16 %v3270
      %v4707 = vunpack.c.h.b16 %v3270
      %v4708 = vunpack.c.l.b16 %v3271
      %v4709 = vunpack.c.h.b16 %v3271
      %v4710 = vunpack.c.l.b16 %v3272
      %v4711 = vunpack.c.h.b16 %v3272
      %v4712 = vunpack.c.l.b16 %v3273
      %v4713 = vunpack.c.h.b16 %v3273
      %v4714 = vunpack.c.l.b16 %v3274
      %v4715 = vunpack.c.h.b16 %v3274
      %v4716 = vunpack.c.l.b16 %v3275
      %v4717 = vunpack.c.h.b16 %v3275
      %v4718 = vunpack.c.l.b16 %v3276
      %v4719 = vunpack.c.h.b16 %v3276
      %v4720 = vunpack.c.l.b16 %v3277
      %v4721 = vunpack.c.h.b16 %v3277
      %v4722 = vunpack.c.l.b16 %v3278
      %v4723 = vunpack.c.h.b16 %v3278
      %v4724 = vunpack.c.l.b16 %v3279
      %v4725 = vunpack.c.h.b16 %v3279
      %v4726 = vunpack.c.l.b16 %v3280
      %v4727 = vunpack.c.h.b16 %v3280
      %v4728 = vunpack.c.l.b16 %v3281
      %v4729 = vunpack.c.h.b16 %v3281
      %v4730 = vunpack.c.l.b16 %v3282
      %v4731 = vunpack.c.h.b16 %v3282
      %v4732 = vpack.c.b16 %v4516, %v4508
      %v4733 = vpack.c.b16 %v4517, %v4509
      %v4734 = vpack.c.b16 %v4518, %v4510
      %v4735 = vpack.c.b16 %v4519, %v4511
      %v4736 = vpack.c.b16 %v4520, %v4512
      %v4737 = vpack.c.b16 %v4521, %v4513
      %v4738 = vpack.c.b16 %v4522, %v4514
      %v4739 = vpack.c.b16 %v4523, %v4515
      %v4740 = vpack.c.b16 %v4532, %v4524
      %v4741 = vpack.c.b16 %v4533, %v4525
      %v4742 = vpack.c.b16 %v4534, %v4526
      %v4743 = vpack.c.b16 %v4535, %v4527
      %v4744 = vpack.c.b16 %v4536, %v4528
      %v4745 = vpack.c.b16 %v4537, %v4529
      %v4746 = vpack.c.b16 %v4538, %v4530
      %v4747 = vpack.c.b16 %v4539, %v4531
      %v4748 = vpack.c.b16 %v4548, %v4540
      %v4749 = vpack.c.b16 %v4549, %v4541
      %v4750 = vpack.c.b16 %v4550, %v4542
      %v4751 = vpack.c.b16 %v4551, %v4543
      %v4752 = vpack.c.b16 %v4552, %v4544
      %v4753 = vpack.c.b16 %v4553, %v4545
      %v4754 = vpack.c.b16 %v4554, %v4546
      %v4755 = vpack.c.b16 %v4555, %v4547
      %v4756 = vpack.c.b16 %v4564, %v4556
      %v4757 = vpack.c.b16 %v4565, %v4557
      %v4758 = vpack.c.b16 %v4566, %v4558
      %v4759 = vpack.c.b16 %v4567, %v4559
      %v4760 = vpack.c.b16 %v4568, %v4560
      %v4761 = vpack.c.b16 %v4569, %v4561
      %v4762 = vpack.c.b16 %v4570, %v4562
      %v4763 = vpack.c.b16 %v4571, %v4563
      %v4764 = vpack.c.b16 %v4580, %v4572
      %v4765 = vpack.c.b16 %v4581, %v4573
      %v4766 = vpack.c.b16 %v4582, %v4574
      %v4767 = vpack.c.b16 %v4583, %v4575
      %v4768 = vpack.c.b16 %v4584, %v4576
      %v4769 = vpack.c.b16 %v4585, %v4577
      %v4770 = vpack.c.b16 %v4586, %v4578
      %v4771 = vpack.c.b16 %v4587, %v4579
      %v4772 = vpack.c.b16 %v4596, %v4588
      %v4773 = vpack.c.b16 %v4597, %v4589
      %v4774 = vpack.c.b16 %v4598, %v4590
      %v4775 = vpack.c.b16 %v4599, %v4591
      %v4776 = vpack.c.b16 %v4600, %v4592
      %v4777 = vpack.c.b16 %v4601, %v4593
      %v4778 = vpack.c.b16 %v4602, %v4594
      %v4779 = vpack.c.b16 %v4603, %v4595
      %v4780 = vpack.c.b16 %v4612, %v4604
      %v4781 = vpack.c.b16 %v4613, %v4605
      %v4782 = vpack.c.b16 %v4614, %v4606
      %v4783 = vpack.c.b16 %v4615, %v4607
      %v4784 = vpack.c.b16 %v4616, %v4608
      %v4785 = vpack.c.b16 %v4617, %v4609
      %v4786 = vpack.c.b16 %v4618, %v4610
      %v4787 = vpack.c.b16 %v4619, %v4611
      %v4788 = vpack.c.b16 %v4628, %v4620
      %v4789 = vpack.c.b16 %v4629, %v4621
      %v4790 = vpack.c.b16 %v4630, %v4622
      %v4791 = vpack.c.b16 %v4631, %v4623
      %v4792 = vpack.c.b16 %v4632, %v4624
      %v4793 = vpack.c.b16 %v4633, %v4625
      %v4794 = vpack.c.b16 %v4634, %v4626
      %v4795 = vpack.c.b16 %v4635, %v4627
      %v4796 = vpack.c.b16 %v4644, %v4636
      %v4797 = vpack.c.b16 %v4645, %v4637
      %v4798 = vpack.c.b16 %v4646, %v4638
      %v4799 = vpack.c.b16 %v4647, %v4639
      %v4800 = vpack.c.b16 %v4648, %v4640
      %v4801 = vpack.c.b16 %v4649, %v4641
      %v4802 = vpack.c.b16 %v4650, %v4642
      %v4803 = vpack.c.b16 %v4651, %v4643
      %v4804 = vpack.c.b16 %v4660, %v4652
      %v4805 = vpack.c.b16 %v4661, %v4653
      %v4806 = vpack.c.b16 %v4662, %v4654
      %v4807 = vpack.c.b16 %v4663, %v4655
      %v4808 = vpack.c.b16 %v4664, %v4656
      %v4809 = vpack.c.b16 %v4665, %v4657
      %v4810 = vpack.c.b16 %v4666, %v4658
      %v4811 = vpack.c.b16 %v4667, %v4659
      %v4812 = vpack.c.b16 %v4676, %v4668
      %v4813 = vpack.c.b16 %v4677, %v4669
      %v4814 = vpack.c.b16 %v4678, %v4670
      %v4815 = vpack.c.b16 %v4679, %v4671
      %v4816 = vpack.c.b16 %v4680, %v4672
      %v4817 = vpack.c.b16 %v4681, %v4673
      %v4818 = vpack.c.b16 %v4682, %v4674
      %v4819 = vpack.c.b16 %v4683, %v4675
      %v4820 = vpack.c.b16 %v4692, %v4684
      %v4821 = vpack.c.b16 %v4693, %v4685
      %v4822 = vpack.c.b16 %v4694, %v4686
      %v4823 = vpack.c.b16 %v4695, %v4687
      %v4824 = vpack.c.b16 %v4696, %v4688
      %v4825 = vpack.c.b16 %v4697, %v4689
      %v4826 = vpack.c.b16 %v4698, %v4690
      %v4827 = vpack.c.b16 %v4699, %v4691
      %v4828 = vpack.c.b16 %v4708, %v4700
      %v4829 = vpack.c.b16 %v4709, %v4701
      %v4830 = vpack.c.b16 %v4710, %v4702
      %v4831 = vpack.c.b16 %v4711, %v4703
      %v4832 = vpack.c.b16 %v4712, %v4704
      %v4833 = vpack.c.b16 %v4713, %v4705
      %v4834 = vpack.c.b16 %v4714, %v4706
      %v4835 = vpack.c.b16 %v4715, %v4707
      %v4836 = vpack.c.b16 %v4724, %v4716
      %v4837 = vpack.c.b16 %v4725, %v4717
      %v4838 = vpack.c.b16 %v4726, %v4718
      %v4839 = vpack.c.b16 %v4727, %v4719
      %v4840 = vpack.c.b16 %v4728, %v4720
      %v4841 = vpack.c.b16 %v4729, %v4721
      %v4842 = vpack.c.b16 %v4730, %v4722
      %v4843 = vpack.c.b16 %v4731, %v4723
      %v4957 = vsel %vm3998, %v4337, 0
      %v4960 = vsel %vm3998, %v4355, 0
      %v4963 = vsel %vm3998, %v4373, 0
      %v4966 = vsel %vm3998, %v4391, 0
      %4968 = vmatprep.subr.bf16.mxu0 %v4733
      %4969 = vmatpush1.bf16.msra.mxu0 %v4732
      %4970 = vmatprep.subr.bf16.mxu0 %v4741
      %4971 = vmatpush1.bf16.msra.mxu0 %v4740
      %4972 = vmatprep.subr.bf16.mxu0 %v4749
      %4973 = vmatpush1.bf16.msra.mxu0 %v4748
      %4974 = vmatprep.subr.bf16.mxu0 %v4757
      %4975 = vmatpush1.bf16.msra.mxu0 %v4756
      %4976 = vmatprep.subr.bf16.mxu0 %v4765
      %4977 = vmatpush1.bf16.msra.mxu0 %v4764
      %4978 = vmatprep.subr.bf16.mxu0 %v4773
      %4979 = vmatpush1.bf16.msra.mxu0 %v4772
      %4980 = vmatprep.subr.bf16.mxu0 %v4781
      %4981 = vmatpush1.bf16.msra.mxu0 %v4780
      %4982 = vmatprep.subr.bf16.mxu0 %v4789
      %4983 = vmatpush1.bf16.msra.mxu0 %v4788
      %4984 = vmatprep.subr.bf16.mxu0 %v4797
      %4985 = vmatpush1.bf16.msra.mxu0 %v4796
      %4986 = vmatprep.subr.bf16.mxu0 %v4805
      %4987 = vmatpush1.bf16.msra.mxu0 %v4804
      %4988 = vmatprep.subr.bf16.mxu0 %v4813
      %4989 = vmatpush1.bf16.msra.mxu0 %v4812
      %4990 = vmatprep.subr.bf16.mxu0 %v4821
      %4991 = vmatpush1.bf16.msra.mxu0 %v4820
      %4992 = vmatprep.subr.bf16.mxu0 %v4829
      %4993 = vmatpush1.bf16.msra.mxu0 %v4828
      %4994 = vmatprep.subr.bf16.mxu0 %v4837
      %4995 = vmatpush1.bf16.msra.mxu0 %v4836
      %4996 = vmatprep.subr.bf16.mxu0 0
      %4997 = vmatpush1.bf16.msra.mxu0 0
      %4998 = vmatprep.subr.bf16.mxu0 0
      %4999 = vmatpush1.bf16.msra.mxu0 0
      %5000 = vmatprep.mubr.bf16.mxu0 %v4957
      %5001 = vmatmul.mubr.bf16.gmra.mrb[0].mxu0 %v4320
      %v5002 = vpop.f32.mrb[0].mxu0
      %v5003 = vadd.f32 %v4046, %v5002
      %v5004 = vpop.f32.mrb[0].mxu0
      %v5005 = vadd.f32 %v4048, %v5004
      %v5006 = vpop.f32.mrb[0].mxu0
      %v5007 = vadd.f32 %v4050, %v5006
      %v5008 = vpop.f32.mrb[0].mxu0
      %v5009 = vadd.f32 %v4052, %v5008
      %5010 = vmatprep.mubr.bf16.mxu0 %v4960
      %5011 = vmatmul.mubr.bf16.gmra.mrb[0].mxu0 %v4346
      %v5012 = vpop.f32.mrb[0].mxu0
      %v5013 = vadd.f32 %v4056, %v5012
      %v5014 = vpop.f32.mrb[0].mxu0
      %v5015 = vadd.f32 %v4058, %v5014
      %v5016 = vpop.f32.mrb[0].mxu0
      %v5017 = vadd.f32 %v4060, %v5016
      %v5018 = vpop.f32.mrb[0].mxu0
      %v5019 = vadd.f32 %v4062, %v5018
      %5020 = vmatprep.mubr.bf16.mxu0 %v4963
      %5021 = vmatmul.mubr.bf16.gmra.mrb[0].mxu0 %v4364
      %v5022 = vpop.f32.mrb[0].mxu0
      %v5023 = vadd.f32 %v4066, %v5022
      %v5024 = vpop.f32.mrb[0].mxu0
      %v5025 = vadd.f32 %v4068, %v5024
      %v5026 = vpop.f32.mrb[0].mxu0
      %v5027 = vadd.f32 %v4070, %v5026
      %v5028 = vpop.f32.mrb[0].mxu0
      %v5029 = vadd.f32 %v4072, %v5028
      %5030 = vmatprep.mubr.bf16.mxu0 %v4966
      %5031 = vmatmul.mubr.bf16.gmra.mrb[0].mxu0 %v4382
      %v5032 = vpop.f32.mrb[0].mxu0
      %v5033 = vadd.f32 %v4076, %v5032
      %v5034 = vpop.f32.mrb[0].mxu0
      %v5035 = vadd.f32 %v4078, %v5034
      %v5036 = vpop.f32.mrb[0].mxu0
      %v5037 = vadd.f32 %v4080, %v5036
      %v5038 = vpop.f32.mrb[0].mxu0
      %v5039 = vadd.f32 %v4082, %v5038
      %5040 = vdwg.mxu0
      %5041 = vmatprep.subr.bf16.mxu0 %v4735
      %5042 = vmatpush1.bf16.msra.mxu0 %v4734
      %5043 = vmatprep.subr.bf16.mxu0 %v4743
      %5044 = vmatpush1.bf16.msra.mxu0 %v4742
      %5045 = vmatprep.subr.bf16.mxu0 %v4751
      %5046 = vmatpush1.bf16.msra.mxu0 %v4750
      %5047 = vmatprep.subr.bf16.mxu0 %v4759
      %5048 = vmatpush1.bf16.msra.mxu0 %v4758
      %5049 = vmatprep.subr.bf16.mxu0 %v4767
      %5050 = vmatpush1.bf16.msra.mxu0 %v4766
      %5051 = vmatprep.subr.bf16.mxu0 %v4775
      %5052 = vmatpush1.bf16.msra.mxu0 %v4774
      %5053 = vmatprep.subr.bf16.mxu0 %v4783
      %5054 = vmatpush1.bf16.msra.mxu0 %v4782
      %5055 = vmatprep.subr.bf16.mxu0 %v4791
      %5056 = vmatpush1.bf16.msra.mxu0 %v4790
      %5057 = vmatprep.subr.bf16.mxu0 %v4799
      %5058 = vmatpush1.bf16.msra.mxu0 %v4798
      %5059 = vmatprep.subr.bf16.mxu0 %v4807
      %5060 = vmatpush1.bf16.msra.mxu0 %v4806
      %5061 = vmatprep.subr.bf16.mxu0 %v4815
      %5062 = vmatpush1.bf16.msra.mxu0 %v4814
      %5063 = vmatprep.subr.bf16.mxu0 %v4823
      %5064 = vmatpush1.bf16.msra.mxu0 %v4822
      %5065 = vmatprep.subr.bf16.mxu0 %v4831
      %5066 = vmatpush1.bf16.msra.mxu0 %v4830
      %5067 = vmatprep.subr.bf16.mxu0 %v4839
      %5068 = vmatpush1.bf16.msra.mxu0 %v4838
      %5069 = vmatprep.subr.bf16.mxu0 0
      %5070 = vmatpush1.bf16.msra.mxu0 0
      %5071 = vmatprep.subr.bf16.mxu0 0
      %5072 = vmatpush1.bf16.msra.mxu0 0
      %5073 = vmatprep.mubr.bf16.mxu0 %v4957
      %5074 = vmatmul.mubr.bf16.gmra.mrb[0].mxu0 %v4320
      %v5075 = vpop.f32.mrb[0].mxu0
      %v5076 = vadd.f32 %v4119, %v5075
      %v5077 = vpop.f32.mrb[0].mxu0
      %v5078 = vadd.f32 %v4121, %v5077
      %v5079 = vpop.f32.mrb[0].mxu0
      %v5080 = vadd.f32 %v4123, %v5079
      %v5081 = vpop.f32.mrb[0].mxu0
      %v5082 = vadd.f32 %v4125, %v5081
      %5083 = vmatprep.mubr.bf16.mxu0 %v4960
      %5084 = vmatmul.mubr.bf16.gmra.mrb[0].mxu0 %v4346
      %v5085 = vpop.f32.mrb[0].mxu0
      %v5086 = vadd.f32 %v4129, %v5085
      %v5087 = vpop.f32.mrb[0].mxu0
      %v5088 = vadd.f32 %v4131, %v5087
      %v5089 = vpop.f32.mrb[0].mxu0
      %v5090 = vadd.f32 %v4133, %v5089
      %v5091 = vpop.f32.mrb[0].mxu0
      %v5092 = vadd.f32 %v4135, %v5091
      %5093 = vmatprep.mubr.bf16.mxu0 %v4963
      %5094 = vmatmul.mubr.bf16.gmra.mrb[0].mxu0 %v4364
      %v5095 = vpop.f32.mrb[0].mxu0
      %v5096 = vadd.f32 %v4139, %v5095
      %v5097 = vpop.f32.mrb[0].mxu0
      %v5098 = vadd.f32 %v4141, %v5097
      %v5099 = vpop.f32.mrb[0].mxu0
      %v5100 = vadd.f32 %v4143, %v5099
      %v5101 = vpop.f32.mrb[0].mxu0
      %v5102 = vadd.f32 %v4145, %v5101
      %5103 = vmatprep.mubr.bf16.mxu0 %v4966
      %5104 = vmatmul.mubr.bf16.gmra.mrb[0].mxu0 %v4382
      %v5105 = vpop.f32.mrb[0].mxu0
      %v5106 = vadd.f32 %v4149, %v5105
      %v5107 = vpop.f32.mrb[0].mxu0
      %v5108 = vadd.f32 %v4151, %v5107
      %v5109 = vpop.f32.mrb[0].mxu0
      %v5110 = vadd.f32 %v4153, %v5109
      %v5111 = vpop.f32.mrb[0].mxu0
      %v5112 = vadd.f32 %v4155, %v5111
      %5113 = vdwg.mxu0
      %5114 = vmatprep.subr.bf16.mxu0 %v4737
      %5115 = vmatpush1.bf16.msra.mxu0 %v4736
      %5116 = vmatprep.subr.bf16.mxu0 %v4745
      %5117 = vmatpush1.bf16.msra.mxu0 %v4744
      %5118 = vmatprep.subr.bf16.mxu0 %v4753
      %5119 = vmatpush1.bf16.msra.mxu0 %v4752
      %5120 = vmatprep.subr.bf16.mxu0 %v4761
      %5121 = vmatpush1.bf16.msra.mxu0 %v4760
      %5122 = vmatprep.subr.bf16.mxu0 %v4769
      %5123 = vmatpush1.bf16.msra.mxu0 %v4768
      %5124 = vmatprep.subr.bf16.mxu0 %v4777
      %5125 = vmatpush1.bf16.msra.mxu0 %v4776
      %5126 = vmatprep.subr.bf16.mxu0 %v4785
      %5127 = vmatpush1.bf16.msra.mxu0 %v4784
      %5128 = vmatprep.subr.bf16.mxu0 %v4793
      %5129 = vmatpush1.bf16.msra.mxu0 %v4792
      %5130 = vmatprep.subr.bf16.mxu0 %v4801
      %5131 = vmatpush1.bf16.msra.mxu0 %v4800
      %5132 = vmatprep.subr.bf16.mxu0 %v4809
      %5133 = vmatpush1.bf16.msra.mxu0 %v4808
      %5134 = vmatprep.subr.bf16.mxu0 %v4817
      %5135 = vmatpush1.bf16.msra.mxu0 %v4816
      %5136 = vmatprep.subr.bf16.mxu0 %v4825
      %5137 = vmatpush1.bf16.msra.mxu0 %v4824
      %5138 = vmatprep.subr.bf16.mxu0 %v4833
      %5139 = vmatpush1.bf16.msra.mxu0 %v4832
      %5140 = vmatprep.subr.bf16.mxu0 %v4841
      %5141 = vmatpush1.bf16.msra.mxu0 %v4840
      %5142 = vmatprep.subr.bf16.mxu0 0
      %5143 = vmatpush1.bf16.msra.mxu0 0
      %5144 = vmatprep.subr.bf16.mxu0 0
      %5145 = vmatpush1.bf16.msra.mxu0 0
      %5146 = vmatprep.mubr.bf16.mxu0 %v4957
      %5147 = vmatmul.mubr.bf16.gmra.mrb[0].mxu0 %v4320
      %v5148 = vpop.f32.mrb[0].mxu0
      %v5149 = vadd.f32 %v4192, %v5148
      %v5150 = vpop.f32.mrb[0].mxu0
      %v5151 = vadd.f32 %v4194, %v5150
      %v5152 = vpop.f32.mrb[0].mxu0
      %v5153 = vadd.f32 %v4196, %v5152
      %v5154 = vpop.f32.mrb[0].mxu0
      %v5155 = vadd.f32 %v4198, %v5154
      %5156 = vmatprep.mubr.bf16.mxu0 %v4960
      %5157 = vmatmul.mubr.bf16.gmra.mrb[0].mxu0 %v4346
      %v5158 = vpop.f32.mrb[0].mxu0
      %v5159 = vadd.f32 %v4202, %v5158
      %v5160 = vpop.f32.mrb[0].mxu0
      %v5161 = vadd.f32 %v4204, %v5160
      %v5162 = vpop.f32.mrb[0].mxu0
      %v5163 = vadd.f32 %v4206, %v5162
      %v5164 = vpop.f32.mrb[0].mxu0
      %v5165 = vadd.f32 %v4208, %v5164
      %5166 = vmatprep.mubr.bf16.mxu0 %v4963
      %5167 = vmatmul.mubr.bf16.gmra.mrb[0].mxu0 %v4364
      %v5168 = vpop.f32.mrb[0].mxu0
      %v5169 = vadd.f32 %v4212, %v5168
      %v5170 = vpop.f32.mrb[0].mxu0
      %v5171 = vadd.f32 %v4214, %v5170
      %v5172 = vpop.f32.mrb[0].mxu0
      %v5173 = vadd.f32 %v4216, %v5172
      %v5174 = vpop.f32.mrb[0].mxu0
      %v5175 = vadd.f32 %v4218, %v5174
      %5176 = vmatprep.mubr.bf16.mxu0 %v4966
      %5177 = vmatmul.mubr.bf16.gmra.mrb[0].mxu0 %v4382
      %v5178 = vpop.f32.mrb[0].mxu0
      %v5179 = vadd.f32 %v4222, %v5178
      %v5180 = vpop.f32.mrb[0].mxu0
      %v5181 = vadd.f32 %v4224, %v5180
      %v5182 = vpop.f32.mrb[0].mxu0
      %v5183 = vadd.f32 %v4226, %v5182
      %v5184 = vpop.f32.mrb[0].mxu0
      %v5185 = vadd.f32 %v4228, %v5184
      %5186 = vdwg.mxu0
      %5187 = vmatprep.subr.bf16.mxu0 %v4739
      %5188 = vmatpush1.bf16.msra.mxu0 %v4738
      %5189 = vmatprep.subr.bf16.mxu0 %v4747
      %5190 = vmatpush1.bf16.msra.mxu0 %v4746
      %5191 = vmatprep.subr.bf16.mxu0 %v4755
      %5192 = vmatpush1.bf16.msra.mxu0 %v4754
      %5193 = vmatprep.subr.bf16.mxu0 %v4763
      %5194 = vmatpush1.bf16.msra.mxu0 %v4762
      %5195 = vmatprep.subr.bf16.mxu0 %v4771
      %5196 = vmatpush1.bf16.msra.mxu0 %v4770
      %5197 = vmatprep.subr.bf16.mxu0 %v4779
      %5198 = vmatpush1.bf16.msra.mxu0 %v4778
      %5199 = vmatprep.subr.bf16.mxu0 %v4787
      %5200 = vmatpush1.bf16.msra.mxu0 %v4786
      %5201 = vmatprep.subr.bf16.mxu0 %v4795
      %5202 = vmatpush1.bf16.msra.mxu0 %v4794
      %5203 = vmatprep.subr.bf16.mxu0 %v4803
      %5204 = vmatpush1.bf16.msra.mxu0 %v4802
      %5205 = vmatprep.subr.bf16.mxu0 %v4811
      %5206 = vmatpush1.bf16.msra.mxu0 %v4810
      %5207 = vmatprep.subr.bf16.mxu0 %v4819
      %5208 = vmatpush1.bf16.msra.mxu0 %v4818
      %5209 = vmatprep.subr.bf16.mxu0 %v4827
      %5210 = vmatpush1.bf16.msra.mxu0 %v4826
      %5211 = vmatprep.subr.bf16.mxu0 %v4835
      %5212 = vmatpush1.bf16.msra.mxu0 %v4834
      %5213 = vmatprep.subr.bf16.mxu0 %v4843
      %5214 = vmatpush1.bf16.msra.mxu0 %v4842
      %5215 = vmatprep.subr.bf16.mxu0 0
      %5216 = vmatpush1.bf16.msra.mxu0 0
      %5217 = vmatprep.subr.bf16.mxu0 0
      %5218 = vmatpush1.bf16.msra.mxu0 0
      %5219 = vmatprep.mubr.bf16.mxu0 %v4957
      %5220 = vmatmul.mubr.bf16.gmra.mrb[0].mxu0 %v4320
      %v5221 = vpop.f32.mrb[0].mxu0
      %v5222 = vadd.f32 %v4265, %v5221
      %v5223 = vpop.f32.mrb[0].mxu0
      %v5224 = vadd.f32 %v4267, %v5223
      %v5225 = vpop.f32.mrb[0].mxu0
      %v5226 = vadd.f32 %v4269, %v5225
      %v5227 = vpop.f32.mrb[0].mxu0
      %v5228 = vadd.f32 %v4271, %v5227
      %5229 = vmatprep.mubr.bf16.mxu0 %v4960
      %5230 = vmatmul.mubr.bf16.gmra.mrb[0].mxu0 %v4346
      %v5231 = vpop.f32.mrb[0].mxu0
      %v5232 = vadd.f32 %v4275, %v5231
      %v5233 = vpop.f32.mrb[0].mxu0
      %v5234 = vadd.f32 %v4277, %v5233
      %v5235 = vpop.f32.mrb[0].mxu0
      %v5236 = vadd.f32 %v4279, %v5235
      %v5237 = vpop.f32.mrb[0].mxu0
      %v5238 = vadd.f32 %v4281, %v5237
      %5239 = vmatprep.mubr.bf16.mxu0 %v4963
      %5240 = vmatmul.mubr.bf16.gmra.mrb[0].mxu0 %v4364
      %v5241 = vpop.f32.mrb[0].mxu0
      %v5242 = vadd.f32 %v4285, %v5241
      %v5243 = vpop.f32.mrb[0].mxu0
      %v5244 = vadd.f32 %v4287, %v5243
      %v5245 = vpop.f32.mrb[0].mxu0
      %v5246 = vadd.f32 %v4289, %v5245
      %v5247 = vpop.f32.mrb[0].mxu0
      %v5248 = vadd.f32 %v4291, %v5247
      %5249 = vmatprep.mubr.bf16.mxu0 %v4966
      %5250 = vmatmul.mubr.bf16.gmra.mrb[0].mxu0 %v4382
      %v5251 = vpop.f32.mrb[0].mxu0
      %v5252 = vadd.f32 %v4295, %v5251
      %v5253 = vpop.f32.mrb[0].mxu0
      %v5254 = vadd.f32 %v4297, %v5253
      %v5255 = vpop.f32.mrb[0].mxu0
      %v5256 = vadd.f32 %v4299, %v5255
      %v5257 = vpop.f32.mrb[0].mxu0
      %v5258 = vadd.f32 %v4301, %v5257
      %5259 = vdwg.mxu0
      %v5260 = vld [vmem:[#allocation3 + $0x10] sm:$0xf0]
      %v5261 = vld [vmem:[#allocation3 + $0x18] sm:$0xf0]
      %s5262 = scalar_lea.vmem %s4, 1792
      %v5263 = vld [vmem:[%s5262] sm:$0xff]
      %v5264 = vld [vmem:[%s5262 + $0x8] sm:$0xff]
      %v5265 = vld [vmem:[%s5262 + $0x10] sm:$0xff]
      %v5266 = vld [vmem:[%s5262 + $0x18] sm:$0xff]
      %v5267 = vld [vmem:[%s5262 + $0x20] sm:$0xff]
      %v5268 = vld [vmem:[%s5262 + $0x28] sm:$0xff]
      %v5269 = vld [vmem:[%s5262 + $0x30] sm:$0xff]
      %v5270 = vld [vmem:[%s5262 + $0x38] sm:$0xff]
      %v5271 = vld [vmem:[%s5262 + $0x40] sm:$0xff]
      %v5272 = vld [vmem:[%s5262 + $0x48] sm:$0xff]
      %v5273 = vld [vmem:[%s5262 + $0x50] sm:$0xff]
      %v5274 = vld [vmem:[%s5262 + $0x58] sm:$0xff]
      %v5275 = vld [vmem:[%s5262 + $0x60] sm:$0xff]
      %v5276 = vld [vmem:[%s5262 + $0x68] sm:$0xff]
      %v5277 = vld [vmem:[%s5262 + $0x70] sm:$0xff]
      %v5278 = vld [vmem:[%s5262 + $0x78] sm:$0xff]
      %v5279 = vld [vmem:[%s5262 + $0x80] sm:$0xff]
      %v5280 = vld [vmem:[%s5262 + $0x88] sm:$0xff]
      %v5281 = vld [vmem:[%s5262 + $0x90] sm:$0xff]
      %v5282 = vld [vmem:[%s5262 + $0x98] sm:$0xff]
      %v5283 = vld [vmem:[%s5262 + $0xa0] sm:$0xff]
      %v5284 = vld [vmem:[%s5262 + $0xa8] sm:$0xff]
      %v5285 = vld [vmem:[%s5262 + $0xb0] sm:$0xff]
      %v5286 = vld [vmem:[%s5262 + $0xb8] sm:$0xff]
      %v5287 = vld [vmem:[%s5262 + $0xc0] sm:$0xff]
      %v5288 = vld [vmem:[%s5262 + $0xc8] sm:$0xff]
      %v5289 = vld [vmem:[%s5262 + $0xd0] sm:$0xff]
      %v5290 = vld [vmem:[%s5262 + $0xd8] sm:$0xff]
      %v5291 = vld [vmem:[%s5262 + $0xe0] sm:$0xff]
      %v5292 = vld [vmem:[%s5262 + $0xe8] sm:$0xff]
      %v5293 = vld [vmem:[%s5262 + $0xf0] sm:$0xff]
      %v5294 = vld [vmem:[%s5262 + $0xf8] sm:$0xff]
      %v5295 = vld [vmem:[%s5262 + $0x100] sm:$0xff]
      %v5296 = vld [vmem:[%s5262 + $0x108] sm:$0xff]
      %v5297 = vld [vmem:[%s5262 + $0x110] sm:$0xff]
      %v5298 = vld [vmem:[%s5262 + $0x118] sm:$0xff]
      %v5299 = vld [vmem:[%s5262 + $0x120] sm:$0xff]
      %v5300 = vld [vmem:[%s5262 + $0x128] sm:$0xff]
      %v5301 = vld [vmem:[%s5262 + $0x130] sm:$0xff]
      %v5302 = vld [vmem:[%s5262 + $0x138] sm:$0xff]
      %v5303 = vld [vmem:[%s5262 + $0x140] sm:$0xff]
      %v5304 = vld [vmem:[%s5262 + $0x148] sm:$0xff]
      %v5305 = vld [vmem:[%s5262 + $0x150] sm:$0xff]
      %v5306 = vld [vmem:[%s5262 + $0x158] sm:$0xff]
      %v5307 = vld [vmem:[%s5262 + $0x160] sm:$0xff]
      %v5308 = vld [vmem:[%s5262 + $0x168] sm:$0xff]
      %v5309 = vld [vmem:[%s5262 + $0x170] sm:$0xff]
      %v5310 = vld [vmem:[%s5262 + $0x178] sm:$0xff]
      %v5311 = vld [vmem:[%s5262 + $0x180] sm:$0xff]
      %v5312 = vld [vmem:[%s5262 + $0x188] sm:$0xff]
      %v5313 = vld [vmem:[%s5262 + $0x190] sm:$0xff]
      %v5314 = vld [vmem:[%s5262 + $0x198] sm:$0xff]
      %v5315 = vld [vmem:[%s5262 + $0x1a0] sm:$0xff]
      %v5316 = vld [vmem:[%s5262 + $0x1a8] sm:$0xff]
      %v5317 = vld [vmem:[%s5262 + $0x1b0] sm:$0xff]
      %v5318 = vld [vmem:[%s5262 + $0x1b8] sm:$0xff]
      %v5319 = vld [vmem:[%s5262 + $0x1c0] sm:$0xff]
      %v5320 = vld [vmem:[%s5262 + $0x1c8] sm:$0xff]
      %v5321 = vld [vmem:[%s5262 + $0x1d0] sm:$0xff]
      %v5322 = vld [vmem:[%s5262 + $0x1d8] sm:$0xff]
      %v5323 = vld [vmem:[%s5262 + $0x1e0] sm:$0xff]
      %v5324 = vld [vmem:[%s5262 + $0x1e8] sm:$0xff]
      %v5325 = vld [vmem:[%s5262 + $0x1f0] sm:$0xff]
      %v5326 = vld [vmem:[%s5262 + $0x1f8] sm:$0xff]
      %v5327 = vld [vmem:[%s5262 + $0x200] sm:$0xff]
      %v5328 = vld [vmem:[%s5262 + $0x208] sm:$0xff]
      %v5329 = vld [vmem:[%s5262 + $0x210] sm:$0xff]
      %v5330 = vld [vmem:[%s5262 + $0x218] sm:$0xff]
      %v5331 = vld [vmem:[%s5262 + $0x220] sm:$0xff]
      %v5332 = vld [vmem:[%s5262 + $0x228] sm:$0xff]
      %v5333 = vld [vmem:[%s5262 + $0x230] sm:$0xff]
      %v5334 = vld [vmem:[%s5262 + $0x238] sm:$0xff]
      %v5335 = vld [vmem:[%s5262 + $0x240] sm:$0xff]
      %v5336 = vld [vmem:[%s5262 + $0x248] sm:$0xff]
      %v5337 = vld [vmem:[%s5262 + $0x250] sm:$0xff]
      %v5338 = vld [vmem:[%s5262 + $0x258] sm:$0xff]
      %v5339 = vld [vmem:[%s5262 + $0x260] sm:$0xff]
      %v5340 = vld [vmem:[%s5262 + $0x268] sm:$0xff]
      %v5341 = vld [vmem:[%s5262 + $0x270] sm:$0xff]
      %v5342 = vld [vmem:[%s5262 + $0x278] sm:$0xff]
      %v5343 = vld [vmem:[%s5262 + $0x280] sm:$0xff]
      %v5344 = vld [vmem:[%s5262 + $0x288] sm:$0xff]
      %v5345 = vld [vmem:[%s5262 + $0x290] sm:$0xff]
      %v5346 = vld [vmem:[%s5262 + $0x298] sm:$0xff]
      %v5347 = vld [vmem:[%s5262 + $0x2a0] sm:$0xff]
      %v5348 = vld [vmem:[%s5262 + $0x2a8] sm:$0xff]
      %v5349 = vld [vmem:[%s5262 + $0x2b0] sm:$0xff]
      %v5350 = vld [vmem:[%s5262 + $0x2b8] sm:$0xff]
      %v5351 = vld [vmem:[%s5262 + $0x2c0] sm:$0xff]
      %v5352 = vld [vmem:[%s5262 + $0x2c8] sm:$0xff]
      %v5353 = vld [vmem:[%s5262 + $0x2d0] sm:$0xff]
      %v5354 = vld [vmem:[%s5262 + $0x2d8] sm:$0xff]
      %v5355 = vld [vmem:[%s5262 + $0x2e0] sm:$0xff]
      %v5356 = vld [vmem:[%s5262 + $0x2e8] sm:$0xff]
      %v5357 = vld [vmem:[%s5262 + $0x2f0] sm:$0xff]
      %v5358 = vld [vmem:[%s5262 + $0x2f8] sm:$0xff]
      %v5359 = vld [vmem:[%s5262 + $0x300] sm:$0xff]
      %v5360 = vld [vmem:[%s5262 + $0x308] sm:$0xff]
      %v5361 = vld [vmem:[%s5262 + $0x310] sm:$0xff]
      %v5362 = vld [vmem:[%s5262 + $0x318] sm:$0xff]
      %v5363 = vld [vmem:[%s5262 + $0x320] sm:$0xff]
      %v5364 = vld [vmem:[%s5262 + $0x328] sm:$0xff]
      %v5365 = vld [vmem:[%s5262 + $0x330] sm:$0xff]
      %v5366 = vld [vmem:[%s5262 + $0x338] sm:$0xff]
      %v5367 = vld [vmem:[%s5262 + $0x340] sm:$0xff]
      %v5368 = vld [vmem:[%s5262 + $0x348] sm:$0xff]
      %v5369 = vld [vmem:[%s5262 + $0x350] sm:$0xff]
      %v5370 = vld [vmem:[%s5262 + $0x358] sm:$0xff]
      %v5371 = vld [vmem:[%s5262 + $0x360] sm:$0xff]
      %v5372 = vld [vmem:[%s5262 + $0x368] sm:$0xff]
      %v5373 = vld [vmem:[%s5262 + $0x370] sm:$0xff]
      %v5374 = vld [vmem:[%s5262 + $0x378] sm:$0xff]
      %v5385 = vrot.slane %v5260, 4
      %v5386 = vrot.slane %v3163, 4
      %v5387 = vsel %vm3088, %v5385, %v5386
      %v5388 = vrot.slane %v5261, 4
      %v5389 = vrot.slane %v3164, 4
      %v5390 = vsel %vm3088, %v5388, %v5389
      %v5391 = vrot.slane %v3165, 4
      %v5392 = vsel %vm3088, %v5386, %v5391
      %v5393 = vrot.slane %v3166, 4
      %v5394 = vsel %vm3088, %v5389, %v5393
      %v5395 = vrot.slane %v3167, 4
      %v5396 = vsel %vm3088, %v5391, %v5395
      %v5397 = vrot.slane %v3168, 4
      %v5398 = vsel %vm3088, %v5393, %v5397
      %v5399 = vrot.slane %v3169, 4
      %v5400 = vsel %vm3088, %v5395, %v5399
      %v5401 = vrot.slane %v3170, 4
      %v5402 = vsel %vm3088, %v5397, %v5401
      %v5519 = vunpack.c.l.b16 %v5263
      %v5520 = vunpack.c.h.b16 %v5263
      %v5521 = vunpack.c.l.b16 %v5264
      %v5522 = vunpack.c.h.b16 %v5264
      %v5523 = vunpack.c.l.b16 %v5265
      %v5524 = vunpack.c.h.b16 %v5265
      %v5525 = vunpack.c.l.b16 %v5266
      %v5526 = vunpack.c.h.b16 %v5266
      %v5527 = vunpack.c.l.b16 %v5267
      %v5528 = vunpack.c.h.b16 %v5267
      %v5529 = vunpack.c.l.b16 %v5268
      %v5530 = vunpack.c.h.b16 %v5268
      %v5531 = vunpack.c.l.b16 %v5269
      %v5532 = vunpack.c.h.b16 %v5269
      %v5533 = vunpack.c.l.b16 %v5270
      %v5534 = vunpack.c.h.b16 %v5270
      %v5535 = vunpack.c.l.b16 %v5271
      %v5536 = vunpack.c.h.b16 %v5271
      %v5537 = vunpack.c.l.b16 %v5272
      %v5538 = vunpack.c.h.b16 %v5272
      %v5539 = vunpack.c.l.b16 %v5273
      %v5540 = vunpack.c.h.b16 %v5273
      %v5541 = vunpack.c.l.b16 %v5274
      %v5542 = vunpack.c.h.b16 %v5274
      %v5543 = vunpack.c.l.b16 %v5275
      %v5544 = vunpack.c.h.b16 %v5275
      %v5545 = vunpack.c.l.b16 %v5276
      %v5546 = vunpack.c.h.b16 %v5276
      %v5547 = vunpack.c.l.b16 %v5277
      %v5548 = vunpack.c.h.b16 %v5277
      %v5549 = vunpack.c.l.b16 %v5278
      %v5550 = vunpack.c.h.b16 %v5278
      %v5551 = vunpack.c.l.b16 %v5279
      %v5552 = vunpack.c.h.b16 %v5279
      %v5553 = vunpack.c.l.b16 %v5280
      %v5554 = vunpack.c.h.b16 %v5280
      %v5555 = vunpack.c.l.b16 %v5281
      %v5556 = vunpack.c.h.b16 %v5281
      %v5557 = vunpack.c.l.b16 %v5282
      %v5558 = vunpack.c.h.b16 %v5282
      %v5559 = vunpack.c.l.b16 %v5283
      %v5560 = vunpack.c.h.b16 %v5283
      %v5561 = vunpack.c.l.b16 %v5284
      %v5562 = vunpack.c.h.b16 %v5284
      %v5563 = vunpack.c.l.b16 %v5285
      %v5564 = vunpack.c.h.b16 %v5285
      %v5565 = vunpack.c.l.b16 %v5286
      %v5566 = vunpack.c.h.b16 %v5286
      %v5567 = vunpack.c.l.b16 %v5287
      %v5568 = vunpack.c.h.b16 %v5287
      %v5569 = vunpack.c.l.b16 %v5288
      %v5570 = vunpack.c.h.b16 %v5288
      %v5571 = vunpack.c.l.b16 %v5289
      %v5572 = vunpack.c.h.b16 %v5289
      %v5573 = vunpack.c.l.b16 %v5290
      %v5574 = vunpack.c.h.b16 %v5290
      %v5575 = vunpack.c.l.b16 %v5291
      %v5576 = vunpack.c.h.b16 %v5291
      %v5577 = vunpack.c.l.b16 %v5292
      %v5578 = vunpack.c.h.b16 %v5292
      %v5579 = vunpack.c.l.b16 %v5293
      %v5580 = vunpack.c.h.b16 %v5293
      %v5581 = vunpack.c.l.b16 %v5294
      %v5582 = vunpack.c.h.b16 %v5294
      %v5583 = vunpack.c.l.b16 %v5295
      %v5584 = vunpack.c.h.b16 %v5295
      %v5585 = vunpack.c.l.b16 %v5296
      %v5586 = vunpack.c.h.b16 %v5296
      %v5587 = vunpack.c.l.b16 %v5297
      %v5588 = vunpack.c.h.b16 %v5297
      %v5589 = vunpack.c.l.b16 %v5298
      %v5590 = vunpack.c.h.b16 %v5298
      %v5591 = vunpack.c.l.b16 %v5299
      %v5592 = vunpack.c.h.b16 %v5299
      %v5593 = vunpack.c.l.b16 %v5300
      %v5594 = vunpack.c.h.b16 %v5300
      %v5595 = vunpack.c.l.b16 %v5301
      %v5596 = vunpack.c.h.b16 %v5301
      %v5597 = vunpack.c.l.b16 %v5302
      %v5598 = vunpack.c.h.b16 %v5302
      %v5599 = vunpack.c.l.b16 %v5303
      %v5600 = vunpack.c.h.b16 %v5303
      %v5601 = vunpack.c.l.b16 %v5304
      %v5602 = vunpack.c.h.b16 %v5304
      %v5603 = vunpack.c.l.b16 %v5305
      %v5604 = vunpack.c.h.b16 %v5305
      %v5605 = vunpack.c.l.b16 %v5306
      %v5606 = vunpack.c.h.b16 %v5306
      %v5607 = vunpack.c.l.b16 %v5307
      %v5608 = vunpack.c.h.b16 %v5307
      %v5609 = vunpack.c.l.b16 %v5308
      %v5610 = vunpack.c.h.b16 %v5308
      %v5611 = vunpack.c.l.b16 %v5309
      %v5612 = vunpack.c.h.b16 %v5309
      %v5613 = vunpack.c.l.b16 %v5310
      %v5614 = vunpack.c.h.b16 %v5310
      %v5615 = vunpack.c.l.b16 %v5311
      %v5616 = vunpack.c.h.b16 %v5311
      %v5617 = vunpack.c.l.b16 %v5312
      %v5618 = vunpack.c.h.b16 %v5312
      %v5619 = vunpack.c.l.b16 %v5313
      %v5620 = vunpack.c.h.b16 %v5313
      %v5621 = vunpack.c.l.b16 %v5314
      %v5622 = vunpack.c.h.b16 %v5314
      %v5623 = vunpack.c.l.b16 %v5315
      %v5624 = vunpack.c.h.b16 %v5315
      %v5625 = vunpack.c.l.b16 %v5316
      %v5626 = vunpack.c.h.b16 %v5316
      %v5627 = vunpack.c.l.b16 %v5317
      %v5628 = vunpack.c.h.b16 %v5317
      %v5629 = vunpack.c.l.b16 %v5318
      %v5630 = vunpack.c.h.b16 %v5318
      %v5631 = vunpack.c.l.b16 %v5319
      %v5632 = vunpack.c.h.b16 %v5319
      %v5633 = vunpack.c.l.b16 %v5320
      %v5634 = vunpack.c.h.b16 %v5320
      %v5635 = vunpack.c.l.b16 %v5321
      %v5636 = vunpack.c.h.b16 %v5321
      %v5637 = vunpack.c.l.b16 %v5322
      %v5638 = vunpack.c.h.b16 %v5322
      %v5639 = vunpack.c.l.b16 %v5323
      %v5640 = vunpack.c.h.b16 %v5323
      %v5641 = vunpack.c.l.b16 %v5324
      %v5642 = vunpack.c.h.b16 %v5324
      %v5643 = vunpack.c.l.b16 %v5325
      %v5644 = vunpack.c.h.b16 %v5325
      %v5645 = vunpack.c.l.b16 %v5326
      %v5646 = vunpack.c.h.b16 %v5326
      %v5647 = vunpack.c.l.b16 %v5327
      %v5648 = vunpack.c.h.b16 %v5327
      %v5649 = vunpack.c.l.b16 %v5328
      %v5650 = vunpack.c.h.b16 %v5328
      %v5651 = vunpack.c.l.b16 %v5329
      %v5652 = vunpack.c.h.b16 %v5329
      %v5653 = vunpack.c.l.b16 %v5330
      %v5654 = vunpack.c.h.b16 %v5330
      %v5655 = vunpack.c.l.b16 %v5331
      %v5656 = vunpack.c.h.b16 %v5331
      %v5657 = vunpack.c.l.b16 %v5332
      %v5658 = vunpack.c.h.b16 %v5332
      %v5659 = vunpack.c.l.b16 %v5333
      %v5660 = vunpack.c.h.b16 %v5333
      %v5661 = vunpack.c.l.b16 %v5334
      %v5662 = vunpack.c.h.b16 %v5334
      %v5663 = vunpack.c.l.b16 %v5335
      %v5664 = vunpack.c.h.b16 %v5335
      %v5665 = vunpack.c.l.b16 %v5336
      %v5666 = vunpack.c.h.b16 %v5336
      %v5667 = vunpack.c.l.b16 %v5337
      %v5668 = vunpack.c.h.b16 %v5337
      %v5669 = vunpack.c.l.b16 %v5338
      %v5670 = vunpack.c.h.b16 %v5338
      %v5671 = vunpack.c.l.b16 %v5339
      %v5672 = vunpack.c.h.b16 %v5339
      %v5673 = vunpack.c.l.b16 %v5340
      %v5674 = vunpack.c.h.b16 %v5340
      %v5675 = vunpack.c.l.b16 %v5341
      %v5676 = vunpack.c.h.b16 %v5341
      %v5677 = vunpack.c.l.b16 %v5342
      %v5678 = vunpack.c.h.b16 %v5342
      %v5679 = vunpack.c.l.b16 %v5343
      %v5680 = vunpack.c.h.b16 %v5343
      %v5681 = vunpack.c.l.b16 %v5344
      %v5682 = vunpack.c.h.b16 %v5344
      %v5683 = vunpack.c.l.b16 %v5345
      %v5684 = vunpack.c.h.b16 %v5345
      %v5685 = vunpack.c.l.b16 %v5346
      %v5686 = vunpack.c.h.b16 %v5346
      %v5687 = vunpack.c.l.b16 %v5347
      %v5688 = vunpack.c.h.b16 %v5347
      %v5689 = vunpack.c.l.b16 %v5348
      %v5690 = vunpack.c.h.b16 %v5348
      %v5691 = vunpack.c.l.b16 %v5349
      %v5692 = vunpack.c.h.b16 %v5349
      %v5693 = vunpack.c.l.b16 %v5350
      %v5694 = vunpack.c.h.b16 %v5350
      %v5695 = vunpack.c.l.b16 %v5351
      %v5696 = vunpack.c.h.b16 %v5351
      %v5697 = vunpack.c.l.b16 %v5352
      %v5698 = vunpack.c.h.b16 %v5352
      %v5699 = vunpack.c.l.b16 %v5353
      %v5700 = vunpack.c.h.b16 %v5353
      %v5701 = vunpack.c.l.b16 %v5354
      %v5702 = vunpack.c.h.b16 %v5354
      %v5703 = vunpack.c.l.b16 %v5355
      %v5704 = vunpack.c.h.b16 %v5355
      %v5705 = vunpack.c.l.b16 %v5356
      %v5706 = vunpack.c.h.b16 %v5356
      %v5707 = vunpack.c.l.b16 %v5357
      %v5708 = vunpack.c.h.b16 %v5357
      %v5709 = vunpack.c.l.b16 %v5358
      %v5710 = vunpack.c.h.b16 %v5358
      %v5711 = vunpack.c.l.b16 %v5359
      %v5712 = vunpack.c.h.b16 %v5359
      %v5713 = vunpack.c.l.b16 %v5360
      %v5714 = vunpack.c.h.b16 %v5360
      %v5715 = vunpack.c.l.b16 %v5361
      %v5716 = vunpack.c.h.b16 %v5361
      %v5717 = vunpack.c.l.b16 %v5362
      %v5718 = vunpack.c.h.b16 %v5362
      %v5719 = vunpack.c.l.b16 %v5363
      %v5720 = vunpack.c.h.b16 %v5363
      %v5721 = vunpack.c.l.b16 %v5364
      %v5722 = vunpack.c.h.b16 %v5364
      %v5723 = vunpack.c.l.b16 %v5365
      %v5724 = vunpack.c.h.b16 %v5365
      %v5725 = vunpack.c.l.b16 %v5366
      %v5726 = vunpack.c.h.b16 %v5366
      %v5727 = vunpack.c.l.b16 %v5367
      %v5728 = vunpack.c.h.b16 %v5367
      %v5729 = vunpack.c.l.b16 %v5368
      %v5730 = vunpack.c.h.b16 %v5368
      %v5731 = vunpack.c.l.b16 %v5369
      %v5732 = vunpack.c.h.b16 %v5369
      %v5733 = vunpack.c.l.b16 %v5370
      %v5734 = vunpack.c.h.b16 %v5370
      %v5735 = vunpack.c.l.b16 %v5371
      %v5736 = vunpack.c.h.b16 %v5371
      %v5737 = vunpack.c.l.b16 %v5372
      %v5738 = vunpack.c.h.b16 %v5372
      %v5739 = vunpack.c.l.b16 %v5373
      %v5740 = vunpack.c.h.b16 %v5373
      %v5741 = vunpack.c.l.b16 %v5374
      %v5742 = vunpack.c.h.b16 %v5374
      %v5743 = vpack.c.b16 %v5527, %v5519
      %v5744 = vpack.c.b16 %v5528, %v5520
      %v5745 = vpack.c.b16 %v5529, %v5521
      %v5746 = vpack.c.b16 %v5530, %v5522
      %v5747 = vpack.c.b16 %v5531, %v5523
      %v5748 = vpack.c.b16 %v5532, %v5524
      %v5749 = vpack.c.b16 %v5533, %v5525
      %v5750 = vpack.c.b16 %v5534, %v5526
      %v5751 = vpack.c.b16 %v5543, %v5535
      %v5752 = vpack.c.b16 %v5544, %v5536
      %v5753 = vpack.c.b16 %v5545, %v5537
      %v5754 = vpack.c.b16 %v5546, %v5538
      %v5755 = vpack.c.b16 %v5547, %v5539
      %v5756 = vpack.c.b16 %v5548, %v5540
      %v5757 = vpack.c.b16 %v5549, %v5541
      %v5758 = vpack.c.b16 %v5550, %v5542
      %v5759 = vpack.c.b16 %v5559, %v5551
      %v5760 = vpack.c.b16 %v5560, %v5552
      %v5761 = vpack.c.b16 %v5561, %v5553
      %v5762 = vpack.c.b16 %v5562, %v5554
      %v5763 = vpack.c.b16 %v5563, %v5555
      %v5764 = vpack.c.b16 %v5564, %v5556
      %v5765 = vpack.c.b16 %v5565, %v5557
      %v5766 = vpack.c.b16 %v5566, %v5558
      %v5767 = vpack.c.b16 %v5575, %v5567
      %v5768 = vpack.c.b16 %v5576, %v5568
      %v5769 = vpack.c.b16 %v5577, %v5569
      %v5770 = vpack.c.b16 %v5578, %v5570
      %v5771 = vpack.c.b16 %v5579, %v5571
      %v5772 = vpack.c.b16 %v5580, %v5572
      %v5773 = vpack.c.b16 %v5581, %v5573
      %v5774 = vpack.c.b16 %v5582, %v5574
      %v5775 = vpack.c.b16 %v5591, %v5583
      %v5776 = vpack.c.b16 %v5592, %v5584
      %v5777 = vpack.c.b16 %v5593, %v5585
      %v5778 = vpack.c.b16 %v5594, %v5586
      %v5779 = vpack.c.b16 %v5595, %v5587
      %v5780 = vpack.c.b16 %v5596, %v5588
      %v5781 = vpack.c.b16 %v5597, %v5589
      %v5782 = vpack.c.b16 %v5598, %v5590
      %v5783 = vpack.c.b16 %v5607, %v5599
      %v5784 = vpack.c.b16 %v5608, %v5600
      %v5785 = vpack.c.b16 %v5609, %v5601
      %v5786 = vpack.c.b16 %v5610, %v5602
      %v5787 = vpack.c.b16 %v5611, %v5603
      %v5788 = vpack.c.b16 %v5612, %v5604
      %v5789 = vpack.c.b16 %v5613, %v5605
      %v5790 = vpack.c.b16 %v5614, %v5606
      %v5791 = vpack.c.b16 %v5623, %v5615
      %v5792 = vpack.c.b16 %v5624, %v5616
      %v5793 = vpack.c.b16 %v5625, %v5617
      %v5794 = vpack.c.b16 %v5626, %v5618
      %v5795 = vpack.c.b16 %v5627, %v5619
      %v5796 = vpack.c.b16 %v5628, %v5620
      %v5797 = vpack.c.b16 %v5629, %v5621
      %v5798 = vpack.c.b16 %v5630, %v5622
      %v5799 = vpack.c.b16 %v5639, %v5631
      %v5800 = vpack.c.b16 %v5640, %v5632
      %v5801 = vpack.c.b16 %v5641, %v5633
      %v5802 = vpack.c.b16 %v5642, %v5634
      %v5803 = vpack.c.b16 %v5643, %v5635
      %v5804 = vpack.c.b16 %v5644, %v5636
      %v5805 = vpack.c.b16 %v5645, %v5637
      %v5806 = vpack.c.b16 %v5646, %v5638
      %v5807 = vpack.c.b16 %v5655, %v5647
      %v5808 = vpack.c.b16 %v5656, %v5648
      %v5809 = vpack.c.b16 %v5657, %v5649
      %v5810 = vpack.c.b16 %v5658, %v5650
      %v5811 = vpack.c.b16 %v5659, %v5651
      %v5812 = vpack.c.b16 %v5660, %v5652
      %v5813 = vpack.c.b16 %v5661, %v5653
      %v5814 = vpack.c.b16 %v5662, %v5654
      %v5815 = vpack.c.b16 %v5671, %v5663
      %v5816 = vpack.c.b16 %v5672, %v5664
      %v5817 = vpack.c.b16 %v5673, %v5665
      %v5818 = vpack.c.b16 %v5674, %v5666
      %v5819 = vpack.c.b16 %v5675, %v5667
      %v5820 = vpack.c.b16 %v5676, %v5668
      %v5821 = vpack.c.b16 %v5677, %v5669
      %v5822 = vpack.c.b16 %v5678, %v5670
      %v5823 = vpack.c.b16 %v5687, %v5679
      %v5824 = vpack.c.b16 %v5688, %v5680
      %v5825 = vpack.c.b16 %v5689, %v5681
      %v5826 = vpack.c.b16 %v5690, %v5682
      %v5827 = vpack.c.b16 %v5691, %v5683
      %v5828 = vpack.c.b16 %v5692, %v5684
      %v5829 = vpack.c.b16 %v5693, %v5685
      %v5830 = vpack.c.b16 %v5694, %v5686
      %v5831 = vpack.c.b16 %v5703, %v5695
      %v5832 = vpack.c.b16 %v5704, %v5696
      %v5833 = vpack.c.b16 %v5705, %v5697
      %v5834 = vpack.c.b16 %v5706, %v5698
      %v5835 = vpack.c.b16 %v5707, %v5699
      %v5836 = vpack.c.b16 %v5708, %v5700
      %v5837 = vpack.c.b16 %v5709, %v5701
      %v5838 = vpack.c.b16 %v5710, %v5702
      %v5839 = vpack.c.b16 %v5719, %v5711
      %v5840 = vpack.c.b16 %v5720, %v5712
      %v5841 = vpack.c.b16 %v5721, %v5713
      %v5842 = vpack.c.b16 %v5722, %v5714
      %v5843 = vpack.c.b16 %v5723, %v5715
      %v5844 = vpack.c.b16 %v5724, %v5716
      %v5845 = vpack.c.b16 %v5725, %v5717
      %v5846 = vpack.c.b16 %v5726, %v5718
      %v5847 = vpack.c.b16 %v5735, %v5727
      %v5848 = vpack.c.b16 %v5736, %v5728
      %v5849 = vpack.c.b16 %v5737, %v5729
      %v5850 = vpack.c.b16 %v5738, %v5730
      %v5851 = vpack.c.b16 %v5739, %v5731
      %v5852 = vpack.c.b16 %v5740, %v5732
      %v5853 = vpack.c.b16 %v5741, %v5733
      %v5854 = vpack.c.b16 %v5742, %v5734
      %v5968 = vsel %vm3998, %v5390, 0
      %v5971 = vsel %vm3998, %v5394, 0
      %v5974 = vsel %vm3998, %v5398, 0
      %v5977 = vsel %vm3998, %v5402, 0
      %5979 = vmatprep.subr.bf16.mxu0 %v5744
      %5980 = vmatpush1.bf16.msra.mxu0 %v5743
      %5981 = vmatprep.subr.bf16.mxu0 %v5752
      %5982 = vmatpush1.bf16.msra.mxu0 %v5751
      %5983 = vmatprep.subr.bf16.mxu0 %v5760
      %5984 = vmatpush1.bf16.msra.mxu0 %v5759
      %5985 = vmatprep.subr.bf16.mxu0 %v5768
      %5986 = vmatpush1.bf16.msra.mxu0 %v5767
      %5987 = vmatprep.subr.bf16.mxu0 %v5776
      %5988 = vmatpush1.bf16.msra.mxu0 %v5775
      %5989 = vmatprep.subr.bf16.mxu0 %v5784
      %5990 = vmatpush1.bf16.msra.mxu0 %v5783
      %5991 = vmatprep.subr.bf16.mxu0 %v5792
      %5992 = vmatpush1.bf16.msra.mxu0 %v5791
      %5993 = vmatprep.subr.bf16.mxu0 %v5800
      %5994 = vmatpush1.bf16.msra.mxu0 %v5799
      %5995 = vmatprep.subr.bf16.mxu0 %v5808
      %5996 = vmatpush1.bf16.msra.mxu0 %v5807
      %5997 = vmatprep.subr.bf16.mxu0 %v5816
      %5998 = vmatpush1.bf16.msra.mxu0 %v5815
      %5999 = vmatprep.subr.bf16.mxu0 %v5824
      %6000 = vmatpush1.bf16.msra.mxu0 %v5823
      %6001 = vmatprep.subr.bf16.mxu0 %v5832
      %6002 = vmatpush1.bf16.msra.mxu0 %v5831
      %6003 = vmatprep.subr.bf16.mxu0 %v5840
      %6004 = vmatpush1.bf16.msra.mxu0 %v5839
      %6005 = vmatprep.subr.bf16.mxu0 %v5848
      %6006 = vmatpush1.bf16.msra.mxu0 %v5847
      %6007 = vmatprep.subr.bf16.mxu0 0
      %6008 = vmatpush1.bf16.msra.mxu0 0
      %6009 = vmatprep.subr.bf16.mxu0 0
      %6010 = vmatpush1.bf16.msra.mxu0 0
      %6011 = vmatprep.mubr.bf16.mxu0 %v5968
      %6012 = vmatmul.mubr.bf16.gmra.mrb[0].mxu0 %v5387
      %v6013 = vpop.f32.mrb[0].mxu0
      %v6014 = vadd.f32 0.0, %v6013
      %v6015 = vpop.f32.mrb[0].mxu0
      %v6016 = vadd.f32 0.0, %v6015
      %v6017 = vpop.f32.mrb[0].mxu0
      %v6018 = vadd.f32 0.0, %v6017
      %v6019 = vpop.f32.mrb[0].mxu0
      %v6020 = vadd.f32 0.0, %v6019
      %6021 = vmatprep.mubr.bf16.mxu0 %v5971
      %6022 = vmatmul.mubr.bf16.gmra.mrb[0].mxu0 %v5392
      %v6023 = vpop.f32.mrb[0].mxu0
      %v6024 = vadd.f32 0.0, %v6023
      %v6025 = vpop.f32.mrb[0].mxu0
      %v6026 = vadd.f32 0.0, %v6025
      %v6027 = vpop.f32.mrb[0].mxu0
      %v6028 = vadd.f32 0.0, %v6027
      %v6029 = vpop.f32.mrb[0].mxu0
      %v6030 = vadd.f32 0.0, %v6029
      %6031 = vmatprep.mubr.bf16.mxu0 %v5974
      %6032 = vmatmul.mubr.bf16.gmra.mrb[0].mxu0 %v5396
      %v6033 = vpop.f32.mrb[0].mxu0
      %v6034 = vadd.f32 0.0, %v6033
      %v6035 = vpop.f32.mrb[0].mxu0
      %v6036 = vadd.f32 0.0, %v6035
      %v6037 = vpop.f32.mrb[0].mxu0
      %v6038 = vadd.f32 0.0, %v6037
      %v6039 = vpop.f32.mrb[0].mxu0
      %v6040 = vadd.f32 0.0, %v6039
      %6041 = vmatprep.mubr.bf16.mxu0 %v5977
      %6042 = vmatmul.mubr.bf16.gmra.mrb[0].mxu0 %v5400
      %v6043 = vpop.f32.mrb[0].mxu0
      %v6044 = vadd.f32 0.0, %v6043
      %v6045 = vpop.f32.mrb[0].mxu0
      %v6046 = vadd.f32 0.0, %v6045
      %v6047 = vpop.f32.mrb[0].mxu0
      %v6048 = vadd.f32 0.0, %v6047
      %v6049 = vpop.f32.mrb[0].mxu0
      %v6050 = vadd.f32 0.0, %v6049
      %6051 = vdwg.mxu0
      %6052 = vmatprep.subr.bf16.mxu0 %v5746
      %6053 = vmatpush1.bf16.msra.mxu0 %v5745
      %6054 = vmatprep.subr.bf16.mxu0 %v5754
      %6055 = vmatpush1.bf16.msra.mxu0 %v5753
      %6056 = vmatprep.subr.bf16.mxu0 %v5762
      %6057 = vmatpush1.bf16.msra.mxu0 %v5761
      %6058 = vmatprep.subr.bf16.mxu0 %v5770
      %6059 = vmatpush1.bf16.msra.mxu0 %v5769
      %6060 = vmatprep.subr.bf16.mxu0 %v5778
      %6061 = vmatpush1.bf16.msra.mxu0 %v5777
      %6062 = vmatprep.subr.bf16.mxu0 %v5786
      %6063 = vmatpush1.bf16.msra.mxu0 %v5785
      %6064 = vmatprep.subr.bf16.mxu0 %v5794
      %6065 = vmatpush1.bf16.msra.mxu0 %v5793
      %6066 = vmatprep.subr.bf16.mxu0 %v5802
      %6067 = vmatpush1.bf16.msra.mxu0 %v5801
      %6068 = vmatprep.subr.bf16.mxu0 %v5810
      %6069 = vmatpush1.bf16.msra.mxu0 %v5809
      %6070 = vmatprep.subr.bf16.mxu0 %v5818
      %6071 = vmatpush1.bf16.msra.mxu0 %v5817
      %6072 = vmatprep.subr.bf16.mxu0 %v5826
      %6073 = vmatpush1.bf16.msra.mxu0 %v5825
      %6074 = vmatprep.subr.bf16.mxu0 %v5834
      %6075 = vmatpush1.bf16.msra.mxu0 %v5833
      %6076 = vmatprep.subr.bf16.mxu0 %v5842
      %6077 = vmatpush1.bf16.msra.mxu0 %v5841
      %6078 = vmatprep.subr.bf16.mxu0 %v5850
      %6079 = vmatpush1.bf16.msra.mxu0 %v5849
      %6080 = vmatprep.subr.bf16.mxu0 0
      %6081 = vmatpush1.bf16.msra.mxu0 0
      %6082 = vmatprep.subr.bf16.mxu0 0
      %6083 = vmatpush1.bf16.msra.mxu0 0
      %6084 = vmatprep.mubr.bf16.mxu0 %v5968
      %6085 = vmatmul.mubr.bf16.gmra.mrb[0].mxu0 %v5387
      %v6086 = vpop.f32.mrb[0].mxu0
      %v6087 = vadd.f32 0.0, %v6086
      %v6088 = vpop.f32.mrb[0].mxu0
      %v6089 = vadd.f32 0.0, %v6088
      %v6090 = vpop.f32.mrb[0].mxu0
      %v6091 = vadd.f32 0.0, %v6090
      %v6092 = vpop.f32.mrb[0].mxu0
      %v6093 = vadd.f32 0.0, %v6092
      %6094 = vmatprep.mubr.bf16.mxu0 %v5971
      %6095 = vmatmul.mubr.bf16.gmra.mrb[0].mxu0 %v5392
      %v6096 = vpop.f32.mrb[0].mxu0
      %v6097 = vadd.f32 0.0, %v6096
      %v6098 = vpop.f32.mrb[0].mxu0
      %v6099 = vadd.f32 0.0, %v6098
      %v6100 = vpop.f32.mrb[0].mxu0
      %v6101 = vadd.f32 0.0, %v6100
      %v6102 = vpop.f32.mrb[0].mxu0
      %v6103 = vadd.f32 0.0, %v6102
      %6104 = vmatprep.mubr.bf16.mxu0 %v5974
      %6105 = vmatmul.mubr.bf16.gmra.mrb[0].mxu0 %v5396
      %v6106 = vpop.f32.mrb[0].mxu0
      %v6107 = vadd.f32 0.0, %v6106
      %v6108 = vpop.f32.mrb[0].mxu0
      %v6109 = vadd.f32 0.0, %v6108
      %v6110 = vpop.f32.mrb[0].mxu0
      %v6111 = vadd.f32 0.0, %v6110
      %v6112 = vpop.f32.mrb[0].mxu0
      %v6113 = vadd.f32 0.0, %v6112
      %6114 = vmatprep.mubr.bf16.mxu0 %v5977
      %6115 = vmatmul.mubr.bf16.gmra.mrb[0].mxu0 %v5400
      %v6116 = vpop.f32.mrb[0].mxu0
      %v6117 = vadd.f32 0.0, %v6116
      %v6118 = vpop.f32.mrb[0].mxu0
      %v6119 = vadd.f32 0.0, %v6118
      %v6120 = vpop.f32.mrb[0].mxu0
      %v6121 = vadd.f32 0.0, %v6120
      %v6122 = vpop.f32.mrb[0].mxu0
      %v6123 = vadd.f32 0.0, %v6122
      %6124 = vdwg.mxu0
      %6125 = vmatprep.subr.bf16.mxu0 %v5748
      %6126 = vmatpush1.bf16.msra.mxu0 %v5747
      %6127 = vmatprep.subr.bf16.mxu0 %v5756
      %6128 = vmatpush1.bf16.msra.mxu0 %v5755
      %6129 = vmatprep.subr.bf16.mxu0 %v5764
      %6130 = vmatpush1.bf16.msra.mxu0 %v5763
      %6131 = vmatprep.subr.bf16.mxu0 %v5772
      %6132 = vmatpush1.bf16.msra.mxu0 %v5771
      %6133 = vmatprep.subr.bf16.mxu0 %v5780
      %6134 = vmatpush1.bf16.msra.mxu0 %v5779
      %6135 = vmatprep.subr.bf16.mxu0 %v5788
      %6136 = vmatpush1.bf16.msra.mxu0 %v5787
      %6137 = vmatprep.subr.bf16.mxu0 %v5796
      %6138 = vmatpush1.bf16.msra.mxu0 %v5795
      %6139 = vmatprep.subr.bf16.mxu0 %v5804
      %6140 = vmatpush1.bf16.msra.mxu0 %v5803
      %6141 = vmatprep.subr.bf16.mxu0 %v5812
      %6142 = vmatpush1.bf16.msra.mxu0 %v5811
      %6143 = vmatprep.subr.bf16.mxu0 %v5820
      %6144 = vmatpush1.bf16.msra.mxu0 %v5819
      %6145 = vmatprep.subr.bf16.mxu0 %v5828
      %6146 = vmatpush1.bf16.msra.mxu0 %v5827
      %6147 = vmatprep.subr.bf16.mxu0 %v5836
      %6148 = vmatpush1.bf16.msra.mxu0 %v5835
      %6149 = vmatprep.subr.bf16.mxu0 %v5844
      %6150 = vmatpush1.bf16.msra.mxu0 %v5843
      %6151 = vmatprep.subr.bf16.mxu0 %v5852
      %6152 = vmatpush1.bf16.msra.mxu0 %v5851
      %6153 = vmatprep.subr.bf16.mxu0 0
      %6154 = vmatpush1.bf16.msra.mxu0 0
      %6155 = vmatprep.subr.bf16.mxu0 0
      %6156 = vmatpush1.bf16.msra.mxu0 0
      %6157 = vmatprep.mubr.bf16.mxu0 %v5968
      %6158 = vmatmul.mubr.bf16.gmra.mrb[0].mxu0 %v5387
      %v6159 = vpop.f32.mrb[0].mxu0
      %v6160 = vadd.f32 0.0, %v6159
      %v6161 = vpop.f32.mrb[0].mxu0
      %v6162 = vadd.f32 0.0, %v6161
      %v6163 = vpop.f32.mrb[0].mxu0
      %v6164 = vadd.f32 0.0, %v6163
      %v6165 = vpop.f32.mrb[0].mxu0
      %v6166 = vadd.f32 0.0, %v6165
      %6167 = vmatprep.mubr.bf16.mxu0 %v5971
      %6168 = vmatmul.mubr.bf16.gmra.mrb[0].mxu0 %v5392
      %v6169 = vpop.f32.mrb[0].mxu0
      %v6170 = vadd.f32 0.0, %v6169
      %v6171 = vpop.f32.mrb[0].mxu0
      %v6172 = vadd.f32 0.0, %v6171
      %v6173 = vpop.f32.mrb[0].mxu0
      %v6174 = vadd.f32 0.0, %v6173
      %v6175 = vpop.f32.mrb[0].mxu0
      %v6176 = vadd.f32 0.0, %v6175
      %6177 = vmatprep.mubr.bf16.mxu0 %v5974
      %6178 = vmatmul.mubr.bf16.gmra.mrb[0].mxu0 %v5396
      %v6179 = vpop.f32.mrb[0].mxu0
      %v6180 = vadd.f32 0.0, %v6179
      %v6181 = vpop.f32.mrb[0].mxu0
      %v6182 = vadd.f32 0.0, %v6181
      %v6183 = vpop.f32.mrb[0].mxu0
      %v6184 = vadd.f32 0.0, %v6183
      %v6185 = vpop.f32.mrb[0].mxu0
      %v6186 = vadd.f32 0.0, %v6185
      %6187 = vmatprep.mubr.bf16.mxu0 %v5977
      %6188 = vmatmul.mubr.bf16.gmra.mrb[0].mxu0 %v5400
      %v6189 = vpop.f32.mrb[0].mxu0
      %v6190 = vadd.f32 0.0, %v6189
      %v6191 = vpop.f32.mrb[0].mxu0
      %v6192 = vadd.f32 0.0, %v6191
      %v6193 = vpop.f32.mrb[0].mxu0
      %v6194 = vadd.f32 0.0, %v6193
      %v6195 = vpop.f32.mrb[0].mxu0
      %v6196 = vadd.f32 0.0, %v6195
      %6197 = vdwg.mxu0
      %6198 = vmatprep.subr.bf16.mxu0 %v5750
      %6199 = vmatpush1.bf16.msra.mxu0 %v5749
      %6200 = vmatprep.subr.bf16.mxu0 %v5758
      %6201 = vmatpush1.bf16.msra.mxu0 %v5757
      %6202 = vmatprep.subr.bf16.mxu0 %v5766
      %6203 = vmatpush1.bf16.msra.mxu0 %v5765
      %6204 = vmatprep.subr.bf16.mxu0 %v5774
      %6205 = vmatpush1.bf16.msra.mxu0 %v5773
      %6206 = vmatprep.subr.bf16.mxu0 %v5782
      %6207 = vmatpush1.bf16.msra.mxu0 %v5781
      %6208 = vmatprep.subr.bf16.mxu0 %v5790
      %6209 = vmatpush1.bf16.msra.mxu0 %v5789
      %6210 = vmatprep.subr.bf16.mxu0 %v5798
      %6211 = vmatpush1.bf16.msra.mxu0 %v5797
      %6212 = vmatprep.subr.bf16.mxu0 %v5806
      %6213 = vmatpush1.bf16.msra.mxu0 %v5805
      %6214 = vmatprep.subr.bf16.mxu0 %v5814
      %6215 = vmatpush1.bf16.msra.mxu0 %v5813
      %6216 = vmatprep.subr.bf16.mxu0 %v5822
      %6217 = vmatpush1.bf16.msra.mxu0 %v5821
      %6218 = vmatprep.subr.bf16.mxu0 %v5830
      %6219 = vmatpush1.bf16.msra.mxu0 %v5829
      %6220 = vmatprep.subr.bf16.mxu0 %v5838
      %6221 = vmatpush1.bf16.msra.mxu0 %v5837
      %6222 = vmatprep.subr.bf16.mxu0 %v5846
      %6223 = vmatpush1.bf16.msra.mxu0 %v5845
      %6224 = vmatprep.subr.bf16.mxu0 %v5854
      %6225 = vmatpush1.bf16.msra.mxu0 %v5853
      %6226 = vmatprep.subr.bf16.mxu0 0
      %6227 = vmatpush1.bf16.msra.mxu0 0
      %6228 = vmatprep.subr.bf16.mxu0 0
      %6229 = vmatpush1.bf16.msra.mxu0 0
      %6230 = vmatprep.mubr.bf16.mxu0 %v5968
      %6231 = vmatmul.mubr.bf16.gmra.mrb[0].mxu0 %v5387
      %v6232 = vpop.f32.mrb[0].mxu0
      %v6233 = vadd.f32 0.0, %v6232
      %v6234 = vpop.f32.mrb[0].mxu0
      %v6235 = vadd.f32 0.0, %v6234
      %v6236 = vpop.f32.mrb[0].mxu0
      %v6237 = vadd.f32 0.0, %v6236
      %v6238 = vpop.f32.mrb[0].mxu0
      %v6239 = vadd.f32 0.0, %v6238
      %6240 = vmatprep.mubr.bf16.mxu0 %v5971
      %6241 = vmatmul.mubr.bf16.gmra.mrb[0].mxu0 %v5392
      %v6242 = vpop.f32.mrb[0].mxu0
      %v6243 = vadd.f32 0.0, %v6242
      %v6244 = vpop.f32.mrb[0].mxu0
      %v6245 = vadd.f32 0.0, %v6244
      %v6246 = vpop.f32.mrb[0].mxu0
      %v6247 = vadd.f32 0.0, %v6246
      %v6248 = vpop.f32.mrb[0].mxu0
      %v6249 = vadd.f32 0.0, %v6248
      %6250 = vmatprep.mubr.bf16.mxu0 %v5974
      %6251 = vmatmul.mubr.bf16.gmra.mrb[0].mxu0 %v5396
      %v6252 = vpop.f32.mrb[0].mxu0
      %v6253 = vadd.f32 0.0, %v6252
      %v6254 = vpop.f32.mrb[0].mxu0
      %v6255 = vadd.f32 0.0, %v6254
      %v6256 = vpop.f32.mrb[0].mxu0
      %v6257 = vadd.f32 0.0, %v6256
      %v6258 = vpop.f32.mrb[0].mxu0
      %v6259 = vadd.f32 0.0, %v6258
      %6260 = vmatprep.mubr.bf16.mxu0 %v5977
      %6261 = vmatmul.mubr.bf16.gmra.mrb[0].mxu0 %v5400
      %v6262 = vpop.f32.mrb[0].mxu0
      %v6263 = vadd.f32 0.0, %v6262
      %v6264 = vpop.f32.mrb[0].mxu0
      %v6265 = vadd.f32 0.0, %v6264
      %v6266 = vpop.f32.mrb[0].mxu0
      %v6267 = vadd.f32 0.0, %v6266
      %v6268 = vpop.f32.mrb[0].mxu0
      %v6269 = vadd.f32 0.0, %v6268
      %6270 = vdwg.mxu0
      %v6271 = vadd.f32 %v5003, %v6014
      %v6272 = vadd.f32 %v5005, %v6016
      %v6273 = vadd.f32 %v5076, %v6087
      %v6274 = vadd.f32 %v5078, %v6089
      %v6275 = vadd.f32 %v5149, %v6160
      %v6276 = vadd.f32 %v5151, %v6162
      %v6277 = vadd.f32 %v5222, %v6233
      %v6278 = vadd.f32 %v5224, %v6235
      %v6279 = vadd.f32 %v5007, %v6018
      %v6280 = vadd.f32 %v5009, %v6020
      %v6281 = vadd.f32 %v5080, %v6091
      %v6282 = vadd.f32 %v5082, %v6093
      %v6283 = vadd.f32 %v5153, %v6164
      %v6284 = vadd.f32 %v5155, %v6166
      %v6285 = vadd.f32 %v5226, %v6237
      %v6286 = vadd.f32 %v5228, %v6239
      %v6287 = vadd.f32 %v5013, %v6024
      %v6288 = vadd.f32 %v5015, %v6026
      %v6289 = vadd.f32 %v5086, %v6097
      %v6290 = vadd.f32 %v5088, %v6099
      %v6291 = vadd.f32 %v5159, %v6170
      %v6292 = vadd.f32 %v5161, %v6172
      %v6293 = vadd.f32 %v5232, %v6243
      %v6294 = vadd.f32 %v5234, %v6245
      %v6295 = vadd.f32 %v5017, %v6028
      %v6296 = vadd.f32 %v5019, %v6030
      %v6297 = vadd.f32 %v5090, %v6101
      %v6298 = vadd.f32 %v5092, %v6103
      %v6299 = vadd.f32 %v5163, %v6174
      %v6300 = vadd.f32 %v5165, %v6176
      %v6301 = vadd.f32 %v5236, %v6247
      %v6302 = vadd.f32 %v5238, %v6249
      %v6303 = vadd.f32 %v5023, %v6034
      %v6304 = vadd.f32 %v5025, %v6036
      %v6305 = vadd.f32 %v5096, %v6107
      %v6306 = vadd.f32 %v5098, %v6109
      %v6307 = vadd.f32 %v5169, %v6180
      %v6308 = vadd.f32 %v5171, %v6182
      %v6309 = vadd.f32 %v5242, %v6253
      %v6310 = vadd.f32 %v5244, %v6255
      %v6311 = vadd.f32 %v5027, %v6038
      %v6312 = vadd.f32 %v5029, %v6040
      %v6313 = vadd.f32 %v5100, %v6111
      %v6314 = vadd.f32 %v5102, %v6113
      %v6315 = vadd.f32 %v5173, %v6184
      %v6316 = vadd.f32 %v5175, %v6186
      %v6317 = vadd.f32 %v5246, %v6257
      %v6318 = vadd.f32 %v5248, %v6259
      %v6319 = vadd.f32 %v5033, %v6044
      %v6320 = vadd.f32 %v5035, %v6046
      %v6321 = vadd.f32 %v5106, %v6117
      %v6322 = vadd.f32 %v5108, %v6119
      %v6323 = vadd.f32 %v5179, %v6190
      %v6324 = vadd.f32 %v5181, %v6192
      %v6325 = vadd.f32 %v5252, %v6263
      %v6326 = vadd.f32 %v5254, %v6265
      %v6327 = vadd.f32 %v5037, %v6048
      %v6328 = vadd.f32 %v5039, %v6050
      %v6329 = vadd.f32 %v5110, %v6121
      %v6330 = vadd.f32 %v5112, %v6123
      %v6331 = vadd.f32 %v5183, %v6194
      %v6332 = vadd.f32 %v5185, %v6196
      %v6333 = vadd.f32 %v5256, %v6267
      %v6334 = vadd.f32 %v5258, %v6269
      %v6335 = vld [vmem:[#allocation3 + $0x80] sm:$0x1f]
      %v6336 = vld [vmem:[#allocation3 + $0x88] sm:$0x1f]
      %s6337 = scalar_lea.vmem %s4, 2688
      %v6338 = vld [vmem:[%s6337] sm:$0xff]
      %v6339 = vld [vmem:[%s6337 + $0x8] sm:$0xff]
      %v6340 = vld [vmem:[%s6337 + $0x10] sm:$0xff]
      %v6341 = vld [vmem:[%s6337 + $0x18] sm:$0xff]
      %v6342 = vld [vmem:[%s6337 + $0x20] sm:$0xff]
      %v6343 = vld [vmem:[%s6337 + $0x28] sm:$0xff]
      %v6344 = vld [vmem:[%s6337 + $0x30] sm:$0xff]
      %v6345 = vld [vmem:[%s6337 + $0x38] sm:$0xff]
      %v6346 = vld [vmem:[%s6337 + $0x40] sm:$0xff]
      %v6347 = vld [vmem:[%s6337 + $0x48] sm:$0xff]
      %v6348 = vld [vmem:[%s6337 + $0x50] sm:$0xff]
      %v6349 = vld [vmem:[%s6337 + $0x58] sm:$0xff]
      %v6350 = vld [vmem:[%s6337 + $0x60] sm:$0xff]
      %v6351 = vld [vmem:[%s6337 + $0x68] sm:$0xff]
      %v6352 = vld [vmem:[%s6337 + $0x70] sm:$0xff]
      %v6353 = vld [vmem:[%s6337 + $0x78] sm:$0xff]
      %v6354 = vld [vmem:[%s6337 + $0x80] sm:$0xff]
      %v6355 = vld [vmem:[%s6337 + $0x88] sm:$0xff]
      %v6356 = vld [vmem:[%s6337 + $0x90] sm:$0xff]
      %v6357 = vld [vmem:[%s6337 + $0x98] sm:$0xff]
      %v6358 = vld [vmem:[%s6337 + $0xa0] sm:$0xff]
      %v6359 = vld [vmem:[%s6337 + $0xa8] sm:$0xff]
      %v6360 = vld [vmem:[%s6337 + $0xb0] sm:$0xff]
      %v6361 = vld [vmem:[%s6337 + $0xb8] sm:$0xff]
      %v6362 = vld [vmem:[%s6337 + $0xc0] sm:$0xff]
      %v6363 = vld [vmem:[%s6337 + $0xc8] sm:$0xff]
      %v6364 = vld [vmem:[%s6337 + $0xd0] sm:$0xff]
      %v6365 = vld [vmem:[%s6337 + $0xd8] sm:$0xff]
      %v6366 = vld [vmem:[%s6337 + $0xe0] sm:$0xff]
      %v6367 = vld [vmem:[%s6337 + $0xe8] sm:$0xff]
      %v6368 = vld [vmem:[%s6337 + $0xf0] sm:$0xff]
      %v6369 = vld [vmem:[%s6337 + $0xf8] sm:$0xff]
      %v6370 = vld [vmem:[%s6337 + $0x100] sm:$0xff]
      %v6371 = vld [vmem:[%s6337 + $0x108] sm:$0xff]
      %v6372 = vld [vmem:[%s6337 + $0x110] sm:$0xff]
      %v6373 = vld [vmem:[%s6337 + $0x118] sm:$0xff]
      %v6374 = vld [vmem:[%s6337 + $0x120] sm:$0xff]
      %v6375 = vld [vmem:[%s6337 + $0x128] sm:$0xff]
      %v6376 = vld [vmem:[%s6337 + $0x130] sm:$0xff]
      %v6377 = vld [vmem:[%s6337 + $0x138] sm:$0xff]
      %v6378 = vld [vmem:[%s6337 + $0x140] sm:$0xff]
      %v6379 = vld [vmem:[%s6337 + $0x148] sm:$0xff]
      %v6380 = vld [vmem:[%s6337 + $0x150] sm:$0xff]
      %v6381 = vld [vmem:[%s6337 + $0x158] sm:$0xff]
      %v6382 = vld [vmem:[%s6337 + $0x160] sm:$0xff]
      %v6383 = vld [vmem:[%s6337 + $0x168] sm:$0xff]
      %v6384 = vld [vmem:[%s6337 + $0x170] sm:$0xff]
      %v6385 = vld [vmem:[%s6337 + $0x178] sm:$0xff]
      %v6386 = vld [vmem:[%s6337 + $0x180] sm:$0xff]
      %v6387 = vld [vmem:[%s6337 + $0x188] sm:$0xff]
      %v6388 = vld [vmem:[%s6337 + $0x190] sm:$0xff]
      %v6389 = vld [vmem:[%s6337 + $0x198] sm:$0xff]
      %v6390 = vld [vmem:[%s6337 + $0x1a0] sm:$0xff]
      %v6391 = vld [vmem:[%s6337 + $0x1a8] sm:$0xff]
      %v6392 = vld [vmem:[%s6337 + $0x1b0] sm:$0xff]
      %v6393 = vld [vmem:[%s6337 + $0x1b8] sm:$0xff]
      %v6394 = vld [vmem:[%s6337 + $0x1c0] sm:$0xff]
      %v6395 = vld [vmem:[%s6337 + $0x1c8] sm:$0xff]
      %v6396 = vld [vmem:[%s6337 + $0x1d0] sm:$0xff]
      %v6397 = vld [vmem:[%s6337 + $0x1d8] sm:$0xff]
      %v6398 = vld [vmem:[%s6337 + $0x1e0] sm:$0xff]
      %v6399 = vld [vmem:[%s6337 + $0x1e8] sm:$0xff]
      %v6400 = vld [vmem:[%s6337 + $0x1f0] sm:$0xff]
      %v6401 = vld [vmem:[%s6337 + $0x1f8] sm:$0xff]
      %v6402 = vld [vmem:[%s6337 + $0x200] sm:$0xff]
      %v6403 = vld [vmem:[%s6337 + $0x208] sm:$0xff]
      %v6404 = vld [vmem:[%s6337 + $0x210] sm:$0xff]
      %v6405 = vld [vmem:[%s6337 + $0x218] sm:$0xff]
      %v6406 = vld [vmem:[%s6337 + $0x220] sm:$0xff]
      %v6407 = vld [vmem:[%s6337 + $0x228] sm:$0xff]
      %v6408 = vld [vmem:[%s6337 + $0x230] sm:$0xff]
      %v6409 = vld [vmem:[%s6337 + $0x238] sm:$0xff]
      %v6410 = vld [vmem:[%s6337 + $0x240] sm:$0xff]
      %v6411 = vld [vmem:[%s6337 + $0x248] sm:$0xff]
      %v6412 = vld [vmem:[%s6337 + $0x250] sm:$0xff]
      %v6413 = vld [vmem:[%s6337 + $0x258] sm:$0xff]
      %v6414 = vld [vmem:[%s6337 + $0x260] sm:$0xff]
      %v6415 = vld [vmem:[%s6337 + $0x268] sm:$0xff]
      %v6416 = vld [vmem:[%s6337 + $0x270] sm:$0xff]
      %v6417 = vld [vmem:[%s6337 + $0x278] sm:$0xff]
      %v6418 = vld [vmem:[%s6337 + $0x280] sm:$0xff]
      %v6419 = vld [vmem:[%s6337 + $0x288] sm:$0xff]
      %v6420 = vld [vmem:[%s6337 + $0x290] sm:$0xff]
      %v6421 = vld [vmem:[%s6337 + $0x298] sm:$0xff]
      %v6422 = vld [vmem:[%s6337 + $0x2a0] sm:$0xff]
      %v6423 = vld [vmem:[%s6337 + $0x2a8] sm:$0xff]
      %v6424 = vld [vmem:[%s6337 + $0x2b0] sm:$0xff]
      %v6425 = vld [vmem:[%s6337 + $0x2b8] sm:$0xff]
      %v6426 = vld [vmem:[%s6337 + $0x2c0] sm:$0xff]
      %v6427 = vld [vmem:[%s6337 + $0x2c8] sm:$0xff]
      %v6428 = vld [vmem:[%s6337 + $0x2d0] sm:$0xff]
      %v6429 = vld [vmem:[%s6337 + $0x2d8] sm:$0xff]
      %v6430 = vld [vmem:[%s6337 + $0x2e0] sm:$0xff]
      %v6431 = vld [vmem:[%s6337 + $0x2e8] sm:$0xff]
      %v6432 = vld [vmem:[%s6337 + $0x2f0] sm:$0xff]
      %v6433 = vld [vmem:[%s6337 + $0x2f8] sm:$0xff]
      %v6434 = vld [vmem:[%s6337 + $0x300] sm:$0xff]
      %v6435 = vld [vmem:[%s6337 + $0x308] sm:$0xff]
      %v6436 = vld [vmem:[%s6337 + $0x310] sm:$0xff]
      %v6437 = vld [vmem:[%s6337 + $0x318] sm:$0xff]
      %v6438 = vld [vmem:[%s6337 + $0x320] sm:$0xff]
      %v6439 = vld [vmem:[%s6337 + $0x328] sm:$0xff]
      %v6440 = vld [vmem:[%s6337 + $0x330] sm:$0xff]
      %v6441 = vld [vmem:[%s6337 + $0x338] sm:$0xff]
      %v6442 = vld [vmem:[%s6337 + $0x340] sm:$0xff]
      %v6443 = vld [vmem:[%s6337 + $0x348] sm:$0xff]
      %v6444 = vld [vmem:[%s6337 + $0x350] sm:$0xff]
      %v6445 = vld [vmem:[%s6337 + $0x358] sm:$0xff]
      %v6446 = vld [vmem:[%s6337 + $0x360] sm:$0xff]
      %v6447 = vld [vmem:[%s6337 + $0x368] sm:$0xff]
      %v6448 = vld [vmem:[%s6337 + $0x370] sm:$0xff]
      %v6449 = vld [vmem:[%s6337 + $0x378] sm:$0xff]
      %vm6450 = vsmask.f32 3328
      %v6452 = vshrl.u32 %v3283, 16
      %v6454 = vrot.slane %v6452, 4
      %v6455 = vshll.u32 %v3283, 16
      %v6457 = vrot.slane %v6455, 5
      %v6458 = vor.u32 %v6454, %v6457
      %v6460 = vshrl.u32 %v3285, 16
      %v6462 = vrot.slane %v6460, 4
      %v6463 = vshll.u32 %v3285, 16
      %v6465 = vrot.slane %v6463, 5
      %v6466 = vor.u32 %v6462, %v6465
      %v6467 = vsel %vm6450, %v6458, %v6466
      %v6469 = vshrl.u32 %v3284, 16
      %v6471 = vrot.slane %v6469, 4
      %v6472 = vshll.u32 %v3284, 16
      %v6474 = vrot.slane %v6472, 5
      %v6475 = vor.u32 %v6471, %v6474
      %v6477 = vshrl.u32 %v3286, 16
      %v6479 = vrot.slane %v6477, 4
      %v6480 = vshll.u32 %v3286, 16
      %v6482 = vrot.slane %v6480, 5
      %v6483 = vor.u32 %v6479, %v6482
      %v6484 = vsel %vm6450, %v6475, %v6483
      %v6486 = vshrl.u32 %v3287, 16
      %v6488 = vrot.slane %v6486, 4
      %v6489 = vshll.u32 %v3287, 16
      %v6491 = vrot.slane %v6489, 5
      %v6492 = vor.u32 %v6488, %v6491
      %v6493 = vsel %vm6450, %v6466, %v6492
      %v6495 = vshrl.u32 %v3288, 16
      %v6497 = vrot.slane %v6495, 4
      %v6498 = vshll.u32 %v3288, 16
      %v6500 = vrot.slane %v6498, 5
      %v6501 = vor.u32 %v6497, %v6500
      %v6502 = vsel %vm6450, %v6483, %v6501
      %v6504 = vshrl.u32 %v3289, 16
      %v6506 = vrot.slane %v6504, 4
      %v6507 = vshll.u32 %v3289, 16
      %v6509 = vrot.slane %v6507, 5
      %v6510 = vor.u32 %v6506, %v6509
      %v6511 = vsel %vm6450, %v6492, %v6510
      %v6513 = vshrl.u32 %v3290, 16
      %v6515 = vrot.slane %v6513, 4
      %v6516 = vshll.u32 %v3290, 16
      %v6518 = vrot.slane %v6516, 5
      %v6519 = vor.u32 %v6515, %v6518
      %v6520 = vsel %vm6450, %v6501, %v6519
      %v6522 = vshrl.u32 %v6335, 16
      %v6524 = vrot.slane %v6522, 4
      %v6525 = vshll.u32 %v6335, 16
      %v6527 = vrot.slane %v6525, 5
      %v6528 = vor.u32 %v6524, %v6527
      %v6529 = vsel %vm6450, %v6510, %v6528
      %v6531 = vshrl.u32 %v6336, 16
      %v6533 = vrot.slane %v6531, 4
      %v6534 = vshll.u32 %v6336, 16
      %v6536 = vrot.slane %v6534, 5
      %v6537 = vor.u32 %v6533, %v6536
      %v6538 = vsel %vm6450, %v6519, %v6537
      %v6655 = vunpack.c.l.b16 %v6338
      %v6656 = vunpack.c.h.b16 %v6338
      %v6657 = vunpack.c.l.b16 %v6339
      %v6658 = vunpack.c.h.b16 %v6339
      %v6659 = vunpack.c.l.b16 %v6340
      %v6660 = vunpack.c.h.b16 %v6340
      %v6661 = vunpack.c.l.b16 %v6341
      %v6662 = vunpack.c.h.b16 %v6341
      %v6663 = vunpack.c.l.b16 %v6342
      %v6664 = vunpack.c.h.b16 %v6342
      %v6665 = vunpack.c.l.b16 %v6343
      %v6666 = vunpack.c.h.b16 %v6343
      %v6667 = vunpack.c.l.b16 %v6344
      %v6668 = vunpack.c.h.b16 %v6344
      %v6669 = vunpack.c.l.b16 %v6345
      %v6670 = vunpack.c.h.b16 %v6345
      %v6671 = vunpack.c.l.b16 %v6346
      %v6672 = vunpack.c.h.b16 %v6346
      %v6673 = vunpack.c.l.b16 %v6347
      %v6674 = vunpack.c.h.b16 %v6347
      %v6675 = vunpack.c.l.b16 %v6348
      %v6676 = vunpack.c.h.b16 %v6348
      %v6677 = vunpack.c.l.b16 %v6349
      %v6678 = vunpack.c.h.b16 %v6349
      %v6679 = vunpack.c.l.b16 %v6350
      %v6680 = vunpack.c.h.b16 %v6350
      %v6681 = vunpack.c.l.b16 %v6351
      %v6682 = vunpack.c.h.b16 %v6351
      %v6683 = vunpack.c.l.b16 %v6352
      %v6684 = vunpack.c.h.b16 %v6352
      %v6685 = vunpack.c.l.b16 %v6353
      %v6686 = vunpack.c.h.b16 %v6353
      %v6687 = vunpack.c.l.b16 %v6354
      %v6688 = vunpack.c.h.b16 %v6354
      %v6689 = vunpack.c.l.b16 %v6355
      %v6690 = vunpack.c.h.b16 %v6355
      %v6691 = vunpack.c.l.b16 %v6356
      %v6692 = vunpack.c.h.b16 %v6356
      %v6693 = vunpack.c.l.b16 %v6357
      %v6694 = vunpack.c.h.b16 %v6357
      %v6695 = vunpack.c.l.b16 %v6358
      %v6696 = vunpack.c.h.b16 %v6358
      %v6697 = vunpack.c.l.b16 %v6359
      %v6698 = vunpack.c.h.b16 %v6359
      %v6699 = vunpack.c.l.b16 %v6360
      %v6700 = vunpack.c.h.b16 %v6360
      %v6701 = vunpack.c.l.b16 %v6361
      %v6702 = vunpack.c.h.b16 %v6361
      %v6703 = vunpack.c.l.b16 %v6362
      %v6704 = vunpack.c.h.b16 %v6362
      %v6705 = vunpack.c.l.b16 %v6363
      %v6706 = vunpack.c.h.b16 %v6363
      %v6707 = vunpack.c.l.b16 %v6364
      %v6708 = vunpack.c.h.b16 %v6364
      %v6709 = vunpack.c.l.b16 %v6365
      %v6710 = vunpack.c.h.b16 %v6365
      %v6711 = vunpack.c.l.b16 %v6366
      %v6712 = vunpack.c.h.b16 %v6366
      %v6713 = vunpack.c.l.b16 %v6367
      %v6714 = vunpack.c.h.b16 %v6367
      %v6715 = vunpack.c.l.b16 %v6368
      %v6716 = vunpack.c.h.b16 %v6368
      %v6717 = vunpack.c.l.b16 %v6369
      %v6718 = vunpack.c.h.b16 %v6369
      %v6719 = vunpack.c.l.b16 %v6370
      %v6720 = vunpack.c.h.b16 %v6370
      %v6721 = vunpack.c.l.b16 %v6371
      %v6722 = vunpack.c.h.b16 %v6371
      %v6723 = vunpack.c.l.b16 %v6372
      %v6724 = vunpack.c.h.b16 %v6372
      %v6725 = vunpack.c.l.b16 %v6373
      %v6726 = vunpack.c.h.b16 %v6373
      %v6727 = vunpack.c.l.b16 %v6374
      %v6728 = vunpack.c.h.b16 %v6374
      %v6729 = vunpack.c.l.b16 %v6375
      %v6730 = vunpack.c.h.b16 %v6375
      %v6731 = vunpack.c.l.b16 %v6376
      %v6732 = vunpack.c.h.b16 %v6376
      %v6733 = vunpack.c.l.b16 %v6377
      %v6734 = vunpack.c.h.b16 %v6377
      %v6735 = vunpack.c.l.b16 %v6378
      %v6736 = vunpack.c.h.b16 %v6378
      %v6737 = vunpack.c.l.b16 %v6379
      %v6738 = vunpack.c.h.b16 %v6379
      %v6739 = vunpack.c.l.b16 %v6380
      %v6740 = vunpack.c.h.b16 %v6380
      %v6741 = vunpack.c.l.b16 %v6381
      %v6742 = vunpack.c.h.b16 %v6381
      %v6743 = vunpack.c.l.b16 %v6382
      %v6744 = vunpack.c.h.b16 %v6382
      %v6745 = vunpack.c.l.b16 %v6383
      %v6746 = vunpack.c.h.b16 %v6383
      %v6747 = vunpack.c.l.b16 %v6384
      %v6748 = vunpack.c.h.b16 %v6384
      %v6749 = vunpack.c.l.b16 %v6385
      %v6750 = vunpack.c.h.b16 %v6385
      %v6751 = vunpack.c.l.b16 %v6386
      %v6752 = vunpack.c.h.b16 %v6386
      %v6753 = vunpack.c.l.b16 %v6387
      %v6754 = vunpack.c.h.b16 %v6387
      %v6755 = vunpack.c.l.b16 %v6388
      %v6756 = vunpack.c.h.b16 %v6388
      %v6757 = vunpack.c.l.b16 %v6389
      %v6758 = vunpack.c.h.b16 %v6389
      %v6759 = vunpack.c.l.b16 %v6390
      %v6760 = vunpack.c.h.b16 %v6390
      %v6761 = vunpack.c.l.b16 %v6391
      %v6762 = vunpack.c.h.b16 %v6391
      %v6763 = vunpack.c.l.b16 %v6392
      %v6764 = vunpack.c.h.b16 %v6392
      %v6765 = vunpack.c.l.b16 %v6393
      %v6766 = vunpack.c.h.b16 %v6393
      %v6767 = vunpack.c.l.b16 %v6394
      %v6768 = vunpack.c.h.b16 %v6394
      %v6769 = vunpack.c.l.b16 %v6395
      %v6770 = vunpack.c.h.b16 %v6395
      %v6771 = vunpack.c.l.b16 %v6396
      %v6772 = vunpack.c.h.b16 %v6396
      %v6773 = vunpack.c.l.b16 %v6397
      %v6774 = vunpack.c.h.b16 %v6397
      %v6775 = vunpack.c.l.b16 %v6398
      %v6776 = vunpack.c.h.b16 %v6398
      %v6777 = vunpack.c.l.b16 %v6399
      %v6778 = vunpack.c.h.b16 %v6399
      %v6779 = vunpack.c.l.b16 %v6400
      %v6780 = vunpack.c.h.b16 %v6400
      %v6781 = vunpack.c.l.b16 %v6401
      %v6782 = vunpack.c.h.b16 %v6401
      %v6783 = vunpack.c.l.b16 %v6402
      %v6784 = vunpack.c.h.b16 %v6402
      %v6785 = vunpack.c.l.b16 %v6403
      %v6786 = vunpack.c.h.b16 %v6403
      %v6787 = vunpack.c.l.b16 %v6404
      %v6788 = vunpack.c.h.b16 %v6404
      %v6789 = vunpack.c.l.b16 %v6405
      %v6790 = vunpack.c.h.b16 %v6405
      %v6791 = vunpack.c.l.b16 %v6406
      %v6792 = vunpack.c.h.b16 %v6406
      %v6793 = vunpack.c.l.b16 %v6407
      %v6794 = vunpack.c.h.b16 %v6407
      %v6795 = vunpack.c.l.b16 %v6408
      %v6796 = vunpack.c.h.b16 %v6408
      %v6797 = vunpack.c.l.b16 %v6409
      %v6798 = vunpack.c.h.b16 %v6409
      %v6799 = vunpack.c.l.b16 %v6410
      %v6800 = vunpack.c.h.b16 %v6410
      %v6801 = vunpack.c.l.b16 %v6411
      %v6802 = vunpack.c.h.b16 %v6411
      %v6803 = vunpack.c.l.b16 %v6412
      %v6804 = vunpack.c.h.b16 %v6412
      %v6805 = vunpack.c.l.b16 %v6413
      %v6806 = vunpack.c.h.b16 %v6413
      %v6807 = vunpack.c.l.b16 %v6414
      %v6808 = vunpack.c.h.b16 %v6414
      %v6809 = vunpack.c.l.b16 %v6415
      %v6810 = vunpack.c.h.b16 %v6415
      %v6811 = vunpack.c.l.b16 %v6416
      %v6812 = vunpack.c.h.b16 %v6416
      %v6813 = vunpack.c.l.b16 %v6417
      %v6814 = vunpack.c.h.b16 %v6417
      %v6815 = vunpack.c.l.b16 %v6418
      %v6816 = vunpack.c.h.b16 %v6418
      %v6817 = vunpack.c.l.b16 %v6419
      %v6818 = vunpack.c.h.b16 %v6419
      %v6819 = vunpack.c.l.b16 %v6420
      %v6820 = vunpack.c.h.b16 %v6420
      %v6821 = vunpack.c.l.b16 %v6421
      %v6822 = vunpack.c.h.b16 %v6421
      %v6823 = vunpack.c.l.b16 %v6422
      %v6824 = vunpack.c.h.b16 %v6422
      %v6825 = vunpack.c.l.b16 %v6423
      %v6826 = vunpack.c.h.b16 %v6423
      %v6827 = vunpack.c.l.b16 %v6424
      %v6828 = vunpack.c.h.b16 %v6424
      %v6829 = vunpack.c.l.b16 %v6425
      %v6830 = vunpack.c.h.b16 %v6425
      %v6831 = vunpack.c.l.b16 %v6426
      %v6832 = vunpack.c.h.b16 %v6426
      %v6833 = vunpack.c.l.b16 %v6427
      %v6834 = vunpack.c.h.b16 %v6427
      %v6835 = vunpack.c.l.b16 %v6428
      %v6836 = vunpack.c.h.b16 %v6428
      %v6837 = vunpack.c.l.b16 %v6429
      %v6838 = vunpack.c.h.b16 %v6429
      %v6839 = vunpack.c.l.b16 %v6430
      %v6840 = vunpack.c.h.b16 %v6430
      %v6841 = vunpack.c.l.b16 %v6431
      %v6842 = vunpack.c.h.b16 %v6431
      %v6843 = vunpack.c.l.b16 %v6432
      %v6844 = vunpack.c.h.b16 %v6432
      %v6845 = vunpack.c.l.b16 %v6433
      %v6846 = vunpack.c.h.b16 %v6433
      %v6847 = vunpack.c.l.b16 %v6434
      %v6848 = vunpack.c.h.b16 %v6434
      %v6849 = vunpack.c.l.b16 %v6435
      %v6850 = vunpack.c.h.b16 %v6435
      %v6851 = vunpack.c.l.b16 %v6436
      %v6852 = vunpack.c.h.b16 %v6436
      %v6853 = vunpack.c.l.b16 %v6437
      %v6854 = vunpack.c.h.b16 %v6437
      %v6855 = vunpack.c.l.b16 %v6438
      %v6856 = vunpack.c.h.b16 %v6438
      %v6857 = vunpack.c.l.b16 %v6439
      %v6858 = vunpack.c.h.b16 %v6439
      %v6859 = vunpack.c.l.b16 %v6440
      %v6860 = vunpack.c.h.b16 %v6440
      %v6861 = vunpack.c.l.b16 %v6441
      %v6862 = vunpack.c.h.b16 %v6441
      %v6863 = vunpack.c.l.b16 %v6442
      %v6864 = vunpack.c.h.b16 %v6442
      %v6865 = vunpack.c.l.b16 %v6443
      %v6866 = vunpack.c.h.b16 %v6443
      %v6867 = vunpack.c.l.b16 %v6444
      %v6868 = vunpack.c.h.b16 %v6444
      %v6869 = vunpack.c.l.b16 %v6445
      %v6870 = vunpack.c.h.b16 %v6445
      %v6871 = vunpack.c.l.b16 %v6446
      %v6872 = vunpack.c.h.b16 %v6446
      %v6873 = vunpack.c.l.b16 %v6447
      %v6874 = vunpack.c.h.b16 %v6447
      %v6875 = vunpack.c.l.b16 %v6448
      %v6876 = vunpack.c.h.b16 %v6448
      %v6877 = vunpack.c.l.b16 %v6449
      %v6878 = vunpack.c.h.b16 %v6449
      %v6879 = vpack.c.b16 %v6663, %v6655
      %v6880 = vpack.c.b16 %v6664, %v6656
      %v6881 = vpack.c.b16 %v6665, %v6657
      %v6882 = vpack.c.b16 %v6666, %v6658
      %v6883 = vpack.c.b16 %v6667, %v6659
      %v6884 = vpack.c.b16 %v6668, %v6660
      %v6885 = vpack.c.b16 %v6669, %v6661
      %v6886 = vpack.c.b16 %v6670, %v6662
      %v6887 = vpack.c.b16 %v6679, %v6671
      %v6888 = vpack.c.b16 %v6680, %v6672
      %v6889 = vpack.c.b16 %v6681, %v6673
      %v6890 = vpack.c.b16 %v6682, %v6674
      %v6891 = vpack.c.b16 %v6683, %v6675
      %v6892 = vpack.c.b16 %v6684, %v6676
      %v6893 = vpack.c.b16 %v6685, %v6677
      %v6894 = vpack.c.b16 %v6686, %v6678
      %v6895 = vpack.c.b16 %v6695, %v6687
      %v6896 = vpack.c.b16 %v6696, %v6688
      %v6897 = vpack.c.b16 %v6697, %v6689
      %v6898 = vpack.c.b16 %v6698, %v6690
      %v6899 = vpack.c.b16 %v6699, %v6691
      %v6900 = vpack.c.b16 %v6700, %v6692
      %v6901 = vpack.c.b16 %v6701, %v6693
      %v6902 = vpack.c.b16 %v6702, %v6694
      %v6903 = vpack.c.b16 %v6711, %v6703
      %v6904 = vpack.c.b16 %v6712, %v6704
      %v6905 = vpack.c.b16 %v6713, %v6705
      %v6906 = vpack.c.b16 %v6714, %v6706
      %v6907 = vpack.c.b16 %v6715, %v6707
      %v6908 = vpack.c.b16 %v6716, %v6708
      %v6909 = vpack.c.b16 %v6717, %v6709
      %v6910 = vpack.c.b16 %v6718, %v6710
      %v6911 = vpack.c.b16 %v6727, %v6719
      %v6912 = vpack.c.b16 %v6728, %v6720
      %v6913 = vpack.c.b16 %v6729, %v6721
      %v6914 = vpack.c.b16 %v6730, %v6722
      %v6915 = vpack.c.b16 %v6731, %v6723
      %v6916 = vpack.c.b16 %v6732, %v6724
      %v6917 = vpack.c.b16 %v6733, %v6725
      %v6918 = vpack.c.b16 %v6734, %v6726
      %v6919 = vpack.c.b16 %v6743, %v6735
      %v6920 = vpack.c.b16 %v6744, %v6736
      %v6921 = vpack.c.b16 %v6745, %v6737
      %v6922 = vpack.c.b16 %v6746, %v6738
      %v6923 = vpack.c.b16 %v6747, %v6739
      %v6924 = vpack.c.b16 %v6748, %v6740
      %v6925 = vpack.c.b16 %v6749, %v6741
      %v6926 = vpack.c.b16 %v6750, %v6742
      %v6927 = vpack.c.b16 %v6759, %v6751
      %v6928 = vpack.c.b16 %v6760, %v6752
      %v6929 = vpack.c.b16 %v6761, %v6753
      %v6930 = vpack.c.b16 %v6762, %v6754
      %v6931 = vpack.c.b16 %v6763, %v6755
      %v6932 = vpack.c.b16 %v6764, %v6756
      %v6933 = vpack.c.b16 %v6765, %v6757
      %v6934 = vpack.c.b16 %v6766, %v6758
      %v6935 = vpack.c.b16 %v6775, %v6767
      %v6936 = vpack.c.b16 %v6776, %v6768
      %v6937 = vpack.c.b16 %v6777, %v6769
      %v6938 = vpack.c.b16 %v6778, %v6770
      %v6939 = vpack.c.b16 %v6779, %v6771
      %v6940 = vpack.c.b16 %v6780, %v6772
      %v6941 = vpack.c.b16 %v6781, %v6773
      %v6942 = vpack.c.b16 %v6782, %v6774
      %v6943 = vpack.c.b16 %v6791, %v6783
      %v6944 = vpack.c.b16 %v6792, %v6784
      %v6945 = vpack.c.b16 %v6793, %v6785
      %v6946 = vpack.c.b16 %v6794, %v6786
      %v6947 = vpack.c.b16 %v6795, %v6787
      %v6948 = vpack.c.b16 %v6796, %v6788
      %v6949 = vpack.c.b16 %v6797, %v6789
      %v6950 = vpack.c.b16 %v6798, %v6790
      %v6951 = vpack.c.b16 %v6807, %v6799
      %v6952 = vpack.c.b16 %v6808, %v6800
      %v6953 = vpack.c.b16 %v6809, %v6801
      %v6954 = vpack.c.b16 %v6810, %v6802
      %v6955 = vpack.c.b16 %v6811, %v6803
      %v6956 = vpack.c.b16 %v6812, %v6804
      %v6957 = vpack.c.b16 %v6813, %v6805
      %v6958 = vpack.c.b16 %v6814, %v6806
      %v6959 = vpack.c.b16 %v6823, %v6815
      %v6960 = vpack.c.b16 %v6824, %v6816
      %v6961 = vpack.c.b16 %v6825, %v6817
      %v6962 = vpack.c.b16 %v6826, %v6818
      %v6963 = vpack.c.b16 %v6827, %v6819
      %v6964 = vpack.c.b16 %v6828, %v6820
      %v6965 = vpack.c.b16 %v6829, %v6821
      %v6966 = vpack.c.b16 %v6830, %v6822
      %v6967 = vpack.c.b16 %v6839, %v6831
      %v6968 = vpack.c.b16 %v6840, %v6832
      %v6969 = vpack.c.b16 %v6841, %v6833
      %v6970 = vpack.c.b16 %v6842, %v6834
      %v6971 = vpack.c.b16 %v6843, %v6835
      %v6972 = vpack.c.b16 %v6844, %v6836
      %v6973 = vpack.c.b16 %v6845, %v6837
      %v6974 = vpack.c.b16 %v6846, %v6838
      %v6975 = vpack.c.b16 %v6855, %v6847
      %v6976 = vpack.c.b16 %v6856, %v6848
      %v6977 = vpack.c.b16 %v6857, %v6849
      %v6978 = vpack.c.b16 %v6858, %v6850
      %v6979 = vpack.c.b16 %v6859, %v6851
      %v6980 = vpack.c.b16 %v6860, %v6852
      %v6981 = vpack.c.b16 %v6861, %v6853
      %v6982 = vpack.c.b16 %v6862, %v6854
      %v6983 = vpack.c.b16 %v6871, %v6863
      %v6984 = vpack.c.b16 %v6872, %v6864
      %v6985 = vpack.c.b16 %v6873, %v6865
      %v6986 = vpack.c.b16 %v6874, %v6866
      %v6987 = vpack.c.b16 %v6875, %v6867
      %v6988 = vpack.c.b16 %v6876, %v6868
      %v6989 = vpack.c.b16 %v6877, %v6869
      %v6990 = vpack.c.b16 %v6878, %v6870
      %v7104 = vsel %vm3998, %v6484, 0
      %v7107 = vsel %vm3998, %v6502, 0
      %v7110 = vsel %vm3998, %v6520, 0
      %v7113 = vsel %vm3998, %v6538, 0
      %7115 = vmatprep.subr.bf16.mxu0 %v6880
      %7116 = vmatpush1.bf16.msra.mxu0 %v6879
      %7117 = vmatprep.subr.bf16.mxu0 %v6888
      %7118 = vmatpush1.bf16.msra.mxu0 %v6887
      %7119 = vmatprep.subr.bf16.mxu0 %v6896
      %7120 = vmatpush1.bf16.msra.mxu0 %v6895
      %7121 = vmatprep.subr.bf16.mxu0 %v6904
      %7122 = vmatpush1.bf16.msra.mxu0 %v6903
      %7123 = vmatprep.subr.bf16.mxu0 %v6912
      %7124 = vmatpush1.bf16.msra.mxu0 %v6911
      %7125 = vmatprep.subr.bf16.mxu0 %v6920
      %7126 = vmatpush1.bf16.msra.mxu0 %v6919
      %7127 = vmatprep.subr.bf16.mxu0 %v6928
      %7128 = vmatpush1.bf16.msra.mxu0 %v6927
      %7129 = vmatprep.subr.bf16.mxu0 %v6936
      %7130 = vmatpush1.bf16.msra.mxu0 %v6935
      %7131 = vmatprep.subr.bf16.mxu0 %v6944
      %7132 = vmatpush1.bf16.msra.mxu0 %v6943
      %7133 = vmatprep.subr.bf16.mxu0 %v6952
      %7134 = vmatpush1.bf16.msra.mxu0 %v6951
      %7135 = vmatprep.subr.bf16.mxu0 %v6960
      %7136 = vmatpush1.bf16.msra.mxu0 %v6959
      %7137 = vmatprep.subr.bf16.mxu0 %v6968
      %7138 = vmatpush1.bf16.msra.mxu0 %v6967
      %7139 = vmatprep.subr.bf16.mxu0 %v6976
      %7140 = vmatpush1.bf16.msra.mxu0 %v6975
      %7141 = vmatprep.subr.bf16.mxu0 %v6984
      %7142 = vmatpush1.bf16.msra.mxu0 %v6983
      %7143 = vmatprep.subr.bf16.mxu0 0
      %7144 = vmatpush1.bf16.msra.mxu0 0
      %7145 = vmatprep.subr.bf16.mxu0 0
      %7146 = vmatpush1.bf16.msra.mxu0 0
      %7147 = vmatprep.mubr.bf16.mxu0 %v7104
      %7148 = vmatmul.mubr.bf16.gmra.mrb[0].mxu0 %v6467
      %v7149 = vpop.f32.mrb[0].mxu0
      %v7150 = vadd.f32 0.0, %v7149
      %v7151 = vpop.f32.mrb[0].mxu0
      %v7152 = vadd.f32 0.0, %v7151
      %v7153 = vpop.f32.mrb[0].mxu0
      %v7154 = vadd.f32 0.0, %v7153
      %v7155 = vpop.f32.mrb[0].mxu0
      %v7156 = vadd.f32 0.0, %v7155
      %7157 = vmatprep.mubr.bf16.mxu0 %v7107
      %7158 = vmatmul.mubr.bf16.gmra.mrb[0].mxu0 %v6493
      %v7159 = vpop.f32.mrb[0].mxu0
      %v7160 = vadd.f32 0.0, %v7159
      %v7161 = vpop.f32.mrb[0].mxu0
      %v7162 = vadd.f32 0.0, %v7161
      %v7163 = vpop.f32.mrb[0].mxu0
      %v7164 = vadd.f32 0.0, %v7163
      %v7165 = vpop.f32.mrb[0].mxu0
      %v7166 = vadd.f32 0.0, %v7165
      %7167 = vmatprep.mubr.bf16.mxu0 %v7110
      %7168 = vmatmul.mubr.bf16.gmra.mrb[0].mxu0 %v6511
      %v7169 = vpop.f32.mrb[0].mxu0
      %v7170 = vadd.f32 0.0, %v7169
      %v7171 = vpop.f32.mrb[0].mxu0
      %v7172 = vadd.f32 0.0, %v7171
      %v7173 = vpop.f32.mrb[0].mxu0
      %v7174 = vadd.f32 0.0, %v7173
      %v7175 = vpop.f32.mrb[0].mxu0
      %v7176 = vadd.f32 0.0, %v7175
      %7177 = vmatprep.mubr.bf16.mxu0 %v7113
      %7178 = vmatmul.mubr.bf16.gmra.mrb[0].mxu0 %v6529
      %v7179 = vpop.f32.mrb[0].mxu0
      %v7180 = vadd.f32 0.0, %v7179
      %v7181 = vpop.f32.mrb[0].mxu0
      %v7182 = vadd.f32 0.0, %v7181
      %v7183 = vpop.f32.mrb[0].mxu0
      %v7184 = vadd.f32 0.0, %v7183
      %v7185 = vpop.f32.mrb[0].mxu0
      %v7186 = vadd.f32 0.0, %v7185
      %7187 = vdwg.mxu0
      %7188 = vmatprep.subr.bf16.mxu0 %v6882
      %7189 = vmatpush1.bf16.msra.mxu0 %v6881
      %7190 = vmatprep.subr.bf16.mxu0 %v6890
      %7191 = vmatpush1.bf16.msra.mxu0 %v6889
      %7192 = vmatprep.subr.bf16.mxu0 %v6898
      %7193 = vmatpush1.bf16.msra.mxu0 %v6897
      %7194 = vmatprep.subr.bf16.mxu0 %v6906
      %7195 = vmatpush1.bf16.msra.mxu0 %v6905
      %7196 = vmatprep.subr.bf16.mxu0 %v6914
      %7197 = vmatpush1.bf16.msra.mxu0 %v6913
      %7198 = vmatprep.subr.bf16.mxu0 %v6922
      %7199 = vmatpush1.bf16.msra.mxu0 %v6921
      %7200 = vmatprep.subr.bf16.mxu0 %v6930
      %7201 = vmatpush1.bf16.msra.mxu0 %v6929
      %7202 = vmatprep.subr.bf16.mxu0 %v6938
      %7203 = vmatpush1.bf16.msra.mxu0 %v6937
      %7204 = vmatprep.subr.bf16.mxu0 %v6946
      %7205 = vmatpush1.bf16.msra.mxu0 %v6945
      %7206 = vmatprep.subr.bf16.mxu0 %v6954
      %7207 = vmatpush1.bf16.msra.mxu0 %v6953
      %7208 = vmatprep.subr.bf16.mxu0 %v6962
      %7209 = vmatpush1.bf16.msra.mxu0 %v6961
      %7210 = vmatprep.subr.bf16.mxu0 %v6970
      %7211 = vmatpush1.bf16.msra.mxu0 %v6969
      %7212 = vmatprep.subr.bf16.mxu0 %v6978
      %7213 = vmatpush1.bf16.msra.mxu0 %v6977
      %7214 = vmatprep.subr.bf16.mxu0 %v6986
      %7215 = vmatpush1.bf16.msra.mxu0 %v6985
      %7216 = vmatprep.subr.bf16.mxu0 0
      %7217 = vmatpush1.bf16.msra.mxu0 0
      %7218 = vmatprep.subr.bf16.mxu0 0
      %7219 = vmatpush1.bf16.msra.mxu0 0
      %7220 = vmatprep.mubr.bf16.mxu0 %v7104
      %7221 = vmatmul.mubr.bf16.gmra.mrb[0].mxu0 %v6467
      %v7222 = vpop.f32.mrb[0].mxu0
      %v7223 = vadd.f32 0.0, %v7222
      %v7224 = vpop.f32.mrb[0].mxu0
      %v7225 = vadd.f32 0.0, %v7224
      %v7226 = vpop.f32.mrb[0].mxu0
      %v7227 = vadd.f32 0.0, %v7226
      %v7228 = vpop.f32.mrb[0].mxu0
      %v7229 = vadd.f32 0.0, %v7228
      %7230 = vmatprep.mubr.bf16.mxu0 %v7107
      %7231 = vmatmul.mubr.bf16.gmra.mrb[0].mxu0 %v6493
      %v7232 = vpop.f32.mrb[0].mxu0
      %v7233 = vadd.f32 0.0, %v7232
      %v7234 = vpop.f32.mrb[0].mxu0
      %v7235 = vadd.f32 0.0, %v7234
      %v7236 = vpop.f32.mrb[0].mxu0
      %v7237 = vadd.f32 0.0, %v7236
      %v7238 = vpop.f32.mrb[0].mxu0
      %v7239 = vadd.f32 0.0, %v7238
      %7240 = vmatprep.mubr.bf16.mxu0 %v7110
      %7241 = vmatmul.mubr.bf16.gmra.mrb[0].mxu0 %v6511
      %v7242 = vpop.f32.mrb[0].mxu0
      %v7243 = vadd.f32 0.0, %v7242
      %v7244 = vpop.f32.mrb[0].mxu0
      %v7245 = vadd.f32 0.0, %v7244
      %v7246 = vpop.f32.mrb[0].mxu0
      %v7247 = vadd.f32 0.0, %v7246
      %v7248 = vpop.f32.mrb[0].mxu0
      %v7249 = vadd.f32 0.0, %v7248
      %7250 = vmatprep.mubr.bf16.mxu0 %v7113
      %7251 = vmatmul.mubr.bf16.gmra.mrb[0].mxu0 %v6529
      %v7252 = vpop.f32.mrb[0].mxu0
      %v7253 = vadd.f32 0.0, %v7252
      %v7254 = vpop.f32.mrb[0].mxu0
      %v7255 = vadd.f32 0.0, %v7254
      %v7256 = vpop.f32.mrb[0].mxu0
      %v7257 = vadd.f32 0.0, %v7256
      %v7258 = vpop.f32.mrb[0].mxu0
      %v7259 = vadd.f32 0.0, %v7258
      %7260 = vdwg.mxu0
      %7261 = vmatprep.subr.bf16.mxu0 %v6884
      %7262 = vmatpush1.bf16.msra.mxu0 %v6883
      %7263 = vmatprep.subr.bf16.mxu0 %v6892
      %7264 = vmatpush1.bf16.msra.mxu0 %v6891
      %7265 = vmatprep.subr.bf16.mxu0 %v6900
      %7266 = vmatpush1.bf16.msra.mxu0 %v6899
      %7267 = vmatprep.subr.bf16.mxu0 %v6908
      %7268 = vmatpush1.bf16.msra.mxu0 %v6907
      %7269 = vmatprep.subr.bf16.mxu0 %v6916
      %7270 = vmatpush1.bf16.msra.mxu0 %v6915
      %7271 = vmatprep.subr.bf16.mxu0 %v6924
      %7272 = vmatpush1.bf16.msra.mxu0 %v6923
      %7273 = vmatprep.subr.bf16.mxu0 %v6932
      %7274 = vmatpush1.bf16.msra.mxu0 %v6931
      %7275 = vmatprep.subr.bf16.mxu0 %v6940
      %7276 = vmatpush1.bf16.msra.mxu0 %v6939
      %7277 = vmatprep.subr.bf16.mxu0 %v6948
      %7278 = vmatpush1.bf16.msra.mxu0 %v6947
      %7279 = vmatprep.subr.bf16.mxu0 %v6956
      %7280 = vmatpush1.bf16.msra.mxu0 %v6955
      %7281 = vmatprep.subr.bf16.mxu0 %v6964
      %7282 = vmatpush1.bf16.msra.mxu0 %v6963
      %7283 = vmatprep.subr.bf16.mxu0 %v6972
      %7284 = vmatpush1.bf16.msra.mxu0 %v6971
      %7285 = vmatprep.subr.bf16.mxu0 %v6980
      %7286 = vmatpush1.bf16.msra.mxu0 %v6979
      %7287 = vmatprep.subr.bf16.mxu0 %v6988
      %7288 = vmatpush1.bf16.msra.mxu0 %v6987
      %7289 = vmatprep.subr.bf16.mxu0 0
      %7290 = vmatpush1.bf16.msra.mxu0 0
      %7291 = vmatprep.subr.bf16.mxu0 0
      %7292 = vmatpush1.bf16.msra.mxu0 0
      %7293 = vmatprep.mubr.bf16.mxu0 %v7104
      %7294 = vmatmul.mubr.bf16.gmra.mrb[0].mxu0 %v6467
      %v7295 = vpop.f32.mrb[0].mxu0
      %v7296 = vadd.f32 0.0, %v7295
      %v7297 = vpop.f32.mrb[0].mxu0
      %v7298 = vadd.f32 0.0, %v7297
      %v7299 = vpop.f32.mrb[0].mxu0
      %v7300 = vadd.f32 0.0, %v7299
      %v7301 = vpop.f32.mrb[0].mxu0
      %v7302 = vadd.f32 0.0, %v7301
      %7303 = vmatprep.mubr.bf16.mxu0 %v7107
      %7304 = vmatmul.mubr.bf16.gmra.mrb[0].mxu0 %v6493
      %v7305 = vpop.f32.mrb[0].mxu0
      %v7306 = vadd.f32 0.0, %v7305
      %v7307 = vpop.f32.mrb[0].mxu0
      %v7308 = vadd.f32 0.0, %v7307
      %v7309 = vpop.f32.mrb[0].mxu0
      %v7310 = vadd.f32 0.0, %v7309
      %v7311 = vpop.f32.mrb[0].mxu0
      %v7312 = vadd.f32 0.0, %v7311
      %7313 = vmatprep.mubr.bf16.mxu0 %v7110
      %7314 = vmatmul.mubr.bf16.gmra.mrb[0].mxu0 %v6511
      %v7315 = vpop.f32.mrb[0].mxu0
      %v7316 = vadd.f32 0.0, %v7315
      %v7317 = vpop.f32.mrb[0].mxu0
      %v7318 = vadd.f32 0.0, %v7317
      %v7319 = vpop.f32.mrb[0].mxu0
      %v7320 = vadd.f32 0.0, %v7319
      %v7321 = vpop.f32.mrb[0].mxu0
      %v7322 = vadd.f32 0.0, %v7321
      %7323 = vmatprep.mubr.bf16.mxu0 %v7113
      %7324 = vmatmul.mubr.bf16.gmra.mrb[0].mxu0 %v6529
      %v7325 = vpop.f32.mrb[0].mxu0
      %v7326 = vadd.f32 0.0, %v7325
      %v7327 = vpop.f32.mrb[0].mxu0
      %v7328 = vadd.f32 0.0, %v7327
      %v7329 = vpop.f32.mrb[0].mxu0
      %v7330 = vadd.f32 0.0, %v7329
      %v7331 = vpop.f32.mrb[0].mxu0
      %v7332 = vadd.f32 0.0, %v7331
      %7333 = vdwg.mxu0
      %7334 = vmatprep.subr.bf16.mxu0 %v6886
      %7335 = vmatpush1.bf16.msra.mxu0 %v6885
      %7336 = vmatprep.subr.bf16.mxu0 %v6894
      %7337 = vmatpush1.bf16.msra.mxu0 %v6893
      %7338 = vmatprep.subr.bf16.mxu0 %v6902
      %7339 = vmatpush1.bf16.msra.mxu0 %v6901
      %7340 = vmatprep.subr.bf16.mxu0 %v6910
      %7341 = vmatpush1.bf16.msra.mxu0 %v6909
      %7342 = vmatprep.subr.bf16.mxu0 %v6918
      %7343 = vmatpush1.bf16.msra.mxu0 %v6917
      %7344 = vmatprep.subr.bf16.mxu0 %v6926
      %7345 = vmatpush1.bf16.msra.mxu0 %v6925
      %7346 = vmatprep.subr.bf16.mxu0 %v6934
      %7347 = vmatpush1.bf16.msra.mxu0 %v6933
      %7348 = vmatprep.subr.bf16.mxu0 %v6942
      %7349 = vmatpush1.bf16.msra.mxu0 %v6941
      %7350 = vmatprep.subr.bf16.mxu0 %v6950
      %7351 = vmatpush1.bf16.msra.mxu0 %v6949
      %7352 = vmatprep.subr.bf16.mxu0 %v6958
      %7353 = vmatpush1.bf16.msra.mxu0 %v6957
      %7354 = vmatprep.subr.bf16.mxu0 %v6966
      %7355 = vmatpush1.bf16.msra.mxu0 %v6965
      %7356 = vmatprep.subr.bf16.mxu0 %v6974
      %7357 = vmatpush1.bf16.msra.mxu0 %v6973
      %7358 = vmatprep.subr.bf16.mxu0 %v6982
      %7359 = vmatpush1.bf16.msra.mxu0 %v6981
      %7360 = vmatprep.subr.bf16.mxu0 %v6990
      %7361 = vmatpush1.bf16.msra.mxu0 %v6989
      %7362 = vmatprep.subr.bf16.mxu0 0
      %7363 = vmatpush1.bf16.msra.mxu0 0
      %7364 = vmatprep.subr.bf16.mxu0 0
      %7365 = vmatpush1.bf16.msra.mxu0 0
      %7366 = vmatprep.mubr.bf16.mxu0 %v7104
      %7367 = vmatmul.mubr.bf16.gmra.mrb[0].mxu0 %v6467
      %v7368 = vpop.f32.mrb[0].mxu0
      %v7369 = vadd.f32 0.0, %v7368
      %v7370 = vpop.f32.mrb[0].mxu0
      %v7371 = vadd.f32 0.0, %v7370
      %v7372 = vpop.f32.mrb[0].mxu0
      %v7373 = vadd.f32 0.0, %v7372
      %v7374 = vpop.f32.mrb[0].mxu0
      %v7375 = vadd.f32 0.0, %v7374
      %7376 = vmatprep.mubr.bf16.mxu0 %v7107
      %7377 = vmatmul.mubr.bf16.gmra.mrb[0].mxu0 %v6493
      %v7378 = vpop.f32.mrb[0].mxu0
      %v7379 = vadd.f32 0.0, %v7378
      %v7380 = vpop.f32.mrb[0].mxu0
      %v7381 = vadd.f32 0.0, %v7380
      %v7382 = vpop.f32.mrb[0].mxu0
      %v7383 = vadd.f32 0.0, %v7382
      %v7384 = vpop.f32.mrb[0].mxu0
      %v7385 = vadd.f32 0.0, %v7384
      %7386 = vmatprep.mubr.bf16.mxu0 %v7110
      %7387 = vmatmul.mubr.bf16.gmra.mrb[0].mxu0 %v6511
      %v7388 = vpop.f32.mrb[0].mxu0
      %v7389 = vadd.f32 0.0, %v7388
      %v7390 = vpop.f32.mrb[0].mxu0
      %v7391 = vadd.f32 0.0, %v7390
      %v7392 = vpop.f32.mrb[0].mxu0
      %v7393 = vadd.f32 0.0, %v7392
      %v7394 = vpop.f32.mrb[0].mxu0
      %v7395 = vadd.f32 0.0, %v7394
      %7396 = vmatprep.mubr.bf16.mxu0 %v7113
      %7397 = vmatmul.mubr.bf16.gmra.mrb[0].mxu0 %v6529
      %v7398 = vpop.f32.mrb[0].mxu0
      %v7399 = vadd.f32 0.0, %v7398
      %v7400 = vpop.f32.mrb[0].mxu0
      %v7401 = vadd.f32 0.0, %v7400
      %v7402 = vpop.f32.mrb[0].mxu0
      %v7403 = vadd.f32 0.0, %v7402
      %v7404 = vpop.f32.mrb[0].mxu0
      %v7405 = vadd.f32 0.0, %v7404
      %7406 = vdwg.mxu0
      %v7407 = vadd.f32 %v6271, %v7150
      %v7408 = vadd.f32 %v6272, %v7152
      %v7409 = vadd.f32 %v6273, %v7223
      %v7410 = vadd.f32 %v6274, %v7225
      %v7411 = vadd.f32 %v6275, %v7296
      %v7412 = vadd.f32 %v6276, %v7298
      %v7413 = vadd.f32 %v6277, %v7369
      %v7414 = vadd.f32 %v6278, %v7371
      %v7415 = vadd.f32 %v6279, %v7154
      %v7416 = vadd.f32 %v6280, %v7156
      %v7417 = vadd.f32 %v6281, %v7227
      %v7418 = vadd.f32 %v6282, %v7229
      %v7419 = vadd.f32 %v6283, %v7300
      %v7420 = vadd.f32 %v6284, %v7302
      %v7421 = vadd.f32 %v6285, %v7373
      %v7422 = vadd.f32 %v6286, %v7375
      %v7423 = vadd.f32 %v6287, %v7160
      %v7424 = vadd.f32 %v6288, %v7162
      %v7425 = vadd.f32 %v6289, %v7233
      %v7426 = vadd.f32 %v6290, %v7235
      %v7427 = vadd.f32 %v6291, %v7306
      %v7428 = vadd.f32 %v6292, %v7308
      %v7429 = vadd.f32 %v6293, %v7379
      %v7430 = vadd.f32 %v6294, %v7381
      %v7431 = vadd.f32 %v6295, %v7164
      %v7432 = vadd.f32 %v6296, %v7166
      %v7433 = vadd.f32 %v6297, %v7237
      %v7434 = vadd.f32 %v6298, %v7239
      %v7435 = vadd.f32 %v6299, %v7310
      %v7436 = vadd.f32 %v6300, %v7312
      %v7437 = vadd.f32 %v6301, %v7383
      %v7438 = vadd.f32 %v6302, %v7385
      %v7439 = vadd.f32 %v6303, %v7170
      %v7440 = vadd.f32 %v6304, %v7172
      %v7441 = vadd.f32 %v6305, %v7243
      %v7442 = vadd.f32 %v6306, %v7245
      %v7443 = vadd.f32 %v6307, %v7316
      %v7444 = vadd.f32 %v6308, %v7318
      %v7445 = vadd.f32 %v6309, %v7389
      %v7446 = vadd.f32 %v6310, %v7391
      %v7447 = vadd.f32 %v6311, %v7174
      %v7448 = vadd.f32 %v6312, %v7176
      %v7449 = vadd.f32 %v6313, %v7247
      %v7450 = vadd.f32 %v6314, %v7249
      %v7451 = vadd.f32 %v6315, %v7320
      %v7452 = vadd.f32 %v6316, %v7322
      %v7453 = vadd.f32 %v6317, %v7393
      %v7454 = vadd.f32 %v6318, %v7395
      %v7455 = vadd.f32 %v6319, %v7180
      %v7456 = vadd.f32 %v6320, %v7182
      %v7457 = vadd.f32 %v6321, %v7253
      %v7458 = vadd.f32 %v6322, %v7255
      %v7459 = vadd.f32 %v6323, %v7326
      %v7460 = vadd.f32 %v6324, %v7328
      %v7461 = vadd.f32 %v6325, %v7399
      %v7462 = vadd.f32 %v6326, %v7401
      %v7463 = vadd.f32 %v6327, %v7184
      %v7464 = vadd.f32 %v6328, %v7186
      %v7465 = vadd.f32 %v6329, %v7257
      %v7466 = vadd.f32 %v6330, %v7259
      %v7467 = vadd.f32 %v6331, %v7330
      %v7468 = vadd.f32 %v6332, %v7332
      %v7469 = vadd.f32 %v6333, %v7403
      %v7470 = vadd.f32 %v6334, %v7405
      %v7471 = vmax.f32 %v7407, %v7409
      %v7472 = vmax.f32 %v7408, %v7410
      %v7473 = vmax.f32 %v7415, %v7417
      %v7474 = vmax.f32 %v7416, %v7418
      %v7475 = vmax.f32 %v7423, %v7425
      %v7476 = vmax.f32 %v7424, %v7426
      %v7477 = vmax.f32 %v7431, %v7433
      %v7478 = vmax.f32 %v7432, %v7434
      %v7479 = vmax.f32 %v7439, %v7441
      %v7480 = vmax.f32 %v7440, %v7442
      %v7481 = vmax.f32 %v7447, %v7449
      %v7482 = vmax.f32 %v7448, %v7450
      %v7483 = vmax.f32 %v7455, %v7457
      %v7484 = vmax.f32 %v7456, %v7458
      %v7485 = vmax.f32 %v7463, %v7465
      %v7486 = vmax.f32 %v7464, %v7466
      %v7487 = vmax.f32 %v7411, %v7413
      %v7488 = vmax.f32 %v7412, %v7414
      %v7489 = vmax.f32 %v7419, %v7421
      %v7490 = vmax.f32 %v7420, %v7422
      %v7491 = vmax.f32 %v7427, %v7429
      %v7492 = vmax.f32 %v7428, %v7430
      %v7493 = vmax.f32 %v7435, %v7437
      %v7494 = vmax.f32 %v7436, %v7438
      %v7495 = vmax.f32 %v7443, %v7445
      %v7496 = vmax.f32 %v7444, %v7446
      %v7497 = vmax.f32 %v7451, %v7453
      %v7498 = vmax.f32 %v7452, %v7454
      %v7499 = vmax.f32 %v7459, %v7461
      %v7500 = vmax.f32 %v7460, %v7462
      %v7501 = vmax.f32 %v7467, %v7469
      %v7502 = vmax.f32 %v7468, %v7470
      %v7503 = vmax.f32 %v7471, %v7487
      %v7504 = vmax.f32 %v7472, %v7488
      %v7505 = vmax.f32 %v7473, %v7489
      %v7506 = vmax.f32 %v7474, %v7490
      %v7507 = vmax.f32 %v7475, %v7491
      %v7508 = vmax.f32 %v7476, %v7492
      %v7509 = vmax.f32 %v7477, %v7493
      %v7510 = vmax.f32 %v7478, %v7494
      %v7511 = vmax.f32 %v7479, %v7495
      %v7512 = vmax.f32 %v7480, %v7496
      %v7513 = vmax.f32 %v7481, %v7497
      %v7514 = vmax.f32 %v7482, %v7498
      %v7515 = vmax.f32 %v7483, %v7499
      %v7516 = vmax.f32 %v7484, %v7500
      %v7517 = vmax.f32 %v7485, %v7501
      %v7518 = vmax.f32 %v7486, %v7502
      %v7519 = vld [vmem:[%s5] sm:$0x3]
      %v7521 = vlaneseq
      %v7522 = vshrl.u32 %v7521, 7
      %v7523 = vsub.s32 0, %v7522
      %v7524 = vrot.slane %v7519, %v7523
      %v7525 = vlaneseq
      %v7526 = vshrl.u32 %v7525, 7
      %v7527 = vsub.s32 1, %v7526
      %v7528 = vrot.slane %v7519, %v7527
      %v7531 = vadd.f32 %v7503, %v7524
      %v7532 = vadd.f32 %v7504, %v7528
      %v7533 = vadd.f32 %v7505, %v7524
      %v7534 = vadd.f32 %v7506, %v7528
      %v7535 = vadd.f32 %v7507, %v7524
      %v7536 = vadd.f32 %v7508, %v7528
      %v7537 = vadd.f32 %v7509, %v7524
      %v7538 = vadd.f32 %v7510, %v7528
      %v7539 = vadd.f32 %v7511, %v7524
      %v7540 = vadd.f32 %v7512, %v7528
      %v7541 = vadd.f32 %v7513, %v7524
      %v7542 = vadd.f32 %v7514, %v7528
      %v7543 = vadd.f32 %v7515, %v7524
      %v7544 = vadd.f32 %v7516, %v7528
      %v7545 = vadd.f32 %v7517, %v7524
      %v7546 = vadd.f32 %v7518, %v7528
      %v7547 = vmax.f32 %v7531, 0.0
      %v7548 = vmax.f32 %v7532, 0.0
      %v7549 = vmax.f32 %v7533, 0.0
      %v7550 = vmax.f32 %v7534, 0.0
      %v7551 = vmax.f32 %v7535, 0.0
      %v7552 = vmax.f32 %v7536, 0.0
      %v7553 = vmax.f32 %v7537, 0.0
      %v7554 = vmax.f32 %v7538, 0.0
      %v7555 = vmax.f32 %v7539, 0.0
      %v7556 = vmax.f32 %v7540, 0.0
      %v7557 = vmax.f32 %v7541, 0.0
      %v7558 = vmax.f32 %v7542, 0.0
      %v7559 = vmax.f32 %v7543, 0.0
      %v7560 = vmax.f32 %v7544, 0.0
      %v7561 = vmax.f32 %v7545, 0.0
      %v7562 = vmax.f32 %v7546, 0.0
      %v7563 = vpack.c.bf16 %v7549, %v7547
      %v7564 = vpack.c.bf16 %v7550, %v7548
      %v7565 = vpack.c.bf16 %v7553, %v7551
      %v7566 = vpack.c.bf16 %v7554, %v7552
      %v7567 = vpack.c.bf16 %v7557, %v7555
      %v7568 = vpack.c.bf16 %v7558, %v7556
      %v7569 = vpack.c.bf16 %v7561, %v7559
      %v7570 = vpack.c.bf16 %v7562, %v7560
      %v7579 = vunpack.c.l.b16 %v7563
      %v7580 = vunpack.c.l.b16 %v7564
      %v7581 = vunpack.c.h.b16 %v7563
      %v7582 = vunpack.c.h.b16 %v7564
      %v7583 = vunpack.c.l.b16 %v7565
      %v7584 = vunpack.c.l.b16 %v7566
      %v7585 = vunpack.c.h.b16 %v7565
      %v7586 = vunpack.c.h.b16 %v7566
      %v7587 = vunpack.c.l.b16 %v7567
      %v7588 = vunpack.c.l.b16 %v7568
      %v7589 = vunpack.c.h.b16 %v7567
      %v7590 = vunpack.c.h.b16 %v7568
      %v7591 = vunpack.c.l.b16 %v7569
      %v7592 = vunpack.c.l.b16 %v7570
      %v7593 = vunpack.c.h.b16 %v7569
      %v7594 = vunpack.c.h.b16 %v7570
      %v7595 = vpack.c.b16 %v7580, %v7579
      %v7596 = vpack.c.b16 %v7582, %v7581
      %v7597 = vpack.c.b16 %v7584, %v7583
      %v7598 = vpack.c.b16 %v7586, %v7585
      %v7599 = vpack.c.b16 %v7588, %v7587
      %v7600 = vpack.c.b16 %v7590, %v7589
      %v7601 = vpack.c.b16 %v7592, %v7591
      %v7602 = vpack.c.b16 %v7594, %v7593
      %7611 = vst [vmem:[#allocation4] sm:$0xff] %v7595
      %7612 = vst [vmem:[#allocation4 + $0x8] sm:$0xff] %v7596
      %7613 = vst [vmem:[#allocation4 + $0x10] sm:$0xff] %v7597
      %7614 = vst [vmem:[#allocation4 + $0x18] sm:$0xff] %v7598
      %7615 = vst [vmem:[#allocation4 + $0x20] sm:$0xff] %v7599
      %7616 = vst [vmem:[#allocation4 + $0x28] sm:$0xff] %v7600
      %7617 = vst [vmem:[#allocation4 + $0x30] sm:$0xff] %v7601
      %7618 = vst [vmem:[#allocation4 + $0x38] sm:$0xff] %v7602
      %7619 = vst [vmem:[#allocation4 + $0x40] sm:$0xff] 0
      %v7620 = vld [vmem:[#allocation4] sm:$0xff]
      %v7621 = vld [vmem:[#allocation4 + $0x8] sm:$0xff]
      %v7622 = vld [vmem:[#allocation4 + $0x10] sm:$0xff]
      %v7623 = vld [vmem:[#allocation4 + $0x18] sm:$0xff]
      %v7624 = vld [vmem:[#allocation4 + $0x20] sm:$0xff]
      %v7625 = vld [vmem:[#allocation4 + $0x28] sm:$0xff]
      %v7626 = vld [vmem:[#allocation4 + $0x30] sm:$0xff]
      %v7627 = vld [vmem:[#allocation4 + $0x38] sm:$0xff]
      %v7628 = vld [vmem:[%s6] sm:$0xf]
      %v7629 = vld [vmem:[%s6 + $0x4] sm:$0xf]
      %v7630 = vld [vmem:[%s6 + $0x8] sm:$0xf]
      %v7631 = vld [vmem:[%s6 + $0xc] sm:$0xf]
      %v7632 = vld [vmem:[%s6 + $0x10] sm:$0xf]
      %v7633 = vld [vmem:[%s6 + $0x14] sm:$0xf]
      %v7634 = vld [vmem:[%s6 + $0x18] sm:$0xf]
      %v7635 = vld [vmem:[%s6 + $0x1c] sm:$0xf]
      %v7636 = vld [vmem:[%s6 + $0x20] sm:$0xf]
      %v7637 = vld [vmem:[%s6 + $0x24] sm:$0xf]
      %v7638 = vld [vmem:[%s6 + $0x28] sm:$0xf]
      %v7639 = vld [vmem:[%s6 + $0x2c] sm:$0xf]
      %v7640 = vld [vmem:[%s6 + $0x30] sm:$0xf]
      %v7641 = vld [vmem:[%s6 + $0x34] sm:$0xf]
      %v7642 = vld [vmem:[%s6 + $0x38] sm:$0xf]
      %v7643 = vld [vmem:[%s6 + $0x3c] sm:$0xf]
      %v7644 = vld [vmem:[%s6 + $0x40] sm:$0xf]
      %v7645 = vld [vmem:[%s6 + $0x44] sm:$0xf]
      %v7646 = vld [vmem:[%s6 + $0x48] sm:$0xf]
      %v7647 = vld [vmem:[%s6 + $0x4c] sm:$0xf]
      %v7648 = vld [vmem:[%s6 + $0x50] sm:$0xf]
      %v7649 = vld [vmem:[%s6 + $0x54] sm:$0xf]
      %v7650 = vld [vmem:[%s6 + $0x58] sm:$0xf]
      %v7651 = vld [vmem:[%s6 + $0x5c] sm:$0xf]
      %v7652 = vld [vmem:[%s6 + $0x60] sm:$0xf]
      %v7653 = vld [vmem:[%s6 + $0x64] sm:$0xf]
      %v7654 = vld [vmem:[%s6 + $0x68] sm:$0xf]
      %v7655 = vld [vmem:[%s6 + $0x6c] sm:$0xf]
      %v7656 = vld [vmem:[%s6 + $0x70] sm:$0xf]
      %v7657 = vld [vmem:[%s6 + $0x74] sm:$0xf]
      %v7658 = vld [vmem:[%s6 + $0x78] sm:$0xf]
      %v7659 = vld [vmem:[%s6 + $0x7c] sm:$0xf]
      %v7660 = vld [vmem:[#allocation4] sm:$0xff]
      %v7661 = vld [vmem:[#allocation4 + $0x8] sm:$0xff]
      %v7662 = vld [vmem:[#allocation4 + $0x10] sm:$0xff]
      %v7663 = vld [vmem:[#allocation4 + $0x18] sm:$0xff]
      %v7664 = vld [vmem:[#allocation4 + $0x20] sm:$0xff]
      %v7665 = vld [vmem:[#allocation4 + $0x28] sm:$0xff]
      %v7666 = vld [vmem:[#allocation4 + $0x30] sm:$0xff]
      %v7667 = vld [vmem:[#allocation4 + $0x38] sm:$0xff]
      %v7668 = vld [vmem:[#allocation4 + $0x40] sm:$0x11]
      %s7669 = scalar_lea.vmem %s6, 128
      %v7670 = vld [vmem:[%s7669] sm:$0xf]
      %v7671 = vld [vmem:[%s7669 + $0x4] sm:$0xf]
      %v7672 = vld [vmem:[%s7669 + $0x8] sm:$0xf]
      %v7673 = vld [vmem:[%s7669 + $0xc] sm:$0xf]
      %v7674 = vld [vmem:[%s7669 + $0x10] sm:$0xf]
      %v7675 = vld [vmem:[%s7669 + $0x14] sm:$0xf]
      %v7676 = vld [vmem:[%s7669 + $0x18] sm:$0xf]
      %v7677 = vld [vmem:[%s7669 + $0x1c] sm:$0xf]
      %v7678 = vld [vmem:[%s7669 + $0x20] sm:$0xf]
      %v7679 = vld [vmem:[%s7669 + $0x24] sm:$0xf]
      %v7680 = vld [vmem:[%s7669 + $0x28] sm:$0xf]
      %v7681 = vld [vmem:[%s7669 + $0x2c] sm:$0xf]
      %v7682 = vld [vmem:[%s7669 + $0x30] sm:$0xf]
      %v7683 = vld [vmem:[%s7669 + $0x34] sm:$0xf]
      %v7684 = vld [vmem:[%s7669 + $0x38] sm:$0xf]
      %v7685 = vld [vmem:[%s7669 + $0x3c] sm:$0xf]
      %v7686 = vld [vmem:[%s7669 + $0x40] sm:$0xf]
      %v7687 = vld [vmem:[%s7669 + $0x44] sm:$0xf]
      %v7688 = vld [vmem:[%s7669 + $0x48] sm:$0xf]
      %v7689 = vld [vmem:[%s7669 + $0x4c] sm:$0xf]
      %v7690 = vld [vmem:[%s7669 + $0x50] sm:$0xf]
      %v7691 = vld [vmem:[%s7669 + $0x54] sm:$0xf]
      %v7692 = vld [vmem:[%s7669 + $0x58] sm:$0xf]
      %v7693 = vld [vmem:[%s7669 + $0x5c] sm:$0xf]
      %v7694 = vld [vmem:[%s7669 + $0x60] sm:$0xf]
      %v7695 = vld [vmem:[%s7669 + $0x64] sm:$0xf]
      %v7696 = vld [vmem:[%s7669 + $0x68] sm:$0xf]
      %v7697 = vld [vmem:[%s7669 + $0x6c] sm:$0xf]
      %v7698 = vld [vmem:[%s7669 + $0x70] sm:$0xf]
      %v7699 = vld [vmem:[%s7669 + $0x74] sm:$0xf]
      %v7700 = vld [vmem:[%s7669 + $0x78] sm:$0xf]
      %v7701 = vld [vmem:[%s7669 + $0x7c] sm:$0xf]
      %v7711 = vunpack.c.l.b16 %v7660
      %v7712 = vunpack.c.h.b16 %v7660
      %v7713 = vunpack.c.l.b16 %v7661
      %v7714 = vunpack.c.h.b16 %v7661
      %v7715 = vunpack.c.l.b16 %v7662
      %v7716 = vunpack.c.h.b16 %v7662
      %v7717 = vunpack.c.l.b16 %v7663
      %v7718 = vunpack.c.h.b16 %v7663
      %v7719 = vunpack.c.l.b16 %v7664
      %v7720 = vunpack.c.h.b16 %v7664
      %v7721 = vunpack.c.l.b16 %v7665
      %v7722 = vunpack.c.h.b16 %v7665
      %v7723 = vunpack.c.l.b16 %v7666
      %v7724 = vunpack.c.h.b16 %v7666
      %v7725 = vunpack.c.l.b16 %v7667
      %v7726 = vunpack.c.h.b16 %v7667
      %v7727 = vunpack.c.l.b16 %v7668
      %v7728 = vunpack.c.h.b16 %v7668
      %v7729 = vpack.c.b16 %v7713, %v7711
      %v7730 = vpack.c.b16 %v7714, %v7712
      %v7731 = vpack.c.b16 %v7717, %v7715
      %v7732 = vpack.c.b16 %v7718, %v7716
      %v7733 = vpack.c.b16 %v7721, %v7719
      %v7734 = vpack.c.b16 %v7722, %v7720
      %v7735 = vpack.c.b16 %v7725, %v7723
      %v7736 = vpack.c.b16 %v7726, %v7724
      %v7737 = vpack.c.b16 %v7727, %v7727
      %v7738 = vpack.c.b16 %v7728, %v7728
      %v7740 = vshrl.u32 %v7729, 16
      %v7742 = vshll.u32 %v7729, 16
      %v7744 = vrot.slane %v7742, 1
      %v7745 = vor.u32 %v7740, %v7744
      %v7747 = vshll.u32 %v7731, 16
      %v7749 = vrot.slane %v7747, 1
      %v7750 = vsel %vm544, %v7745, %v7749
      %v7752 = vshrl.u32 %v7730, 16
      %v7754 = vshll.u32 %v7730, 16
      %v7756 = vrot.slane %v7754, 1
      %v7757 = vor.u32 %v7752, %v7756
      %v7759 = vshll.u32 %v7732, 16
      %v7761 = vrot.slane %v7759, 1
      %v7762 = vsel %vm544, %v7757, %v7761
      %v7763 = vshrl.u32 %v7731, 16
      %v7765 = vor.u32 %v7763, %v7749
      %v7767 = vshll.u32 %v7733, 16
      %v7769 = vrot.slane %v7767, 1
      %v7770 = vsel %vm544, %v7765, %v7769
      %v7771 = vshrl.u32 %v7732, 16
      %v7773 = vor.u32 %v7771, %v7761
      %v7775 = vshll.u32 %v7734, 16
      %v7777 = vrot.slane %v7775, 1
      %v7778 = vsel %vm544, %v7773, %v7777
      %v7779 = vshrl.u32 %v7733, 16
      %v7781 = vor.u32 %v7779, %v7769
      %v7783 = vshll.u32 %v7735, 16
      %v7785 = vrot.slane %v7783, 1
      %v7786 = vsel %vm544, %v7781, %v7785
      %v7787 = vshrl.u32 %v7734, 16
      %v7789 = vor.u32 %v7787, %v7777
      %v7791 = vshll.u32 %v7736, 16
      %v7793 = vrot.slane %v7791, 1
      %v7794 = vsel %vm544, %v7789, %v7793
      %v7795 = vshrl.u32 %v7735, 16
      %v7797 = vor.u32 %v7795, %v7785
      %v7799 = vshll.u32 %v7737, 16
      %v7801 = vrot.slane %v7799, 1
      %v7802 = vsel %vm544, %v7797, %v7801
      %v7803 = vshrl.u32 %v7736, 16
      %v7805 = vor.u32 %v7803, %v7793
      %v7807 = vshll.u32 %v7738, 16
      %v7809 = vrot.slane %v7807, 1
      %v7810 = vsel %vm544, %v7805, %v7809
      %v7851 = vunpack.c.l.b16 %v7670
      %v7852 = vunpack.c.l.b16 %v7671
      %v7853 = vunpack.c.l.b16 %v7672
      %v7854 = vunpack.c.l.b16 %v7673
      %v7855 = vunpack.c.l.b16 %v7674
      %v7856 = vunpack.c.l.b16 %v7675
      %v7857 = vunpack.c.l.b16 %v7676
      %v7858 = vunpack.c.l.b16 %v7677
      %v7859 = vunpack.c.l.b16 %v7678
      %v7860 = vunpack.c.l.b16 %v7679
      %v7861 = vunpack.c.l.b16 %v7680
      %v7862 = vunpack.c.l.b16 %v7681
      %v7863 = vunpack.c.l.b16 %v7682
      %v7864 = vunpack.c.l.b16 %v7683
      %v7865 = vunpack.c.l.b16 %v7684
      %v7866 = vunpack.c.l.b16 %v7685
      %v7867 = vunpack.c.l.b16 %v7686
      %v7868 = vunpack.c.l.b16 %v7687
      %v7869 = vunpack.c.l.b16 %v7688
      %v7870 = vunpack.c.l.b16 %v7689
      %v7871 = vunpack.c.l.b16 %v7690
      %v7872 = vunpack.c.l.b16 %v7691
      %v7873 = vunpack.c.l.b16 %v7692
      %v7874 = vunpack.c.l.b16 %v7693
      %v7875 = vunpack.c.l.b16 %v7694
      %v7876 = vunpack.c.l.b16 %v7695
      %v7877 = vunpack.c.l.b16 %v7696
      %v7878 = vunpack.c.l.b16 %v7697
      %v7879 = vunpack.c.l.b16 %v7698
      %v7880 = vunpack.c.l.b16 %v7699
      %v7881 = vunpack.c.l.b16 %v7700
      %v7882 = vunpack.c.l.b16 %v7701
      %v7883 = vpack.c.b16 %v7852, %v7851
      %v7884 = vpack.c.b16 %v7854, %v7853
      %v7885 = vpack.c.b16 %v7856, %v7855
      %v7886 = vpack.c.b16 %v7858, %v7857
      %v7887 = vpack.c.b16 %v7860, %v7859
      %v7888 = vpack.c.b16 %v7862, %v7861
      %v7889 = vpack.c.b16 %v7864, %v7863
      %v7890 = vpack.c.b16 %v7866, %v7865
      %v7891 = vpack.c.b16 %v7868, %v7867
      %v7892 = vpack.c.b16 %v7870, %v7869
      %v7893 = vpack.c.b16 %v7872, %v7871
      %v7894 = vpack.c.b16 %v7874, %v7873
      %v7895 = vpack.c.b16 %v7876, %v7875
      %v7896 = vpack.c.b16 %v7878, %v7877
      %v7897 = vpack.c.b16 %v7880, %v7879
      %v7898 = vpack.c.b16 %v7882, %v7881
      %7915 = vmatprep.subr.bf16.mxu0 0
      %7916 = vmatpush1.bf16.msra.mxu0 %v7883
      %7917 = vmatprep.subr.bf16.mxu0 0
      %7918 = vmatpush1.bf16.msra.mxu0 %v7884
      %7919 = vmatprep.subr.bf16.mxu0 0
      %7920 = vmatpush1.bf16.msra.mxu0 %v7885
      %7921 = vmatprep.subr.bf16.mxu0 0
      %7922 = vmatpush1.bf16.msra.mxu0 %v7886
      %7923 = vmatprep.subr.bf16.mxu0 0
      %7924 = vmatpush1.bf16.msra.mxu0 %v7887
      %7925 = vmatprep.subr.bf16.mxu0 0
      %7926 = vmatpush1.bf16.msra.mxu0 %v7888
      %7927 = vmatprep.subr.bf16.mxu0 0
      %7928 = vmatpush1.bf16.msra.mxu0 %v7889
      %7929 = vmatprep.subr.bf16.mxu0 0
      %7930 = vmatpush1.bf16.msra.mxu0 %v7890
      %7931 = vmatprep.subr.bf16.mxu0 0
      %7932 = vmatpush1.bf16.msra.mxu0 %v7891
      %7933 = vmatprep.subr.bf16.mxu0 0
      %7934 = vmatpush1.bf16.msra.mxu0 %v7892
      %7935 = vmatprep.subr.bf16.mxu0 0
      %7936 = vmatpush1.bf16.msra.mxu0 %v7893
      %7937 = vmatprep.subr.bf16.mxu0 0
      %7938 = vmatpush1.bf16.msra.mxu0 %v7894
      %7939 = vmatprep.subr.bf16.mxu0 0
      %7940 = vmatpush1.bf16.msra.mxu0 %v7895
      %7941 = vmatprep.subr.bf16.mxu0 0
      %7942 = vmatpush1.bf16.msra.mxu0 %v7896
      %7943 = vmatprep.subr.bf16.mxu0 0
      %7944 = vmatpush1.bf16.msra.mxu0 %v7897
      %7945 = vmatprep.subr.bf16.mxu0 0
      %7946 = vmatpush1.bf16.msra.mxu0 %v7898
      %7947 = vmatprep.mubr.bf16.mxu0 %v7762
      %7948 = vmatmul.mubr.bf16.gmra.mrb[0].mxu0 %v7750
      %v7949 = vpop.f32.mrb[0].mxu0
      %v7950 = vadd.f32 0.0, %v7949
      %v7951 = vpop.f32.mrb[0].mxu0
      %v7952 = vpop.f32.mrb[0].mxu0
      %v7953 = vadd.f32 0.0, %v7952
      %v7954 = vpop.f32.mrb[0].mxu0
      %7955 = vmatprep.mubr.bf16.mxu0 %v7778
      %7956 = vmatmul.mubr.bf16.gmra.mrb[0].mxu0 %v7770
      %v7957 = vpop.f32.mrb[0].mxu0
      %v7958 = vadd.f32 0.0, %v7957
      %v7959 = vpop.f32.mrb[0].mxu0
      %v7960 = vpop.f32.mrb[0].mxu0
      %v7961 = vadd.f32 0.0, %v7960
      %v7962 = vpop.f32.mrb[0].mxu0
      %7963 = vmatprep.mubr.bf16.mxu0 %v7794
      %7964 = vmatmul.mubr.bf16.gmra.mrb[0].mxu0 %v7786
      %v7965 = vpop.f32.mrb[0].mxu0
      %v7966 = vadd.f32 0.0, %v7965
      %v7967 = vpop.f32.mrb[0].mxu0
      %v7968 = vpop.f32.mrb[0].mxu0
      %v7969 = vadd.f32 0.0, %v7968
      %v7970 = vpop.f32.mrb[0].mxu0
      %7971 = vmatprep.mubr.bf16.mxu0 %v7810
      %7972 = vmatmul.mubr.bf16.gmra.mrb[0].mxu0 %v7802
      %v7973 = vpop.f32.mrb[0].mxu0
      %v7974 = vadd.f32 0.0, %v7973
      %v7975 = vpop.f32.mrb[0].mxu0
      %v7976 = vpop.f32.mrb[0].mxu0
      %v7977 = vadd.f32 0.0, %v7976
      %v7978 = vpop.f32.mrb[0].mxu0
      %7979 = vdwg.mxu0
      %v7988 = vunpack.c.l.b16 %v7620
      %v7989 = vunpack.c.h.b16 %v7620
      %v7990 = vunpack.c.l.b16 %v7621
      %v7991 = vunpack.c.h.b16 %v7621
      %v7992 = vunpack.c.l.b16 %v7622
      %v7993 = vunpack.c.h.b16 %v7622
      %v7994 = vunpack.c.l.b16 %v7623
      %v7995 = vunpack.c.h.b16 %v7623
      %v7996 = vunpack.c.l.b16 %v7624
      %v7997 = vunpack.c.h.b16 %v7624
      %v7998 = vunpack.c.l.b16 %v7625
      %v7999 = vunpack.c.h.b16 %v7625
      %v8000 = vunpack.c.l.b16 %v7626
      %v8001 = vunpack.c.h.b16 %v7626
      %v8002 = vunpack.c.l.b16 %v7627
      %v8003 = vunpack.c.h.b16 %v7627
      %v8004 = vpack.c.b16 %v7990, %v7988
      %v8005 = vpack.c.b16 %v7991, %v7989
      %v8006 = vpack.c.b16 %v7994, %v7992
      %v8007 = vpack.c.b16 %v7995, %v7993
      %v8008 = vpack.c.b16 %v7998, %v7996
      %v8009 = vpack.c.b16 %v7999, %v7997
      %v8010 = vpack.c.b16 %v8002, %v8000
      %v8011 = vpack.c.b16 %v8003, %v8001
      %v8052 = vunpack.c.l.b16 %v7628
      %v8053 = vunpack.c.l.b16 %v7629
      %v8054 = vunpack.c.l.b16 %v7630
      %v8055 = vunpack.c.l.b16 %v7631
      %v8056 = vunpack.c.l.b16 %v7632
      %v8057 = vunpack.c.l.b16 %v7633
      %v8058 = vunpack.c.l.b16 %v7634
      %v8059 = vunpack.c.l.b16 %v7635
      %v8060 = vunpack.c.l.b16 %v7636
      %v8061 = vunpack.c.l.b16 %v7637
      %v8062 = vunpack.c.l.b16 %v7638
      %v8063 = vunpack.c.l.b16 %v7639
      %v8064 = vunpack.c.l.b16 %v7640
      %v8065 = vunpack.c.l.b16 %v7641
      %v8066 = vunpack.c.l.b16 %v7642
      %v8067 = vunpack.c.l.b16 %v7643
      %v8068 = vunpack.c.l.b16 %v7644
      %v8069 = vunpack.c.l.b16 %v7645
      %v8070 = vunpack.c.l.b16 %v7646
      %v8071 = vunpack.c.l.b16 %v7647
      %v8072 = vunpack.c.l.b16 %v7648
      %v8073 = vunpack.c.l.b16 %v7649
      %v8074 = vunpack.c.l.b16 %v7650
      %v8075 = vunpack.c.l.b16 %v7651
      %v8076 = vunpack.c.l.b16 %v7652
      %v8077 = vunpack.c.l.b16 %v7653
      %v8078 = vunpack.c.l.b16 %v7654
      %v8079 = vunpack.c.l.b16 %v7655
      %v8080 = vunpack.c.l.b16 %v7656
      %v8081 = vunpack.c.l.b16 %v7657
      %v8082 = vunpack.c.l.b16 %v7658
      %v8083 = vunpack.c.l.b16 %v7659
      %v8084 = vpack.c.b16 %v8053, %v8052
      %v8085 = vpack.c.b16 %v8055, %v8054
      %v8086 = vpack.c.b16 %v8057, %v8056
      %v8087 = vpack.c.b16 %v8059, %v8058
      %v8088 = vpack.c.b16 %v8061, %v8060
      %v8089 = vpack.c.b16 %v8063, %v8062
      %v8090 = vpack.c.b16 %v8065, %v8064
      %v8091 = vpack.c.b16 %v8067, %v8066
      %v8092 = vpack.c.b16 %v8069, %v8068
      %v8093 = vpack.c.b16 %v8071, %v8070
      %v8094 = vpack.c.b16 %v8073, %v8072
      %v8095 = vpack.c.b16 %v8075, %v8074
      %v8096 = vpack.c.b16 %v8077, %v8076
      %v8097 = vpack.c.b16 %v8079, %v8078
      %v8098 = vpack.c.b16 %v8081, %v8080
      %v8099 = vpack.c.b16 %v8083, %v8082
      %8116 = vmatprep.subr.bf16.mxu0 0
      %8117 = vmatpush1.bf16.msra.mxu0 %v8084
      %8118 = vmatprep.subr.bf16.mxu0 0
      %8119 = vmatpush1.bf16.msra.mxu0 %v8085
      %8120 = vmatprep.subr.bf16.mxu0 0
      %8121 = vmatpush1.bf16.msra.mxu0 %v8086
      %8122 = vmatprep.subr.bf16.mxu0 0
      %8123 = vmatpush1.bf16.msra.mxu0 %v8087
      %8124 = vmatprep.subr.bf16.mxu0 0
      %8125 = vmatpush1.bf16.msra.mxu0 %v8088
      %8126 = vmatprep.subr.bf16.mxu0 0
      %8127 = vmatpush1.bf16.msra.mxu0 %v8089
      %8128 = vmatprep.subr.bf16.mxu0 0
      %8129 = vmatpush1.bf16.msra.mxu0 %v8090
      %8130 = vmatprep.subr.bf16.mxu0 0
      %8131 = vmatpush1.bf16.msra.mxu0 %v8091
      %8132 = vmatprep.subr.bf16.mxu0 0
      %8133 = vmatpush1.bf16.msra.mxu0 %v8092
      %8134 = vmatprep.subr.bf16.mxu0 0
      %8135 = vmatpush1.bf16.msra.mxu0 %v8093
      %8136 = vmatprep.subr.bf16.mxu0 0
      %8137 = vmatpush1.bf16.msra.mxu0 %v8094
      %8138 = vmatprep.subr.bf16.mxu0 0
      %8139 = vmatpush1.bf16.msra.mxu0 %v8095
      %8140 = vmatprep.subr.bf16.mxu0 0
      %8141 = vmatpush1.bf16.msra.mxu0 %v8096
      %8142 = vmatprep.subr.bf16.mxu0 0
      %8143 = vmatpush1.bf16.msra.mxu0 %v8097
      %8144 = vmatprep.subr.bf16.mxu0 0
      %8145 = vmatpush1.bf16.msra.mxu0 %v8098
      %8146 = vmatprep.subr.bf16.mxu0 0
      %8147 = vmatpush1.bf16.msra.mxu0 %v8099
      %8148 = vmatprep.mubr.bf16.mxu0 %v8005
      %8149 = vmatmul.mubr.bf16.gmra.mrb[0].mxu0 %v8004
      %v8150 = vpop.f32.mrb[0].mxu0
      %v8151 = vadd.f32 %v7950, %v8150
      %v8152 = vpop.f32.mrb[0].mxu0
      %v8153 = vpop.f32.mrb[0].mxu0
      %v8154 = vadd.f32 %v7953, %v8153
      %v8155 = vpop.f32.mrb[0].mxu0
      %8156 = vmatprep.mubr.bf16.mxu0 %v8007
      %8157 = vmatmul.mubr.bf16.gmra.mrb[0].mxu0 %v8006
      %v8158 = vpop.f32.mrb[0].mxu0
      %v8159 = vadd.f32 %v7958, %v8158
      %v8160 = vpop.f32.mrb[0].mxu0
      %v8161 = vpop.f32.mrb[0].mxu0
      %v8162 = vadd.f32 %v7961, %v8161
      %v8163 = vpop.f32.mrb[0].mxu0
      %8164 = vmatprep.mubr.bf16.mxu0 %v8009
      %8165 = vmatmul.mubr.bf16.gmra.mrb[0].mxu0 %v8008
      %v8166 = vpop.f32.mrb[0].mxu0
      %v8167 = vadd.f32 %v7966, %v8166
      %v8168 = vpop.f32.mrb[0].mxu0
      %v8169 = vpop.f32.mrb[0].mxu0
      %v8170 = vadd.f32 %v7969, %v8169
      %v8171 = vpop.f32.mrb[0].mxu0
      %8172 = vmatprep.mubr.bf16.mxu0 %v8011
      %8173 = vmatmul.mubr.bf16.gmra.mrb[0].mxu0 %v8010
      %v8174 = vpop.f32.mrb[0].mxu0
      %v8175 = vadd.f32 %v7974, %v8174
      %v8176 = vpop.f32.mrb[0].mxu0
      %v8177 = vpop.f32.mrb[0].mxu0
      %v8178 = vadd.f32 %v7977, %v8177
      %v8179 = vpop.f32.mrb[0].mxu0
      %8180 = vdwg.mxu0
      %v8181 = vld [vmem:[#allocation4] sm:$0xee]
      %s8182 = scalar_lea.vmem %s6, 256
      %v8183 = vld [vmem:[%s8182] sm:$0xf]
      %v8184 = vld [vmem:[%s8182 + $0x4] sm:$0xf]
      %v8185 = vld [vmem:[%s8182 + $0x8] sm:$0xf]
      %v8186 = vld [vmem:[%s8182 + $0xc] sm:$0xf]
      %v8187 = vld [vmem:[%s8182 + $0x10] sm:$0xf]
      %v8188 = vld [vmem:[%s8182 + $0x14] sm:$0xf]
      %v8189 = vld [vmem:[%s8182 + $0x18] sm:$0xf]
      %v8190 = vld [vmem:[%s8182 + $0x1c] sm:$0xf]
      %v8191 = vld [vmem:[%s8182 + $0x20] sm:$0xf]
      %v8192 = vld [vmem:[%s8182 + $0x24] sm:$0xf]
      %v8193 = vld [vmem:[%s8182 + $0x28] sm:$0xf]
      %v8194 = vld [vmem:[%s8182 + $0x2c] sm:$0xf]
      %v8195 = vld [vmem:[%s8182 + $0x30] sm:$0xf]
      %v8196 = vld [vmem:[%s8182 + $0x34] sm:$0xf]
      %v8197 = vld [vmem:[%s8182 + $0x38] sm:$0xf]
      %v8198 = vld [vmem:[%s8182 + $0x3c] sm:$0xf]
      %v8199 = vld [vmem:[%s8182 + $0x40] sm:$0xf]
      %v8200 = vld [vmem:[%s8182 + $0x44] sm:$0xf]
      %v8201 = vld [vmem:[%s8182 + $0x48] sm:$0xf]
      %v8202 = vld [vmem:[%s8182 + $0x4c] sm:$0xf]
      %v8203 = vld [vmem:[%s8182 + $0x50] sm:$0xf]
      %v8204 = vld [vmem:[%s8182 + $0x54] sm:$0xf]
      %v8205 = vld [vmem:[%s8182 + $0x58] sm:$0xf]
      %v8206 = vld [vmem:[%s8182 + $0x5c] sm:$0xf]
      %v8207 = vld [vmem:[%s8182 + $0x60] sm:$0xf]
      %v8208 = vld [vmem:[%s8182 + $0x64] sm:$0xf]
      %v8209 = vld [vmem:[%s8182 + $0x68] sm:$0xf]
      %v8210 = vld [vmem:[%s8182 + $0x6c] sm:$0xf]
      %v8211 = vld [vmem:[%s8182 + $0x70] sm:$0xf]
      %v8212 = vld [vmem:[%s8182 + $0x74] sm:$0xf]
      %v8213 = vld [vmem:[%s8182 + $0x78] sm:$0xf]
      %v8214 = vld [vmem:[%s8182 + $0x7c] sm:$0xf]
      %v8216 = vunpack.c.l.b16 %v8181
      %v8217 = vunpack.c.h.b16 %v8181
      %v8218 = vpack.c.b16 %v7713, %v8216
      %v8219 = vpack.c.b16 %v7714, %v8217
      %vm8220 = vcmask 1046528
      %v8221 = vrot.slane %v8218, 1
      %v8222 = vrot.slane %v7731, 1
      %v8223 = vsel %vm8220, %v8221, %v8222
      %v8224 = vrot.slane %v8219, 1
      %v8225 = vrot.slane %v7732, 1
      %v8226 = vsel %vm8220, %v8224, %v8225
      %v8227 = vrot.slane %v7733, 1
      %v8228 = vsel %vm8220, %v8222, %v8227
      %v8229 = vrot.slane %v7734, 1
      %v8230 = vsel %vm8220, %v8225, %v8229
      %v8231 = vrot.slane %v7735, 1
      %v8232 = vsel %vm8220, %v8227, %v8231
      %v8233 = vrot.slane %v7736, 1
      %v8234 = vsel %vm8220, %v8229, %v8233
      %v8235 = vrot.slane %v7737, 1
      %v8236 = vsel %vm8220, %v8231, %v8235
      %v8237 = vrot.slane %v7738, 1
      %v8238 = vsel %vm8220, %v8233, %v8237
      %v8279 = vunpack.c.l.b16 %v8183
      %v8280 = vunpack.c.l.b16 %v8184
      %v8281 = vunpack.c.l.b16 %v8185
      %v8282 = vunpack.c.l.b16 %v8186
      %v8283 = vunpack.c.l.b16 %v8187
      %v8284 = vunpack.c.l.b16 %v8188
      %v8285 = vunpack.c.l.b16 %v8189
      %v8286 = vunpack.c.l.b16 %v8190
      %v8287 = vunpack.c.l.b16 %v8191
      %v8288 = vunpack.c.l.b16 %v8192
      %v8289 = vunpack.c.l.b16 %v8193
      %v8290 = vunpack.c.l.b16 %v8194
      %v8291 = vunpack.c.l.b16 %v8195
      %v8292 = vunpack.c.l.b16 %v8196
      %v8293 = vunpack.c.l.b16 %v8197
      %v8294 = vunpack.c.l.b16 %v8198
      %v8295 = vunpack.c.l.b16 %v8199
      %v8296 = vunpack.c.l.b16 %v8200
      %v8297 = vunpack.c.l.b16 %v8201
      %v8298 = vunpack.c.l.b16 %v8202
      %v8299 = vunpack.c.l.b16 %v8203
      %v8300 = vunpack.c.l.b16 %v8204
      %v8301 = vunpack.c.l.b16 %v8205
      %v8302 = vunpack.c.l.b16 %v8206
      %v8303 = vunpack.c.l.b16 %v8207
      %v8304 = vunpack.c.l.b16 %v8208
      %v8305 = vunpack.c.l.b16 %v8209
      %v8306 = vunpack.c.l.b16 %v8210
      %v8307 = vunpack.c.l.b16 %v8211
      %v8308 = vunpack.c.l.b16 %v8212
      %v8309 = vunpack.c.l.b16 %v8213
      %v8310 = vunpack.c.l.b16 %v8214
      %v8311 = vpack.c.b16 %v8280, %v8279
      %v8312 = vpack.c.b16 %v8282, %v8281
      %v8313 = vpack.c.b16 %v8284, %v8283
      %v8314 = vpack.c.b16 %v8286, %v8285
      %v8315 = vpack.c.b16 %v8288, %v8287
      %v8316 = vpack.c.b16 %v8290, %v8289
      %v8317 = vpack.c.b16 %v8292, %v8291
      %v8318 = vpack.c.b16 %v8294, %v8293
      %v8319 = vpack.c.b16 %v8296, %v8295
      %v8320 = vpack.c.b16 %v8298, %v8297
      %v8321 = vpack.c.b16 %v8300, %v8299
      %v8322 = vpack.c.b16 %v8302, %v8301
      %v8323 = vpack.c.b16 %v8304, %v8303
      %v8324 = vpack.c.b16 %v8306, %v8305
      %v8325 = vpack.c.b16 %v8308, %v8307
      %v8326 = vpack.c.b16 %v8310, %v8309
      %8343 = vmatprep.subr.bf16.mxu0 0
      %8344 = vmatpush1.bf16.msra.mxu0 %v8311
      %8345 = vmatprep.subr.bf16.mxu0 0
      %8346 = vmatpush1.bf16.msra.mxu0 %v8312
      %8347 = vmatprep.subr.bf16.mxu0 0
      %8348 = vmatpush1.bf16.msra.mxu0 %v8313
      %8349 = vmatprep.subr.bf16.mxu0 0
      %8350 = vmatpush1.bf16.msra.mxu0 %v8314
      %8351 = vmatprep.subr.bf16.mxu0 0
      %8352 = vmatpush1.bf16.msra.mxu0 %v8315
      %8353 = vmatprep.subr.bf16.mxu0 0
      %8354 = vmatpush1.bf16.msra.mxu0 %v8316
      %8355 = vmatprep.subr.bf16.mxu0 0
      %8356 = vmatpush1.bf16.msra.mxu0 %v8317
      %8357 = vmatprep.subr.bf16.mxu0 0
      %8358 = vmatpush1.bf16.msra.mxu0 %v8318
      %8359 = vmatprep.subr.bf16.mxu0 0
      %8360 = vmatpush1.bf16.msra.mxu0 %v8319
      %8361 = vmatprep.subr.bf16.mxu0 0
      %8362 = vmatpush1.bf16.msra.mxu0 %v8320
      %8363 = vmatprep.subr.bf16.mxu0 0
      %8364 = vmatpush1.bf16.msra.mxu0 %v8321
      %8365 = vmatprep.subr.bf16.mxu0 0
      %8366 = vmatpush1.bf16.msra.mxu0 %v8322
      %8367 = vmatprep.subr.bf16.mxu0 0
      %8368 = vmatpush1.bf16.msra.mxu0 %v8323
      %8369 = vmatprep.subr.bf16.mxu0 0
      %8370 = vmatpush1.bf16.msra.mxu0 %v8324
      %8371 = vmatprep.subr.bf16.mxu0 0
      %8372 = vmatpush1.bf16.msra.mxu0 %v8325
      %8373 = vmatprep.subr.bf16.mxu0 0
      %8374 = vmatpush1.bf16.msra.mxu0 %v8326
      %8375 = vmatprep.mubr.bf16.mxu0 %v8226
      %8376 = vmatmul.mubr.bf16.gmra.mrb[0].mxu0 %v8223
      %v8377 = vpop.f32.mrb[0].mxu0
      %v8378 = vadd.f32 0.0, %v8377
      %v8379 = vpop.f32.mrb[0].mxu0
      %v8380 = vpop.f32.mrb[0].mxu0
      %v8381 = vadd.f32 0.0, %v8380
      %v8382 = vpop.f32.mrb[0].mxu0
      %8383 = vmatprep.mubr.bf16.mxu0 %v8230
      %8384 = vmatmul.mubr.bf16.gmra.mrb[0].mxu0 %v8228
      %v8385 = vpop.f32.mrb[0].mxu0
      %v8386 = vadd.f32 0.0, %v8385
      %v8387 = vpop.f32.mrb[0].mxu0
      %v8388 = vpop.f32.mrb[0].mxu0
      %v8389 = vadd.f32 0.0, %v8388
      %v8390 = vpop.f32.mrb[0].mxu0
      %8391 = vmatprep.mubr.bf16.mxu0 %v8234
      %8392 = vmatmul.mubr.bf16.gmra.mrb[0].mxu0 %v8232
      %v8393 = vpop.f32.mrb[0].mxu0
      %v8394 = vadd.f32 0.0, %v8393
      %v8395 = vpop.f32.mrb[0].mxu0
      %v8396 = vpop.f32.mrb[0].mxu0
      %v8397 = vadd.f32 0.0, %v8396
      %v8398 = vpop.f32.mrb[0].mxu0
      %8399 = vmatprep.mubr.bf16.mxu0 %v8238
      %8400 = vmatmul.mubr.bf16.gmra.mrb[0].mxu0 %v8236
      %v8401 = vpop.f32.mrb[0].mxu0
      %v8402 = vadd.f32 0.0, %v8401
      %v8403 = vpop.f32.mrb[0].mxu0
      %v8404 = vpop.f32.mrb[0].mxu0
      %v8405 = vadd.f32 0.0, %v8404
      %v8406 = vpop.f32.mrb[0].mxu0
      %8407 = vdwg.mxu0
      %v8408 = vadd.f32 %v8151, %v8378
      %v8409 = vadd.f32 %v8154, %v8381
      %v8410 = vadd.f32 %v8159, %v8386
      %v8411 = vadd.f32 %v8162, %v8389
      %v8412 = vadd.f32 %v8167, %v8394
      %v8413 = vadd.f32 %v8170, %v8397
      %v8414 = vadd.f32 %v8175, %v8402
      %v8415 = vadd.f32 %v8178, %v8405
      %v8416 = vld [vmem:[#allocation4 + $0x40] sm:$0x33]
      %s8417 = scalar_lea.vmem %s6, 384
      %v8418 = vld [vmem:[%s8417] sm:$0xf]
      %v8419 = vld [vmem:[%s8417 + $0x4] sm:$0xf]
      %v8420 = vld [vmem:[%s8417 + $0x8] sm:$0xf]
      %v8421 = vld [vmem:[%s8417 + $0xc] sm:$0xf]
      %v8422 = vld [vmem:[%s8417 + $0x10] sm:$0xf]
      %v8423 = vld [vmem:[%s8417 + $0x14] sm:$0xf]
      %v8424 = vld [vmem:[%s8417 + $0x18] sm:$0xf]
      %v8425 = vld [vmem:[%s8417 + $0x1c] sm:$0xf]
      %v8426 = vld [vmem:[%s8417 + $0x20] sm:$0xf]
      %v8427 = vld [vmem:[%s8417 + $0x24] sm:$0xf]
      %v8428 = vld [vmem:[%s8417 + $0x28] sm:$0xf]
      %v8429 = vld [vmem:[%s8417 + $0x2c] sm:$0xf]
      %v8430 = vld [vmem:[%s8417 + $0x30] sm:$0xf]
      %v8431 = vld [vmem:[%s8417 + $0x34] sm:$0xf]
      %v8432 = vld [vmem:[%s8417 + $0x38] sm:$0xf]
      %v8433 = vld [vmem:[%s8417 + $0x3c] sm:$0xf]
      %v8434 = vld [vmem:[%s8417 + $0x40] sm:$0xf]
      %v8435 = vld [vmem:[%s8417 + $0x44] sm:$0xf]
      %v8436 = vld [vmem:[%s8417 + $0x48] sm:$0xf]
      %v8437 = vld [vmem:[%s8417 + $0x4c] sm:$0xf]
      %v8438 = vld [vmem:[%s8417 + $0x50] sm:$0xf]
      %v8439 = vld [vmem:[%s8417 + $0x54] sm:$0xf]
      %v8440 = vld [vmem:[%s8417 + $0x58] sm:$0xf]
      %v8441 = vld [vmem:[%s8417 + $0x5c] sm:$0xf]
      %v8442 = vld [vmem:[%s8417 + $0x60] sm:$0xf]
      %v8443 = vld [vmem:[%s8417 + $0x64] sm:$0xf]
      %v8444 = vld [vmem:[%s8417 + $0x68] sm:$0xf]
      %v8445 = vld [vmem:[%s8417 + $0x6c] sm:$0xf]
      %v8446 = vld [vmem:[%s8417 + $0x70] sm:$0xf]
      %v8447 = vld [vmem:[%s8417 + $0x74] sm:$0xf]
      %v8448 = vld [vmem:[%s8417 + $0x78] sm:$0xf]
      %v8449 = vld [vmem:[%s8417 + $0x7c] sm:$0xf]
      %v8451 = vunpack.c.l.b16 %v8416
      %v8452 = vunpack.c.h.b16 %v8416
      %v8453 = vpack.c.b16 %v8451, %v8451
      %v8454 = vpack.c.b16 %v8452, %v8452
      %vm8455 = vsmask.f32 6400
      %v8457 = vshrl.u32 %v8218, 16
      %v8459 = vrot.slane %v8457, 1
      %v8460 = vshll.u32 %v8218, 16
      %v8462 = vrot.slane %v8460, 2
      %v8463 = vor.u32 %v8459, %v8462
      %v8464 = vrot.slane %v7763, 1
      %v8465 = vrot.slane %v7747, 2
      %v8466 = vor.u32 %v8464, %v8465
      %v8467 = vsel %vm8455, %v8463, %v8466
      %v8469 = vshrl.u32 %v8219, 16
      %v8471 = vrot.slane %v8469, 1
      %v8472 = vshll.u32 %v8219, 16
      %v8474 = vrot.slane %v8472, 2
      %v8475 = vor.u32 %v8471, %v8474
      %v8476 = vrot.slane %v7771, 1
      %v8477 = vrot.slane %v7759, 2
      %v8478 = vor.u32 %v8476, %v8477
      %v8479 = vsel %vm8455, %v8475, %v8478
      %v8480 = vrot.slane %v7779, 1
      %v8481 = vrot.slane %v7767, 2
      %v8482 = vor.u32 %v8480, %v8481
      %v8483 = vsel %vm8455, %v8466, %v8482
      %v8484 = vrot.slane %v7787, 1
      %v8485 = vrot.slane %v7775, 2
      %v8486 = vor.u32 %v8484, %v8485
      %v8487 = vsel %vm8455, %v8478, %v8486
      %v8488 = vrot.slane %v7795, 1
      %v8489 = vrot.slane %v7783, 2
      %v8490 = vor.u32 %v8488, %v8489
      %v8491 = vsel %vm8455, %v8482, %v8490
      %v8492 = vrot.slane %v7803, 1
      %v8493 = vrot.slane %v7791, 2
      %v8494 = vor.u32 %v8492, %v8493
      %v8495 = vsel %vm8455, %v8486, %v8494
      %v8497 = vshrl.u32 %v8453, 16
      %v8499 = vrot.slane %v8497, 1
      %v8500 = vshll.u32 %v8453, 16
      %v8502 = vrot.slane %v8500, 2
      %v8503 = vor.u32 %v8499, %v8502
      %v8504 = vsel %vm8455, %v8490, %v8503
      %v8506 = vshrl.u32 %v8454, 16
      %v8508 = vrot.slane %v8506, 1
      %v8509 = vshll.u32 %v8454, 16
      %v8511 = vrot.slane %v8509, 2
      %v8512 = vor.u32 %v8508, %v8511
      %v8513 = vsel %vm8455, %v8494, %v8512
      %v8554 = vunpack.c.l.b16 %v8418
      %v8555 = vunpack.c.l.b16 %v8419
      %v8556 = vunpack.c.l.b16 %v8420
      %v8557 = vunpack.c.l.b16 %v8421
      %v8558 = vunpack.c.l.b16 %v8422
      %v8559 = vunpack.c.l.b16 %v8423
      %v8560 = vunpack.c.l.b16 %v8424
      %v8561 = vunpack.c.l.b16 %v8425
      %v8562 = vunpack.c.l.b16 %v8426
      %v8563 = vunpack.c.l.b16 %v8427
      %v8564 = vunpack.c.l.b16 %v8428
      %v8565 = vunpack.c.l.b16 %v8429
      %v8566 = vunpack.c.l.b16 %v8430
      %v8567 = vunpack.c.l.b16 %v8431
      %v8568 = vunpack.c.l.b16 %v8432
      %v8569 = vunpack.c.l.b16 %v8433
      %v8570 = vunpack.c.l.b16 %v8434
      %v8571 = vunpack.c.l.b16 %v8435
      %v8572 = vunpack.c.l.b16 %v8436
      %v8573 = vunpack.c.l.b16 %v8437
      %v8574 = vunpack.c.l.b16 %v8438
      %v8575 = vunpack.c.l.b16 %v8439
      %v8576 = vunpack.c.l.b16 %v8440
      %v8577 = vunpack.c.l.b16 %v8441
      %v8578 = vunpack.c.l.b16 %v8442
      %v8579 = vunpack.c.l.b16 %v8443
      %v8580 = vunpack.c.l.b16 %v8444
      %v8581 = vunpack.c.l.b16 %v8445
      %v8582 = vunpack.c.l.b16 %v8446
      %v8583 = vunpack.c.l.b16 %v8447
      %v8584 = vunpack.c.l.b16 %v8448
      %v8585 = vunpack.c.l.b16 %v8449
      %v8586 = vpack.c.b16 %v8555, %v8554
      %v8587 = vpack.c.b16 %v8557, %v8556
      %v8588 = vpack.c.b16 %v8559, %v8558
      %v8589 = vpack.c.b16 %v8561, %v8560
      %v8590 = vpack.c.b16 %v8563, %v8562
      %v8591 = vpack.c.b16 %v8565, %v8564
      %v8592 = vpack.c.b16 %v8567, %v8566
      %v8593 = vpack.c.b16 %v8569, %v8568
      %v8594 = vpack.c.b16 %v8571, %v8570
      %v8595 = vpack.c.b16 %v8573, %v8572
      %v8596 = vpack.c.b16 %v8575, %v8574
      %v8597 = vpack.c.b16 %v8577, %v8576
      %v8598 = vpack.c.b16 %v8579, %v8578
      %v8599 = vpack.c.b16 %v8581, %v8580
      %v8600 = vpack.c.b16 %v8583, %v8582
      %v8601 = vpack.c.b16 %v8585, %v8584
      %8618 = vmatprep.subr.bf16.mxu0 0
      %8619 = vmatpush1.bf16.msra.mxu0 %v8586
      %8620 = vmatprep.subr.bf16.mxu0 0
      %8621 = vmatpush1.bf16.msra.mxu0 %v8587
      %8622 = vmatprep.subr.bf16.mxu0 0
      %8623 = vmatpush1.bf16.msra.mxu0 %v8588
      %8624 = vmatprep.subr.bf16.mxu0 0
      %8625 = vmatpush1.bf16.msra.mxu0 %v8589
      %8626 = vmatprep.subr.bf16.mxu0 0
      %8627 = vmatpush1.bf16.msra.mxu0 %v8590
      %8628 = vmatprep.subr.bf16.mxu0 0
      %8629 = vmatpush1.bf16.msra.mxu0 %v8591
      %8630 = vmatprep.subr.bf16.mxu0 0
      %8631 = vmatpush1.bf16.msra.mxu0 %v8592
      %8632 = vmatprep.subr.bf16.mxu0 0
      %8633 = vmatpush1.bf16.msra.mxu0 %v8593
      %8634 = vmatprep.subr.bf16.mxu0 0
      %8635 = vmatpush1.bf16.msra.mxu0 %v8594
      %8636 = vmatprep.subr.bf16.mxu0 0
      %8637 = vmatpush1.bf16.msra.mxu0 %v8595
      %8638 = vmatprep.subr.bf16.mxu0 0
      %8639 = vmatpush1.bf16.msra.mxu0 %v8596
      %8640 = vmatprep.subr.bf16.mxu0 0
      %8641 = vmatpush1.bf16.msra.mxu0 %v8597
      %8642 = vmatprep.subr.bf16.mxu0 0
      %8643 = vmatpush1.bf16.msra.mxu0 %v8598
      %8644 = vmatprep.subr.bf16.mxu0 0
      %8645 = vmatpush1.bf16.msra.mxu0 %v8599
      %8646 = vmatprep.subr.bf16.mxu0 0
      %8647 = vmatpush1.bf16.msra.mxu0 %v8600
      %8648 = vmatprep.subr.bf16.mxu0 0
      %8649 = vmatpush1.bf16.msra.mxu0 %v8601
      %8650 = vmatprep.mubr.bf16.mxu0 %v8479
      %8651 = vmatmul.mubr.bf16.gmra.mrb[0].mxu0 %v8467
      %v8652 = vpop.f32.mrb[0].mxu0
      %v8653 = vadd.f32 0.0, %v8652
      %v8654 = vpop.f32.mrb[0].mxu0
      %v8655 = vpop.f32.mrb[0].mxu0
      %v8656 = vadd.f32 0.0, %v8655
      %v8657 = vpop.f32.mrb[0].mxu0
      %8658 = vmatprep.mubr.bf16.mxu0 %v8487
      %8659 = vmatmul.mubr.bf16.gmra.mrb[0].mxu0 %v8483
      %v8660 = vpop.f32.mrb[0].mxu0
      %v8661 = vadd.f32 0.0, %v8660
      %v8662 = vpop.f32.mrb[0].mxu0
      %v8663 = vpop.f32.mrb[0].mxu0
      %v8664 = vadd.f32 0.0, %v8663
      %v8665 = vpop.f32.mrb[0].mxu0
      %8666 = vmatprep.mubr.bf16.mxu0 %v8495
      %8667 = vmatmul.mubr.bf16.gmra.mrb[0].mxu0 %v8491
      %v8668 = vpop.f32.mrb[0].mxu0
      %v8669 = vadd.f32 0.0, %v8668
      %v8670 = vpop.f32.mrb[0].mxu0
      %v8671 = vpop.f32.mrb[0].mxu0
      %v8672 = vadd.f32 0.0, %v8671
      %v8673 = vpop.f32.mrb[0].mxu0
      %8674 = vmatprep.mubr.bf16.mxu0 %v8513
      %8675 = vmatmul.mubr.bf16.gmra.mrb[0].mxu0 %v8504
      %v8676 = vpop.f32.mrb[0].mxu0
      %v8677 = vadd.f32 0.0, %v8676
      %v8678 = vpop.f32.mrb[0].mxu0
      %v8679 = vpop.f32.mrb[0].mxu0
      %v8680 = vadd.f32 0.0, %v8679
      %v8681 = vpop.f32.mrb[0].mxu0
      %8682 = vdwg.mxu0
      %v8683 = vadd.f32 %v8408, %v8653
      %v8684 = vadd.f32 %v8409, %v8656
      %v8685 = vadd.f32 %v8410, %v8661
      %v8686 = vadd.f32 %v8411, %v8664
      %v8687 = vadd.f32 %v8412, %v8669
      %v8688 = vadd.f32 %v8413, %v8672
      %v8689 = vadd.f32 %v8414, %v8677
      %v8690 = vadd.f32 %v8415, %v8680
      %v8691 = vld [vmem:[#allocation4] sm:$0xcc]
      %s8692 = scalar_lea.vmem %s6, 512
      %v8693 = vld [vmem:[%s8692] sm:$0xf]
      %v8694 = vld [vmem:[%s8692 + $0x4] sm:$0xf]
      %v8695 = vld [vmem:[%s8692 + $0x8] sm:$0xf]
      %v8696 = vld [vmem:[%s8692 + $0xc] sm:$0xf]
      %v8697 = vld [vmem:[%s8692 + $0x10] sm:$0xf]
      %v8698 = vld [vmem:[%s8692 + $0x14] sm:$0xf]
      %v8699 = vld [vmem:[%s8692 + $0x18] sm:$0xf]
      %v8700 = vld [vmem:[%s8692 + $0x1c] sm:$0xf]
      %v8701 = vld [vmem:[%s8692 + $0x20] sm:$0xf]
      %v8702 = vld [vmem:[%s8692 + $0x24] sm:$0xf]
      %v8703 = vld [vmem:[%s8692 + $0x28] sm:$0xf]
      %v8704 = vld [vmem:[%s8692 + $0x2c] sm:$0xf]
      %v8705 = vld [vmem:[%s8692 + $0x30] sm:$0xf]
      %v8706 = vld [vmem:[%s8692 + $0x34] sm:$0xf]
      %v8707 = vld [vmem:[%s8692 + $0x38] sm:$0xf]
      %v8708 = vld [vmem:[%s8692 + $0x3c] sm:$0xf]
      %v8709 = vld [vmem:[%s8692 + $0x40] sm:$0xf]
      %v8710 = vld [vmem:[%s8692 + $0x44] sm:$0xf]
      %v8711 = vld [vmem:[%s8692 + $0x48] sm:$0xf]
      %v8712 = vld [vmem:[%s8692 + $0x4c] sm:$0xf]
      %v8713 = vld [vmem:[%s8692 + $0x50] sm:$0xf]
      %v8714 = vld [vmem:[%s8692 + $0x54] sm:$0xf]
      %v8715 = vld [vmem:[%s8692 + $0x58] sm:$0xf]
      %v8716 = vld [vmem:[%s8692 + $0x5c] sm:$0xf]
      %v8717 = vld [vmem:[%s8692 + $0x60] sm:$0xf]
      %v8718 = vld [vmem:[%s8692 + $0x64] sm:$0xf]
      %v8719 = vld [vmem:[%s8692 + $0x68] sm:$0xf]
      %v8720 = vld [vmem:[%s8692 + $0x6c] sm:$0xf]
      %v8721 = vld [vmem:[%s8692 + $0x70] sm:$0xf]
      %v8722 = vld [vmem:[%s8692 + $0x74] sm:$0xf]
      %v8723 = vld [vmem:[%s8692 + $0x78] sm:$0xf]
      %v8724 = vld [vmem:[%s8692 + $0x7c] sm:$0xf]
      %v8726 = vunpack.c.l.b16 %v8691
      %v8727 = vunpack.c.h.b16 %v8691
      %v8728 = vpack.c.b16 %v7713, %v8726
      %v8729 = vpack.c.b16 %v7714, %v8727
      %vm8730 = vcmask 1045504
      %v8731 = vrot.slane %v8728, 2
      %v8732 = vrot.slane %v7731, 2
      %v8733 = vsel %vm8730, %v8731, %v8732
      %v8734 = vrot.slane %v8729, 2
      %v8735 = vrot.slane %v7732, 2
      %v8736 = vsel %vm8730, %v8734, %v8735
      %v8737 = vrot.slane %v7733, 2
      %v8738 = vsel %vm8730, %v8732, %v8737
      %v8739 = vrot.slane %v7734, 2
      %v8740 = vsel %vm8730, %v8735, %v8739
      %v8741 = vrot.slane %v7735, 2
      %v8742 = vsel %vm8730, %v8737, %v8741
      %v8743 = vrot.slane %v7736, 2
      %v8744 = vsel %vm8730, %v8739, %v8743
      %v8745 = vrot.slane %v8453, 2
      %v8746 = vsel %vm8730, %v8741, %v8745
      %v8747 = vrot.slane %v8454, 2
      %v8748 = vsel %vm8730, %v8743, %v8747
      %v8789 = vunpack.c.l.b16 %v8693
      %v8790 = vunpack.c.l.b16 %v8694
      %v8791 = vunpack.c.l.b16 %v8695
      %v8792 = vunpack.c.l.b16 %v8696
      %v8793 = vunpack.c.l.b16 %v8697
      %v8794 = vunpack.c.l.b16 %v8698
      %v8795 = vunpack.c.l.b16 %v8699
      %v8796 = vunpack.c.l.b16 %v8700
      %v8797 = vunpack.c.l.b16 %v8701
      %v8798 = vunpack.c.l.b16 %v8702
      %v8799 = vunpack.c.l.b16 %v8703
      %v8800 = vunpack.c.l.b16 %v8704
      %v8801 = vunpack.c.l.b16 %v8705
      %v8802 = vunpack.c.l.b16 %v8706
      %v8803 = vunpack.c.l.b16 %v8707
      %v8804 = vunpack.c.l.b16 %v8708
      %v8805 = vunpack.c.l.b16 %v8709
      %v8806 = vunpack.c.l.b16 %v8710
      %v8807 = vunpack.c.l.b16 %v8711
      %v8808 = vunpack.c.l.b16 %v8712
      %v8809 = vunpack.c.l.b16 %v8713
      %v8810 = vunpack.c.l.b16 %v8714
      %v8811 = vunpack.c.l.b16 %v8715
      %v8812 = vunpack.c.l.b16 %v8716
      %v8813 = vunpack.c.l.b16 %v8717
      %v8814 = vunpack.c.l.b16 %v8718
      %v8815 = vunpack.c.l.b16 %v8719
      %v8816 = vunpack.c.l.b16 %v8720
      %v8817 = vunpack.c.l.b16 %v8721
      %v8818 = vunpack.c.l.b16 %v8722
      %v8819 = vunpack.c.l.b16 %v8723
      %v8820 = vunpack.c.l.b16 %v8724
      %v8821 = vpack.c.b16 %v8790, %v8789
      %v8822 = vpack.c.b16 %v8792, %v8791
      %v8823 = vpack.c.b16 %v8794, %v8793
      %v8824 = vpack.c.b16 %v8796, %v8795
      %v8825 = vpack.c.b16 %v8798, %v8797
      %v8826 = vpack.c.b16 %v8800, %v8799
      %v8827 = vpack.c.b16 %v8802, %v8801
      %v8828 = vpack.c.b16 %v8804, %v8803
      %v8829 = vpack.c.b16 %v8806, %v8805
      %v8830 = vpack.c.b16 %v8808, %v8807
      %v8831 = vpack.c.b16 %v8810, %v8809
      %v8832 = vpack.c.b16 %v8812, %v8811
      %v8833 = vpack.c.b16 %v8814, %v8813
      %v8834 = vpack.c.b16 %v8816, %v8815
      %v8835 = vpack.c.b16 %v8818, %v8817
      %v8836 = vpack.c.b16 %v8820, %v8819
      %8853 = vmatprep.subr.bf16.mxu0 0
      %8854 = vmatpush1.bf16.msra.mxu0 %v8821
      %8855 = vmatprep.subr.bf16.mxu0 0
      %8856 = vmatpush1.bf16.msra.mxu0 %v8822
      %8857 = vmatprep.subr.bf16.mxu0 0
      %8858 = vmatpush1.bf16.msra.mxu0 %v8823
      %8859 = vmatprep.subr.bf16.mxu0 0
      %8860 = vmatpush1.bf16.msra.mxu0 %v8824
      %8861 = vmatprep.subr.bf16.mxu0 0
      %8862 = vmatpush1.bf16.msra.mxu0 %v8825
      %8863 = vmatprep.subr.bf16.mxu0 0
      %8864 = vmatpush1.bf16.msra.mxu0 %v8826
      %8865 = vmatprep.subr.bf16.mxu0 0
      %8866 = vmatpush1.bf16.msra.mxu0 %v8827
      %8867 = vmatprep.subr.bf16.mxu0 0
      %8868 = vmatpush1.bf16.msra.mxu0 %v8828
      %8869 = vmatprep.subr.bf16.mxu0 0
      %8870 = vmatpush1.bf16.msra.mxu0 %v8829
      %8871 = vmatprep.subr.bf16.mxu0 0
      %8872 = vmatpush1.bf16.msra.mxu0 %v8830
      %8873 = vmatprep.subr.bf16.mxu0 0
      %8874 = vmatpush1.bf16.msra.mxu0 %v8831
      %8875 = vmatprep.subr.bf16.mxu0 0
      %8876 = vmatpush1.bf16.msra.mxu0 %v8832
      %8877 = vmatprep.subr.bf16.mxu0 0
      %8878 = vmatpush1.bf16.msra.mxu0 %v8833
      %8879 = vmatprep.subr.bf16.mxu0 0
      %8880 = vmatpush1.bf16.msra.mxu0 %v8834
      %8881 = vmatprep.subr.bf16.mxu0 0
      %8882 = vmatpush1.bf16.msra.mxu0 %v8835
      %8883 = vmatprep.subr.bf16.mxu0 0
      %8884 = vmatpush1.bf16.msra.mxu0 %v8836
      %8885 = vmatprep.mubr.bf16.mxu0 %v8736
      %8886 = vmatmul.mubr.bf16.gmra.mrb[0].mxu0 %v8733
      %v8887 = vpop.f32.mrb[0].mxu0
      %v8888 = vadd.f32 0.0, %v8887
      %v8889 = vpop.f32.mrb[0].mxu0
      %v8890 = vpop.f32.mrb[0].mxu0
      %v8891 = vadd.f32 0.0, %v8890
      %v8892 = vpop.f32.mrb[0].mxu0
      %8893 = vmatprep.mubr.bf16.mxu0 %v8740
      %8894 = vmatmul.mubr.bf16.gmra.mrb[0].mxu0 %v8738
      %v8895 = vpop.f32.mrb[0].mxu0
      %v8896 = vadd.f32 0.0, %v8895
      %v8897 = vpop.f32.mrb[0].mxu0
      %v8898 = vpop.f32.mrb[0].mxu0
      %v8899 = vadd.f32 0.0, %v8898
      %v8900 = vpop.f32.mrb[0].mxu0
      %8901 = vmatprep.mubr.bf16.mxu0 %v8744
      %8902 = vmatmul.mubr.bf16.gmra.mrb[0].mxu0 %v8742
      %v8903 = vpop.f32.mrb[0].mxu0
      %v8904 = vadd.f32 0.0, %v8903
      %v8905 = vpop.f32.mrb[0].mxu0
      %v8906 = vpop.f32.mrb[0].mxu0
      %v8907 = vadd.f32 0.0, %v8906
      %v8908 = vpop.f32.mrb[0].mxu0
      %8909 = vmatprep.mubr.bf16.mxu0 %v8748
      %8910 = vmatmul.mubr.bf16.gmra.mrb[0].mxu0 %v8746
      %v8911 = vpop.f32.mrb[0].mxu0
      %v8912 = vadd.f32 0.0, %v8911
      %v8913 = vpop.f32.mrb[0].mxu0
      %v8914 = vpop.f32.mrb[0].mxu0
      %v8915 = vadd.f32 0.0, %v8914
      %v8916 = vpop.f32.mrb[0].mxu0
      %8917 = vdwg.mxu0
      %v8918 = vadd.f32 %v8683, %v8888
      %v8919 = vadd.f32 %v8684, %v8891
      %v8920 = vadd.f32 %v8685, %v8896
      %v8921 = vadd.f32 %v8686, %v8899
      %v8922 = vadd.f32 %v8687, %v8904
      %v8923 = vadd.f32 %v8688, %v8907
      %v8924 = vadd.f32 %v8689, %v8912
      %v8925 = vadd.f32 %v8690, %v8915
      %v8926 = vld [vmem:[#allocation4 + $0x40] sm:$0x77]
      %s8927 = scalar_lea.vmem %s6, 640
      %v8928 = vld [vmem:[%s8927] sm:$0xf]
      %v8929 = vld [vmem:[%s8927 + $0x4] sm:$0xf]
      %v8930 = vld [vmem:[%s8927 + $0x8] sm:$0xf]
      %v8931 = vld [vmem:[%s8927 + $0xc] sm:$0xf]
      %v8932 = vld [vmem:[%s8927 + $0x10] sm:$0xf]
      %v8933 = vld [vmem:[%s8927 + $0x14] sm:$0xf]
      %v8934 = vld [vmem:[%s8927 + $0x18] sm:$0xf]
      %v8935 = vld [vmem:[%s8927 + $0x1c] sm:$0xf]
      %v8936 = vld [vmem:[%s8927 + $0x20] sm:$0xf]
      %v8937 = vld [vmem:[%s8927 + $0x24] sm:$0xf]
      %v8938 = vld [vmem:[%s8927 + $0x28] sm:$0xf]
      %v8939 = vld [vmem:[%s8927 + $0x2c] sm:$0xf]
      %v8940 = vld [vmem:[%s8927 + $0x30] sm:$0xf]
      %v8941 = vld [vmem:[%s8927 + $0x34] sm:$0xf]
      %v8942 = vld [vmem:[%s8927 + $0x38] sm:$0xf]
      %v8943 = vld [vmem:[%s8927 + $0x3c] sm:$0xf]
      %v8944 = vld [vmem:[%s8927 + $0x40] sm:$0xf]
      %v8945 = vld [vmem:[%s8927 + $0x44] sm:$0xf]
      %v8946 = vld [vmem:[%s8927 + $0x48] sm:$0xf]
      %v8947 = vld [vmem:[%s8927 + $0x4c] sm:$0xf]
      %v8948 = vld [vmem:[%s8927 + $0x50] sm:$0xf]
      %v8949 = vld [vmem:[%s8927 + $0x54] sm:$0xf]
      %v8950 = vld [vmem:[%s8927 + $0x58] sm:$0xf]
      %v8951 = vld [vmem:[%s8927 + $0x5c] sm:$0xf]
      %v8952 = vld [vmem:[%s8927 + $0x60] sm:$0xf]
      %v8953 = vld [vmem:[%s8927 + $0x64] sm:$0xf]
      %v8954 = vld [vmem:[%s8927 + $0x68] sm:$0xf]
      %v8955 = vld [vmem:[%s8927 + $0x6c] sm:$0xf]
      %v8956 = vld [vmem:[%s8927 + $0x70] sm:$0xf]
      %v8957 = vld [vmem:[%s8927 + $0x74] sm:$0xf]
      %v8958 = vld [vmem:[%s8927 + $0x78] sm:$0xf]
      %v8959 = vld [vmem:[%s8927 + $0x7c] sm:$0xf]
      %v8961 = vunpack.c.l.b16 %v8926
      %v8962 = vunpack.c.h.b16 %v8926
      %v8963 = vpack.c.b16 %v8961, %v8961
      %v8964 = vpack.c.b16 %v8962, %v8962
      %vm8965 = vsmask.f32 5376
      %v8967 = vshrl.u32 %v8728, 16
      %v8969 = vrot.slane %v8967, 2
      %v8970 = vshll.u32 %v8728, 16
      %v8972 = vrot.slane %v8970, 3
      %v8973 = vor.u32 %v8969, %v8972
      %v8974 = vrot.slane %v7763, 2
      %v8975 = vrot.slane %v7747, 3
      %v8976 = vor.u32 %v8974, %v8975
      %v8977 = vsel %vm8965, %v8973, %v8976
      %v8979 = vshrl.u32 %v8729, 16
      %v8981 = vrot.slane %v8979, 2
      %v8982 = vshll.u32 %v8729, 16
      %v8984 = vrot.slane %v8982, 3
      %v8985 = vor.u32 %v8981, %v8984
      %v8986 = vrot.slane %v7771, 2
      %v8987 = vrot.slane %v7759, 3
      %v8988 = vor.u32 %v8986, %v8987
      %v8989 = vsel %vm8965, %v8985, %v8988
      %v8990 = vrot.slane %v7779, 2
      %v8991 = vrot.slane %v7767, 3
      %v8992 = vor.u32 %v8990, %v8991
      %v8993 = vsel %vm8965, %v8976, %v8992
      %v8994 = vrot.slane %v7787, 2
      %v8995 = vrot.slane %v7775, 3
      %v8996 = vor.u32 %v8994, %v8995
      %v8997 = vsel %vm8965, %v8988, %v8996
      %v8998 = vrot.slane %v7795, 2
      %v8999 = vrot.slane %v7783, 3
      %v9000 = vor.u32 %v8998, %v8999
      %v9001 = vsel %vm8965, %v8992, %v9000
      %v9002 = vrot.slane %v7803, 2
      %v9003 = vrot.slane %v7791, 3
      %v9004 = vor.u32 %v9002, %v9003
      %v9005 = vsel %vm8965, %v8996, %v9004
      %v9007 = vshrl.u32 %v8963, 16
      %v9009 = vrot.slane %v9007, 2
      %v9010 = vshll.u32 %v8963, 16
      %v9012 = vrot.slane %v9010, 3
      %v9013 = vor.u32 %v9009, %v9012
      %v9014 = vsel %vm8965, %v9000, %v9013
      %v9016 = vshrl.u32 %v8964, 16
      %v9018 = vrot.slane %v9016, 2
      %v9019 = vshll.u32 %v8964, 16
      %v9021 = vrot.slane %v9019, 3
      %v9022 = vor.u32 %v9018, %v9021
      %v9023 = vsel %vm8965, %v9004, %v9022
      %v9064 = vunpack.c.l.b16 %v8928
      %v9065 = vunpack.c.l.b16 %v8929
      %v9066 = vunpack.c.l.b16 %v8930
      %v9067 = vunpack.c.l.b16 %v8931
      %v9068 = vunpack.c.l.b16 %v8932
      %v9069 = vunpack.c.l.b16 %v8933
      %v9070 = vunpack.c.l.b16 %v8934
      %v9071 = vunpack.c.l.b16 %v8935
      %v9072 = vunpack.c.l.b16 %v8936
      %v9073 = vunpack.c.l.b16 %v8937
      %v9074 = vunpack.c.l.b16 %v8938
      %v9075 = vunpack.c.l.b16 %v8939
      %v9076 = vunpack.c.l.b16 %v8940
      %v9077 = vunpack.c.l.b16 %v8941
      %v9078 = vunpack.c.l.b16 %v8942
      %v9079 = vunpack.c.l.b16 %v8943
      %v9080 = vunpack.c.l.b16 %v8944
      %v9081 = vunpack.c.l.b16 %v8945
      %v9082 = vunpack.c.l.b16 %v8946
      %v9083 = vunpack.c.l.b16 %v8947
      %v9084 = vunpack.c.l.b16 %v8948
      %v9085 = vunpack.c.l.b16 %v8949
      %v9086 = vunpack.c.l.b16 %v8950
      %v9087 = vunpack.c.l.b16 %v8951
      %v9088 = vunpack.c.l.b16 %v8952
      %v9089 = vunpack.c.l.b16 %v8953
      %v9090 = vunpack.c.l.b16 %v8954
      %v9091 = vunpack.c.l.b16 %v8955
      %v9092 = vunpack.c.l.b16 %v8956
      %v9093 = vunpack.c.l.b16 %v8957
      %v9094 = vunpack.c.l.b16 %v8958
      %v9095 = vunpack.c.l.b16 %v8959
      %v9096 = vpack.c.b16 %v9065, %v9064
      %v9097 = vpack.c.b16 %v9067, %v9066
      %v9098 = vpack.c.b16 %v9069, %v9068
      %v9099 = vpack.c.b16 %v9071, %v9070
      %v9100 = vpack.c.b16 %v9073, %v9072
      %v9101 = vpack.c.b16 %v9075, %v9074
      %v9102 = vpack.c.b16 %v9077, %v9076
      %v9103 = vpack.c.b16 %v9079, %v9078
      %v9104 = vpack.c.b16 %v9081, %v9080
      %v9105 = vpack.c.b16 %v9083, %v9082
      %v9106 = vpack.c.b16 %v9085, %v9084
      %v9107 = vpack.c.b16 %v9087, %v9086
      %v9108 = vpack.c.b16 %v9089, %v9088
      %v9109 = vpack.c.b16 %v9091, %v9090
      %v9110 = vpack.c.b16 %v9093, %v9092
      %v9111 = vpack.c.b16 %v9095, %v9094
      %9128 = vmatprep.subr.bf16.mxu0 0
      %9129 = vmatpush1.bf16.msra.mxu0 %v9096
      %9130 = vmatprep.subr.bf16.mxu0 0
      %9131 = vmatpush1.bf16.msra.mxu0 %v9097
      %9132 = vmatprep.subr.bf16.mxu0 0
      %9133 = vmatpush1.bf16.msra.mxu0 %v9098
      %9134 = vmatprep.subr.bf16.mxu0 0
      %9135 = vmatpush1.bf16.msra.mxu0 %v9099
      %9136 = vmatprep.subr.bf16.mxu0 0
      %9137 = vmatpush1.bf16.msra.mxu0 %v9100
      %9138 = vmatprep.subr.bf16.mxu0 0
      %9139 = vmatpush1.bf16.msra.mxu0 %v9101
      %9140 = vmatprep.subr.bf16.mxu0 0
      %9141 = vmatpush1.bf16.msra.mxu0 %v9102
      %9142 = vmatprep.subr.bf16.mxu0 0
      %9143 = vmatpush1.bf16.msra.mxu0 %v9103
      %9144 = vmatprep.subr.bf16.mxu0 0
      %9145 = vmatpush1.bf16.msra.mxu0 %v9104
      %9146 = vmatprep.subr.bf16.mxu0 0
      %9147 = vmatpush1.bf16.msra.mxu0 %v9105
      %9148 = vmatprep.subr.bf16.mxu0 0
      %9149 = vmatpush1.bf16.msra.mxu0 %v9106
      %9150 = vmatprep.subr.bf16.mxu0 0
      %9151 = vmatpush1.bf16.msra.mxu0 %v9107
      %9152 = vmatprep.subr.bf16.mxu0 0
      %9153 = vmatpush1.bf16.msra.mxu0 %v9108
      %9154 = vmatprep.subr.bf16.mxu0 0
      %9155 = vmatpush1.bf16.msra.mxu0 %v9109
      %9156 = vmatprep.subr.bf16.mxu0 0
      %9157 = vmatpush1.bf16.msra.mxu0 %v9110
      %9158 = vmatprep.subr.bf16.mxu0 0
      %9159 = vmatpush1.bf16.msra.mxu0 %v9111
      %9160 = vmatprep.mubr.bf16.mxu0 %v8989
      %9161 = vmatmul.mubr.bf16.gmra.mrb[0].mxu0 %v8977
      %v9162 = vpop.f32.mrb[0].mxu0
      %v9163 = vadd.f32 0.0, %v9162
      %v9164 = vpop.f32.mrb[0].mxu0
      %v9165 = vpop.f32.mrb[0].mxu0
      %v9166 = vadd.f32 0.0, %v9165
      %v9167 = vpop.f32.mrb[0].mxu0
      %9168 = vmatprep.mubr.bf16.mxu0 %v8997
      %9169 = vmatmul.mubr.bf16.gmra.mrb[0].mxu0 %v8993
      %v9170 = vpop.f32.mrb[0].mxu0
      %v9171 = vadd.f32 0.0, %v9170
      %v9172 = vpop.f32.mrb[0].mxu0
      %v9173 = vpop.f32.mrb[0].mxu0
      %v9174 = vadd.f32 0.0, %v9173
      %v9175 = vpop.f32.mrb[0].mxu0
      %9176 = vmatprep.mubr.bf16.mxu0 %v9005
      %9177 = vmatmul.mubr.bf16.gmra.mrb[0].mxu0 %v9001
      %v9178 = vpop.f32.mrb[0].mxu0
      %v9179 = vadd.f32 0.0, %v9178
      %v9180 = vpop.f32.mrb[0].mxu0
      %v9181 = vpop.f32.mrb[0].mxu0
      %v9182 = vadd.f32 0.0, %v9181
      %v9183 = vpop.f32.mrb[0].mxu0
      %9184 = vmatprep.mubr.bf16.mxu0 %v9023
      %9185 = vmatmul.mubr.bf16.gmra.mrb[0].mxu0 %v9014
      %v9186 = vpop.f32.mrb[0].mxu0
      %v9187 = vadd.f32 0.0, %v9186
      %v9188 = vpop.f32.mrb[0].mxu0
      %v9189 = vpop.f32.mrb[0].mxu0
      %v9190 = vadd.f32 0.0, %v9189
      %v9191 = vpop.f32.mrb[0].mxu0
      %9192 = vdwg.mxu0
      %v9193 = vadd.f32 %v8918, %v9163
      %v9194 = vadd.f32 %v8919, %v9166
      %v9195 = vadd.f32 %v8920, %v9171
      %v9196 = vadd.f32 %v8921, %v9174
      %v9197 = vadd.f32 %v8922, %v9179
      %v9198 = vadd.f32 %v8923, %v9182
      %v9199 = vadd.f32 %v8924, %v9187
      %v9200 = vadd.f32 %v8925, %v9190
      %v9201 = vld [vmem:[#allocation4] sm:$0x88]
      %s9202 = scalar_lea.vmem %s6, 768
      %v9203 = vld [vmem:[%s9202] sm:$0xf]
      %v9204 = vld [vmem:[%s9202 + $0x4] sm:$0xf]
      %v9205 = vld [vmem:[%s9202 + $0x8] sm:$0xf]
      %v9206 = vld [vmem:[%s9202 + $0xc] sm:$0xf]
      %v9207 = vld [vmem:[%s9202 + $0x10] sm:$0xf]
      %v9208 = vld [vmem:[%s9202 + $0x14] sm:$0xf]
      %v9209 = vld [vmem:[%s9202 + $0x18] sm:$0xf]
      %v9210 = vld [vmem:[%s9202 + $0x1c] sm:$0xf]
      %v9211 = vld [vmem:[%s9202 + $0x20] sm:$0xf]
      %v9212 = vld [vmem:[%s9202 + $0x24] sm:$0xf]
      %v9213 = vld [vmem:[%s9202 + $0x28] sm:$0xf]
      %v9214 = vld [vmem:[%s9202 + $0x2c] sm:$0xf]
      %v9215 = vld [vmem:[%s9202 + $0x30] sm:$0xf]
      %v9216 = vld [vmem:[%s9202 + $0x34] sm:$0xf]
      %v9217 = vld [vmem:[%s9202 + $0x38] sm:$0xf]
      %v9218 = vld [vmem:[%s9202 + $0x3c] sm:$0xf]
      %v9219 = vld [vmem:[%s9202 + $0x40] sm:$0xf]
      %v9220 = vld [vmem:[%s9202 + $0x44] sm:$0xf]
      %v9221 = vld [vmem:[%s9202 + $0x48] sm:$0xf]
      %v9222 = vld [vmem:[%s9202 + $0x4c] sm:$0xf]
      %v9223 = vld [vmem:[%s9202 + $0x50] sm:$0xf]
      %v9224 = vld [vmem:[%s9202 + $0x54] sm:$0xf]
      %v9225 = vld [vmem:[%s9202 + $0x58] sm:$0xf]
      %v9226 = vld [vmem:[%s9202 + $0x5c] sm:$0xf]
      %v9227 = vld [vmem:[%s9202 + $0x60] sm:$0xf]
      %v9228 = vld [vmem:[%s9202 + $0x64] sm:$0xf]
      %v9229 = vld [vmem:[%s9202 + $0x68] sm:$0xf]
      %v9230 = vld [vmem:[%s9202 + $0x6c] sm:$0xf]
      %v9231 = vld [vmem:[%s9202 + $0x70] sm:$0xf]
      %v9232 = vld [vmem:[%s9202 + $0x74] sm:$0xf]
      %v9233 = vld [vmem:[%s9202 + $0x78] sm:$0xf]
      %v9234 = vld [vmem:[%s9202 + $0x7c] sm:$0xf]
      %v9236 = vunpack.c.l.b16 %v9201
      %v9237 = vunpack.c.h.b16 %v9201
      %v9238 = vpack.c.b16 %v7713, %v9236
      %v9239 = vpack.c.b16 %v7714, %v9237
      %vm9240 = vcmask 1044480
      %v9241 = vrot.slane %v9238, 3
      %v9242 = vrot.slane %v7731, 3
      %v9243 = vsel %vm9240, %v9241, %v9242
      %v9244 = vrot.slane %v9239, 3
      %v9245 = vrot.slane %v7732, 3
      %v9246 = vsel %vm9240, %v9244, %v9245
      %v9247 = vrot.slane %v7733, 3
      %v9248 = vsel %vm9240, %v9242, %v9247
      %v9249 = vrot.slane %v7734, 3
      %v9250 = vsel %vm9240, %v9245, %v9249
      %v9251 = vrot.slane %v7735, 3
      %v9252 = vsel %vm9240, %v9247, %v9251
      %v9253 = vrot.slane %v7736, 3
      %v9254 = vsel %vm9240, %v9249, %v9253
      %v9255 = vrot.slane %v8963, 3
      %v9256 = vsel %vm9240, %v9251, %v9255
      %v9257 = vrot.slane %v8964, 3
      %v9258 = vsel %vm9240, %v9253, %v9257
      %v9299 = vunpack.c.l.b16 %v9203
      %v9300 = vunpack.c.l.b16 %v9204
      %v9301 = vunpack.c.l.b16 %v9205
      %v9302 = vunpack.c.l.b16 %v9206
      %v9303 = vunpack.c.l.b16 %v9207
      %v9304 = vunpack.c.l.b16 %v9208
      %v9305 = vunpack.c.l.b16 %v9209
      %v9306 = vunpack.c.l.b16 %v9210
      %v9307 = vunpack.c.l.b16 %v9211
      %v9308 = vunpack.c.l.b16 %v9212
      %v9309 = vunpack.c.l.b16 %v9213
      %v9310 = vunpack.c.l.b16 %v9214
      %v9311 = vunpack.c.l.b16 %v9215
      %v9312 = vunpack.c.l.b16 %v9216
      %v9313 = vunpack.c.l.b16 %v9217
      %v9314 = vunpack.c.l.b16 %v9218
      %v9315 = vunpack.c.l.b16 %v9219
      %v9316 = vunpack.c.l.b16 %v9220
      %v9317 = vunpack.c.l.b16 %v9221
      %v9318 = vunpack.c.l.b16 %v9222
      %v9319 = vunpack.c.l.b16 %v9223
      %v9320 = vunpack.c.l.b16 %v9224
      %v9321 = vunpack.c.l.b16 %v9225
      %v9322 = vunpack.c.l.b16 %v9226
      %v9323 = vunpack.c.l.b16 %v9227
      %v9324 = vunpack.c.l.b16 %v9228
      %v9325 = vunpack.c.l.b16 %v9229
      %v9326 = vunpack.c.l.b16 %v9230
      %v9327 = vunpack.c.l.b16 %v9231
      %v9328 = vunpack.c.l.b16 %v9232
      %v9329 = vunpack.c.l.b16 %v9233
      %v9330 = vunpack.c.l.b16 %v9234
      %v9331 = vpack.c.b16 %v9300, %v9299
      %v9332 = vpack.c.b16 %v9302, %v9301
      %v9333 = vpack.c.b16 %v9304, %v9303
      %v9334 = vpack.c.b16 %v9306, %v9305
      %v9335 = vpack.c.b16 %v9308, %v9307
      %v9336 = vpack.c.b16 %v9310, %v9309
      %v9337 = vpack.c.b16 %v9312, %v9311
      %v9338 = vpack.c.b16 %v9314, %v9313
      %v9339 = vpack.c.b16 %v9316, %v9315
      %v9340 = vpack.c.b16 %v9318, %v9317
      %v9341 = vpack.c.b16 %v9320, %v9319
      %v9342 = vpack.c.b16 %v9322, %v9321
      %v9343 = vpack.c.b16 %v9324, %v9323
      %v9344 = vpack.c.b16 %v9326, %v9325
      %v9345 = vpack.c.b16 %v9328, %v9327
      %v9346 = vpack.c.b16 %v9330, %v9329
      %9363 = vmatprep.subr.bf16.mxu0 0
      %9364 = vmatpush1.bf16.msra.mxu0 %v9331
      %9365 = vmatprep.subr.bf16.mxu0 0
      %9366 = vmatpush1.bf16.msra.mxu0 %v9332
      %9367 = vmatprep.subr.bf16.mxu0 0
      %9368 = vmatpush1.bf16.msra.mxu0 %v9333
      %9369 = vmatprep.subr.bf16.mxu0 0
      %9370 = vmatpush1.bf16.msra.mxu0 %v9334
      %9371 = vmatprep.subr.bf16.mxu0 0
      %9372 = vmatpush1.bf16.msra.mxu0 %v9335
      %9373 = vmatprep.subr.bf16.mxu0 0
      %9374 = vmatpush1.bf16.msra.mxu0 %v9336
      %9375 = vmatprep.subr.bf16.mxu0 0
      %9376 = vmatpush1.bf16.msra.mxu0 %v9337
      %9377 = vmatprep.subr.bf16.mxu0 0
      %9378 = vmatpush1.bf16.msra.mxu0 %v9338
      %9379 = vmatprep.subr.bf16.mxu0 0
      %9380 = vmatpush1.bf16.msra.mxu0 %v9339
      %9381 = vmatprep.subr.bf16.mxu0 0
      %9382 = vmatpush1.bf16.msra.mxu0 %v9340
      %9383 = vmatprep.subr.bf16.mxu0 0
      %9384 = vmatpush1.bf16.msra.mxu0 %v9341
      %9385 = vmatprep.subr.bf16.mxu0 0
      %9386 = vmatpush1.bf16.msra.mxu0 %v9342
      %9387 = vmatprep.subr.bf16.mxu0 0
      %9388 = vmatpush1.bf16.msra.mxu0 %v9343
      %9389 = vmatprep.subr.bf16.mxu0 0
      %9390 = vmatpush1.bf16.msra.mxu0 %v9344
      %9391 = vmatprep.subr.bf16.mxu0 0
      %9392 = vmatpush1.bf16.msra.mxu0 %v9345
      %9393 = vmatprep.subr.bf16.mxu0 0
      %9394 = vmatpush1.bf16.msra.mxu0 %v9346
      %9395 = vmatprep.mubr.bf16.mxu0 %v9246
      %9396 = vmatmul.mubr.bf16.gmra.mrb[0].mxu0 %v9243
      %v9397 = vpop.f32.mrb[0].mxu0
      %v9398 = vadd.f32 0.0, %v9397
      %v9399 = vpop.f32.mrb[0].mxu0
      %v9400 = vpop.f32.mrb[0].mxu0
      %v9401 = vadd.f32 0.0, %v9400
      %v9402 = vpop.f32.mrb[0].mxu0
      %9403 = vmatprep.mubr.bf16.mxu0 %v9250
      %9404 = vmatmul.mubr.bf16.gmra.mrb[0].mxu0 %v9248
      %v9405 = vpop.f32.mrb[0].mxu0
      %v9406 = vadd.f32 0.0, %v9405
      %v9407 = vpop.f32.mrb[0].mxu0
      %v9408 = vpop.f32.mrb[0].mxu0
      %v9409 = vadd.f32 0.0, %v9408
      %v9410 = vpop.f32.mrb[0].mxu0
      %9411 = vmatprep.mubr.bf16.mxu0 %v9254
      %9412 = vmatmul.mubr.bf16.gmra.mrb[0].mxu0 %v9252
      %v9413 = vpop.f32.mrb[0].mxu0
      %v9414 = vadd.f32 0.0, %v9413
      %v9415 = vpop.f32.mrb[0].mxu0
      %v9416 = vpop.f32.mrb[0].mxu0
      %v9417 = vadd.f32 0.0, %v9416
      %v9418 = vpop.f32.mrb[0].mxu0
      %9419 = vmatprep.mubr.bf16.mxu0 %v9258
      %9420 = vmatmul.mubr.bf16.gmra.mrb[0].mxu0 %v9256
      %v9421 = vpop.f32.mrb[0].mxu0
      %v9422 = vadd.f32 0.0, %v9421
      %v9423 = vpop.f32.mrb[0].mxu0
      %v9424 = vpop.f32.mrb[0].mxu0
      %v9425 = vadd.f32 0.0, %v9424
      %v9426 = vpop.f32.mrb[0].mxu0
      %9427 = vdwg.mxu0
      %v9428 = vadd.f32 %v9193, %v9398
      %v9429 = vadd.f32 %v9194, %v9401
      %v9430 = vadd.f32 %v9195, %v9406
      %v9431 = vadd.f32 %v9196, %v9409
      %v9432 = vadd.f32 %v9197, %v9414
      %v9433 = vadd.f32 %v9198, %v9417
      %v9434 = vadd.f32 %v9199, %v9422
      %v9435 = vadd.f32 %v9200, %v9425
      %v9436 = vld [vmem:[%s7] sm:$0x1]
      %v9438 = vlaneseq
      %v9439 = vshrl.u32 %v9438, 7
      %v9440 = vsub.s32 0, %v9439
      %v9441 = vrot.slane %v9436, %v9440
      %v9443 = vadd.f32 %v9428, %v9441
      %v9444 = vadd.f32 %v9429, %v9441
      %v9445 = vadd.f32 %v9430, %v9441
      %v9446 = vadd.f32 %v9431, %v9441
      %v9447 = vadd.f32 %v9432, %v9441
      %v9448 = vadd.f32 %v9433, %v9441
      %v9449 = vadd.f32 %v9434, %v9441
      %v9450 = vadd.f32 %v9435, %v9441
      %vm9451 = vcmask 80896
      %9452 = vst.msk [vmem:[%s307] sm:$0xff] %vm9451, %v9443
      %9453 = vst.msk [vmem:[%s307 + $0x8] sm:$0xff] %vm9451, %v9444
      %9454 = vst.msk [vmem:[%s307 + $0x10] sm:$0xff] %vm9451, %v9445
      %9455 = vst.msk [vmem:[%s307 + $0x18] sm:$0xff] %vm9451, %v9446
      %9456 = vst.msk [vmem:[%s307 + $0x20] sm:$0xff] %vm9451, %v9447
      %9457 = vst.msk [vmem:[%s307 + $0x28] sm:$0xff] %vm9451, %v9448
      %9458 = vst.msk [vmem:[%s307 + $0x30] sm:$0xff] %vm9451, %v9449
      %9459 = vst.msk [vmem:[%s307 + $0x38] sm:$0xff] %vm9451, %v9450
      %s9460 = smul.u32 8, %s19
      %p9461 = scmp.lt.s32.totalorder %s9460, 15
      %s9462 = scalar_select %p9461, %s9460, 15
      %s9463 = smul.addr %s9462, 8
      %s9464 = scalar_lea.vmem %s8, %s9463
      // Predicated region
      $region53: #{cnn_mnist_forward.1} parent=51 // pred_check
        %p9465 = pneg %p210
      $region54: #{cnn_mnist_forward.1} parent=51 // pred_check_branch
        %9467 = sbr.rel (%p9465) target = $region56
      $region55: #{cnn_mnist_forward.1} parent=51 // pred_region
        %s9468 = smul.u32 8, %s19
      $region56: #{cnn_mnist_forward.1} parent=51 // pred_fallthru
        _
    $region52: #{cnn_mnist_forward.1} parent=5 // pred_fallthru
      _
    %p9469 = scmp.le.s32.totalorder 2, %s14
    // Predicated region
    $region57: #{cnn_mnist_forward.1} parent=5 // pred_check
      %p9470 = pneg %p9469
    $region58: #{cnn_mnist_forward.1} parent=5 // pred_check_branch
      %9472 = sbr.rel (%p9470) target = $region60
    $region59: #{cnn_mnist_forward.1} parent=5 // pred_region
      %s9473 = ssub.s32 %s14, 2
      // Predicated region
      $region61: #{cnn_mnist_forward.1} parent=59 // pred_check
        %p9474 = pneg %p216
      $region62: #{cnn_mnist_forward.1} parent=59 // pred_check_branch
        %9476 = sbr.rel (%p9474) target = $region64
      $region63: #{cnn_mnist_forward.1} parent=59 // pred_region
        %s9477 = smul.u32 8, %s20
        %p9478 = scmp.lt.s32.totalorder %s9477, 15
        %s9479 = scalar_select %p9478, %s9477, 15
        %s9480 = smul.addr %s9479, 8
        %s9481 = scalar_lea.vmem %s8, %s9480
      $region64: #{cnn_mnist_forward.1} parent=59 // pred_fallthru
        _
    $region60: #{cnn_mnist_forward.1} parent=5 // pred_fallthru
      _
  $region6: #{cnn_mnist_forward.1} parent=0 // loop_footer
    %s18 = sadd.s32 1, %s14
  $region7: #{cnn_mnist_forward.1} parent=0 // loop_footer_branch
    %13 = sbr.rel target = $region3
  $region8: #{cnn_mnist_forward.1} parent=0 // loop_exit
    _

</llo_original>
